<compile_context>
chip_gen: v5e
topology: v5e:2x2
jax: 0.10.0
libtpu: 0.0.40
codegen_flags: <defaults>
</compile_context>

<pallas_src>
import math
import jax
import jax.numpy as jnp
from jax.experimental import pallas as pl
from jax.experimental.pallas import tpu as pltpu


# ----------------------------- quantization helpers -----------------------------

def _act_quant(y, a_bit):
    """DoReFa-style activation quantization: clip to [0,1], uniform levels."""
    if a_bit is None or a_bit >= 32:
        return y
    n = float(2 ** a_bit - 1)
    return jnp.round(jnp.clip(y, 0.0, 1.0) * n) * (1.0 / n)


def weight_quant(w, w_bit):
    """DoReFa-style weight quantization (runs once, outside the kernels)."""
    if w_bit is None or w_bit >= 32:
        return w
    n = float(2 ** w_bit - 1)
    t = jnp.tanh(w)
    m = jnp.maximum(jnp.max(jnp.abs(t)), 1e-12)
    w01 = t / (2.0 * m) + 0.5
    return 2.0 * (jnp.round(w01 * n) / n) - 1.0


# --------------------- in-kernel helpers (operate on values) ---------------------

def _pad_hw(x, p):
    """Zero-pad the (H, W) dims of an (H, W, C) value by p, in VMEM."""
    if p == 0:
        return x
    h, w, c = x.shape
    zc = jnp.zeros((h, p, c), x.dtype)
    x = jnp.concatenate([zc, x, zc], axis=1)
    zr = jnp.zeros((p, w + 2 * p, c), x.dtype)
    return jnp.concatenate([zr, x, zr], axis=0)


def _conv3x3_s1(xp, w2d, ho, wo):
    """3x3 stride-1 conv.  xp: (ho+2, wo+2, C) f32, w2d: (9*C, Cout) bf16.
    All 9 taps are packed into the contraction dim -> a single MXU matmul.
    Taps come from 3 kx-shifted copies + sublane-aligned row slices."""
    c = xp.shape[-1]
    p = ho * wo
    sxs = [xp[:, kx:kx + wo, :].reshape((ho + 2) * wo, c) for kx in range(3)]
    cols = [sxs[kx][ky * wo: ky * wo + p, :] for ky in range(3) for kx in range(3)]
    packed = jnp.concatenate(cols, axis=-1).astype(jnp.bfloat16)      # (P, 9C)
    return jnp.dot(packed, w2d, preferred_element_type=jnp.float32)   # (P, Cout) f32


def _conv3x3_s2_phases(xph, w2d, ho, wo):
    """3x3 stride-2 conv on a phase-decomposed padded input.
    xph: (4, ho+1, wo+1, C) f32 where phase 2a+b = x_padded[a::2, b::2].
    Every tap is a contiguous window of one phase -> one packed matmul,
    computing only the ho*wo needed outputs."""
    c = xph.shape[-1]
    p = ho * wo
    cols = []
    for ky in range(3):
        a, ro = ky % 2, ky // 2
        for kx in range(3):
            b, co = kx % 2, kx // 2
            tap = xph[2 * a + b, ro:ro + ho, co:co + wo, :]
            cols.append(tap.reshape(p, c))
    packed = jnp.concatenate(cols, axis=-1).astype(jnp.bfloat16)      # (P, 9C)
    return jnp.dot(packed, w2d, preferred_element_type=jnp.float32)


# ----------------------------------- kernels -----------------------------------

def _make_stem_kernel(h, w, cout, abit):
    def kernel(x_ref, w_ref, s_ref, b_ref, o_ref):
        x = _pad_hw(x_ref[0].astype(jnp.float32), 1)                  # (h+2,w+2,cin)
        y = _conv3x3_s1(x, w_ref[...], h, w)
        y = _act_quant(jnp.maximum(y * s_ref[...] + b_ref[...], 0.0), abit)
        out = _pad_hw(y.reshape(h, w, cout), 1).astype(jnp.bfloat16)  # pre-pad output
        o_ref[...] = out.reshape(o_ref.shape)
    return kernel


def _make_block_kernel_s1(h, w, cin, cout, resize, abit):
    p = h * w

    def kernel(x_ref, w1, s1, b1, w2, s2, b2, *rest):
        if resize:
            wi, si, bi, o_ref = rest
        else:
            (o_ref,) = rest
        x = x_ref[0].astype(jnp.float32)                              # (h+2,w+2,cin)
        # conv1 + bn1 + relu + act_q1
        y1 = _conv3x3_s1(x, w1[...], h, w)
        y1 = _act_quant(jnp.maximum(y1 * s1[...] + b1[...], 0.0), abit)
        # conv2 + bn2 (intermediate stays in VMEM, padded in-kernel)
        y1p = _pad_hw(y1.reshape(h, w, cout), 1)
        y2 = _conv3x3_s1(y1p, w2[...], h, w)
        y2 = y2 * s2[...] + b2[...]
        # identity branch
        xi = x[1:1 + h, 1:1 + w, :].reshape(p, cin)
        if resize:
            ident = jnp.dot(xi.astype(jnp.bfloat16), wi[...],
                            preferred_element_type=jnp.float32)
            ident = _act_quant(ident * si[...] + bi[...], abit)
        else:
            ident = xi
        y = _act_quant(y2 + ident, abit)
        out = _pad_hw(y.reshape(h, w, cout), 1).astype(jnp.bfloat16)
        o_ref[...] = out.reshape(o_ref.shape)

    return kernel


def _make_block_kernel_s2(ho, wo, cin, cout, abit):
    p = ho * wo

    def kernel(x_ref, w1, s1, b1, w2, s2, b2, wi, si, bi, o_ref):
        xph = x_ref[0].astype(jnp.float32)                            # (4,ho+1,wo+1,cin)
        y1 = _conv3x3_s2_phases(xph, w1[...], ho, wo)
        y1 = _act_quant(jnp.maximum(y1 * s1[...] + b1[...], 0.0), abit)
        y1p = _pad_hw(y1.reshape(ho, wo, cout), 1)
        y2 = _conv3x3_s1(y1p, w2[...], ho, wo)
        y2 = y2 * s2[...] + b2[...]
        # 1x1 stride-2 identity conv == 1x1 conv on x[2i,2j] == phase (1,1) of
        # the padded input, restricted to its first ho x wo entries.
        xi = xph[3, :ho, :wo, :].reshape(p, cin)
        ident = jnp.dot(xi.astype(jnp.bfloat16), wi[...],
                        preferred_element_type=jnp.float32)
        ident = _act_quant(ident * si[...] + bi[...], abit)
        y = _act_quant(y2 + ident, abit)
        out = _pad_hw(y.reshape(ho, wo, cout), 1).astype(jnp.bfloat16)
        o_ref[...] = out.reshape(o_ref.shape)

    return kernel


def _make_head_kernel(inv_hw, abit):
    def kernel(x_ref, w_ref, b_ref, o_ref):
        # The spatial border of the block output is exact zeros, so summing the
        # whole padded map equals summing the 8x8 interior.
        x = x_ref[...].astype(jnp.float32)
        pooled = jnp.sum(x, axis=(1, 2)) * inv_hw                     # (N, C)
        pooled = _act_quant(pooled, abit).astype(jnp.bfloat16)
        y = jnp.dot(pooled, w_ref[...], preferred_element_type=jnp.float32)
        o_ref[...] = y + b_ref[...]
    return kernel


# ----------------------------------- glue ---------------------------------------

def _resident_spec(arr):
    nd = arr.ndim
    return pl.BlockSpec(arr.shape, lambda i, _z=(0,) * nd: _z)        # VMEM resident


def stem_forward(x, pw, abit):
    n, h, w, cin = x.shape
    cout = pw['w'].shape[-1]
    return pl.pallas_call(
        _make_stem_kernel(h, w, cout, abit),
        grid=(n,),
        in_specs=[pl.BlockSpec((1, h, w, cin), lambda i: (i, 0, 0, 0)),
                  _resident_spec(pw['w']),
                  _resident_spec(pw['scale']),
                  _resident_spec(pw['bias'])],
        out_specs=pl.BlockSpec((1, h + 2, w + 2, cout), lambda i: (i, 0, 0, 0)),
        out_shape=jax.ShapeDtypeStruct((n, h + 2, w + 2, cout), jnp.bfloat16),
        compiler_params=pltpu.CompilerParams(dimension_semantics=("parallel",)),
    )(x, pw['w'], pw['scale'], pw['bias'])


def block_forward(xpad, pw, h, w, cin, cout, stride, abit):
    """One fused pallas_call per residual block; xpad is the producer's
    spatially pre-padded bf16 output of shape (N, h+2, w+2, cin)."""
    n = xpad.shape[0]
    resize = (cin != cout) or (stride != 1)
    ho, wo = h // stride, w // stride

    if stride == 2:
        # Phase split in XLA glue (stage-transition blocks only):
        # phase 2a+b = xpad[a::2, b::2].
        xin = jnp.stack([xpad[:, a::2, b::2, :] for a in (0, 1) for b in (0, 1)],
                        axis=1)                                       # (N,4,ho+1,wo+1,cin)
        in0 = pl.BlockSpec((1, 4, ho + 1, wo + 1, cin), lambda i: (i, 0, 0, 0, 0))
        kernel = _make_block_kernel_s2(ho, wo, cin, cout, abit)
    else:
        xin = xpad
        in0 = pl.BlockSpec((1, h + 2, w + 2, cin), lambda i: (i, 0, 0, 0))
        kernel = _make_block_kernel_s1(h, w, cin, cout, resize, abit)

    args = [xin,
            pw['conv1']['w'], pw['conv1']['scale'], pw['conv1']['bias'],
            pw['conv2']['w'], pw['conv2']['scale'], pw['conv2']['bias']]
    in_specs = [in0] + [_resident_spec(a) for a in args[1:]]
    if resize:
        extra = [pw['idconv']['w'], pw['idconv']['scale'], pw['idconv']['bias']]
        args += extra
        in_specs += [_resident_spec(a) for a in extra]

    return pl.pallas_call(
        kernel,
        grid=(n,),
        in_specs=in_specs,
        out_specs=pl.BlockSpec((1, ho + 2, wo + 2, cout), lambda i: (i, 0, 0, 0)),
        out_shape=jax.ShapeDtypeStruct((n, ho + 2, wo + 2, cout), jnp.bfloat16),
        compiler_params=pltpu.CompilerParams(dimension_semantics=("parallel",)),
    )(*args)


def head_forward(xpad, pw, h, w, abit, ncls):
    n = xpad.shape[0]
    vspec = pl.BlockSpec(memory_space=pltpu.MemorySpace.VMEM)
    return pl.pallas_call(
        _make_head_kernel(1.0 / float(h * w), abit),
        out_shape=jax.ShapeDtypeStruct((n, ncls), jnp.float32),
        in_specs=[vspec, vspec, vspec],
        out_specs=vspec,
    )(xpad, pw['w'], pw['b'])


# --------------------------- one-time weight preparation ------------------------

def _prep_conv(w_oihw, conv_b, bn, w_bit):
    """Quantize weights, fold BN, reshape to (K*K*Cin, Cout) bf16 kernel layout."""
    cout, cin, k, _ = w_oihw.shape
    wq = weight_quant(w_oihw, w_bit)
    w2d = jnp.transpose(wq, (2, 3, 1, 0)).reshape(k * k * cin, cout).astype(jnp.bfloat16)
    scale = bn['gamma'] / jnp.sqrt(bn['var'] + bn['eps'])
    bias = (conv_b - bn['mean']) * scale + bn['beta']
    return dict(w=w2d,
                scale=scale.reshape(1, cout).astype(jnp.float32),
                bias=bias.reshape(1, cout).astype(jnp.float32))


def prepare_params(params, cfg):
    """Run ONCE (hoisted out of the forward): returns a pytree of arrays only."""
    pp = dict(stem=_prep_conv(params['stem']['w'], params['stem']['b'],
                              params['bn1'], cfg['first_wbit']))
    blocks = []
    in_c = cfg['init_block_channels']
    bid = 0
    for i, stage in enumerate(cfg['channels']):
        for j, out_c in enumerate(stage):
            stride = 2 if (j == 0 and i != 0) else 1
            bp = params['blocks'][bid]
            wbit = cfg['nbit_wlist'][bid]
            b = dict(conv1=_prep_conv(bp['conv1']['w'], bp['conv1']['b'], bp['bn1'], wbit),
                     conv2=_prep_conv(bp['conv2']['w'], bp['conv2']['b'], bp['bn2'], wbit))
            if (in_c != out_c) or (stride != 1):
                b['idconv'] = _prep_conv(bp['idconv']['w'], bp['idconv']['b'],
                                         bp['bn3'], wbit)
            blocks.append(b)
            in_c = out_c
            bid += 1
    pp['blocks'] = blocks
    wq = weight_quant(params['fc']['w'], cfg['last_wbit'])            # (ncls, C)
    pp['fc'] = dict(w=wq.T.astype(jnp.bfloat16),
                    b=params['fc']['b'].reshape(1, -1).astype(jnp.float32))
    return pp


# ----------------------------------- forward ------------------------------------

def cifar_resnet_forward(x_nchw, pp, cfg):
    n, cin, h, w = x_nchw.shape
    x = jnp.transpose(x_nchw, (0, 2, 3, 1)).astype(jnp.bfloat16)      # NCHW -> NHWC bf16
    x = stem_forward(x, pp['stem'], cfg['first_abit'])                # padded bf16 out

    in_c = cfg['init_block_channels']
    bid = 0
    for i, stage in enumerate(cfg['channels']):
        for j, out_c in enumerate(stage):
            stride = 2 if (j == 0 and i != 0) else 1
            x = block_forward(x, pp['blocks'][bid], h, w, in_c, out_c, stride,
                              cfg['nbit_alist'][bid])
            h, w = h // stride, w // stride
            in_c = out_c
            bid += 1

    assert h == 8 and w == 8, "final feature map must be 8x8 (AvgPool2d(8))"
    return head_forward(x, pp['fc'], h, w, cfg['last_abit'], cfg['num_classes'])


# ------------------------------ parameter creation ------------------------------

def _kaiming_uniform_conv(key, cout, cin, k):
    fan_in = cin * k * k
    bound = math.sqrt(2.0) * math.sqrt(3.0 / fan_in)
    return jax.random.uniform(key, (cout, cin, k, k), jnp.float32, -bound, bound)


def _bn_params(key, c):
    k1, k2, k3, k4 = jax.random.split(key, 4)
    return dict(gamma=jax.random.uniform(k1, (c,), jnp.float32, 0.5, 1.5),
                beta=jax.random.uniform(k2, (c,), jnp.float32, -0.1, 0.1),
                mean=0.1 * jax.random.normal(k3, (c,), jnp.float32),
                var=jax.random.uniform(k4, (c,), jnp.float32, 0.5, 1.5),
                eps=1e-5)


def build_params(key, cfg):
    keys = iter(jax.random.split(key, 128))
    p = {}
    c0 = cfg['init_block_channels']
    p['stem'] = dict(w=_kaiming_uniform_conv(next(keys), c0, cfg['in_channels'], 3),
                     b=jnp.zeros((c0,), jnp.float32))
    p['bn1'] = _bn_params(next(keys), c0)
    blocks = []
    in_c = c0
    for i, stage in enumerate(cfg['channels']):
        for j, out_c in enumerate(stage):
            stride = 2 if (j == 0 and i != 0) else 1
            bp = {}
            bp['conv1'] = dict(w=_kaiming_uniform_conv(next(keys), out_c, in_c, 3),
                               b=jnp.zeros((out_c,), jnp.float32))
            bp['bn1'] = _bn_params(next(keys), out_c)
            bp['conv2'] = dict(w=_kaiming_uniform_conv(next(keys), out_c, out_c, 3),
                               b=jnp.zeros((out_c,), jnp.float32))
            bp['bn2'] = _bn_params(next(keys), out_c)
            if (in_c != out_c) or (stride != 1):
                bp['idconv'] = dict(w=_kaiming_uniform_conv(next(keys), out_c, in_c, 1),
                                    b=jnp.zeros((out_c,), jnp.float32))
                bp['bn3'] = _bn_params(next(keys), out_c)
            blocks.append(bp)
            in_c = out_c
    p['blocks'] = blocks
    bound = 1.0 / math.sqrt(in_c)
    p['fc'] = dict(
        w=jax.random.uniform(next(keys), (cfg['num_classes'], in_c), jnp.float32,
                             -bound, bound),
        b=jax.random.uniform(next(keys), (cfg['num_classes'],), jnp.float32,
                             -bound, bound))
    return p


# ------------------------------------- main --------------------------------------

if __name__ == "__main__":
    cfg = dict(
        channels=[[8], [16]],        # two stages, one ResBlock each
        init_block_channels=8,
        nbit_wlist=[8, 8],
        nbit_alist=[8, 8],
        first_wbit=8, first_abit=8,
        last_wbit=8, last_abit=8,
        in_channels=3,
        num_classes=10,
    )
    key = jax.random.PRNGKey(0)
    k_param, k_x = jax.random.split(key)
    params = build_params(k_param, cfg)
    prepped = prepare_params(params, cfg)   # one-time weight prep (hoisted out of fwd)

    # spatial 16 -> stem 16 -> stage1 16 -> stage2 (stride 2) 8 -> avgpool(8) -> 1
    x = jax.random.normal(k_x, (2, cfg['in_channels'], 16, 16), jnp.float32)

    fwd = jax.jit(lambda xx, pw: cifar_resnet_forward(xx, pw, cfg))
    logits = jax.block_until_ready(fwd(x, prepped))

    assert logits.shape == (2, cfg['num_classes']), logits.shape
    assert bool(jnp.all(jnp.isfinite(logits)))
    print("KERNEL_OK")
</pallas_src>

<mosaic_0001>
module attributes {stable_mosaic.version = 11 : i64} {
  func.func @kernel(%arg0: i32, %arg1: memref<1x16x16x3xbf16, #tpu.memory_space<vmem>>, %arg2: memref<27x8xbf16, #tpu.memory_space<vmem>>, %arg3: memref<1x8xf32, #tpu.memory_space<vmem>>, %arg4: memref<1x8xf32, #tpu.memory_space<vmem>>, %arg5: memref<1x18x18x8xbf16, #tpu.memory_space<vmem>>) attributes {dimension_semantics = [#tpu.dimension_semantics<parallel>], iteration_bounds = array<i64: 2>, scalar_prefetch = 0 : i64, scratch_operands = 0 : i64, tpu.core_type = #tpu.core_type<tc>, window_params = [{transform_indices = @transform_0, window_bounds = array<i64: 1, 16, 16, 3>}, {pipeline_mode = #tpu.pipeline_mode<synchronous>, transform_indices = @transform_1, window_bounds = array<i64: 27, 8>}, {pipeline_mode = #tpu.pipeline_mode<synchronous>, transform_indices = @transform_2, window_bounds = array<i64: 1, 8>}, {pipeline_mode = #tpu.pipeline_mode<synchronous>, transform_indices = @transform_3, window_bounds = array<i64: 1, 8>}, {transform_indices = @transform_4, window_bounds = array<i64: 1, 18, 18, 8>}]} {
    %c0 = arith.constant 0 : index
    %c0_0 = arith.constant 0 : index
    %c0_1 = arith.constant 0 : index
    %c0_2 = arith.constant 0 : index
    %0 = vector.load %arg1[%c0, %c0_0, %c0_1, %c0_2] : memref<1x16x16x3xbf16, #tpu.memory_space<vmem>>, vector<1x16x16x3xbf16>
    %1 = vector.shape_cast %0 : vector<1x16x16x3xbf16> to vector<16x16x3xbf16>
    %2 = arith.extf %1 : vector<16x16x3xbf16> to vector<16x16x3xf32>
    %cst = arith.constant 0.000000e+00 : f32
    %3 = vector.broadcast %cst : f32 to vector<16x1x3xf32>
    %4 = tpu.concatenate %3, %2, %3 in 1 : vector<16x1x3xf32>, vector<16x16x3xf32>, vector<16x1x3xf32> -> vector<16x18x3xf32>
    %cst_3 = arith.constant 0.000000e+00 : f32
    %5 = vector.broadcast %cst_3 : f32 to vector<1x18x3xf32>
    %6 = tpu.concatenate %5, %4, %5 in 0 : vector<1x18x3xf32>, vector<16x18x3xf32>, vector<1x18x3xf32> -> vector<18x18x3xf32>
    %c0_4 = arith.constant 0 : index
    %c0_5 = arith.constant 0 : index
    %7 = vector.load %arg2[%c0_4, %c0_5] : memref<27x8xbf16, #tpu.memory_space<vmem>>, vector<27x8xbf16>
    %8 = vector.extract_strided_slice %6 {offsets = [0, 0, 0], sizes = [18, 16, 3], strides = [1, 1, 1]} : vector<18x18x3xf32> to vector<18x16x3xf32>
    %9 = vector.shape_cast %8 : vector<18x16x3xf32> to vector<288x3xf32>
    %10 = vector.extract_strided_slice %6 {offsets = [0, 1, 0], sizes = [18, 16, 3], strides = [1, 1, 1]} : vector<18x18x3xf32> to vector<18x16x3xf32>
    %11 = vector.shape_cast %10 : vector<18x16x3xf32> to vector<288x3xf32>
    %12 = vector.extract_strided_slice %6 {offsets = [0, 2, 0], sizes = [18, 16, 3], strides = [1, 1, 1]} : vector<18x18x3xf32> to vector<18x16x3xf32>
    %13 = vector.shape_cast %12 : vector<18x16x3xf32> to vector<288x3xf32>
    %14 = vector.extract_strided_slice %9 {offsets = [0, 0], sizes = [256, 3], strides = [1, 1]} : vector<288x3xf32> to vector<256x3xf32>
    %15 = vector.extract_strided_slice %11 {offsets = [0, 0], sizes = [256, 3], strides = [1, 1]} : vector<288x3xf32> to vector<256x3xf32>
    %16 = vector.extract_strided_slice %13 {offsets = [0, 0], sizes = [256, 3], strides = [1, 1]} : vector<288x3xf32> to vector<256x3xf32>
    %17 = vector.extract_strided_slice %9 {offsets = [16, 0], sizes = [256, 3], strides = [1, 1]} : vector<288x3xf32> to vector<256x3xf32>
    %18 = vector.extract_strided_slice %11 {offsets = [16, 0], sizes = [256, 3], strides = [1, 1]} : vector<288x3xf32> to vector<256x3xf32>
    %19 = vector.extract_strided_slice %13 {offsets = [16, 0], sizes = [256, 3], strides = [1, 1]} : vector<288x3xf32> to vector<256x3xf32>
    %20 = vector.extract_strided_slice %9 {offsets = [32, 0], sizes = [256, 3], strides = [1, 1]} : vector<288x3xf32> to vector<256x3xf32>
    %21 = vector.extract_strided_slice %11 {offsets = [32, 0], sizes = [256, 3], strides = [1, 1]} : vector<288x3xf32> to vector<256x3xf32>
    %22 = vector.extract_strided_slice %13 {offsets = [32, 0], sizes = [256, 3], strides = [1, 1]} : vector<288x3xf32> to vector<256x3xf32>
    %23 = tpu.concatenate %14, %15, %16, %17, %18, %19, %20, %21, %22 in 1 : vector<256x3xf32>, vector<256x3xf32>, vector<256x3xf32>, vector<256x3xf32>, vector<256x3xf32>, vector<256x3xf32>, vector<256x3xf32>, vector<256x3xf32>, vector<256x3xf32> -> vector<256x27xf32>
    %24 = arith.truncf %23 : vector<256x27xf32> to vector<256x27xbf16>
    %cst_6 = arith.constant dense<0.000000e+00> : vector<256x8xf32>
    %25 = tpu.matmul %24, %7, %cst_6 {dimension_numbers = #tpu.dot_dimension_numbers<[1], [0], [0], [1], [0, 0, 1, 1], [], []>} : vector<256x27xbf16>, vector<27x8xbf16>, vector<256x8xf32> -> vector<256x8xf32>
    %c0_7 = arith.constant 0 : index
    %c0_8 = arith.constant 0 : index
    %26 = vector.load %arg3[%c0_7, %c0_8] : memref<1x8xf32, #tpu.memory_space<vmem>>, vector<1x8xf32>
    %27 = vector.broadcast %26 : vector<1x8xf32> to vector<256x8xf32>
    %28 = arith.mulf %25, %27 : vector<256x8xf32>
    %c0_9 = arith.constant 0 : index
    %c0_10 = arith.constant 0 : index
    %29 = vector.load %arg4[%c0_9, %c0_10] : memref<1x8xf32, #tpu.memory_space<vmem>>, vector<1x8xf32>
    %30 = vector.broadcast %29 : vector<1x8xf32> to vector<256x8xf32>
    %31 = arith.addf %28, %30 : vector<256x8xf32>
    %cst_11 = arith.constant 0.000000e+00 : f32
    %32 = vector.broadcast %cst_11 : f32 to vector<256x8xf32>
    %33 = arith.maximumf %31, %32 : vector<256x8xf32>
    %cst_12 = arith.constant 0.000000e+00 : f32
    %cst_13 = arith.constant 1.000000e+00 : f32
    %34 = vector.broadcast %cst_12 : f32 to vector<256x8xf32>
    %35 = arith.maximumf %34, %33 : vector<256x8xf32>
    %36 = vector.broadcast %cst_13 : f32 to vector<256x8xf32>
    %37 = arith.minimumf %36, %35 : vector<256x8xf32>
    %cst_14 = arith.constant 2.550000e+02 : f32
    %38 = vector.broadcast %cst_14 : f32 to vector<256x8xf32>
    %39 = arith.mulf %37, %38 : vector<256x8xf32>
    %40 = math.roundeven %39 : vector<256x8xf32>
    %cst_15 = arith.constant 0.00392156886 : f32
    %41 = vector.broadcast %cst_15 : f32 to vector<256x8xf32>
    %42 = arith.mulf %40, %41 : vector<256x8xf32>
    %43 = vector.shape_cast %42 : vector<256x8xf32> to vector<16x16x8xf32>
    %cst_16 = arith.constant 0.000000e+00 : f32
    %44 = vector.broadcast %cst_16 : f32 to vector<16x1x8xf32>
    %45 = tpu.concatenate %44, %43, %44 in 1 : vector<16x1x8xf32>, vector<16x16x8xf32>, vector<16x1x8xf32> -> vector<16x18x8xf32>
    %cst_17 = arith.constant 0.000000e+00 : f32
    %46 = vector.broadcast %cst_17 : f32 to vector<1x18x8xf32>
    %47 = tpu.concatenate %46, %45, %46 in 0 : vector<1x18x8xf32>, vector<16x18x8xf32>, vector<1x18x8xf32> -> vector<18x18x8xf32>
    %48 = arith.truncf %47 : vector<18x18x8xf32> to vector<18x18x8xbf16>
    %49 = vector.shape_cast %48 : vector<18x18x8xbf16> to vector<1x18x18x8xbf16>
    %c0_18 = arith.constant 0 : index
    %c0_19 = arith.constant 0 : index
    %c0_20 = arith.constant 0 : index
    %c0_21 = arith.constant 0 : index
    %50 = vector.load %arg5[%c0_18, %c0_19, %c0_20, %c0_21] : memref<1x18x18x8xbf16, #tpu.memory_space<vmem>>, vector<1x18x18x8xbf16>
    tpu.vector_store %arg5[%c0_18, %c0_19, %c0_20, %c0_21], %49 {strides = array<i32>} : memref<1x18x18x8xbf16, #tpu.memory_space<vmem>>, vector<1x18x18x8xbf16>,
    return
  }
  func.func @transform_0(%arg0: i32) -> (i32, i32, i32, i32) {
    %c0_i32 = arith.constant 0 : i32
    %c0_i32_0 = arith.constant 0 : i32
    %c0_i32_1 = arith.constant 0 : i32
    %c0_i32_2 = arith.constant 0 : i32
    return %arg0, %c0_i32, %c0_i32_0, %c0_i32_1 : i32, i32, i32, i32
  }
  func.func @transform_1(%arg0: i32) -> (i32, i32) {
    %c0_i32 = arith.constant 0 : i32
    %c0_i32_0 = arith.constant 0 : i32
    %c0_i32_1 = arith.constant 0 : i32
    return %c0_i32, %c0_i32_0 : i32, i32
  }
  func.func @transform_2(%arg0: i32) -> (i32, i32) {
    %c0_i32 = arith.constant 0 : i32
    %c0_i32_0 = arith.constant 0 : i32
    %c0_i32_1 = arith.constant 0 : i32
    return %c0_i32, %c0_i32_0 : i32, i32
  }
  func.func @transform_3(%arg0: i32) -> (i32, i32) {
    %c0_i32 = arith.constant 0 : i32
    %c0_i32_0 = arith.constant 0 : i32
    %c0_i32_1 = arith.constant 0 : i32
    return %c0_i32, %c0_i32_0 : i32, i32
  }
  func.func @transform_4(%arg0: i32) -> (i32, i32, i32, i32) {
    %c0_i32 = arith.constant 0 : i32
    %c0_i32_0 = arith.constant 0 : i32
    %c0_i32_1 = arith.constant 0 : i32
    %c0_i32_2 = arith.constant 0 : i32
    return %arg0, %c0_i32, %c0_i32_0, %c0_i32_1 : i32, i32, i32, i32
  }
}

module attributes {stable_mosaic.version = 11 : i64} {
  func.func @kernel(%arg0: i32, %arg1: memref<1x18x18x8xbf16, #tpu.memory_space<vmem>>, %arg2: memref<72x8xbf16, #tpu.memory_space<vmem>>, %arg3: memref<1x8xf32, #tpu.memory_space<vmem>>, %arg4: memref<1x8xf32, #tpu.memory_space<vmem>>, %arg5: memref<72x8xbf16, #tpu.memory_space<vmem>>, %arg6: memref<1x8xf32, #tpu.memory_space<vmem>>, %arg7: memref<1x8xf32, #tpu.memory_space<vmem>>, %arg8: memref<1x18x18x8xbf16, #tpu.memory_space<vmem>>) attributes {dimension_semantics = [#tpu.dimension_semantics<parallel>], iteration_bounds = array<i64: 2>, scalar_prefetch = 0 : i64, scratch_operands = 0 : i64, tpu.core_type = #tpu.core_type<tc>, window_params = [{transform_indices = @transform_0, window_bounds = array<i64: 1, 18, 18, 8>}, {pipeline_mode = #tpu.pipeline_mode<synchronous>, transform_indices = @transform_1, window_bounds = array<i64: 72, 8>}, {pipeline_mode = #tpu.pipeline_mode<synchronous>, transform_indices = @transform_2, window_bounds = array<i64: 1, 8>}, {pipeline_mode = #tpu.pipeline_mode<synchronous>, transform_indices = @transform_3, window_bounds = array<i64: 1, 8>}, {pipeline_mode = #tpu.pipeline_mode<synchronous>, transform_indices = @transform_4, window_bounds = array<i64: 72, 8>}, {pipeline_mode = #tpu.pipeline_mode<synchronous>, transform_indices = @transform_5, window_bounds = array<i64: 1, 8>}, {pipeline_mode = #tpu.pipeline_mode<synchronous>, transform_indices = @transform_6, window_bounds = array<i64: 1, 8>}, {transform_indices = @transform_7, window_bounds = array<i64: 1, 18, 18, 8>}]} {
    %c0 = arith.constant 0 : index
    %c0_0 = arith.constant 0 : index
    %c0_1 = arith.constant 0 : index
    %c0_2 = arith.constant 0 : index
    %0 = vector.load %arg1[%c0, %c0_0, %c0_1, %c0_2] : memref<1x18x18x8xbf16, #tpu.memory_space<vmem>>, vector<1x18x18x8xbf16>
    %1 = vector.shape_cast %0 : vector<1x18x18x8xbf16> to vector<18x18x8xbf16>
    %2 = arith.extf %1 : vector<18x18x8xbf16> to vector<18x18x8xf32>
    %c0_3 = arith.constant 0 : index
    %c0_4 = arith.constant 0 : index
    %3 = vector.load %arg2[%c0_3, %c0_4] : memref<72x8xbf16, #tpu.memory_space<vmem>>, vector<72x8xbf16>
    %4 = vector.extract_strided_slice %2 {offsets = [0, 0, 0], sizes = [18, 16, 8], strides = [1, 1, 1]} : vector<18x18x8xf32> to vector<18x16x8xf32>
    %5 = vector.shape_cast %4 : vector<18x16x8xf32> to vector<288x8xf32>
    %6 = vector.extract_strided_slice %2 {offsets = [0, 1, 0], sizes = [18, 16, 8], strides = [1, 1, 1]} : vector<18x18x8xf32> to vector<18x16x8xf32>
    %7 = vector.shape_cast %6 : vector<18x16x8xf32> to vector<288x8xf32>
    %8 = vector.extract_strided_slice %2 {offsets = [0, 2, 0], sizes = [18, 16, 8], strides = [1, 1, 1]} : vector<18x18x8xf32> to vector<18x16x8xf32>
    %9 = vector.shape_cast %8 : vector<18x16x8xf32> to vector<288x8xf32>
    %10 = vector.extract_strided_slice %5 {offsets = [0, 0], sizes = [256, 8], strides = [1, 1]} : vector<288x8xf32> to vector<256x8xf32>
    %11 = vector.extract_strided_slice %7 {offsets = [0, 0], sizes = [256, 8], strides = [1, 1]} : vector<288x8xf32> to vector<256x8xf32>
    %12 = vector.extract_strided_slice %9 {offsets = [0, 0], sizes = [256, 8], strides = [1, 1]} : vector<288x8xf32> to vector<256x8xf32>
    %13 = vector.extract_strided_slice %5 {offsets = [16, 0], sizes = [256, 8], strides = [1, 1]} : vector<288x8xf32> to vector<256x8xf32>
    %14 = vector.extract_strided_slice %7 {offsets = [16, 0], sizes = [256, 8], strides = [1, 1]} : vector<288x8xf32> to vector<256x8xf32>
    %15 = vector.extract_strided_slice %9 {offsets = [16, 0], sizes = [256, 8], strides = [1, 1]} : vector<288x8xf32> to vector<256x8xf32>
    %16 = vector.extract_strided_slice %5 {offsets = [32, 0], sizes = [256, 8], strides = [1, 1]} : vector<288x8xf32> to vector<256x8xf32>
    %17 = vector.extract_strided_slice %7 {offsets = [32, 0], sizes = [256, 8], strides = [1, 1]} : vector<288x8xf32> to vector<256x8xf32>
    %18 = vector.extract_strided_slice %9 {offsets = [32, 0], sizes = [256, 8], strides = [1, 1]} : vector<288x8xf32> to vector<256x8xf32>
    %19 = tpu.concatenate %10, %11, %12, %13, %14, %15, %16, %17, %18 in 1 : vector<256x8xf32>, vector<256x8xf32>, vector<256x8xf32>, vector<256x8xf32>, vector<256x8xf32>, vector<256x8xf32>, vector<256x8xf32>, vector<256x8xf32>, vector<256x8xf32> -> vector<256x72xf32>
    %20 = arith.truncf %19 : vector<256x72xf32> to vector<256x72xbf16>
    %cst = arith.constant dense<0.000000e+00> : vector<256x8xf32>
    %21 = tpu.matmul %20, %3, %cst {dimension_numbers = #tpu.dot_dimension_numbers<[1], [0], [0], [1], [0, 0, 1, 1], [], []>} : vector<256x72xbf16>, vector<72x8xbf16>, vector<256x8xf32> -> vector<256x8xf32>
    %c0_5 = arith.constant 0 : index
    %c0_6 = arith.constant 0 : index
    %22 = vector.load %arg3[%c0_5, %c0_6] : memref<1x8xf32, #tpu.memory_space<vmem>>, vector<1x8xf32>
    %23 = vector.broadcast %22 : vector<1x8xf32> to vector<256x8xf32>
    %24 = arith.mulf %21, %23 : vector<256x8xf32>
    %c0_7 = arith.constant 0 : index
    %c0_8 = arith.constant 0 : index
    %25 = vector.load %arg4[%c0_7, %c0_8] : memref<1x8xf32, #tpu.memory_space<vmem>>, vector<1x8xf32>
    %26 = vector.broadcast %25 : vector<1x8xf32> to vector<256x8xf32>
    %27 = arith.addf %24, %26 : vector<256x8xf32>
    %cst_9 = arith.constant 0.000000e+00 : f32
    %28 = vector.broadcast %cst_9 : f32 to vector<256x8xf32>
    %29 = arith.maximumf %27, %28 : vector<256x8xf32>
    %cst_10 = arith.constant 0.000000e+00 : f32
    %cst_11 = arith.constant 1.000000e+00 : f32
    %30 = vector.broadcast %cst_10 : f32 to vector<256x8xf32>
    %31 = arith.maximumf %30, %29 : vector<256x8xf32>
    %32 = vector.broadcast %cst_11 : f32 to vector<256x8xf32>
    %33 = arith.minimumf %32, %31 : vector<256x8xf32>
    %cst_12 = arith.constant 2.550000e+02 : f32
    %34 = vector.broadcast %cst_12 : f32 to vector<256x8xf32>
    %35 = arith.mulf %33, %34 : vector<256x8xf32>
    %36 = math.roundeven %35 : vector<256x8xf32>
    %cst_13 = arith.constant 0.00392156886 : f32
    %37 = vector.broadcast %cst_13 : f32 to vector<256x8xf32>
    %38 = arith.mulf %36, %37 : vector<256x8xf32>
    %39 = vector.shape_cast %38 : vector<256x8xf32> to vector<16x16x8xf32>
    %cst_14 = arith.constant 0.000000e+00 : f32
    %40 = vector.broadcast %cst_14 : f32 to vector<16x1x8xf32>
    %41 = tpu.concatenate %40, %39, %40 in 1 : vector<16x1x8xf32>, vector<16x16x8xf32>, vector<16x1x8xf32> -> vector<16x18x8xf32>
    %cst_15 = arith.constant 0.000000e+00 : f32
    %42 = vector.broadcast %cst_15 : f32 to vector<1x18x8xf32>
    %43 = tpu.concatenate %42, %41, %42 in 0 : vector<1x18x8xf32>, vector<16x18x8xf32>, vector<1x18x8xf32> -> vector<18x18x8xf32>
    %c0_16 = arith.constant 0 : index
    %c0_17 = arith.constant 0 : index
    %44 = vector.load %arg5[%c0_16, %c0_17] : memref<72x8xbf16, #tpu.memory_space<vmem>>, vector<72x8xbf16>
    %45 = vector.extract_strided_slice %43 {offsets = [0, 0, 0], sizes = [18, 16, 8], strides = [1, 1, 1]} : vector<18x18x8xf32> to vector<18x16x8xf32>
    %46 = vector.shape_cast %45 : vector<18x16x8xf32> to vector<288x8xf32>
    %47 = vector.extract_strided_slice %43 {offsets = [0, 1, 0], sizes = [18, 16, 8], strides = [1, 1, 1]} : vector<18x18x8xf32> to vector<18x16x8xf32>
    %48 = vector.shape_cast %47 : vector<18x16x8xf32> to vector<288x8xf32>
    %49 = vector.extract_strided_slice %43 {offsets = [0, 2, 0], sizes = [18, 16, 8], strides = [1, 1, 1]} : vector<18x18x8xf32> to vector<18x16x8xf32>
    %50 = vector.shape_cast %49 : vector<18x16x8xf32> to vector<288x8xf32>
    %51 = vector.extract_strided_slice %46 {offsets = [0, 0], sizes = [256, 8], strides = [1, 1]} : vector<288x8xf32> to vector<256x8xf32>
    %52 = vector.extract_strided_slice %48 {offsets = [0, 0], sizes = [256, 8], strides = [1, 1]} : vector<288x8xf32> to vector<256x8xf32>
    %53 = vector.extract_strided_slice %50 {offsets = [0, 0], sizes = [256, 8], strides = [1, 1]} : vector<288x8xf32> to vector<256x8xf32>
    %54 = vector.extract_strided_slice %46 {offsets = [16, 0], sizes = [256, 8], strides = [1, 1]} : vector<288x8xf32> to vector<256x8xf32>
    %55 = vector.extract_strided_slice %48 {offsets = [16, 0], sizes = [256, 8], strides = [1, 1]} : vector<288x8xf32> to vector<256x8xf32>
    %56 = vector.extract_strided_slice %50 {offsets = [16, 0], sizes = [256, 8], strides = [1, 1]} : vector<288x8xf32> to vector<256x8xf32>
    %57 = vector.extract_strided_slice %46 {offsets = [32, 0], sizes = [256, 8], strides = [1, 1]} : vector<288x8xf32> to vector<256x8xf32>
    %58 = vector.extract_strided_slice %48 {offsets = [32, 0], sizes = [256, 8], strides = [1, 1]} : vector<288x8xf32> to vector<256x8xf32>
    %59 = vector.extract_strided_slice %50 {offsets = [32, 0], sizes = [256, 8], strides = [1, 1]} : vector<288x8xf32> to vector<256x8xf32>
    %60 = tpu.concatenate %51, %52, %53, %54, %55, %56, %57, %58, %59 in 1 : vector<256x8xf32>, vector<256x8xf32>, vector<256x8xf32>, vector<256x8xf32>, vector<256x8xf32>, vector<256x8xf32>, vector<256x8xf32>, vector<256x8xf32>, vector<256x8xf32> -> vector<256x72xf32>
    %61 = arith.truncf %60 : vector<256x72xf32> to vector<256x72xbf16>
    %cst_18 = arith.constant dense<0.000000e+00> : vector<256x8xf32>
    %62 = tpu.matmul %61, %44, %cst_18 {dimension_numbers = #tpu.dot_dimension_numbers<[1], [0], [0], [1], [0, 0, 1, 1], [], []>} : vector<256x72xbf16>, vector<72x8xbf16>, vector<256x8xf32> -> vector<256x8xf32>
    %c0_19 = arith.constant 0 : index
    %c0_20 = arith.constant 0 : index
    %63 = vector.load %arg6[%c0_19, %c0_20] : memref<1x8xf32, #tpu.memory_space<vmem>>, vector<1x8xf32>
    %64 = vector.broadcast %63 : vector<1x8xf32> to vector<256x8xf32>
    %65 = arith.mulf %62, %64 : vector<256x8xf32>
    %c0_21 = arith.constant 0 : index
    %c0_22 = arith.constant 0 : index
    %66 = vector.load %arg7[%c0_21, %c0_22] : memref<1x8xf32, #tpu.memory_space<vmem>>, vector<1x8xf32>
    %67 = vector.broadcast %66 : vector<1x8xf32> to vector<256x8xf32>
    %68 = arith.addf %65, %67 : vector<256x8xf32>
    %69 = vector.extract_strided_slice %2 {offsets = [1, 1, 0], sizes = [16, 16, 8], strides = [1, 1, 1]} : vector<18x18x8xf32> to vector<16x16x8xf32>
    %70 = vector.shape_cast %69 : vector<16x16x8xf32> to vector<256x8xf32>
    %71 = arith.addf %68, %70 : vector<256x8xf32>
    %cst_23 = arith.constant 0.000000e+00 : f32
    %cst_24 = arith.constant 1.000000e+00 : f32
    %72 = vector.broadcast %cst_23 : f32 to vector<256x8xf32>
    %73 = arith.maximumf %72, %71 : vector<256x8xf32>
    %74 = vector.broadcast %cst_24 : f32 to vector<256x8xf32>
    %75 = arith.minimumf %74, %73 : vector<256x8xf32>
    %cst_25 = arith.constant 2.550000e+02 : f32
    %76 = vector.broadcast %cst_25 : f32 to vector<256x8xf32>
    %77 = arith.mulf %75, %76 : vector<256x8xf32>
    %78 = math.roundeven %77 : vector<256x8xf32>
    %cst_26 = arith.constant 0.00392156886 : f32
    %79 = vector.broadcast %cst_26 : f32 to vector<256x8xf32>
    %80 = arith.mulf %78, %79 : vector<256x8xf32>
    %81 = vector.shape_cast %80 : vector<256x8xf32> to vector<16x16x8xf32>
    %cst_27 = arith.constant 0.000000e+00 : f32
    %82 = vector.broadcast %cst_27 : f32 to vector<16x1x8xf32>
    %83 = tpu.concatenate %82, %81, %82 in 1 : vector<16x1x8xf32>, vector<16x16x8xf32>, vector<16x1x8xf32> -> vector<16x18x8xf32>
    %cst_28 = arith.constant 0.000000e+00 : f32
    %84 = vector.broadcast %cst_28 : f32 to vector<1x18x8xf32>
    %85 = tpu.concatenate %84, %83, %84 in 0 : vector<1x18x8xf32>, vector<16x18x8xf32>, vector<1x18x8xf32> -> vector<18x18x8xf32>
    %86 = arith.truncf %85 : vector<18x18x8xf32> to vector<18x18x8xbf16>
    %87 = vector.shape_cast %86 : vector<18x18x8xbf16> to vector<1x18x18x8xbf16>
    %c0_29 = arith.constant 0 : index
    %c0_30 = arith.constant 0 : index
    %c0_31 = arith.constant 0 : index
    %c0_32 = arith.constant 0 : index
    %88 = vector.load %arg8[%c0_29, %c0_30, %c0_31, %c0_32] : memref<1x18x18x8xbf16, #tpu.memory_space<vmem>>, vector<1x18x18x8xbf16>
    tpu.vector_store %arg8[%c0_29, %c0_30, %c0_31, %c0_32], %87 {strides = array<i32>} : memref<1x18x18x8xbf16, #tpu.memory_space<vmem>>, vector<1x18x18x8xbf16>,
    return
  }
  func.func @transform_0(%arg0: i32) -> (i32, i32, i32, i32) {
    %c0_i32 = arith.constant 0 : i32
    %c0_i32_0 = arith.constant 0 : i32
    %c0_i32_1 = arith.constant 0 : i32
    %c0_i32_2 = arith.constant 0 : i32
    return %arg0, %c0_i32, %c0_i32_0, %c0_i32_1 : i32, i32, i32, i32
  }
  func.func @transform_1(%arg0: i32) -> (i32, i32) {
    %c0_i32 = arith.constant 0 : i32
    %c0_i32_0 = arith.constant 0 : i32
    %c0_i32_1 = arith.constant 0 : i32
    return %c0_i32, %c0_i32_0 : i32, i32
  }
  func.func @transform_2(%arg0: i32) -> (i32, i32) {
    %c0_i32 = arith.constant 0 : i32
    %c0_i32_0 = arith.constant 0 : i32
    %c0_i32_1 = arith.constant 0 : i32
    return %c0_i32, %c0_i32_0 : i32, i32
  }
  func.func @transform_3(%arg0: i32) -> (i32, i32) {
    %c0_i32 = arith.constant 0 : i32
    %c0_i32_0 = arith.constant 0 : i32
    %c0_i32_1 = arith.constant 0 : i32
    return %c0_i32, %c0_i32_0 : i32, i32
  }
  func.func @transform_4(%arg0: i32) -> (i32, i32) {
    %c0_i32 = arith.constant 0 : i32
    %c0_i32_0 = arith.constant 0 : i32
    %c0_i32_1 = arith.constant 0 : i32
    return %c0_i32, %c0_i32_0 : i32, i32
  }
  func.func @transform_5(%arg0: i32) -> (i32, i32) {
    %c0_i32 = arith.constant 0 : i32
    %c0_i32_0 = arith.constant 0 : i32
    %c0_i32_1 = arith.constant 0 : i32
    return %c0_i32, %c0_i32_0 : i32, i32
  }
  func.func @transform_6(%arg0: i32) -> (i32, i32) {
    %c0_i32 = arith.constant 0 : i32
    %c0_i32_0 = arith.constant 0 : i32
    %c0_i32_1 = arith.constant 0 : i32
    return %c0_i32, %c0_i32_0 : i32, i32
  }
  func.func @transform_7(%arg0: i32) -> (i32, i32, i32, i32) {
    %c0_i32 = arith.constant 0 : i32
    %c0_i32_0 = arith.constant 0 : i32
    %c0_i32_1 = arith.constant 0 : i32
    %c0_i32_2 = arith.constant 0 : i32
    return %arg0, %c0_i32, %c0_i32_0, %c0_i32_1 : i32, i32, i32, i32
  }
}

module attributes {stable_mosaic.version = 11 : i64} {
  func.func @kernel(%arg0: i32, %arg1: memref<1x4x9x9x8xbf16, #tpu.memory_space<vmem>>, %arg2: memref<72x16xbf16, #tpu.memory_space<vmem>>, %arg3: memref<1x16xf32, #tpu.memory_space<vmem>>, %arg4: memref<1x16xf32, #tpu.memory_space<vmem>>, %arg5: memref<144x16xbf16, #tpu.memory_space<vmem>>, %arg6: memref<1x16xf32, #tpu.memory_space<vmem>>, %arg7: memref<1x16xf32, #tpu.memory_space<vmem>>, %arg8: memref<8x16xbf16, #tpu.memory_space<vmem>>, %arg9: memref<1x16xf32, #tpu.memory_space<vmem>>, %arg10: memref<1x16xf32, #tpu.memory_space<vmem>>, %arg11: memref<1x10x10x16xbf16, #tpu.memory_space<vmem>>) attributes {dimension_semantics = [#tpu.dimension_semantics<parallel>], iteration_bounds = array<i64: 2>, scalar_prefetch = 0 : i64, scratch_operands = 0 : i64, tpu.core_type = #tpu.core_type<tc>, window_params = [{transform_indices = @transform_0, window_bounds = array<i64: 1, 4, 9, 9, 8>}, {pipeline_mode = #tpu.pipeline_mode<synchronous>, transform_indices = @transform_1, window_bounds = array<i64: 72, 16>}, {pipeline_mode = #tpu.pipeline_mode<synchronous>, transform_indices = @transform_2, window_bounds = array<i64: 1, 16>}, {pipeline_mode = #tpu.pipeline_mode<synchronous>, transform_indices = @transform_3, window_bounds = array<i64: 1, 16>}, {pipeline_mode = #tpu.pipeline_mode<synchronous>, transform_indices = @transform_4, window_bounds = array<i64: 144, 16>}, {pipeline_mode = #tpu.pipeline_mode<synchronous>, transform_indices = @transform_5, window_bounds = array<i64: 1, 16>}, {pipeline_mode = #tpu.pipeline_mode<synchronous>, transform_indices = @transform_6, window_bounds = array<i64: 1, 16>}, {pipeline_mode = #tpu.pipeline_mode<synchronous>, transform_indices = @transform_7, window_bounds = array<i64: 8, 16>}, {pipeline_mode = #tpu.pipeline_mode<synchronous>, transform_indices = @transform_8, window_bounds = array<i64: 1, 16>}, {pipeline_mode = #tpu.pipeline_mode<synchronous>, transform_indices = @transform_9, window_bounds = array<i64: 1, 16>}, {transform_indices = @transform_10, window_bounds = array<i64: 1, 10, 10, 16>}]} {
    %c0 = arith.constant 0 : index
    %c0_0 = arith.constant 0 : index
    %c0_1 = arith.constant 0 : index
    %c0_2 = arith.constant 0 : index
    %c0_3 = arith.constant 0 : index
    %0 = vector.load %arg1[%c0, %c0_0, %c0_1, %c0_2, %c0_3] : memref<1x4x9x9x8xbf16, #tpu.memory_space<vmem>>, vector<1x4x9x9x8xbf16>
    %1 = vector.shape_cast %0 : vector<1x4x9x9x8xbf16> to vector<4x9x9x8xbf16>
    %2 = arith.extf %1 : vector<4x9x9x8xbf16> to vector<4x9x9x8xf32>
    %c0_4 = arith.constant 0 : index
    %c0_5 = arith.constant 0 : index
    %3 = vector.load %arg2[%c0_4, %c0_5] : memref<72x16xbf16, #tpu.memory_space<vmem>>, vector<72x16xbf16>
    %4 = vector.extract_strided_slice %2 {offsets = [0, 0, 0, 0], sizes = [1, 8, 8, 8], strides = [1, 1, 1, 1]} : vector<4x9x9x8xf32> to vector<1x8x8x8xf32>
    %5 = vector.shape_cast %4 : vector<1x8x8x8xf32> to vector<8x8x8xf32>
    %6 = vector.shape_cast %5 : vector<8x8x8xf32> to vector<64x8xf32>
    %7 = vector.extract_strided_slice %2 {offsets = [1, 0, 0, 0], sizes = [1, 8, 8, 8], strides = [1, 1, 1, 1]} : vector<4x9x9x8xf32> to vector<1x8x8x8xf32>
    %8 = vector.shape_cast %7 : vector<1x8x8x8xf32> to vector<8x8x8xf32>
    %9 = vector.shape_cast %8 : vector<8x8x8xf32> to vector<64x8xf32>
    %10 = vector.extract_strided_slice %2 {offsets = [0, 0, 1, 0], sizes = [1, 8, 8, 8], strides = [1, 1, 1, 1]} : vector<4x9x9x8xf32> to vector<1x8x8x8xf32>
    %11 = vector.shape_cast %10 : vector<1x8x8x8xf32> to vector<8x8x8xf32>
    %12 = vector.shape_cast %11 : vector<8x8x8xf32> to vector<64x8xf32>
    %13 = vector.extract_strided_slice %2 {offsets = [2, 0, 0, 0], sizes = [1, 8, 8, 8], strides = [1, 1, 1, 1]} : vector<4x9x9x8xf32> to vector<1x8x8x8xf32>
    %14 = vector.shape_cast %13 : vector<1x8x8x8xf32> to vector<8x8x8xf32>
    %15 = vector.shape_cast %14 : vector<8x8x8xf32> to vector<64x8xf32>
    %16 = vector.extract_strided_slice %2 {offsets = [3, 0, 0, 0], sizes = [1, 8, 8, 8], strides = [1, 1, 1, 1]} : vector<4x9x9x8xf32> to vector<1x8x8x8xf32>
    %17 = vector.shape_cast %16 : vector<1x8x8x8xf32> to vector<8x8x8xf32>
    %18 = vector.shape_cast %17 : vector<8x8x8xf32> to vector<64x8xf32>
    %19 = vector.extract_strided_slice %2 {offsets = [2, 0, 1, 0], sizes = [1, 8, 8, 8], strides = [1, 1, 1, 1]} : vector<4x9x9x8xf32> to vector<1x8x8x8xf32>
    %20 = vector.shape_cast %19 : vector<1x8x8x8xf32> to vector<8x8x8xf32>
    %21 = vector.shape_cast %20 : vector<8x8x8xf32> to vector<64x8xf32>
    %22 = vector.extract_strided_slice %2 {offsets = [0, 1, 0, 0], sizes = [1, 8, 8, 8], strides = [1, 1, 1, 1]} : vector<4x9x9x8xf32> to vector<1x8x8x8xf32>
    %23 = vector.shape_cast %22 : vector<1x8x8x8xf32> to vector<8x8x8xf32>
    %24 = vector.shape_cast %23 : vector<8x8x8xf32> to vector<64x8xf32>
    %25 = vector.extract_strided_slice %2 {offsets = [1, 1, 0, 0], sizes = [1, 8, 8, 8], strides = [1, 1, 1, 1]} : vector<4x9x9x8xf32> to vector<1x8x8x8xf32>
    %26 = vector.shape_cast %25 : vector<1x8x8x8xf32> to vector<8x8x8xf32>
    %27 = vector.shape_cast %26 : vector<8x8x8xf32> to vector<64x8xf32>
    %28 = vector.extract_strided_slice %2 {offsets = [0, 1, 1, 0], sizes = [1, 8, 8, 8], strides = [1, 1, 1, 1]} : vector<4x9x9x8xf32> to vector<1x8x8x8xf32>
    %29 = vector.shape_cast %28 : vector<1x8x8x8xf32> to vector<8x8x8xf32>
    %30 = vector.shape_cast %29 : vector<8x8x8xf32> to vector<64x8xf32>
    %31 = tpu.concatenate %6, %9, %12, %15, %18, %21, %24, %27, %30 in 1 : vector<64x8xf32>, vector<64x8xf32>, vector<64x8xf32>, vector<64x8xf32>, vector<64x8xf32>, vector<64x8xf32>, vector<64x8xf32>, vector<64x8xf32>, vector<64x8xf32> -> vector<64x72xf32>
    %32 = arith.truncf %31 : vector<64x72xf32> to vector<64x72xbf16>
    %cst = arith.constant dense<0.000000e+00> : vector<64x16xf32>
    %33 = tpu.matmul %32, %3, %cst {dimension_numbers = #tpu.dot_dimension_numbers<[1], [0], [0], [1], [0, 0, 1, 1], [], []>} : vector<64x72xbf16>, vector<72x16xbf16>, vector<64x16xf32> -> vector<64x16xf32>
    %c0_6 = arith.constant 0 : index
    %c0_7 = arith.constant 0 : index
    %34 = vector.load %arg3[%c0_6, %c0_7] : memref<1x16xf32, #tpu.memory_space<vmem>>, vector<1x16xf32>
    %35 = vector.broadcast %34 : vector<1x16xf32> to vector<64x16xf32>
    %36 = arith.mulf %33, %35 : vector<64x16xf32>
    %c0_8 = arith.constant 0 : index
    %c0_9 = arith.constant 0 : index
    %37 = vector.load %arg4[%c0_8, %c0_9] : memref<1x16xf32, #tpu.memory_space<vmem>>, vector<1x16xf32>
    %38 = vector.broadcast %37 : vector<1x16xf32> to vector<64x16xf32>
    %39 = arith.addf %36, %38 : vector<64x16xf32>
    %cst_10 = arith.constant 0.000000e+00 : f32
    %40 = vector.broadcast %cst_10 : f32 to vector<64x16xf32>
    %41 = arith.maximumf %39, %40 : vector<64x16xf32>
    %cst_11 = arith.constant 0.000000e+00 : f32
    %cst_12 = arith.constant 1.000000e+00 : f32
    %42 = vector.broadcast %cst_11 : f32 to vector<64x16xf32>
    %43 = arith.maximumf %42, %41 : vector<64x16xf32>
    %44 = vector.broadcast %cst_12 : f32 to vector<64x16xf32>
    %45 = arith.minimumf %44, %43 : vector<64x16xf32>
    %cst_13 = arith.constant 2.550000e+02 : f32
    %46 = vector.broadcast %cst_13 : f32 to vector<64x16xf32>
    %47 = arith.mulf %45, %46 : vector<64x16xf32>
    %48 = math.roundeven %47 : vector<64x16xf32>
    %cst_14 = arith.constant 0.00392156886 : f32
    %49 = vector.broadcast %cst_14 : f32 to vector<64x16xf32>
    %50 = arith.mulf %48, %49 : vector<64x16xf32>
    %51 = vector.shape_cast %50 : vector<64x16xf32> to vector<8x8x16xf32>
    %cst_15 = arith.constant 0.000000e+00 : f32
    %52 = vector.broadcast %cst_15 : f32 to vector<8x1x16xf32>
    %53 = tpu.concatenate %52, %51, %52 in 1 : vector<8x1x16xf32>, vector<8x8x16xf32>, vector<8x1x16xf32> -> vector<8x10x16xf32>
    %cst_16 = arith.constant 0.000000e+00 : f32
    %54 = vector.broadcast %cst_16 : f32 to vector<1x10x16xf32>
    %55 = tpu.concatenate %54, %53, %54 in 0 : vector<1x10x16xf32>, vector<8x10x16xf32>, vector<1x10x16xf32> -> vector<10x10x16xf32>
    %c0_17 = arith.constant 0 : index
    %c0_18 = arith.constant 0 : index
    %56 = vector.load %arg5[%c0_17, %c0_18] : memref<144x16xbf16, #tpu.memory_space<vmem>>, vector<144x16xbf16>
    %57 = vector.extract_strided_slice %55 {offsets = [0, 0, 0], sizes = [10, 8, 16], strides = [1, 1, 1]} : vector<10x10x16xf32> to vector<10x8x16xf32>
    %58 = vector.shape_cast %57 : vector<10x8x16xf32> to vector<80x16xf32>
    %59 = vector.extract_strided_slice %55 {offsets = [0, 1, 0], sizes = [10, 8, 16], strides = [1, 1, 1]} : vector<10x10x16xf32> to vector<10x8x16xf32>
    %60 = vector.shape_cast %59 : vector<10x8x16xf32> to vector<80x16xf32>
    %61 = vector.extract_strided_slice %55 {offsets = [0, 2, 0], sizes = [10, 8, 16], strides = [1, 1, 1]} : vector<10x10x16xf32> to vector<10x8x16xf32>
    %62 = vector.shape_cast %61 : vector<10x8x16xf32> to vector<80x16xf32>
    %63 = vector.extract_strided_slice %58 {offsets = [0, 0], sizes = [64, 16], strides = [1, 1]} : vector<80x16xf32> to vector<64x16xf32>
    %64 = vector.extract_strided_slice %60 {offsets = [0, 0], sizes = [64, 16], strides = [1, 1]} : vector<80x16xf32> to vector<64x16xf32>
    %65 = vector.extract_strided_slice %62 {offsets = [0, 0], sizes = [64, 16], strides = [1, 1]} : vector<80x16xf32> to vector<64x16xf32>
    %66 = vector.extract_strided_slice %58 {offsets = [8, 0], sizes = [64, 16], strides = [1, 1]} : vector<80x16xf32> to vector<64x16xf32>
    %67 = vector.extract_strided_slice %60 {offsets = [8, 0], sizes = [64, 16], strides = [1, 1]} : vector<80x16xf32> to vector<64x16xf32>
    %68 = vector.extract_strided_slice %62 {offsets = [8, 0], sizes = [64, 16], strides = [1, 1]} : vector<80x16xf32> to vector<64x16xf32>
    %69 = vector.extract_strided_slice %58 {offsets = [16, 0], sizes = [64, 16], strides = [1, 1]} : vector<80x16xf32> to vector<64x16xf32>
    %70 = vector.extract_strided_slice %60 {offsets = [16, 0], sizes = [64, 16], strides = [1, 1]} : vector<80x16xf32> to vector<64x16xf32>
    %71 = vector.extract_strided_slice %62 {offsets = [16, 0], sizes = [64, 16], strides = [1, 1]} : vector<80x16xf32> to vector<64x16xf32>
    %72 = tpu.concatenate %63, %64, %65, %66, %67, %68, %69, %70, %71 in 1 : vector<64x16xf32>, vector<64x16xf32>, vector<64x16xf32>, vector<64x16xf32>, vector<64x16xf32>, vector<64x16xf32>, vector<64x16xf32>, vector<64x16xf32>, vector<64x16xf32> -> vector<64x144xf32>
    %73 = arith.truncf %72 : vector<64x144xf32> to vector<64x144xbf16>
    %cst_19 = arith.constant dense<0.000000e+00> : vector<64x16xf32>
    %74 = tpu.matmul %73, %56, %cst_19 {dimension_numbers = #tpu.dot_dimension_numbers<[1], [0], [0], [1], [0, 0, 1, 1], [], []>} : vector<64x144xbf16>, vector<144x16xbf16>, vector<64x16xf32> -> vector<64x16xf32>
    %c0_20 = arith.constant 0 : index
    %c0_21 = arith.constant 0 : index
    %75 = vector.load %arg6[%c0_20, %c0_21] : memref<1x16xf32, #tpu.memory_space<vmem>>, vector<1x16xf32>
    %76 = vector.broadcast %75 : vector<1x16xf32> to vector<64x16xf32>
    %77 = arith.mulf %74, %76 : vector<64x16xf32>
    %c0_22 = arith.constant 0 : index
    %c0_23 = arith.constant 0 : index
    %78 = vector.load %arg7[%c0_22, %c0_23] : memref<1x16xf32, #tpu.memory_space<vmem>>, vector<1x16xf32>
    %79 = vector.broadcast %78 : vector<1x16xf32> to vector<64x16xf32>
    %80 = arith.addf %77, %79 : vector<64x16xf32>
    %81 = vector.extract_strided_slice %2 {offsets = [3, 0, 0, 0], sizes = [1, 8, 8, 8], strides = [1, 1, 1, 1]} : vector<4x9x9x8xf32> to vector<1x8x8x8xf32>
    %82 = vector.shape_cast %81 : vector<1x8x8x8xf32> to vector<8x8x8xf32>
    %83 = vector.shape_cast %82 : vector<8x8x8xf32> to vector<64x8xf32>
    %84 = arith.truncf %83 : vector<64x8xf32> to vector<64x8xbf16>
    %c0_24 = arith.constant 0 : index
    %c0_25 = arith.constant 0 : index
    %85 = vector.load %arg8[%c0_24, %c0_25] : memref<8x16xbf16, #tpu.memory_space<vmem>>, vector<8x16xbf16>
    %cst_26 = arith.constant dense<0.000000e+00> : vector<64x16xf32>
    %86 = tpu.matmul %84, %85, %cst_26 {dimension_numbers = #tpu.dot_dimension_numbers<[1], [0], [0], [1], [0, 0, 1, 1], [], []>} : vector<64x8xbf16>, vector<8x16xbf16>, vector<64x16xf32> -> vector<64x16xf32>
    %c0_27 = arith.constant 0 : index
    %c0_28 = arith.constant 0 : index
    %87 = vector.load %arg9[%c0_27, %c0_28] : memref<1x16xf32, #tpu.memory_space<vmem>>, vector<1x16xf32>
    %88 = vector.broadcast %87 : vector<1x16xf32> to vector<64x16xf32>
    %89 = arith.mulf %86, %88 : vector<64x16xf32>
    %c0_29 = arith.constant 0 : index
    %c0_30 = arith.constant 0 : index
    %90 = vector.load %arg10[%c0_29, %c0_30] : memref<1x16xf32, #tpu.memory_space<vmem>>, vector<1x16xf32>
    %91 = vector.broadcast %90 : vector<1x16xf32> to vector<64x16xf32>
    %92 = arith.addf %89, %91 : vector<64x16xf32>
    %cst_31 = arith.constant 0.000000e+00 : f32
    %cst_32 = arith.constant 1.000000e+00 : f32
    %93 = vector.broadcast %cst_31 : f32 to vector<64x16xf32>
    %94 = arith.maximumf %93, %92 : vector<64x16xf32>
    %95 = vector.broadcast %cst_32 : f32 to vector<64x16xf32>
    %96 = arith.minimumf %95, %94 : vector<64x16xf32>
    %cst_33 = arith.constant 2.550000e+02 : f32
    %97 = vector.broadcast %cst_33 : f32 to vector<64x16xf32>
    %98 = arith.mulf %96, %97 : vector<64x16xf32>
    %99 = math.roundeven %98 : vector<64x16xf32>
    %cst_34 = arith.constant 0.00392156886 : f32
    %100 = vector.broadcast %cst_34 : f32 to vector<64x16xf32>
    %101 = arith.mulf %99, %100 : vector<64x16xf32>
    %102 = arith.addf %80, %101 : vector<64x16xf32>
    %cst_35 = arith.constant 0.000000e+00 : f32
    %cst_36 = arith.constant 1.000000e+00 : f32
    %103 = vector.broadcast %cst_35 : f32 to vector<64x16xf32>
    %104 = arith.maximumf %103, %102 : vector<64x16xf32>
    %105 = vector.broadcast %cst_36 : f32 to vector<64x16xf32>
    %106 = arith.minimumf %105, %104 : vector<64x16xf32>
    %cst_37 = arith.constant 2.550000e+02 : f32
    %107 = vector.broadcast %cst_37 : f32 to vector<64x16xf32>
    %108 = arith.mulf %106, %107 : vector<64x16xf32>
    %109 = math.roundeven %108 : vector<64x16xf32>
    %cst_38 = arith.constant 0.00392156886 : f32
    %110 = vector.broadcast %cst_38 : f32 to vector<64x16xf32>
    %111 = arith.mulf %109, %110 : vector<64x16xf32>
    %112 = vector.shape_cast %111 : vector<64x16xf32> to vector<8x8x16xf32>
    %cst_39 = arith.constant 0.000000e+00 : f32
    %113 = vector.broadcast %cst_39 : f32 to vector<8x1x16xf32>
    %114 = tpu.concatenate %113, %112, %113 in 1 : vector<8x1x16xf32>, vector<8x8x16xf32>, vector<8x1x16xf32> -> vector<8x10x16xf32>
    %cst_40 = arith.constant 0.000000e+00 : f32
    %115 = vector.broadcast %cst_40 : f32 to vector<1x10x16xf32>
    %116 = tpu.concatenate %115, %114, %115 in 0 : vector<1x10x16xf32>, vector<8x10x16xf32>, vector<1x10x16xf32> -> vector<10x10x16xf32>
    %117 = arith.truncf %116 : vector<10x10x16xf32> to vector<10x10x16xbf16>
    %118 = vector.shape_cast %117 : vector<10x10x16xbf16> to vector<1x10x10x16xbf16>
    %c0_41 = arith.constant 0 : index
    %c0_42 = arith.constant 0 : index
    %c0_43 = arith.constant 0 : index
    %c0_44 = arith.constant 0 : index
    %119 = vector.load %arg11[%c0_41, %c0_42, %c0_43, %c0_44] : memref<1x10x10x16xbf16, #tpu.memory_space<vmem>>, vector<1x10x10x16xbf16>
    tpu.vector_store %arg11[%c0_41, %c0_42, %c0_43, %c0_44], %118 {strides = array<i32>} : memref<1x10x10x16xbf16, #tpu.memory_space<vmem>>, vector<1x10x10x16xbf16>,
    return
  }
  func.func @transform_0(%arg0: i32) -> (i32, i32, i32, i32, i32) {
    %c0_i32 = arith.constant 0 : i32
    %c0_i32_0 = arith.constant 0 : i32
    %c0_i32_1 = arith.constant 0 : i32
    %c0_i32_2 = arith.constant 0 : i32
    %c0_i32_3 = arith.constant 0 : i32
    return %arg0, %c0_i32, %c0_i32_0, %c0_i32_1, %c0_i32_2 : i32, i32, i32, i32, i32
  }
  func.func @transform_1(%arg0: i32) -> (i32, i32) {
    %c0_i32 = arith.constant 0 : i32
    %c0_i32_0 = arith.constant 0 : i32
    %c0_i32_1 = arith.constant 0 : i32
    return %c0_i32, %c0_i32_0 : i32, i32
  }
  func.func @transform_2(%arg0: i32) -> (i32, i32) {
    %c0_i32 = arith.constant 0 : i32
    %c0_i32_0 = arith.constant 0 : i32
    %c0_i32_1 = arith.constant 0 : i32
    return %c0_i32, %c0_i32_0 : i32, i32
  }
  func.func @transform_3(%arg0: i32) -> (i32, i32) {
    %c0_i32 = arith.constant 0 : i32
    %c0_i32_0 = arith.constant 0 : i32
    %c0_i32_1 = arith.constant 0 : i32
    return %c0_i32, %c0_i32_0 : i32, i32
  }
  func.func @transform_4(%arg0: i32) -> (i32, i32) {
    %c0_i32 = arith.constant 0 : i32
    %c0_i32_0 = arith.constant 0 : i32
    %c0_i32_1 = arith.constant 0 : i32
    return %c0_i32, %c0_i32_0 : i32, i32
  }
  func.func @transform_5(%arg0: i32) -> (i32, i32) {
    %c0_i32 = arith.constant 0 : i32
    %c0_i32_0 = arith.constant 0 : i32
    %c0_i32_1 = arith.constant 0 : i32
    return %c0_i32, %c0_i32_0 : i32, i32
  }
  func.func @transform_6(%arg0: i32) -> (i32, i32) {
    %c0_i32 = arith.constant 0 : i32
    %c0_i32_0 = arith.constant 0 : i32
    %c0_i32_1 = arith.constant 0 : i32
    return %c0_i32, %c0_i32_0 : i32, i32
  }
  func.func @transform_7(%arg0: i32) -> (i32, i32) {
    %c0_i32 = arith.constant 0 : i32
    %c0_i32_0 = arith.constant 0 : i32
    %c0_i32_1 = arith.constant 0 : i32
    return %c0_i32, %c0_i32_0 : i32, i32
  }
  func.func @transform_8(%arg0: i32) -> (i32, i32) {
    %c0_i32 = arith.constant 0 : i32
    %c0_i32_0 = arith.constant 0 : i32
    %c0_i32_1 = arith.constant 0 : i32
    return %c0_i32, %c0_i32_0 : i32, i32
  }
  func.func @transform_9(%arg0: i32) -> (i32, i32) {
    %c0_i32 = arith.constant 0 : i32
    %c0_i32_0 = arith.constant 0 : i32
    %c0_i32_1 = arith.constant 0 : i32
    return %c0_i32, %c0_i32_0 : i32, i32
  }
  func.func @transform_10(%arg0: i32) -> (i32, i32, i32, i32) {
    %c0_i32 = arith.constant 0 : i32
    %c0_i32_0 = arith.constant 0 : i32
    %c0_i32_1 = arith.constant 0 : i32
    %c0_i32_2 = arith.constant 0 : i32
    return %arg0, %c0_i32, %c0_i32_0, %c0_i32_1 : i32, i32, i32, i32
  }
}

module attributes {stable_mosaic.version = 11 : i64} {
  func.func @kernel(%arg0: memref<2x10x10x16xbf16, #tpu.memory_space<vmem>>, %arg1: memref<16x10xbf16, #tpu.memory_space<vmem>>, %arg2: memref<1x10xf32, #tpu.memory_space<vmem>>, %arg3: memref<2x10xf32, #tpu.memory_space<vmem>>) attributes {dimension_semantics = [], scalar_prefetch = 0 : i64, scratch_operands = 0 : i64, tpu.core_type = #tpu.core_type<tc>} {
    %c0 = arith.constant 0 : index
    %c0_0 = arith.constant 0 : index
    %c0_1 = arith.constant 0 : index
    %c0_2 = arith.constant 0 : index
    %0 = vector.load %arg0[%c0, %c0_0, %c0_1, %c0_2] : memref<2x10x10x16xbf16, #tpu.memory_space<vmem>>, vector<2x10x10x16xbf16>
    %1 = arith.extf %0 : vector<2x10x10x16xbf16> to vector<2x10x10x16xf32>
    %cst = arith.constant dense<0.000000e+00> : vector<2x16xf32>
    %2 = vector.multi_reduction <add>, %1, %cst [1, 2] : vector<2x10x10x16xf32> to vector<2x16xf32>
    %cst_3 = arith.constant 1.562500e-02 : f32
    %3 = vector.broadcast %cst_3 : f32 to vector<2x16xf32>
    %4 = arith.mulf %2, %3 : vector<2x16xf32>
    %cst_4 = arith.constant 0.000000e+00 : f32
    %cst_5 = arith.constant 1.000000e+00 : f32
    %5 = vector.broadcast %cst_4 : f32 to vector<2x16xf32>
    %6 = arith.maximumf %5, %4 : vector<2x16xf32>
    %7 = vector.broadcast %cst_5 : f32 to vector<2x16xf32>
    %8 = arith.minimumf %7, %6 : vector<2x16xf32>
    %cst_6 = arith.constant 2.550000e+02 : f32
    %9 = vector.broadcast %cst_6 : f32 to vector<2x16xf32>
    %10 = arith.mulf %8, %9 : vector<2x16xf32>
    %11 = math.roundeven %10 : vector<2x16xf32>
    %cst_7 = arith.constant 0.00392156886 : f32
    %12 = vector.broadcast %cst_7 : f32 to vector<2x16xf32>
    %13 = arith.mulf %11, %12 : vector<2x16xf32>
    %14 = arith.truncf %13 : vector<2x16xf32> to vector<2x16xbf16>
    %c0_8 = arith.constant 0 : index
    %c0_9 = arith.constant 0 : index
    %15 = vector.load %arg1[%c0_8, %c0_9] : memref<16x10xbf16, #tpu.memory_space<vmem>>, vector<16x10xbf16>
    %cst_10 = arith.constant dense<0.000000e+00> : vector<2x10xf32>
    %16 = tpu.matmul %14, %15, %cst_10 {dimension_numbers = #tpu.dot_dimension_numbers<[1], [0], [0], [1], [0, 0, 1, 1], [], []>} : vector<2x16xbf16>, vector<16x10xbf16>, vector<2x10xf32> -> vector<2x10xf32>
    %c0_11 = arith.constant 0 : index
    %c0_12 = arith.constant 0 : index
    %17 = vector.load %arg2[%c0_11, %c0_12] : memref<1x10xf32, #tpu.memory_space<vmem>>, vector<1x10xf32>
    %18 = vector.broadcast %17 : vector<1x10xf32> to vector<2x10xf32>
    %19 = arith.addf %16, %18 : vector<2x10xf32>
    %c0_13 = arith.constant 0 : index
    %c0_14 = arith.constant 0 : index
    %20 = vector.load %arg3[%c0_13, %c0_14] : memref<2x10xf32, #tpu.memory_space<vmem>>, vector<2x10xf32>
    tpu.vector_store %arg3[%c0_13, %c0_14], %19 {strides = array<i32>} : memref<2x10xf32, #tpu.memory_space<vmem>>, vector<2x10xf32>,
    return
  }
}

</mosaic_0001>

<llo_original>
// kernel: _lambda_.7
$region0: #{_lambda_.7}
  #allocation0 [shape = 'u32[]', space=smem, size = 0x4, offset = 0x4, fixed_abs, tag = 'smem constant byte address 0x4 - core index']
  #allocation1 [shape = 'u32[72,128]{1,0:T(1,128)}', space=vmem, size = 0x9000, scoped, tag = 'internal scratch']
  %s0 = inlined_call_operand.vmem [shape: bf16[2,10,10,16], index: 0, kind: input, shape index: {}]
  %s1 = inlined_call_operand.vmem [shape: bf16[16,10], index: 1, kind: input, shape index: {}]
  %s2 = inlined_call_operand.vmem [shape: f32[1,10], index: 2, kind: input, shape index: {}]
  %s3 = inlined_call_operand.hbm [shape: f32[2,10], index: 3, kind: output, shape index: {}]
  %s4 = sld [smem:[#allocation0]]
  $region22: #{_lambda_.7} parent=0
    _
  %s6 = ssub.s32 1, %s4
  %s7 = scalar_select 0, %s6, %s4
  $region1: #{_lambda_.7} parent=0
    #allocation2 [shape = 'u8[1024]{0}', space=vmem, size = 0x400, scoped, tag = 'output window, operand 0, single buffered']
    #allocation3 [shape = 's32[1]{0}', space=sflag, size = 0x4, scoped, tag = 'scoped memory for _lambda_.7']
    %8 = vsyncpa [#allocation3], 0
    // Predicated region
    $region2: #{_lambda_.7} parent=1 // pred_check
      _
    $region3: #{_lambda_.7} parent=1 // pred_check_branch
      %10 = sbr.rel (0) target = $region5
    $region4: #{_lambda_.7} parent=1 // pred_region
      _
    $region5: #{_lambda_.7} parent=1 // pred_fallthru
      _
    // Predicated region
    $region6: #{_lambda_.7} parent=1 // pred_check
      _
    $region7: #{_lambda_.7} parent=1 // pred_check_branch
      %12 = sbr.rel (0) target = $region9
    $region8: #{_lambda_.7} parent=1 // pred_region
      _
    $region9: #{_lambda_.7} parent=1 // pred_fallthru
      _
    // Predicated region
    $region10: #{_lambda_.7} parent=1 // pred_check
      _
    $region11: #{_lambda_.7} parent=1 // pred_check_branch
      %14 = sbr.rel (0) target = $region13
    $region12: #{_lambda_.7} parent=1 // pred_region
      _
    $region13: #{_lambda_.7} parent=1 // pred_fallthru
      _
    %v16 = vld [vmem:[%s0] sm:$0xf]
    %v17 = vld [vmem:[%s0 + $0x4] sm:$0x1]
    %v18 = vld [vmem:[%s0 + $0x8] sm:$0xf]
    %v19 = vld [vmem:[%s0 + $0xc] sm:$0x1]
    %v20 = vld [vmem:[%s0 + $0x10] sm:$0xf]
    %v21 = vld [vmem:[%s0 + $0x14] sm:$0x1]
    %v22 = vld [vmem:[%s0 + $0x18] sm:$0xf]
    %v23 = vld [vmem:[%s0 + $0x1c] sm:$0x1]
    %v24 = vld [vmem:[%s0 + $0x20] sm:$0xf]
    %v25 = vld [vmem:[%s0 + $0x24] sm:$0x1]
    %v26 = vld [vmem:[%s0 + $0x28] sm:$0xf]
    %v27 = vld [vmem:[%s0 + $0x2c] sm:$0x1]
    %v28 = vld [vmem:[%s0 + $0x30] sm:$0xf]
    %v29 = vld [vmem:[%s0 + $0x34] sm:$0x1]
    %v30 = vld [vmem:[%s0 + $0x38] sm:$0xf]
    %v31 = vld [vmem:[%s0 + $0x3c] sm:$0x1]
    %v32 = vld [vmem:[%s0 + $0x40] sm:$0xf]
    %v33 = vld [vmem:[%s0 + $0x44] sm:$0x1]
    %v34 = vld [vmem:[%s0 + $0x48] sm:$0xf]
    %v35 = vld [vmem:[%s0 + $0x4c] sm:$0x1]
    %v36 = vld [vmem:[%s0 + $0x50] sm:$0xf]
    %v37 = vld [vmem:[%s0 + $0x54] sm:$0x1]
    %v38 = vld [vmem:[%s0 + $0x58] sm:$0xf]
    %v39 = vld [vmem:[%s0 + $0x5c] sm:$0x1]
    %v40 = vld [vmem:[%s0 + $0x60] sm:$0xf]
    %v41 = vld [vmem:[%s0 + $0x64] sm:$0x1]
    %v42 = vld [vmem:[%s0 + $0x68] sm:$0xf]
    %v43 = vld [vmem:[%s0 + $0x6c] sm:$0x1]
    %v44 = vld [vmem:[%s0 + $0x70] sm:$0xf]
    %v45 = vld [vmem:[%s0 + $0x74] sm:$0x1]
    %v46 = vld [vmem:[%s0 + $0x78] sm:$0xf]
    %v47 = vld [vmem:[%s0 + $0x7c] sm:$0x1]
    %v48 = vld [vmem:[%s0 + $0x80] sm:$0xf]
    %v49 = vld [vmem:[%s0 + $0x84] sm:$0x1]
    %v50 = vld [vmem:[%s0 + $0x88] sm:$0xf]
    %v51 = vld [vmem:[%s0 + $0x8c] sm:$0x1]
    %v52 = vld [vmem:[%s0 + $0x90] sm:$0xf]
    %v53 = vld [vmem:[%s0 + $0x94] sm:$0x1]
    %v54 = vld [vmem:[%s0 + $0x98] sm:$0xf]
    %v55 = vld [vmem:[%s0 + $0x9c] sm:$0x1]
    %v56 = vunpack.c.l.bf16 %v16
    %v57 = vunpack.c.l.bf16 %v17
    %v58 = vunpack.c.l.bf16 %v18
    %v59 = vunpack.c.l.bf16 %v19
    %v60 = vunpack.c.l.bf16 %v20
    %v61 = vunpack.c.l.bf16 %v21
    %v62 = vunpack.c.l.bf16 %v22
    %v63 = vunpack.c.l.bf16 %v23
    %v64 = vunpack.c.l.bf16 %v24
    %v65 = vunpack.c.l.bf16 %v25
    %v66 = vunpack.c.l.bf16 %v26
    %v67 = vunpack.c.l.bf16 %v27
    %v68 = vunpack.c.l.bf16 %v28
    %v69 = vunpack.c.l.bf16 %v29
    %v70 = vunpack.c.l.bf16 %v30
    %v71 = vunpack.c.l.bf16 %v31
    %v72 = vunpack.c.l.bf16 %v32
    %v73 = vunpack.c.l.bf16 %v33
    %v74 = vunpack.c.l.bf16 %v34
    %v75 = vunpack.c.l.bf16 %v35
    %v76 = vunpack.c.l.bf16 %v36
    %v77 = vunpack.c.l.bf16 %v37
    %v78 = vunpack.c.l.bf16 %v38
    %v79 = vunpack.c.l.bf16 %v39
    %v80 = vunpack.c.l.bf16 %v40
    %v81 = vunpack.c.l.bf16 %v41
    %v82 = vunpack.c.l.bf16 %v42
    %v83 = vunpack.c.l.bf16 %v43
    %v84 = vunpack.c.l.bf16 %v44
    %v85 = vunpack.c.l.bf16 %v45
    %v86 = vunpack.c.l.bf16 %v46
    %v87 = vunpack.c.l.bf16 %v47
    %v88 = vunpack.c.l.bf16 %v48
    %v89 = vunpack.c.l.bf16 %v49
    %v90 = vunpack.c.l.bf16 %v50
    %v91 = vunpack.c.l.bf16 %v51
    %v92 = vunpack.c.l.bf16 %v52
    %v93 = vunpack.c.l.bf16 %v53
    %v94 = vunpack.c.l.bf16 %v54
    %v95 = vunpack.c.l.bf16 %v55
    %vm96 = vcmask 130048
    %v97 = vsel %vm96, %v56, 0.0
    %vm98 = vcmask 123904
    %v99 = vsel %vm98, %v57, 0.0
    %v100 = vadd.f32 %v97, %v99
    %v101 = vsel %vm96, %v58, 0.0
    %v102 = vadd.f32 %v100, %v101
    %v103 = vsel %vm98, %v59, 0.0
    %v104 = vadd.f32 %v102, %v103
    %v105 = vsel %vm96, %v60, 0.0
    %v106 = vadd.f32 %v104, %v105
    %v107 = vsel %vm98, %v61, 0.0
    %v108 = vadd.f32 %v106, %v107
    %v109 = vsel %vm96, %v62, 0.0
    %v110 = vadd.f32 %v108, %v109
    %v111 = vsel %vm98, %v63, 0.0
    %v112 = vadd.f32 %v110, %v111
    %v113 = vsel %vm96, %v64, 0.0
    %v114 = vadd.f32 %v112, %v113
    %v115 = vsel %vm98, %v65, 0.0
    %v116 = vadd.f32 %v114, %v115
    %v117 = vsel %vm96, %v66, 0.0
    %v118 = vadd.f32 %v116, %v117
    %v119 = vsel %vm98, %v67, 0.0
    %v120 = vadd.f32 %v118, %v119
    %v121 = vsel %vm96, %v68, 0.0
    %v122 = vadd.f32 %v120, %v121
    %v123 = vsel %vm98, %v69, 0.0
    %v124 = vadd.f32 %v122, %v123
    %v125 = vsel %vm96, %v70, 0.0
    %v126 = vadd.f32 %v124, %v125
    %v127 = vsel %vm98, %v71, 0.0
    %v128 = vadd.f32 %v126, %v127
    %v129 = vsel %vm96, %v72, 0.0
    %v130 = vadd.f32 %v128, %v129
    %v131 = vsel %vm98, %v73, 0.0
    %v132 = vadd.f32 %v130, %v131
    %v133 = vsel %vm96, %v74, 0.0
    %v134 = vadd.f32 %v132, %v133
    %v135 = vsel %vm98, %v75, 0.0
    %v136 = vadd.f32 %v134, %v135
    %v137 = vrot.slane %v136, 4
    %v138 = vadd.f32 %v136, %v137
    %v139 = vrot.slane %v138, 2
    %v140 = vadd.f32 %v138, %v139
    %v141 = vrot.slane %v140, 1
    %v142 = vadd.f32 %v140, %v141
    %v143 = vsel %vm96, %v76, 0.0
    %v144 = vsel %vm98, %v77, 0.0
    %v145 = vadd.f32 %v143, %v144
    %v146 = vsel %vm96, %v78, 0.0
    %v147 = vadd.f32 %v145, %v146
    %v148 = vsel %vm98, %v79, 0.0
    %v149 = vadd.f32 %v147, %v148
    %v150 = vsel %vm96, %v80, 0.0
    %v151 = vadd.f32 %v149, %v150
    %v152 = vsel %vm98, %v81, 0.0
    %v153 = vadd.f32 %v151, %v152
    %v154 = vsel %vm96, %v82, 0.0
    %v155 = vadd.f32 %v153, %v154
    %v156 = vsel %vm98, %v83, 0.0
    %v157 = vadd.f32 %v155, %v156
    %v158 = vsel %vm96, %v84, 0.0
    %v159 = vadd.f32 %v157, %v158
    %v160 = vsel %vm98, %v85, 0.0
    %v161 = vadd.f32 %v159, %v160
    %v162 = vsel %vm96, %v86, 0.0
    %v163 = vadd.f32 %v161, %v162
    %v164 = vsel %vm98, %v87, 0.0
    %v165 = vadd.f32 %v163, %v164
    %v166 = vsel %vm96, %v88, 0.0
    %v167 = vadd.f32 %v165, %v166
    %v168 = vsel %vm98, %v89, 0.0
    %v169 = vadd.f32 %v167, %v168
    %v170 = vsel %vm96, %v90, 0.0
    %v171 = vadd.f32 %v169, %v170
    %v172 = vsel %vm98, %v91, 0.0
    %v173 = vadd.f32 %v171, %v172
    %v174 = vsel %vm96, %v92, 0.0
    %v175 = vadd.f32 %v173, %v174
    %v176 = vsel %vm98, %v93, 0.0
    %v177 = vadd.f32 %v175, %v176
    %v178 = vsel %vm96, %v94, 0.0
    %v179 = vadd.f32 %v177, %v178
    %v180 = vsel %vm98, %v95, 0.0
    %v181 = vadd.f32 %v179, %v180
    %v182 = vrot.slane %v181, 4
    %v183 = vadd.f32 %v181, %v182
    %v184 = vrot.slane %v183, 2
    %v185 = vadd.f32 %v183, %v184
    %v186 = vrot.slane %v185, 1
    %v187 = vadd.f32 %v185, %v186
    %v188 = vmul.f32 %v142, 0.015625
    %v189 = vmul.f32 %v187, 0.015625
    %v190 = vmax.f32 %v188, 0.0
    %v191 = vmax.f32 %v189, 0.0
    %v192 = vmin.f32 %v190, 1.0
    %v193 = vmin.f32 %v191, 1.0
    %v194 = vmul.f32 %v192, 255.0
    %v195 = vmul.f32 %v193, 255.0
    %v196 = vround.ne.pseudo %v194
    %v197 = vround.ne.pseudo %v195
    %v198 = vmul.f32 %v196, 0.003921569
    %v199 = vmul.f32 %v197, 0.003921569
    %v200 = vpack.c.bf16 %v198, %v198
    %v201 = vpack.c.bf16 %v199, %v199
    %v202 = vld [vmem:[%s1] sm:$0xf]
    %v203 = vld [vmem:[%s1 + $0x4] sm:$0xf]
    %v204 = vld [vmem:[%s2] sm:$0x1]
    %v206 = vperm.slane %v204, 0
    %v210 = vunpack.c.l.b16 %v200
    %v211 = vunpack.c.l.b16 %v201
    %vm212 = vcmask 1041409
    %v213 = vsel %vm212, %v211, %v210
    %v214 = vpack.c.b16 %v213, %v213
    %v217 = vunpack.c.l.b16 %v202
    %v218 = vunpack.c.l.b16 %v203
    %v219 = vpack.c.b16 %v218, %v217
    %v222 = vsel %vm96, %v214, 0
    %224 = vmatpush.bf16.msra.mxu0 0
    %225 = vmatpush.bf16.msra.mxu0 0
    %226 = vmatpush.bf16.msra.mxu0 0
    %227 = vmatpush.bf16.msra.mxu0 0
    %228 = vmatpush.bf16.msra.mxu0 0
    %229 = vmatpush.bf16.msra.mxu0 0
    %230 = vmatpush.bf16.msra.mxu0 0
    %231 = vmatpush.bf16.msra.mxu0 %v219
    %232 = vmatmul.bf16.gmra.mxu0 %v222
    %v233 = vpop.f32.mrf.mxu0
    %v234 = vadd.f32 %v206, %v233
    %v235 = vpop.f32.mrf.mxu0
    %236 = vdwg.mxu0
    %vm237 = vcmask 74752
    %238 = vst.msk [vmem:[#allocation2] sm:$0x3] %vm237, %v234
    // Predicated region
    $region14: #{_lambda_.7} parent=1 // pred_check
      _
    $region15: #{_lambda_.7} parent=1 // pred_check_branch
      %240 = sbr.rel (0) target = $region17
    $region16: #{_lambda_.7} parent=1 // pred_region
      %242 = vsyncadd [#allocation3], 0
      %s244 = sshll.u32 [#allocation2], 4
      %s245 = int_to_ptr.vmem [resolvable:$true] %s244
      %s246 = sshll.u32 %s3, 4
      %s247 = int_to_ptr.hbm [resolvable:$true] %s246
      %249 = dma.vmem_to_hbm [thread:$0]  %s245, 32, %s247, [#allocation3]
    $region17: #{_lambda_.7} parent=1 // pred_fallthru
      _
    // Predicated region
    $region18: #{_lambda_.7} parent=1 // pred_check
      _
    $region19: #{_lambda_.7} parent=1 // pred_check_branch
      %251 = sbr.rel (0) target = $region21
    $region20: #{_lambda_.7} parent=1 // pred_region
      %253 = dma.done [#allocation3], 32
    $region21: #{_lambda_.7} parent=1 // pred_fallthru
      _
    %254 = vsyncpa [#allocation3], 1

// kernel: _lambda_.4
$region0: #{_lambda_.4}
  #allocation0 [shape = 'u32[]', space=smem, size = 0x4, offset = 0x4, fixed_abs, tag = 'smem constant byte address 0x4 - core index']
  #allocation1 [shape = 'u32[72,128]{1,0:T(1,128)}', space=vmem, size = 0x9000, scoped, tag = 'internal scratch']
  %s0 = inlined_call_operand.vmem [shape: bf16[2,16,16,3], index: 0, kind: input, shape index: {}]
  %s1 = inlined_call_operand.vmem [shape: bf16[27,8], index: 1, kind: input, shape index: {}]
  %s2 = inlined_call_operand.vmem [shape: f32[1,8], index: 2, kind: input, shape index: {}]
  %s3 = inlined_call_operand.vmem [shape: f32[1,8], index: 3, kind: input, shape index: {}]
  %s4 = inlined_call_operand.vmem [shape: bf16[2,18,18,8], index: 4, kind: output, shape index: {}]
  %s5 = sld [smem:[#allocation0]]
  $region49: #{_lambda_.4} parent=0
    _
  %s7 = ssub.s32 1, %s5
  %s8 = scalar_select 0, %s7, %s5
  loop: start=0, step=1, limit=4
  $region2: #{_lambda_.4} parent=0 // loop_pre_header
    _
  $region3: #{_lambda_.4} parent=0 // loop_header
    %s10 = sphi 0, %s14
    %p11 = scmp.ge.s32.totalorder %s10, 4
    %s20 = sphi 0, %s22
    %s23 = sphi 0, %s20
    %s24 = sphi 0, %s23
    %s40 = sphi 0, %s24
    %s44 = sphi 0, %s44
    %s46 = sphi 0, %s44
    %s47 = sphi 0, %s46
    %s61 = sphi 0, %s47
    %s65 = sphi 0, %s65
    %s67 = sphi 0, %s65
    %s68 = sphi 0, %s67
    %s82 = sphi 0, %s68
    %s86 = sphi 0, %s86
    %s88 = sphi 0, %s86
    %s89 = sphi 0, %s88
    %s103 = sphi 0, %s89
    %s109 = sphi 0, %s111
    %s112 = sphi 0, %s109
    %s113 = sphi 0, %s112
    %s129 = sphi 0, %s113
  $region4: #{_lambda_.4} parent=0 // loop_header_branch
    %13 = sbr.rel (%p11) target = $region8
  $region5: #{_lambda_.4} parent=0 // loop_body
    %s15 = ssub.s32 %s10, 1
    %s16 = ssub.s32 %s10, 2
    %s17 = sadd.s32 %s10, 1
    %s18 = ssub.s32 %s10, %s17
    %p19 = scmp.eq.s32.totalorder %s18, 0
    %s21 = sadd.s32 %s20, 1
    %s22 = scalar_select %p19, %s20, %s21
    %p25 = pneg %p19
    %p26 = scmp.eq.s32.totalorder %s10, 1
    %p27 = por %p25, %p26
    %p28 = scmp.ne.s32.totalorder %s20, %s23
    %p29 = scmp.eq.s32.totalorder %s10, 0
    %p30 = por %p28, %p29
    %p31 = scmp.ne.s32.totalorder %s20, %s23
    %p32 = scmp.eq.s32.totalorder %s15, 1
    %p33 = por %p31, %p32
    %p34 = scmp.ne.s32.totalorder %s23, %s24
    %p35 = scmp.eq.s32.totalorder %s15, 0
    %p36 = por %p34, %p35
    %p37 = scmp.ne.s32.totalorder %s23, %s24
    %p38 = scmp.eq.s32.totalorder %s16, 1
    %p39 = por %p37, %p38
    %p41 = scmp.ne.s32.totalorder %s24, %s40
    %p42 = scmp.eq.s32.totalorder %s16, 0
    %p43 = por %p41, %p42
    %s45 = sadd.s32 %s44, 1
    %p48 = scmp.eq.s32.totalorder %s10, 1
    %p49 = scmp.ne.s32.totalorder %s44, %s46
    %p50 = scmp.eq.s32.totalorder %s10, 0
    %p51 = por %p49, %p50
    %p52 = scmp.ne.s32.totalorder %s44, %s46
    %p53 = scmp.eq.s32.totalorder %s15, 1
    %p54 = por %p52, %p53
    %p55 = scmp.ne.s32.totalorder %s46, %s47
    %p56 = scmp.eq.s32.totalorder %s15, 0
    %p57 = por %p55, %p56
    %p58 = scmp.ne.s32.totalorder %s46, %s47
    %p59 = scmp.eq.s32.totalorder %s16, 1
    %p60 = por %p58, %p59
    %p62 = scmp.ne.s32.totalorder %s47, %s61
    %p63 = scmp.eq.s32.totalorder %s16, 0
    %p64 = por %p62, %p63
    %s66 = sadd.s32 %s65, 1
    %p69 = scmp.eq.s32.totalorder %s10, 1
    %p70 = scmp.ne.s32.totalorder %s65, %s67
    %p71 = scmp.eq.s32.totalorder %s10, 0
    %p72 = por %p70, %p71
    %p73 = scmp.ne.s32.totalorder %s65, %s67
    %p74 = scmp.eq.s32.totalorder %s15, 1
    %p75 = por %p73, %p74
    %p76 = scmp.ne.s32.totalorder %s67, %s68
    %p77 = scmp.eq.s32.totalorder %s15, 0
    %p78 = por %p76, %p77
    %p79 = scmp.ne.s32.totalorder %s67, %s68
    %p80 = scmp.eq.s32.totalorder %s16, 1
    %p81 = por %p79, %p80
    %p83 = scmp.ne.s32.totalorder %s68, %s82
    %p84 = scmp.eq.s32.totalorder %s16, 0
    %p85 = por %p83, %p84
    %s87 = sadd.s32 %s86, 1
    %p90 = scmp.eq.s32.totalorder %s10, 1
    %p91 = scmp.ne.s32.totalorder %s86, %s88
    %p92 = scmp.eq.s32.totalorder %s10, 0
    %p93 = por %p91, %p92
    %p94 = scmp.ne.s32.totalorder %s86, %s88
    %p95 = scmp.eq.s32.totalorder %s15, 1
    %p96 = por %p94, %p95
    %p97 = scmp.ne.s32.totalorder %s88, %s89
    %p98 = scmp.eq.s32.totalorder %s15, 0
    %p99 = por %p97, %p98
    %p100 = scmp.ne.s32.totalorder %s88, %s89
    %p101 = scmp.eq.s32.totalorder %s16, 1
    %p102 = por %p100, %p101
    %p104 = scmp.ne.s32.totalorder %s89, %s103
    %p105 = scmp.eq.s32.totalorder %s16, 0
    %p106 = por %p104, %p105
    %s107 = ssub.s32 %s10, %s17
    %p108 = scmp.eq.s32.totalorder %s107, 0
    %s110 = sadd.s32 %s109, 1
    %s111 = scalar_select %p108, %s109, %s110
    %p114 = pneg %p108
    %p115 = scmp.eq.s32.totalorder %s10, 1
    %p116 = por %p114, %p115
    %p117 = scmp.ne.s32.totalorder %s109, %s112
    %p118 = scmp.eq.s32.totalorder %s10, 0
    %p119 = por %p117, %p118
    %p120 = scmp.ne.s32.totalorder %s109, %s112
    %p121 = scmp.eq.s32.totalorder %s15, 1
    %p122 = por %p120, %p121
    %p123 = scmp.ne.s32.totalorder %s112, %s113
    %p124 = scmp.eq.s32.totalorder %s15, 0
    %p125 = por %p123, %p124
    %p126 = scmp.ne.s32.totalorder %s112, %s113
    %p127 = scmp.eq.s32.totalorder %s16, 1
    %p128 = por %p126, %p127
    %p130 = scmp.ne.s32.totalorder %s113, %s129
    %p131 = scmp.eq.s32.totalorder %s16, 0
    %p132 = por %p130, %p131
    %p133 = scmp.le.s32.totalorder 1, %s10
    %p134 = scmp.lt.s32.totalorder %s10, 3
    %p135 = pnand %p133, %p134
    %p136 = pneg %p135
    // Predicated region
    $region9: #{_lambda_.4} parent=5 // pred_check
      _
    $region10: #{_lambda_.4} parent=5 // pred_check_branch
      %138 = sbr.rel (%p135) target = $region12
    $region11: #{_lambda_.4} parent=5 // pred_region
      %s139 = ssub.s32 %s10, 1
      // Predicated region
      $region13: #{_lambda_.4} parent=11 // pred_check
        %p140 = pneg %p57
      $region14: #{_lambda_.4} parent=11 // pred_check_branch
        %142 = sbr.rel (%p140) target = $region16
      $region15: #{_lambda_.4} parent=11 // pred_region
        _
      $region16: #{_lambda_.4} parent=11 // pred_fallthru
        _
      // Predicated region
      $region17: #{_lambda_.4} parent=11 // pred_check
        %p143 = pneg %p78
      $region18: #{_lambda_.4} parent=11 // pred_check_branch
        %145 = sbr.rel (%p143) target = $region20
      $region19: #{_lambda_.4} parent=11 // pred_region
        _
      $region20: #{_lambda_.4} parent=11 // pred_fallthru
        _
      // Predicated region
      $region21: #{_lambda_.4} parent=11 // pred_check
        %p146 = pneg %p99
      $region22: #{_lambda_.4} parent=11 // pred_check_branch
        %148 = sbr.rel (%p146) target = $region24
      $region23: #{_lambda_.4} parent=11 // pred_region
        _
      $region24: #{_lambda_.4} parent=11 // pred_fallthru
        _
    $region12: #{_lambda_.4} parent=5 // pred_fallthru
      _
    %p149 = scmp.lt.s32.totalorder %s10, 2
    // Predicated region
    $region25: #{_lambda_.4} parent=5 // pred_check
      %p150 = pneg %p149
    $region26: #{_lambda_.4} parent=5 // pred_check_branch
      %152 = sbr.rel (%p150) target = $region28
    $region27: #{_lambda_.4} parent=5 // pred_region
      // Predicated region
      $region29: #{_lambda_.4} parent=27 // pred_check
        %p153 = pneg %p30
      $region30: #{_lambda_.4} parent=27 // pred_check_branch
        %155 = sbr.rel (%p153) target = $region32
      $region31: #{_lambda_.4} parent=27 // pred_region
        %p156 = scmp.lt.s32.totalorder %s10, 1
        %s157 = scalar_select %p156, %s10, 1
        %s158 = smul.addr %s157, 32
        %s159 = smul.addr %s158, 4
        %s160 = scalar_lea.vmem %s0, %s159
      $region32: #{_lambda_.4} parent=27 // pred_fallthru
        _
    $region28: #{_lambda_.4} parent=5 // pred_fallthru
      _
    %p161 = scmp.le.s32.totalorder 1, %s10
    %p162 = scmp.lt.s32.totalorder %s10, 3
    %p163 = pnand %p161, %p162
    %p164 = pneg %p163
    // Predicated region
    $region33: #{_lambda_.4} parent=5 // pred_check
      _
    $region34: #{_lambda_.4} parent=5 // pred_check_branch
      %166 = sbr.rel (%p163) target = $region36
    $region35: #{_lambda_.4} parent=5 // pred_region
      %s167 = ssub.s32 %s10, 1
      %p168 = scmp.lt.s32.totalorder %s15, 1
      %s169 = scalar_select %p168, %s15, 1
      %s170 = smul.addr %s169, 32
      %s171 = smul.addr %s170, 4
      %s172 = scalar_lea.vmem %s0, %s171
      %p173 = pneg %p36
      %p174 = pneg %p33
      %p175 = pneg %p57
      %p176 = pneg %p54
      %p177 = pneg %p78
      %p178 = pneg %p75
      %p179 = pneg %p99
      %p180 = pneg %p96
      %p181 = pneg %p125
      %p182 = pneg %p122
      %p183 = scmp.lt.s32.totalorder %s15, 1
      %s184 = scalar_select %p183, %s15, 1
      %s185 = smul.addr %s184, 54
      %s186 = smul.addr %s185, 4
      %s187 = scalar_lea.vmem %s4, %s186
      %p188 = scmp.lt.s32.totalorder %s15, 1
      %s189 = scalar_select %p188, %s15, 1
      %s190 = smul.addr %s189, 32
      %s191 = smul.addr %s190, 4
      %s192 = scalar_lea.vmem %s0, %s191
      %p193 = scmp.lt.s32.totalorder %s15, 1
      %s194 = scalar_select %p193, %s15, 1
      %s195 = smul.addr %s194, 54
      %s196 = smul.addr %s195, 4
      %s197 = scalar_lea.vmem %s4, %s196
      %v199 = vld [vmem:[%s192] sm:$0xf]
      %v200 = vld [vmem:[%s192 + $0x4] sm:$0xf]
      %v201 = vld [vmem:[%s192 + $0x8] sm:$0xf]
      %v202 = vld [vmem:[%s192 + $0xc] sm:$0xf]
      %v203 = vld [vmem:[%s192 + $0x10] sm:$0xf]
      %v204 = vld [vmem:[%s192 + $0x14] sm:$0xf]
      %v205 = vld [vmem:[%s192 + $0x18] sm:$0xf]
      %v206 = vld [vmem:[%s192 + $0x1c] sm:$0xf]
      %v207 = vld [vmem:[%s192 + $0x20] sm:$0xf]
      %v208 = vld [vmem:[%s192 + $0x24] sm:$0xf]
      %v209 = vld [vmem:[%s192 + $0x28] sm:$0xf]
      %v210 = vld [vmem:[%s192 + $0x2c] sm:$0xf]
      %v211 = vld [vmem:[%s192 + $0x30] sm:$0xf]
      %v212 = vld [vmem:[%s192 + $0x34] sm:$0xf]
      %v213 = vld [vmem:[%s192 + $0x38] sm:$0xf]
      %v214 = vld [vmem:[%s192 + $0x3c] sm:$0xf]
      %v215 = vld [vmem:[%s192 + $0x40] sm:$0xf]
      %v216 = vld [vmem:[%s192 + $0x44] sm:$0xf]
      %v217 = vld [vmem:[%s192 + $0x48] sm:$0xf]
      %v218 = vld [vmem:[%s192 + $0x4c] sm:$0xf]
      %v219 = vld [vmem:[%s192 + $0x50] sm:$0xf]
      %v220 = vld [vmem:[%s192 + $0x54] sm:$0xf]
      %v221 = vld [vmem:[%s192 + $0x58] sm:$0xf]
      %v222 = vld [vmem:[%s192 + $0x5c] sm:$0xf]
      %v223 = vld [vmem:[%s192 + $0x60] sm:$0xf]
      %v224 = vld [vmem:[%s192 + $0x64] sm:$0xf]
      %v225 = vld [vmem:[%s192 + $0x68] sm:$0xf]
      %v226 = vld [vmem:[%s192 + $0x6c] sm:$0xf]
      %v227 = vld [vmem:[%s192 + $0x70] sm:$0xf]
      %v228 = vld [vmem:[%s192 + $0x74] sm:$0xf]
      %v229 = vld [vmem:[%s192 + $0x78] sm:$0xf]
      %v230 = vld [vmem:[%s192 + $0x7c] sm:$0xf]
      %v231 = vunpack.c.l.bf16 %v199
      %v232 = vunpack.c.l.bf16 %v200
      %v233 = vunpack.c.l.bf16 %v201
      %v234 = vunpack.c.l.bf16 %v202
      %v235 = vunpack.c.l.bf16 %v203
      %v236 = vunpack.c.l.bf16 %v204
      %v237 = vunpack.c.l.bf16 %v205
      %v238 = vunpack.c.l.bf16 %v206
      %v239 = vunpack.c.l.bf16 %v207
      %v240 = vunpack.c.l.bf16 %v208
      %v241 = vunpack.c.l.bf16 %v209
      %v242 = vunpack.c.l.bf16 %v210
      %v243 = vunpack.c.l.bf16 %v211
      %v244 = vunpack.c.l.bf16 %v212
      %v245 = vunpack.c.l.bf16 %v213
      %v246 = vunpack.c.l.bf16 %v214
      %v247 = vunpack.c.l.bf16 %v215
      %v248 = vunpack.c.l.bf16 %v216
      %v249 = vunpack.c.l.bf16 %v217
      %v250 = vunpack.c.l.bf16 %v218
      %v251 = vunpack.c.l.bf16 %v219
      %v252 = vunpack.c.l.bf16 %v220
      %v253 = vunpack.c.l.bf16 %v221
      %v254 = vunpack.c.l.bf16 %v222
      %v255 = vunpack.c.l.bf16 %v223
      %v256 = vunpack.c.l.bf16 %v224
      %v257 = vunpack.c.l.bf16 %v225
      %v258 = vunpack.c.l.bf16 %v226
      %v259 = vunpack.c.l.bf16 %v227
      %v260 = vunpack.c.l.bf16 %v228
      %v261 = vunpack.c.l.bf16 %v229
      %v262 = vunpack.c.l.bf16 %v230
      %vm295 = vcmask 1040384
      %v296 = vrot.slane %v231, 7
      %v297 = vrot.slane %v232, 7
      %v298 = vsel %vm295, %v296, %v297
      %v299 = vrot.slane %v233, 7
      %v300 = vrot.slane %v234, 7
      %v301 = vsel %vm295, %v299, %v300
      %v302 = vrot.slane %v235, 7
      %v303 = vrot.slane %v236, 7
      %v304 = vsel %vm295, %v302, %v303
      %v305 = vrot.slane %v237, 7
      %v306 = vrot.slane %v238, 7
      %v307 = vsel %vm295, %v305, %v306
      %v308 = vrot.slane %v239, 7
      %v309 = vrot.slane %v240, 7
      %v310 = vsel %vm295, %v308, %v309
      %v311 = vrot.slane %v241, 7
      %v312 = vrot.slane %v242, 7
      %v313 = vsel %vm295, %v311, %v312
      %v314 = vrot.slane %v243, 7
      %v315 = vrot.slane %v244, 7
      %v316 = vsel %vm295, %v314, %v315
      %v317 = vrot.slane %v245, 7
      %v318 = vrot.slane %v246, 7
      %v319 = vsel %vm295, %v317, %v318
      %v320 = vrot.slane %v247, 7
      %v321 = vrot.slane %v248, 7
      %v322 = vsel %vm295, %v320, %v321
      %v323 = vrot.slane %v249, 7
      %v324 = vrot.slane %v250, 7
      %v325 = vsel %vm295, %v323, %v324
      %v326 = vrot.slane %v251, 7
      %v327 = vrot.slane %v252, 7
      %v328 = vsel %vm295, %v326, %v327
      %v329 = vrot.slane %v253, 7
      %v330 = vrot.slane %v254, 7
      %v331 = vsel %vm295, %v329, %v330
      %v332 = vrot.slane %v255, 7
      %v333 = vrot.slane %v256, 7
      %v334 = vsel %vm295, %v332, %v333
      %v335 = vrot.slane %v257, 7
      %v336 = vrot.slane %v258, 7
      %v337 = vsel %vm295, %v335, %v336
      %v338 = vrot.slane %v259, 7
      %v339 = vrot.slane %v260, 7
      %v340 = vsel %vm295, %v338, %v339
      %v341 = vrot.slane %v261, 7
      %v342 = vrot.slane %v262, 7
      %v343 = vsel %vm295, %v341, %v342
      %v391 = vsel %vm295, 0.0, %v296
      %v392 = vsel %vm295, 0.0, %v299
      %v393 = vsel %vm295, 0.0, %v302
      %v394 = vsel %vm295, 0.0, %v305
      %v395 = vsel %vm295, 0.0, %v308
      %v396 = vsel %vm295, 0.0, %v311
      %v397 = vsel %vm295, 0.0, %v314
      %v398 = vsel %vm295, 0.0, %v317
      %v399 = vsel %vm295, 0.0, %v320
      %v400 = vsel %vm295, 0.0, %v323
      %v401 = vsel %vm295, 0.0, %v326
      %v402 = vsel %vm295, 0.0, %v329
      %v403 = vsel %vm295, 0.0, %v332
      %v404 = vsel %vm295, 0.0, %v335
      %v405 = vsel %vm295, 0.0, %v338
      %v406 = vsel %vm295, 0.0, %v341
      %v407 = vsel %vm295, %v297, 0.0
      %v408 = vsel %vm295, %v300, 0.0
      %v409 = vsel %vm295, %v303, 0.0
      %v410 = vsel %vm295, %v306, 0.0
      %v411 = vsel %vm295, %v309, 0.0
      %v412 = vsel %vm295, %v312, 0.0
      %v413 = vsel %vm295, %v315, 0.0
      %v414 = vsel %vm295, %v318, 0.0
      %v415 = vsel %vm295, %v321, 0.0
      %v416 = vsel %vm295, %v324, 0.0
      %v417 = vsel %vm295, %v327, 0.0
      %v418 = vsel %vm295, %v330, 0.0
      %v419 = vsel %vm295, %v333, 0.0
      %v420 = vsel %vm295, %v336, 0.0
      %v421 = vsel %vm295, %v339, 0.0
      %v422 = vsel %vm295, %v342, 0.0
      %v423 = vld [vmem:[%s1] sm:$0xf]
      %v424 = vld [vmem:[%s1 + $0x4] sm:$0xf]
      %v425 = vld [vmem:[%s1 + $0x8] sm:$0xf]
      %v426 = vld [vmem:[%s1 + $0xc] sm:$0x3]
      %vm460 = vcmask 1046528
      %v461 = vrot.slane 0.0, 1
      %v462 = vsel %vm460, %v461, %v461
      %v463 = vrot.slane %v391, 1
      %v464 = vrot.slane %v298, 1
      %v465 = vsel %vm460, %v463, %v464
      %v466 = vrot.slane %v407, 1
      %v467 = vsel %vm460, %v464, %v466
      %v468 = vrot.slane %v392, 1
      %v469 = vrot.slane %v301, 1
      %v470 = vsel %vm460, %v468, %v469
      %v471 = vrot.slane %v408, 1
      %v472 = vsel %vm460, %v469, %v471
      %v473 = vrot.slane %v393, 1
      %v474 = vrot.slane %v304, 1
      %v475 = vsel %vm460, %v473, %v474
      %v476 = vrot.slane %v409, 1
      %v477 = vsel %vm460, %v474, %v476
      %v478 = vrot.slane %v394, 1
      %v479 = vrot.slane %v307, 1
      %v480 = vsel %vm460, %v478, %v479
      %v481 = vrot.slane %v410, 1
      %v482 = vsel %vm460, %v479, %v481
      %v483 = vrot.slane %v395, 1
      %v484 = vrot.slane %v310, 1
      %v485 = vsel %vm460, %v483, %v484
      %v486 = vrot.slane %v411, 1
      %v487 = vsel %vm460, %v484, %v486
      %v488 = vrot.slane %v396, 1
      %v489 = vrot.slane %v313, 1
      %v490 = vsel %vm460, %v488, %v489
      %v491 = vrot.slane %v412, 1
      %v492 = vsel %vm460, %v489, %v491
      %v493 = vrot.slane %v397, 1
      %v494 = vrot.slane %v316, 1
      %v495 = vsel %vm460, %v493, %v494
      %v496 = vrot.slane %v413, 1
      %v497 = vsel %vm460, %v494, %v496
      %v498 = vrot.slane %v398, 1
      %v499 = vrot.slane %v319, 1
      %v500 = vsel %vm460, %v498, %v499
      %v501 = vrot.slane %v414, 1
      %v502 = vsel %vm460, %v499, %v501
      %v503 = vrot.slane %v399, 1
      %v504 = vrot.slane %v322, 1
      %v505 = vsel %vm460, %v503, %v504
      %v506 = vrot.slane %v415, 1
      %v507 = vsel %vm460, %v504, %v506
      %v508 = vrot.slane %v400, 1
      %v509 = vrot.slane %v325, 1
      %v510 = vsel %vm460, %v508, %v509
      %v511 = vrot.slane %v416, 1
      %v512 = vsel %vm460, %v509, %v511
      %v513 = vrot.slane %v401, 1
      %v514 = vrot.slane %v328, 1
      %v515 = vsel %vm460, %v513, %v514
      %v516 = vrot.slane %v417, 1
      %v517 = vsel %vm460, %v514, %v516
      %v518 = vrot.slane %v402, 1
      %v519 = vrot.slane %v331, 1
      %v520 = vsel %vm460, %v518, %v519
      %v521 = vrot.slane %v418, 1
      %v522 = vsel %vm460, %v519, %v521
      %v523 = vrot.slane %v403, 1
      %v524 = vrot.slane %v334, 1
      %v525 = vsel %vm460, %v523, %v524
      %v526 = vrot.slane %v419, 1
      %v527 = vsel %vm460, %v524, %v526
      %v528 = vrot.slane %v404, 1
      %v529 = vrot.slane %v337, 1
      %v530 = vsel %vm460, %v528, %v529
      %v531 = vrot.slane %v420, 1
      %v532 = vsel %vm460, %v529, %v531
      %v533 = vrot.slane %v405, 1
      %v534 = vrot.slane %v340, 1
      %v535 = vsel %vm460, %v533, %v534
      %v536 = vrot.slane %v421, 1
      %v537 = vsel %vm460, %v534, %v536
      %v538 = vrot.slane %v406, 1
      %v539 = vrot.slane %v343, 1
      %v540 = vsel %vm460, %v538, %v539
      %v541 = vrot.slane %v422, 1
      %v542 = vsel %vm460, %v539, %v541
      %vm543 = vcmask 1045504
      %v544 = vrot.slane 0.0, 2
      %v545 = vsel %vm543, %v544, %v544
      %v546 = vrot.slane %v391, 2
      %v547 = vrot.slane %v298, 2
      %v548 = vsel %vm543, %v546, %v547
      %v549 = vrot.slane %v407, 2
      %v550 = vsel %vm543, %v547, %v549
      %v551 = vrot.slane %v392, 2
      %v552 = vrot.slane %v301, 2
      %v553 = vsel %vm543, %v551, %v552
      %v554 = vrot.slane %v408, 2
      %v555 = vsel %vm543, %v552, %v554
      %v556 = vrot.slane %v393, 2
      %v557 = vrot.slane %v304, 2
      %v558 = vsel %vm543, %v556, %v557
      %v559 = vrot.slane %v409, 2
      %v560 = vsel %vm543, %v557, %v559
      %v561 = vrot.slane %v394, 2
      %v562 = vrot.slane %v307, 2
      %v563 = vsel %vm543, %v561, %v562
      %v564 = vrot.slane %v410, 2
      %v565 = vsel %vm543, %v562, %v564
      %v566 = vrot.slane %v395, 2
      %v567 = vrot.slane %v310, 2
      %v568 = vsel %vm543, %v566, %v567
      %v569 = vrot.slane %v411, 2
      %v570 = vsel %vm543, %v567, %v569
      %v571 = vrot.slane %v396, 2
      %v572 = vrot.slane %v313, 2
      %v573 = vsel %vm543, %v571, %v572
      %v574 = vrot.slane %v412, 2
      %v575 = vsel %vm543, %v572, %v574
      %v576 = vrot.slane %v397, 2
      %v577 = vrot.slane %v316, 2
      %v578 = vsel %vm543, %v576, %v577
      %v579 = vrot.slane %v413, 2
      %v580 = vsel %vm543, %v577, %v579
      %v581 = vrot.slane %v398, 2
      %v582 = vrot.slane %v319, 2
      %v583 = vsel %vm543, %v581, %v582
      %v584 = vrot.slane %v414, 2
      %v585 = vsel %vm543, %v582, %v584
      %v586 = vrot.slane %v399, 2
      %v587 = vrot.slane %v322, 2
      %v588 = vsel %vm543, %v586, %v587
      %v589 = vrot.slane %v415, 2
      %v590 = vsel %vm543, %v587, %v589
      %v591 = vrot.slane %v400, 2
      %v592 = vrot.slane %v325, 2
      %v593 = vsel %vm543, %v591, %v592
      %v594 = vrot.slane %v416, 2
      %v595 = vsel %vm543, %v592, %v594
      %v596 = vrot.slane %v401, 2
      %v597 = vrot.slane %v328, 2
      %v598 = vsel %vm543, %v596, %v597
      %v599 = vrot.slane %v417, 2
      %v600 = vsel %vm543, %v597, %v599
      %v601 = vrot.slane %v402, 2
      %v602 = vrot.slane %v331, 2
      %v603 = vsel %vm543, %v601, %v602
      %v604 = vrot.slane %v418, 2
      %v605 = vsel %vm543, %v602, %v604
      %v606 = vrot.slane %v403, 2
      %v607 = vrot.slane %v334, 2
      %v608 = vsel %vm543, %v606, %v607
      %v609 = vrot.slane %v419, 2
      %v610 = vsel %vm543, %v607, %v609
      %v611 = vrot.slane %v404, 2
      %v612 = vrot.slane %v337, 2
      %v613 = vsel %vm543, %v611, %v612
      %v614 = vrot.slane %v420, 2
      %v615 = vsel %vm543, %v612, %v614
      %v616 = vrot.slane %v405, 2
      %v617 = vrot.slane %v340, 2
      %v618 = vsel %vm543, %v616, %v617
      %v619 = vrot.slane %v421, 2
      %v620 = vsel %vm543, %v617, %v619
      %v621 = vrot.slane %v406, 2
      %v622 = vrot.slane %v343, 2
      %v623 = vsel %vm543, %v621, %v622
      %v624 = vrot.slane %v422, 2
      %v625 = vsel %vm543, %v622, %v624
      %626 = vrot.lane.b32.xlu0 %v462, 3
      %v627 = vpop.permute.xlu0 %626
      %628 = vrot.lane.b32.xlu0 %v465, 3
      %v629 = vpop.permute.xlu0 %628
      %630 = vrot.lane.b32.xlu0 %v467, 3
      %v631 = vpop.permute.xlu0 %630
      %632 = vrot.lane.b32.xlu0 %v470, 3
      %v633 = vpop.permute.xlu0 %632
      %634 = vrot.lane.b32.xlu0 %v472, 3
      %v635 = vpop.permute.xlu0 %634
      %636 = vrot.lane.b32.xlu0 %v475, 3
      %v637 = vpop.permute.xlu0 %636
      %638 = vrot.lane.b32.xlu0 %v477, 3
      %v639 = vpop.permute.xlu0 %638
      %640 = vrot.lane.b32.xlu0 %v480, 3
      %v641 = vpop.permute.xlu0 %640
      %642 = vrot.lane.b32.xlu0 %v482, 3
      %v643 = vpop.permute.xlu0 %642
      %644 = vrot.lane.b32.xlu0 %v485, 3
      %v645 = vpop.permute.xlu0 %644
      %646 = vrot.lane.b32.xlu0 %v487, 3
      %v647 = vpop.permute.xlu0 %646
      %648 = vrot.lane.b32.xlu0 %v490, 3
      %v649 = vpop.permute.xlu0 %648
      %650 = vrot.lane.b32.xlu0 %v492, 3
      %v651 = vpop.permute.xlu0 %650
      %652 = vrot.lane.b32.xlu0 %v495, 3
      %v653 = vpop.permute.xlu0 %652
      %654 = vrot.lane.b32.xlu0 %v497, 3
      %v655 = vpop.permute.xlu0 %654
      %656 = vrot.lane.b32.xlu0 %v500, 3
      %v657 = vpop.permute.xlu0 %656
      %658 = vrot.lane.b32.xlu0 %v502, 3
      %v659 = vpop.permute.xlu0 %658
      %660 = vrot.lane.b32.xlu0 %v505, 3
      %v661 = vpop.permute.xlu0 %660
      %662 = vrot.lane.b32.xlu0 %v507, 3
      %v663 = vpop.permute.xlu0 %662
      %664 = vrot.lane.b32.xlu0 %v510, 3
      %v665 = vpop.permute.xlu0 %664
      %666 = vrot.lane.b32.xlu0 %v512, 3
      %v667 = vpop.permute.xlu0 %666
      %668 = vrot.lane.b32.xlu0 %v515, 3
      %v669 = vpop.permute.xlu0 %668
      %670 = vrot.lane.b32.xlu0 %v517, 3
      %v671 = vpop.permute.xlu0 %670
      %672 = vrot.lane.b32.xlu0 %v520, 3
      %v673 = vpop.permute.xlu0 %672
      %674 = vrot.lane.b32.xlu0 %v522, 3
      %v675 = vpop.permute.xlu0 %674
      %676 = vrot.lane.b32.xlu0 %v525, 3
      %v677 = vpop.permute.xlu0 %676
      %678 = vrot.lane.b32.xlu0 %v527, 3
      %v679 = vpop.permute.xlu0 %678
      %680 = vrot.lane.b32.xlu0 %v530, 3
      %v681 = vpop.permute.xlu0 %680
      %682 = vrot.lane.b32.xlu0 %v532, 3
      %v683 = vpop.permute.xlu0 %682
      %684 = vrot.lane.b32.xlu0 %v535, 3
      %v685 = vpop.permute.xlu0 %684
      %686 = vrot.lane.b32.xlu0 %v537, 3
      %v687 = vpop.permute.xlu0 %686
      %719 = vrot.lane.b32.xlu0 %v545, 6
      %v720 = vpop.permute.xlu0 %719
      %721 = vrot.lane.b32.xlu0 %v548, 6
      %v722 = vpop.permute.xlu0 %721
      %723 = vrot.lane.b32.xlu0 %v550, 6
      %v724 = vpop.permute.xlu0 %723
      %725 = vrot.lane.b32.xlu0 %v553, 6
      %v726 = vpop.permute.xlu0 %725
      %727 = vrot.lane.b32.xlu0 %v555, 6
      %v728 = vpop.permute.xlu0 %727
      %729 = vrot.lane.b32.xlu0 %v558, 6
      %v730 = vpop.permute.xlu0 %729
      %731 = vrot.lane.b32.xlu0 %v560, 6
      %v732 = vpop.permute.xlu0 %731
      %733 = vrot.lane.b32.xlu0 %v563, 6
      %v734 = vpop.permute.xlu0 %733
      %735 = vrot.lane.b32.xlu0 %v565, 6
      %v736 = vpop.permute.xlu0 %735
      %737 = vrot.lane.b32.xlu0 %v568, 6
      %v738 = vpop.permute.xlu0 %737
      %739 = vrot.lane.b32.xlu0 %v570, 6
      %v740 = vpop.permute.xlu0 %739
      %741 = vrot.lane.b32.xlu0 %v573, 6
      %v742 = vpop.permute.xlu0 %741
      %743 = vrot.lane.b32.xlu0 %v575, 6
      %v744 = vpop.permute.xlu0 %743
      %745 = vrot.lane.b32.xlu0 %v578, 6
      %v746 = vpop.permute.xlu0 %745
      %747 = vrot.lane.b32.xlu0 %v580, 6
      %v748 = vpop.permute.xlu0 %747
      %749 = vrot.lane.b32.xlu0 %v583, 6
      %v750 = vpop.permute.xlu0 %749
      %751 = vrot.lane.b32.xlu0 %v585, 6
      %v752 = vpop.permute.xlu0 %751
      %753 = vrot.lane.b32.xlu0 %v588, 6
      %v754 = vpop.permute.xlu0 %753
      %755 = vrot.lane.b32.xlu0 %v590, 6
      %v756 = vpop.permute.xlu0 %755
      %757 = vrot.lane.b32.xlu0 %v593, 6
      %v758 = vpop.permute.xlu0 %757
      %759 = vrot.lane.b32.xlu0 %v595, 6
      %v760 = vpop.permute.xlu0 %759
      %761 = vrot.lane.b32.xlu0 %v598, 6
      %v762 = vpop.permute.xlu0 %761
      %763 = vrot.lane.b32.xlu0 %v600, 6
      %v764 = vpop.permute.xlu0 %763
      %765 = vrot.lane.b32.xlu0 %v603, 6
      %v766 = vpop.permute.xlu0 %765
      %767 = vrot.lane.b32.xlu0 %v605, 6
      %v768 = vpop.permute.xlu0 %767
      %769 = vrot.lane.b32.xlu0 %v608, 6
      %v770 = vpop.permute.xlu0 %769
      %771 = vrot.lane.b32.xlu0 %v610, 6
      %v772 = vpop.permute.xlu0 %771
      %773 = vrot.lane.b32.xlu0 %v613, 6
      %v774 = vpop.permute.xlu0 %773
      %775 = vrot.lane.b32.xlu0 %v615, 6
      %v776 = vpop.permute.xlu0 %775
      %777 = vrot.lane.b32.xlu0 %v618, 6
      %v778 = vpop.permute.xlu0 %777
      %779 = vrot.lane.b32.xlu0 %v620, 6
      %v780 = vpop.permute.xlu0 %779
      %812 = vrot.lane.b32.xlu0 %v391, 9
      %v813 = vpop.permute.xlu0 %812
      %814 = vrot.lane.b32.xlu0 %v298, 9
      %v815 = vpop.permute.xlu0 %814
      %816 = vrot.lane.b32.xlu0 %v392, 9
      %v817 = vpop.permute.xlu0 %816
      %818 = vrot.lane.b32.xlu0 %v301, 9
      %v819 = vpop.permute.xlu0 %818
      %820 = vrot.lane.b32.xlu0 %v393, 9
      %v821 = vpop.permute.xlu0 %820
      %822 = vrot.lane.b32.xlu0 %v304, 9
      %v823 = vpop.permute.xlu0 %822
      %824 = vrot.lane.b32.xlu0 %v394, 9
      %v825 = vpop.permute.xlu0 %824
      %826 = vrot.lane.b32.xlu0 %v307, 9
      %v827 = vpop.permute.xlu0 %826
      %828 = vrot.lane.b32.xlu0 %v395, 9
      %v829 = vpop.permute.xlu0 %828
      %830 = vrot.lane.b32.xlu0 %v310, 9
      %v831 = vpop.permute.xlu0 %830
      %832 = vrot.lane.b32.xlu0 %v396, 9
      %v833 = vpop.permute.xlu0 %832
      %834 = vrot.lane.b32.xlu0 %v313, 9
      %v835 = vpop.permute.xlu0 %834
      %836 = vrot.lane.b32.xlu0 %v397, 9
      %v837 = vpop.permute.xlu0 %836
      %838 = vrot.lane.b32.xlu0 %v316, 9
      %v839 = vpop.permute.xlu0 %838
      %840 = vrot.lane.b32.xlu0 %v398, 9
      %v841 = vpop.permute.xlu0 %840
      %842 = vrot.lane.b32.xlu0 %v319, 9
      %v843 = vpop.permute.xlu0 %842
      %844 = vrot.lane.b32.xlu0 %v399, 9
      %v845 = vpop.permute.xlu0 %844
      %846 = vrot.lane.b32.xlu0 %v322, 9
      %v847 = vpop.permute.xlu0 %846
      %848 = vrot.lane.b32.xlu0 %v400, 9
      %v849 = vpop.permute.xlu0 %848
      %850 = vrot.lane.b32.xlu0 %v325, 9
      %v851 = vpop.permute.xlu0 %850
      %852 = vrot.lane.b32.xlu0 %v401, 9
      %v853 = vpop.permute.xlu0 %852
      %854 = vrot.lane.b32.xlu0 %v328, 9
      %v855 = vpop.permute.xlu0 %854
      %856 = vrot.lane.b32.xlu0 %v402, 9
      %v857 = vpop.permute.xlu0 %856
      %858 = vrot.lane.b32.xlu0 %v331, 9
      %v859 = vpop.permute.xlu0 %858
      %860 = vrot.lane.b32.xlu0 %v403, 9
      %v861 = vpop.permute.xlu0 %860
      %862 = vrot.lane.b32.xlu0 %v334, 9
      %v863 = vpop.permute.xlu0 %862
      %864 = vrot.lane.b32.xlu0 %v404, 9
      %v865 = vpop.permute.xlu0 %864
      %866 = vrot.lane.b32.xlu0 %v337, 9
      %v867 = vpop.permute.xlu0 %866
      %868 = vrot.lane.b32.xlu0 %v405, 9
      %v869 = vpop.permute.xlu0 %868
      %870 = vrot.lane.b32.xlu0 %v340, 9
      %v871 = vpop.permute.xlu0 %870
      %872 = vrot.lane.b32.xlu0 %v406, 9
      %v873 = vpop.permute.xlu0 %872
      %874 = vrot.lane.b32.xlu0 %v343, 9
      %v875 = vpop.permute.xlu0 %874
      %908 = vrot.lane.b32.xlu0 %v465, 12
      %v909 = vpop.permute.xlu0 %908
      %910 = vrot.lane.b32.xlu0 %v467, 12
      %v911 = vpop.permute.xlu0 %910
      %912 = vrot.lane.b32.xlu0 %v470, 12
      %v913 = vpop.permute.xlu0 %912
      %914 = vrot.lane.b32.xlu0 %v472, 12
      %v915 = vpop.permute.xlu0 %914
      %916 = vrot.lane.b32.xlu0 %v475, 12
      %v917 = vpop.permute.xlu0 %916
      %918 = vrot.lane.b32.xlu0 %v477, 12
      %v919 = vpop.permute.xlu0 %918
      %920 = vrot.lane.b32.xlu0 %v480, 12
      %v921 = vpop.permute.xlu0 %920
      %922 = vrot.lane.b32.xlu0 %v482, 12
      %v923 = vpop.permute.xlu0 %922
      %924 = vrot.lane.b32.xlu0 %v485, 12
      %v925 = vpop.permute.xlu0 %924
      %926 = vrot.lane.b32.xlu0 %v487, 12
      %v927 = vpop.permute.xlu0 %926
      %928 = vrot.lane.b32.xlu0 %v490, 12
      %v929 = vpop.permute.xlu0 %928
      %930 = vrot.lane.b32.xlu0 %v492, 12
      %v931 = vpop.permute.xlu0 %930
      %932 = vrot.lane.b32.xlu0 %v495, 12
      %v933 = vpop.permute.xlu0 %932
      %934 = vrot.lane.b32.xlu0 %v497, 12
      %v935 = vpop.permute.xlu0 %934
      %936 = vrot.lane.b32.xlu0 %v500, 12
      %v937 = vpop.permute.xlu0 %936
      %938 = vrot.lane.b32.xlu0 %v502, 12
      %v939 = vpop.permute.xlu0 %938
      %940 = vrot.lane.b32.xlu0 %v505, 12
      %v941 = vpop.permute.xlu0 %940
      %942 = vrot.lane.b32.xlu0 %v507, 12
      %v943 = vpop.permute.xlu0 %942
      %944 = vrot.lane.b32.xlu0 %v510, 12
      %v945 = vpop.permute.xlu0 %944
      %946 = vrot.lane.b32.xlu0 %v512, 12
      %v947 = vpop.permute.xlu0 %946
      %948 = vrot.lane.b32.xlu0 %v515, 12
      %v949 = vpop.permute.xlu0 %948
      %950 = vrot.lane.b32.xlu0 %v517, 12
      %v951 = vpop.permute.xlu0 %950
      %952 = vrot.lane.b32.xlu0 %v520, 12
      %v953 = vpop.permute.xlu0 %952
      %954 = vrot.lane.b32.xlu0 %v522, 12
      %v955 = vpop.permute.xlu0 %954
      %956 = vrot.lane.b32.xlu0 %v525, 12
      %v957 = vpop.permute.xlu0 %956
      %958 = vrot.lane.b32.xlu0 %v527, 12
      %v959 = vpop.permute.xlu0 %958
      %960 = vrot.lane.b32.xlu0 %v530, 12
      %v961 = vpop.permute.xlu0 %960
      %962 = vrot.lane.b32.xlu0 %v532, 12
      %v963 = vpop.permute.xlu0 %962
      %964 = vrot.lane.b32.xlu0 %v535, 12
      %v965 = vpop.permute.xlu0 %964
      %966 = vrot.lane.b32.xlu0 %v537, 12
      %v967 = vpop.permute.xlu0 %966
      %968 = vrot.lane.b32.xlu0 %v540, 12
      %v969 = vpop.permute.xlu0 %968
      %970 = vrot.lane.b32.xlu0 %v542, 12
      %v971 = vpop.permute.xlu0 %970
      %1004 = vrot.lane.b32.xlu0 %v548, 15
      %v1005 = vpop.permute.xlu0 %1004
      %1006 = vrot.lane.b32.xlu0 %v550, 15
      %v1007 = vpop.permute.xlu0 %1006
      %1008 = vrot.lane.b32.xlu0 %v553, 15
      %v1009 = vpop.permute.xlu0 %1008
      %1010 = vrot.lane.b32.xlu0 %v555, 15
      %v1011 = vpop.permute.xlu0 %1010
      %1012 = vrot.lane.b32.xlu0 %v558, 15
      %v1013 = vpop.permute.xlu0 %1012
      %1014 = vrot.lane.b32.xlu0 %v560, 15
      %v1015 = vpop.permute.xlu0 %1014
      %1016 = vrot.lane.b32.xlu0 %v563, 15
      %v1017 = vpop.permute.xlu0 %1016
      %1018 = vrot.lane.b32.xlu0 %v565, 15
      %v1019 = vpop.permute.xlu0 %1018
      %1020 = vrot.lane.b32.xlu0 %v568, 15
      %v1021 = vpop.permute.xlu0 %1020
      %1022 = vrot.lane.b32.xlu0 %v570, 15
      %v1023 = vpop.permute.xlu0 %1022
      %1024 = vrot.lane.b32.xlu0 %v573, 15
      %v1025 = vpop.permute.xlu0 %1024
      %1026 = vrot.lane.b32.xlu0 %v575, 15
      %v1027 = vpop.permute.xlu0 %1026
      %1028 = vrot.lane.b32.xlu0 %v578, 15
      %v1029 = vpop.permute.xlu0 %1028
      %1030 = vrot.lane.b32.xlu0 %v580, 15
      %v1031 = vpop.permute.xlu0 %1030
      %1032 = vrot.lane.b32.xlu0 %v583, 15
      %v1033 = vpop.permute.xlu0 %1032
      %1034 = vrot.lane.b32.xlu0 %v585, 15
      %v1035 = vpop.permute.xlu0 %1034
      %1036 = vrot.lane.b32.xlu0 %v588, 15
      %v1037 = vpop.permute.xlu0 %1036
      %1038 = vrot.lane.b32.xlu0 %v590, 15
      %v1039 = vpop.permute.xlu0 %1038
      %1040 = vrot.lane.b32.xlu0 %v593, 15
      %v1041 = vpop.permute.xlu0 %1040
      %1042 = vrot.lane.b32.xlu0 %v595, 15
      %v1043 = vpop.permute.xlu0 %1042
      %1044 = vrot.lane.b32.xlu0 %v598, 15
      %v1045 = vpop.permute.xlu0 %1044
      %1046 = vrot.lane.b32.xlu0 %v600, 15
      %v1047 = vpop.permute.xlu0 %1046
      %1048 = vrot.lane.b32.xlu0 %v603, 15
      %v1049 = vpop.permute.xlu0 %1048
      %1050 = vrot.lane.b32.xlu0 %v605, 15
      %v1051 = vpop.permute.xlu0 %1050
      %1052 = vrot.lane.b32.xlu0 %v608, 15
      %v1053 = vpop.permute.xlu0 %1052
      %1054 = vrot.lane.b32.xlu0 %v610, 15
      %v1055 = vpop.permute.xlu0 %1054
      %1056 = vrot.lane.b32.xlu0 %v613, 15
      %v1057 = vpop.permute.xlu0 %1056
      %1058 = vrot.lane.b32.xlu0 %v615, 15
      %v1059 = vpop.permute.xlu0 %1058
      %1060 = vrot.lane.b32.xlu0 %v618, 15
      %v1061 = vpop.permute.xlu0 %1060
      %1062 = vrot.lane.b32.xlu0 %v620, 15
      %v1063 = vpop.permute.xlu0 %1062
      %1064 = vrot.lane.b32.xlu0 %v623, 15
      %v1065 = vpop.permute.xlu0 %1064
      %1066 = vrot.lane.b32.xlu0 %v625, 15
      %v1067 = vpop.permute.xlu0 %1066
      %1100 = vrot.lane.b32.xlu0 %v392, 18
      %v1101 = vpop.permute.xlu0 %1100
      %1102 = vrot.lane.b32.xlu0 %v301, 18
      %v1103 = vpop.permute.xlu0 %1102
      %1104 = vrot.lane.b32.xlu0 %v393, 18
      %v1105 = vpop.permute.xlu0 %1104
      %1106 = vrot.lane.b32.xlu0 %v304, 18
      %v1107 = vpop.permute.xlu0 %1106
      %1108 = vrot.lane.b32.xlu0 %v394, 18
      %v1109 = vpop.permute.xlu0 %1108
      %1110 = vrot.lane.b32.xlu0 %v307, 18
      %v1111 = vpop.permute.xlu0 %1110
      %1112 = vrot.lane.b32.xlu0 %v395, 18
      %v1113 = vpop.permute.xlu0 %1112
      %1114 = vrot.lane.b32.xlu0 %v310, 18
      %v1115 = vpop.permute.xlu0 %1114
      %1116 = vrot.lane.b32.xlu0 %v396, 18
      %v1117 = vpop.permute.xlu0 %1116
      %1118 = vrot.lane.b32.xlu0 %v313, 18
      %v1119 = vpop.permute.xlu0 %1118
      %1120 = vrot.lane.b32.xlu0 %v397, 18
      %v1121 = vpop.permute.xlu0 %1120
      %1122 = vrot.lane.b32.xlu0 %v316, 18
      %v1123 = vpop.permute.xlu0 %1122
      %1124 = vrot.lane.b32.xlu0 %v398, 18
      %v1125 = vpop.permute.xlu0 %1124
      %1126 = vrot.lane.b32.xlu0 %v319, 18
      %v1127 = vpop.permute.xlu0 %1126
      %1128 = vrot.lane.b32.xlu0 %v399, 18
      %v1129 = vpop.permute.xlu0 %1128
      %1130 = vrot.lane.b32.xlu0 %v322, 18
      %v1131 = vpop.permute.xlu0 %1130
      %1132 = vrot.lane.b32.xlu0 %v400, 18
      %v1133 = vpop.permute.xlu0 %1132
      %1134 = vrot.lane.b32.xlu0 %v325, 18
      %v1135 = vpop.permute.xlu0 %1134
      %1136 = vrot.lane.b32.xlu0 %v401, 18
      %v1137 = vpop.permute.xlu0 %1136
      %1138 = vrot.lane.b32.xlu0 %v328, 18
      %v1139 = vpop.permute.xlu0 %1138
      %1140 = vrot.lane.b32.xlu0 %v402, 18
      %v1141 = vpop.permute.xlu0 %1140
      %1142 = vrot.lane.b32.xlu0 %v331, 18
      %v1143 = vpop.permute.xlu0 %1142
      %1144 = vrot.lane.b32.xlu0 %v403, 18
      %v1145 = vpop.permute.xlu0 %1144
      %1146 = vrot.lane.b32.xlu0 %v334, 18
      %v1147 = vpop.permute.xlu0 %1146
      %1148 = vrot.lane.b32.xlu0 %v404, 18
      %v1149 = vpop.permute.xlu0 %1148
      %1150 = vrot.lane.b32.xlu0 %v337, 18
      %v1151 = vpop.permute.xlu0 %1150
      %1152 = vrot.lane.b32.xlu0 %v405, 18
      %v1153 = vpop.permute.xlu0 %1152
      %1154 = vrot.lane.b32.xlu0 %v340, 18
      %v1155 = vpop.permute.xlu0 %1154
      %1156 = vrot.lane.b32.xlu0 %v406, 18
      %v1157 = vpop.permute.xlu0 %1156
      %1158 = vrot.lane.b32.xlu0 %v343, 18
      %v1159 = vpop.permute.xlu0 %1158
      %1160 = vrot.lane.b32.xlu0 0.0, 18
      %v1161 = vpop.permute.xlu0 %1160
      %1193 = vrot.lane.b32.xlu0 %v470, 21
      %v1194 = vpop.permute.xlu0 %1193
      %1195 = vrot.lane.b32.xlu0 %v472, 21
      %v1196 = vpop.permute.xlu0 %1195
      %1197 = vrot.lane.b32.xlu0 %v475, 21
      %v1198 = vpop.permute.xlu0 %1197
      %1199 = vrot.lane.b32.xlu0 %v477, 21
      %v1200 = vpop.permute.xlu0 %1199
      %1201 = vrot.lane.b32.xlu0 %v480, 21
      %v1202 = vpop.permute.xlu0 %1201
      %1203 = vrot.lane.b32.xlu0 %v482, 21
      %v1204 = vpop.permute.xlu0 %1203
      %1205 = vrot.lane.b32.xlu0 %v485, 21
      %v1206 = vpop.permute.xlu0 %1205
      %1207 = vrot.lane.b32.xlu0 %v487, 21
      %v1208 = vpop.permute.xlu0 %1207
      %1209 = vrot.lane.b32.xlu0 %v490, 21
      %v1210 = vpop.permute.xlu0 %1209
      %1211 = vrot.lane.b32.xlu0 %v492, 21
      %v1212 = vpop.permute.xlu0 %1211
      %1213 = vrot.lane.b32.xlu0 %v495, 21
      %v1214 = vpop.permute.xlu0 %1213
      %1215 = vrot.lane.b32.xlu0 %v497, 21
      %v1216 = vpop.permute.xlu0 %1215
      %1217 = vrot.lane.b32.xlu0 %v500, 21
      %v1218 = vpop.permute.xlu0 %1217
      %1219 = vrot.lane.b32.xlu0 %v502, 21
      %v1220 = vpop.permute.xlu0 %1219
      %1221 = vrot.lane.b32.xlu0 %v505, 21
      %v1222 = vpop.permute.xlu0 %1221
      %1223 = vrot.lane.b32.xlu0 %v507, 21
      %v1224 = vpop.permute.xlu0 %1223
      %1225 = vrot.lane.b32.xlu0 %v510, 21
      %v1226 = vpop.permute.xlu0 %1225
      %1227 = vrot.lane.b32.xlu0 %v512, 21
      %v1228 = vpop.permute.xlu0 %1227
      %1229 = vrot.lane.b32.xlu0 %v515, 21
      %v1230 = vpop.permute.xlu0 %1229
      %1231 = vrot.lane.b32.xlu0 %v517, 21
      %v1232 = vpop.permute.xlu0 %1231
      %1233 = vrot.lane.b32.xlu0 %v520, 21
      %v1234 = vpop.permute.xlu0 %1233
      %1235 = vrot.lane.b32.xlu0 %v522, 21
      %v1236 = vpop.permute.xlu0 %1235
      %1237 = vrot.lane.b32.xlu0 %v525, 21
      %v1238 = vpop.permute.xlu0 %1237
      %1239 = vrot.lane.b32.xlu0 %v527, 21
      %v1240 = vpop.permute.xlu0 %1239
      %1241 = vrot.lane.b32.xlu0 %v530, 21
      %v1242 = vpop.permute.xlu0 %1241
      %1243 = vrot.lane.b32.xlu0 %v532, 21
      %v1244 = vpop.permute.xlu0 %1243
      %1245 = vrot.lane.b32.xlu0 %v535, 21
      %v1246 = vpop.permute.xlu0 %1245
      %1247 = vrot.lane.b32.xlu0 %v537, 21
      %v1248 = vpop.permute.xlu0 %1247
      %1249 = vrot.lane.b32.xlu0 %v540, 21
      %v1250 = vpop.permute.xlu0 %1249
      %1251 = vrot.lane.b32.xlu0 %v542, 21
      %v1252 = vpop.permute.xlu0 %1251
      %1253 = vrot.lane.b32.xlu0 %v462, 21
      %v1254 = vpop.permute.xlu0 %1253
      %1286 = vrot.lane.b32.xlu0 %v553, 24
      %v1287 = vpop.permute.xlu0 %1286
      %1288 = vrot.lane.b32.xlu0 %v555, 24
      %v1289 = vpop.permute.xlu0 %1288
      %1290 = vrot.lane.b32.xlu0 %v558, 24
      %v1291 = vpop.permute.xlu0 %1290
      %1292 = vrot.lane.b32.xlu0 %v560, 24
      %v1293 = vpop.permute.xlu0 %1292
      %1294 = vrot.lane.b32.xlu0 %v563, 24
      %v1295 = vpop.permute.xlu0 %1294
      %1296 = vrot.lane.b32.xlu0 %v565, 24
      %v1297 = vpop.permute.xlu0 %1296
      %1298 = vrot.lane.b32.xlu0 %v568, 24
      %v1299 = vpop.permute.xlu0 %1298
      %1300 = vrot.lane.b32.xlu0 %v570, 24
      %v1301 = vpop.permute.xlu0 %1300
      %1302 = vrot.lane.b32.xlu0 %v573, 24
      %v1303 = vpop.permute.xlu0 %1302
      %1304 = vrot.lane.b32.xlu0 %v575, 24
      %v1305 = vpop.permute.xlu0 %1304
      %1306 = vrot.lane.b32.xlu0 %v578, 24
      %v1307 = vpop.permute.xlu0 %1306
      %1308 = vrot.lane.b32.xlu0 %v580, 24
      %v1309 = vpop.permute.xlu0 %1308
      %1310 = vrot.lane.b32.xlu0 %v583, 24
      %v1311 = vpop.permute.xlu0 %1310
      %1312 = vrot.lane.b32.xlu0 %v585, 24
      %v1313 = vpop.permute.xlu0 %1312
      %1314 = vrot.lane.b32.xlu0 %v588, 24
      %v1315 = vpop.permute.xlu0 %1314
      %1316 = vrot.lane.b32.xlu0 %v590, 24
      %v1317 = vpop.permute.xlu0 %1316
      %1318 = vrot.lane.b32.xlu0 %v593, 24
      %v1319 = vpop.permute.xlu0 %1318
      %1320 = vrot.lane.b32.xlu0 %v595, 24
      %v1321 = vpop.permute.xlu0 %1320
      %1322 = vrot.lane.b32.xlu0 %v598, 24
      %v1323 = vpop.permute.xlu0 %1322
      %1324 = vrot.lane.b32.xlu0 %v600, 24
      %v1325 = vpop.permute.xlu0 %1324
      %1326 = vrot.lane.b32.xlu0 %v603, 24
      %v1327 = vpop.permute.xlu0 %1326
      %1328 = vrot.lane.b32.xlu0 %v605, 24
      %v1329 = vpop.permute.xlu0 %1328
      %1330 = vrot.lane.b32.xlu0 %v608, 24
      %v1331 = vpop.permute.xlu0 %1330
      %1332 = vrot.lane.b32.xlu0 %v610, 24
      %v1333 = vpop.permute.xlu0 %1332
      %1334 = vrot.lane.b32.xlu0 %v613, 24
      %v1335 = vpop.permute.xlu0 %1334
      %1336 = vrot.lane.b32.xlu0 %v615, 24
      %v1337 = vpop.permute.xlu0 %1336
      %1338 = vrot.lane.b32.xlu0 %v618, 24
      %v1339 = vpop.permute.xlu0 %1338
      %1340 = vrot.lane.b32.xlu0 %v620, 24
      %v1341 = vpop.permute.xlu0 %1340
      %1342 = vrot.lane.b32.xlu0 %v623, 24
      %v1343 = vpop.permute.xlu0 %1342
      %1344 = vrot.lane.b32.xlu0 %v625, 24
      %v1345 = vpop.permute.xlu0 %1344
      %1346 = vrot.lane.b32.xlu0 %v545, 24
      %v1347 = vpop.permute.xlu0 %1346
      %vm1379 = vcmask 23552
      %v1380 = vsel %vm1379, 0.0, %v627
      %v1381 = vsel %vm1379, %v391, %v629
      %v1382 = vsel %vm1379, %v298, %v631
      %v1383 = vsel %vm1379, %v392, %v633
      %v1384 = vsel %vm1379, %v301, %v635
      %v1385 = vsel %vm1379, %v393, %v637
      %v1386 = vsel %vm1379, %v304, %v639
      %v1387 = vsel %vm1379, %v394, %v641
      %v1388 = vsel %vm1379, %v307, %v643
      %v1389 = vsel %vm1379, %v395, %v645
      %v1390 = vsel %vm1379, %v310, %v647
      %v1391 = vsel %vm1379, %v396, %v649
      %v1392 = vsel %vm1379, %v313, %v651
      %v1393 = vsel %vm1379, %v397, %v653
      %v1394 = vsel %vm1379, %v316, %v655
      %v1395 = vsel %vm1379, %v398, %v657
      %v1396 = vsel %vm1379, %v319, %v659
      %v1397 = vsel %vm1379, %v399, %v661
      %v1398 = vsel %vm1379, %v322, %v663
      %v1399 = vsel %vm1379, %v400, %v665
      %v1400 = vsel %vm1379, %v325, %v667
      %v1401 = vsel %vm1379, %v401, %v669
      %v1402 = vsel %vm1379, %v328, %v671
      %v1403 = vsel %vm1379, %v402, %v673
      %v1404 = vsel %vm1379, %v331, %v675
      %v1405 = vsel %vm1379, %v403, %v677
      %v1406 = vsel %vm1379, %v334, %v679
      %v1407 = vsel %vm1379, %v404, %v681
      %v1408 = vsel %vm1379, %v337, %v683
      %v1409 = vsel %vm1379, %v405, %v685
      %v1410 = vsel %vm1379, %v340, %v687
      %vm1411 = vcmask 48128
      %v1412 = vsel %vm1411, %v1380, %v720
      %v1413 = vsel %vm1411, %v1381, %v722
      %v1414 = vsel %vm1411, %v1382, %v724
      %v1415 = vsel %vm1411, %v1383, %v726
      %v1416 = vsel %vm1411, %v1384, %v728
      %v1417 = vsel %vm1411, %v1385, %v730
      %v1418 = vsel %vm1411, %v1386, %v732
      %v1419 = vsel %vm1411, %v1387, %v734
      %v1420 = vsel %vm1411, %v1388, %v736
      %v1421 = vsel %vm1411, %v1389, %v738
      %v1422 = vsel %vm1411, %v1390, %v740
      %v1423 = vsel %vm1411, %v1391, %v742
      %v1424 = vsel %vm1411, %v1392, %v744
      %v1425 = vsel %vm1411, %v1393, %v746
      %v1426 = vsel %vm1411, %v1394, %v748
      %v1427 = vsel %vm1411, %v1395, %v750
      %v1428 = vsel %vm1411, %v1396, %v752
      %v1429 = vsel %vm1411, %v1397, %v754
      %v1430 = vsel %vm1411, %v1398, %v756
      %v1431 = vsel %vm1411, %v1399, %v758
      %v1432 = vsel %vm1411, %v1400, %v760
      %v1433 = vsel %vm1411, %v1401, %v762
      %v1434 = vsel %vm1411, %v1402, %v764
      %v1435 = vsel %vm1411, %v1403, %v766
      %v1436 = vsel %vm1411, %v1404, %v768
      %v1437 = vsel %vm1411, %v1405, %v770
      %v1438 = vsel %vm1411, %v1406, %v772
      %v1439 = vsel %vm1411, %v1407, %v774
      %v1440 = vsel %vm1411, %v1408, %v776
      %v1441 = vsel %vm1411, %v1409, %v778
      %v1442 = vsel %vm1411, %v1410, %v780
      %vm1443 = vcmask 72704
      %v1444 = vsel %vm1443, %v1412, %v813
      %v1445 = vsel %vm1443, %v1412, %v815
      %v1446 = vsel %vm1443, %v1413, %v817
      %v1447 = vsel %vm1443, %v1414, %v819
      %v1448 = vsel %vm1443, %v1415, %v821
      %v1449 = vsel %vm1443, %v1416, %v823
      %v1450 = vsel %vm1443, %v1417, %v825
      %v1451 = vsel %vm1443, %v1418, %v827
      %v1452 = vsel %vm1443, %v1419, %v829
      %v1453 = vsel %vm1443, %v1420, %v831
      %v1454 = vsel %vm1443, %v1421, %v833
      %v1455 = vsel %vm1443, %v1422, %v835
      %v1456 = vsel %vm1443, %v1423, %v837
      %v1457 = vsel %vm1443, %v1424, %v839
      %v1458 = vsel %vm1443, %v1425, %v841
      %v1459 = vsel %vm1443, %v1426, %v843
      %v1460 = vsel %vm1443, %v1427, %v845
      %v1461 = vsel %vm1443, %v1428, %v847
      %v1462 = vsel %vm1443, %v1429, %v849
      %v1463 = vsel %vm1443, %v1430, %v851
      %v1464 = vsel %vm1443, %v1431, %v853
      %v1465 = vsel %vm1443, %v1432, %v855
      %v1466 = vsel %vm1443, %v1433, %v857
      %v1467 = vsel %vm1443, %v1434, %v859
      %v1468 = vsel %vm1443, %v1435, %v861
      %v1469 = vsel %vm1443, %v1436, %v863
      %v1470 = vsel %vm1443, %v1437, %v865
      %v1471 = vsel %vm1443, %v1438, %v867
      %v1472 = vsel %vm1443, %v1439, %v869
      %v1473 = vsel %vm1443, %v1440, %v871
      %v1474 = vsel %vm1443, %v1441, %v873
      %v1475 = vsel %vm1443, %v1442, %v875
      %vm1476 = vcmask 97280
      %v1477 = vsel %vm1476, %v1444, %v909
      %v1478 = vsel %vm1476, %v1445, %v911
      %v1479 = vsel %vm1476, %v1446, %v913
      %v1480 = vsel %vm1476, %v1447, %v915
      %v1481 = vsel %vm1476, %v1448, %v917
      %v1482 = vsel %vm1476, %v1449, %v919
      %v1483 = vsel %vm1476, %v1450, %v921
      %v1484 = vsel %vm1476, %v1451, %v923
      %v1485 = vsel %vm1476, %v1452, %v925
      %v1486 = vsel %vm1476, %v1453, %v927
      %v1487 = vsel %vm1476, %v1454, %v929
      %v1488 = vsel %vm1476, %v1455, %v931
      %v1489 = vsel %vm1476, %v1456, %v933
      %v1490 = vsel %vm1476, %v1457, %v935
      %v1491 = vsel %vm1476, %v1458, %v937
      %v1492 = vsel %vm1476, %v1459, %v939
      %v1493 = vsel %vm1476, %v1460, %v941
      %v1494 = vsel %vm1476, %v1461, %v943
      %v1495 = vsel %vm1476, %v1462, %v945
      %v1496 = vsel %vm1476, %v1463, %v947
      %v1497 = vsel %vm1476, %v1464, %v949
      %v1498 = vsel %vm1476, %v1465, %v951
      %v1499 = vsel %vm1476, %v1466, %v953
      %v1500 = vsel %vm1476, %v1467, %v955
      %v1501 = vsel %vm1476, %v1468, %v957
      %v1502 = vsel %vm1476, %v1469, %v959
      %v1503 = vsel %vm1476, %v1470, %v961
      %v1504 = vsel %vm1476, %v1471, %v963
      %v1505 = vsel %vm1476, %v1472, %v965
      %v1506 = vsel %vm1476, %v1473, %v967
      %v1507 = vsel %vm1476, %v1474, %v969
      %v1508 = vsel %vm1476, %v1475, %v971
      %vm1509 = vcmask 121856
      %v1510 = vsel %vm1509, %v1477, %v1005
      %v1511 = vsel %vm1509, %v1478, %v1007
      %v1512 = vsel %vm1509, %v1479, %v1009
      %v1513 = vsel %vm1509, %v1480, %v1011
      %v1514 = vsel %vm1509, %v1481, %v1013
      %v1515 = vsel %vm1509, %v1482, %v1015
      %v1516 = vsel %vm1509, %v1483, %v1017
      %v1517 = vsel %vm1509, %v1484, %v1019
      %v1518 = vsel %vm1509, %v1485, %v1021
      %v1519 = vsel %vm1509, %v1486, %v1023
      %v1520 = vsel %vm1509, %v1487, %v1025
      %v1521 = vsel %vm1509, %v1488, %v1027
      %v1522 = vsel %vm1509, %v1489, %v1029
      %v1523 = vsel %vm1509, %v1490, %v1031
      %v1524 = vsel %vm1509, %v1491, %v1033
      %v1525 = vsel %vm1509, %v1492, %v1035
      %v1526 = vsel %vm1509, %v1493, %v1037
      %v1527 = vsel %vm1509, %v1494, %v1039
      %v1528 = vsel %vm1509, %v1495, %v1041
      %v1529 = vsel %vm1509, %v1496, %v1043
      %v1530 = vsel %vm1509, %v1497, %v1045
      %v1531 = vsel %vm1509, %v1498, %v1047
      %v1532 = vsel %vm1509, %v1499, %v1049
      %v1533 = vsel %vm1509, %v1500, %v1051
      %v1534 = vsel %vm1509, %v1501, %v1053
      %v1535 = vsel %vm1509, %v1502, %v1055
      %v1536 = vsel %vm1509, %v1503, %v1057
      %v1537 = vsel %vm1509, %v1504, %v1059
      %v1538 = vsel %vm1509, %v1505, %v1061
      %v1539 = vsel %vm1509, %v1506, %v1063
      %v1540 = vsel %vm1509, %v1507, %v1065
      %v1541 = vsel %vm1509, %v1508, %v1067
      %vm1542 = vcmask 146432
      %v1543 = vsel %vm1542, %v1510, %v1101
      %v1544 = vsel %vm1542, %v1511, %v1103
      %v1545 = vsel %vm1542, %v1512, %v1105
      %v1546 = vsel %vm1542, %v1513, %v1107
      %v1547 = vsel %vm1542, %v1514, %v1109
      %v1548 = vsel %vm1542, %v1515, %v1111
      %v1549 = vsel %vm1542, %v1516, %v1113
      %v1550 = vsel %vm1542, %v1517, %v1115
      %v1551 = vsel %vm1542, %v1518, %v1117
      %v1552 = vsel %vm1542, %v1519, %v1119
      %v1553 = vsel %vm1542, %v1520, %v1121
      %v1554 = vsel %vm1542, %v1521, %v1123
      %v1555 = vsel %vm1542, %v1522, %v1125
      %v1556 = vsel %vm1542, %v1523, %v1127
      %v1557 = vsel %vm1542, %v1524, %v1129
      %v1558 = vsel %vm1542, %v1525, %v1131
      %v1559 = vsel %vm1542, %v1526, %v1133
      %v1560 = vsel %vm1542, %v1527, %v1135
      %v1561 = vsel %vm1542, %v1528, %v1137
      %v1562 = vsel %vm1542, %v1529, %v1139
      %v1563 = vsel %vm1542, %v1530, %v1141
      %v1564 = vsel %vm1542, %v1531, %v1143
      %v1565 = vsel %vm1542, %v1532, %v1145
      %v1566 = vsel %vm1542, %v1533, %v1147
      %v1567 = vsel %vm1542, %v1534, %v1149
      %v1568 = vsel %vm1542, %v1535, %v1151
      %v1569 = vsel %vm1542, %v1536, %v1153
      %v1570 = vsel %vm1542, %v1537, %v1155
      %v1571 = vsel %vm1542, %v1538, %v1157
      %v1572 = vsel %vm1542, %v1539, %v1159
      %v1573 = vsel %vm1542, %v1540, %v1161
      %v1574 = vsel %vm1542, %v1541, %v1161
      %vm1575 = vcmask 171008
      %v1576 = vsel %vm1575, %v1543, %v1194
      %v1577 = vsel %vm1575, %v1544, %v1196
      %v1578 = vsel %vm1575, %v1545, %v1198
      %v1579 = vsel %vm1575, %v1546, %v1200
      %v1580 = vsel %vm1575, %v1547, %v1202
      %v1581 = vsel %vm1575, %v1548, %v1204
      %v1582 = vsel %vm1575, %v1549, %v1206
      %v1583 = vsel %vm1575, %v1550, %v1208
      %v1584 = vsel %vm1575, %v1551, %v1210
      %v1585 = vsel %vm1575, %v1552, %v1212
      %v1586 = vsel %vm1575, %v1553, %v1214
      %v1587 = vsel %vm1575, %v1554, %v1216
      %v1588 = vsel %vm1575, %v1555, %v1218
      %v1589 = vsel %vm1575, %v1556, %v1220
      %v1590 = vsel %vm1575, %v1557, %v1222
      %v1591 = vsel %vm1575, %v1558, %v1224
      %v1592 = vsel %vm1575, %v1559, %v1226
      %v1593 = vsel %vm1575, %v1560, %v1228
      %v1594 = vsel %vm1575, %v1561, %v1230
      %v1595 = vsel %vm1575, %v1562, %v1232
      %v1596 = vsel %vm1575, %v1563, %v1234
      %v1597 = vsel %vm1575, %v1564, %v1236
      %v1598 = vsel %vm1575, %v1565, %v1238
      %v1599 = vsel %vm1575, %v1566, %v1240
      %v1600 = vsel %vm1575, %v1567, %v1242
      %v1601 = vsel %vm1575, %v1568, %v1244
      %v1602 = vsel %vm1575, %v1569, %v1246
      %v1603 = vsel %vm1575, %v1570, %v1248
      %v1604 = vsel %vm1575, %v1571, %v1250
      %v1605 = vsel %vm1575, %v1572, %v1252
      %v1606 = vsel %vm1575, %v1573, %v1254
      %v1607 = vsel %vm1575, %v1574, %v1254
      %vm1608 = vcmask 195584
      %v1609 = vsel %vm1608, %v1576, %v1287
      %v1610 = vsel %vm1608, %v1577, %v1289
      %v1611 = vsel %vm1608, %v1578, %v1291
      %v1612 = vsel %vm1608, %v1579, %v1293
      %v1613 = vsel %vm1608, %v1580, %v1295
      %v1614 = vsel %vm1608, %v1581, %v1297
      %v1615 = vsel %vm1608, %v1582, %v1299
      %v1616 = vsel %vm1608, %v1583, %v1301
      %v1617 = vsel %vm1608, %v1584, %v1303
      %v1618 = vsel %vm1608, %v1585, %v1305
      %v1619 = vsel %vm1608, %v1586, %v1307
      %v1620 = vsel %vm1608, %v1587, %v1309
      %v1621 = vsel %vm1608, %v1588, %v1311
      %v1622 = vsel %vm1608, %v1589, %v1313
      %v1623 = vsel %vm1608, %v1590, %v1315
      %v1624 = vsel %vm1608, %v1591, %v1317
      %v1625 = vsel %vm1608, %v1592, %v1319
      %v1626 = vsel %vm1608, %v1593, %v1321
      %v1627 = vsel %vm1608, %v1594, %v1323
      %v1628 = vsel %vm1608, %v1595, %v1325
      %v1629 = vsel %vm1608, %v1596, %v1327
      %v1630 = vsel %vm1608, %v1597, %v1329
      %v1631 = vsel %vm1608, %v1598, %v1331
      %v1632 = vsel %vm1608, %v1599, %v1333
      %v1633 = vsel %vm1608, %v1600, %v1335
      %v1634 = vsel %vm1608, %v1601, %v1337
      %v1635 = vsel %vm1608, %v1602, %v1339
      %v1636 = vsel %vm1608, %v1603, %v1341
      %v1637 = vsel %vm1608, %v1604, %v1343
      %v1638 = vsel %vm1608, %v1605, %v1345
      %v1639 = vsel %vm1608, %v1606, %v1347
      %v1640 = vsel %vm1608, %v1607, %v1347
      %v1641 = vpack.c.bf16 %v1610, %v1609
      %v1642 = vpack.c.bf16 %v1612, %v1611
      %v1643 = vpack.c.bf16 %v1614, %v1613
      %v1644 = vpack.c.bf16 %v1616, %v1615
      %v1645 = vpack.c.bf16 %v1618, %v1617
      %v1646 = vpack.c.bf16 %v1620, %v1619
      %v1647 = vpack.c.bf16 %v1622, %v1621
      %v1648 = vpack.c.bf16 %v1624, %v1623
      %v1649 = vpack.c.bf16 %v1626, %v1625
      %v1650 = vpack.c.bf16 %v1628, %v1627
      %v1651 = vpack.c.bf16 %v1630, %v1629
      %v1652 = vpack.c.bf16 %v1632, %v1631
      %v1653 = vpack.c.bf16 %v1634, %v1633
      %v1654 = vpack.c.bf16 %v1636, %v1635
      %v1655 = vpack.c.bf16 %v1638, %v1637
      %v1656 = vpack.c.bf16 %v1640, %v1639
      %v1661 = vunpack.c.l.b16 %v423
      %v1662 = vunpack.c.l.b16 %v424
      %v1663 = vunpack.c.l.b16 %v425
      %v1664 = vunpack.c.l.b16 %v426
      %v1665 = vpack.c.b16 %v1662, %v1661
      %v1666 = vpack.c.b16 %v1664, %v1663
      %vm1668 = vcmask 220160
      %v1670 = vsel %vm1668, %v1641, 0
      %v1673 = vsel %vm1668, %v1642, 0
      %v1676 = vsel %vm1668, %v1643, 0
      %v1679 = vsel %vm1668, %v1644, 0
      %v1682 = vsel %vm1668, %v1645, 0
      %v1685 = vsel %vm1668, %v1646, 0
      %v1688 = vsel %vm1668, %v1647, 0
      %v1691 = vsel %vm1668, %v1648, 0
      %v1694 = vsel %vm1668, %v1649, 0
      %v1697 = vsel %vm1668, %v1650, 0
      %v1700 = vsel %vm1668, %v1651, 0
      %v1703 = vsel %vm1668, %v1652, 0
      %v1706 = vsel %vm1668, %v1653, 0
      %v1709 = vsel %vm1668, %v1654, 0
      %v1712 = vsel %vm1668, %v1655, 0
      %v1715 = vsel %vm1668, %v1656, 0
      %vm1717 = vcmask 1044480
      %v1718 = vsel %vm1717, 4294967295, 65535
      %v1719 = vsel %vm543, %v1718, 0
      %v1721 = vand.u32 %v1666, %v1719
      %1723 = vmatpush.bf16.msra.mxu0 0
      %1724 = vmatpush.bf16.msra.mxu0 0
      %1725 = vmatpush.bf16.msra.mxu0 0
      %1726 = vmatpush.bf16.msra.mxu0 0
      %1727 = vmatpush.bf16.msra.mxu0 0
      %1728 = vmatpush.bf16.msra.mxu0 0
      %1729 = vmatpush.bf16.msra.mxu0 %v1721
      %1730 = vmatpush.bf16.msra.mxu0 %v1665
      %1731 = vmatmul.bf16.gmra.mxu0 %v1670
      %v1732 = vpop.f32.mrf.mxu0
      %v1733 = vadd.f32 0.0, %v1732
      %v1734 = vpop.f32.mrf.mxu0
      %v1735 = vadd.f32 0.0, %v1734
      %1736 = vmatmul.bf16.gmra.mxu0 %v1673
      %v1737 = vpop.f32.mrf.mxu0
      %v1738 = vadd.f32 0.0, %v1737
      %v1739 = vpop.f32.mrf.mxu0
      %v1740 = vadd.f32 0.0, %v1739
      %1741 = vmatmul.bf16.gmra.mxu0 %v1676
      %v1742 = vpop.f32.mrf.mxu0
      %v1743 = vadd.f32 0.0, %v1742
      %v1744 = vpop.f32.mrf.mxu0
      %v1745 = vadd.f32 0.0, %v1744
      %1746 = vmatmul.bf16.gmra.mxu0 %v1679
      %v1747 = vpop.f32.mrf.mxu0
      %v1748 = vadd.f32 0.0, %v1747
      %v1749 = vpop.f32.mrf.mxu0
      %v1750 = vadd.f32 0.0, %v1749
      %1751 = vmatmul.bf16.gmra.mxu0 %v1682
      %v1752 = vpop.f32.mrf.mxu0
      %v1753 = vadd.f32 0.0, %v1752
      %v1754 = vpop.f32.mrf.mxu0
      %v1755 = vadd.f32 0.0, %v1754
      %1756 = vmatmul.bf16.gmra.mxu0 %v1685
      %v1757 = vpop.f32.mrf.mxu0
      %v1758 = vadd.f32 0.0, %v1757
      %v1759 = vpop.f32.mrf.mxu0
      %v1760 = vadd.f32 0.0, %v1759
      %1761 = vmatmul.bf16.gmra.mxu0 %v1688
      %v1762 = vpop.f32.mrf.mxu0
      %v1763 = vadd.f32 0.0, %v1762
      %v1764 = vpop.f32.mrf.mxu0
      %v1765 = vadd.f32 0.0, %v1764
      %1766 = vmatmul.bf16.gmra.mxu0 %v1691
      %v1767 = vpop.f32.mrf.mxu0
      %v1768 = vadd.f32 0.0, %v1767
      %v1769 = vpop.f32.mrf.mxu0
      %v1770 = vadd.f32 0.0, %v1769
      %1771 = vmatmul.bf16.gmra.mxu0 %v1694
      %v1772 = vpop.f32.mrf.mxu0
      %v1773 = vadd.f32 0.0, %v1772
      %v1774 = vpop.f32.mrf.mxu0
      %v1775 = vadd.f32 0.0, %v1774
      %1776 = vmatmul.bf16.gmra.mxu0 %v1697
      %v1777 = vpop.f32.mrf.mxu0
      %v1778 = vadd.f32 0.0, %v1777
      %v1779 = vpop.f32.mrf.mxu0
      %v1780 = vadd.f32 0.0, %v1779
      %1781 = vmatmul.bf16.gmra.mxu0 %v1700
      %v1782 = vpop.f32.mrf.mxu0
      %v1783 = vadd.f32 0.0, %v1782
      %v1784 = vpop.f32.mrf.mxu0
      %v1785 = vadd.f32 0.0, %v1784
      %1786 = vmatmul.bf16.gmra.mxu0 %v1703
      %v1787 = vpop.f32.mrf.mxu0
      %v1788 = vadd.f32 0.0, %v1787
      %v1789 = vpop.f32.mrf.mxu0
      %v1790 = vadd.f32 0.0, %v1789
      %1791 = vmatmul.bf16.gmra.mxu0 %v1706
      %v1792 = vpop.f32.mrf.mxu0
      %v1793 = vadd.f32 0.0, %v1792
      %v1794 = vpop.f32.mrf.mxu0
      %v1795 = vadd.f32 0.0, %v1794
      %1796 = vmatmul.bf16.gmra.mxu0 %v1709
      %v1797 = vpop.f32.mrf.mxu0
      %v1798 = vadd.f32 0.0, %v1797
      %v1799 = vpop.f32.mrf.mxu0
      %v1800 = vadd.f32 0.0, %v1799
      %1801 = vmatmul.bf16.gmra.mxu0 %v1712
      %v1802 = vpop.f32.mrf.mxu0
      %v1803 = vadd.f32 0.0, %v1802
      %v1804 = vpop.f32.mrf.mxu0
      %v1805 = vadd.f32 0.0, %v1804
      %1806 = vmatmul.bf16.gmra.mxu0 %v1715
      %v1807 = vpop.f32.mrf.mxu0
      %v1808 = vadd.f32 0.0, %v1807
      %v1809 = vpop.f32.mrf.mxu0
      %v1810 = vadd.f32 0.0, %v1809
      %1811 = vdwg.mxu0
      %v1812 = vld [vmem:[%s2] sm:$0x1]
      %v1814 = vperm.slane %v1812, 0
      %v1816 = vmul.f32 %v1733, %v1814
      %v1817 = vmul.f32 %v1735, %v1814
      %v1818 = vmul.f32 %v1738, %v1814
      %v1819 = vmul.f32 %v1740, %v1814
      %v1820 = vmul.f32 %v1743, %v1814
      %v1821 = vmul.f32 %v1745, %v1814
      %v1822 = vmul.f32 %v1748, %v1814
      %v1823 = vmul.f32 %v1750, %v1814
      %v1824 = vmul.f32 %v1753, %v1814
      %v1825 = vmul.f32 %v1755, %v1814
      %v1826 = vmul.f32 %v1758, %v1814
      %v1827 = vmul.f32 %v1760, %v1814
      %v1828 = vmul.f32 %v1763, %v1814
      %v1829 = vmul.f32 %v1765, %v1814
      %v1830 = vmul.f32 %v1768, %v1814
      %v1831 = vmul.f32 %v1770, %v1814
      %v1832 = vmul.f32 %v1773, %v1814
      %v1833 = vmul.f32 %v1775, %v1814
      %v1834 = vmul.f32 %v1778, %v1814
      %v1835 = vmul.f32 %v1780, %v1814
      %v1836 = vmul.f32 %v1783, %v1814
      %v1837 = vmul.f32 %v1785, %v1814
      %v1838 = vmul.f32 %v1788, %v1814
      %v1839 = vmul.f32 %v1790, %v1814
      %v1840 = vmul.f32 %v1793, %v1814
      %v1841 = vmul.f32 %v1795, %v1814
      %v1842 = vmul.f32 %v1798, %v1814
      %v1843 = vmul.f32 %v1800, %v1814
      %v1844 = vmul.f32 %v1803, %v1814
      %v1845 = vmul.f32 %v1805, %v1814
      %v1846 = vmul.f32 %v1808, %v1814
      %v1847 = vmul.f32 %v1810, %v1814
      %v1848 = vld [vmem:[%s3] sm:$0x1]
      %v1850 = vperm.slane %v1848, 0
      %v1852 = vadd.f32 %v1816, %v1850
      %v1853 = vadd.f32 %v1817, %v1850
      %v1854 = vadd.f32 %v1818, %v1850
      %v1855 = vadd.f32 %v1819, %v1850
      %v1856 = vadd.f32 %v1820, %v1850
      %v1857 = vadd.f32 %v1821, %v1850
      %v1858 = vadd.f32 %v1822, %v1850
      %v1859 = vadd.f32 %v1823, %v1850
      %v1860 = vadd.f32 %v1824, %v1850
      %v1861 = vadd.f32 %v1825, %v1850
      %v1862 = vadd.f32 %v1826, %v1850
      %v1863 = vadd.f32 %v1827, %v1850
      %v1864 = vadd.f32 %v1828, %v1850
      %v1865 = vadd.f32 %v1829, %v1850
      %v1866 = vadd.f32 %v1830, %v1850
      %v1867 = vadd.f32 %v1831, %v1850
      %v1868 = vadd.f32 %v1832, %v1850
      %v1869 = vadd.f32 %v1833, %v1850
      %v1870 = vadd.f32 %v1834, %v1850
      %v1871 = vadd.f32 %v1835, %v1850
      %v1872 = vadd.f32 %v1836, %v1850
      %v1873 = vadd.f32 %v1837, %v1850
      %v1874 = vadd.f32 %v1838, %v1850
      %v1875 = vadd.f32 %v1839, %v1850
      %v1876 = vadd.f32 %v1840, %v1850
      %v1877 = vadd.f32 %v1841, %v1850
      %v1878 = vadd.f32 %v1842, %v1850
      %v1879 = vadd.f32 %v1843, %v1850
      %v1880 = vadd.f32 %v1844, %v1850
      %v1881 = vadd.f32 %v1845, %v1850
      %v1882 = vadd.f32 %v1846, %v1850
      %v1883 = vadd.f32 %v1847, %v1850
      %v1884 = vmax.f32 %v1852, 0.0
      %v1885 = vmax.f32 %v1853, 0.0
      %v1886 = vmax.f32 %v1854, 0.0
      %v1887 = vmax.f32 %v1855, 0.0
      %v1888 = vmax.f32 %v1856, 0.0
      %v1889 = vmax.f32 %v1857, 0.0
      %v1890 = vmax.f32 %v1858, 0.0
      %v1891 = vmax.f32 %v1859, 0.0
      %v1892 = vmax.f32 %v1860, 0.0
      %v1893 = vmax.f32 %v1861, 0.0
      %v1894 = vmax.f32 %v1862, 0.0
      %v1895 = vmax.f32 %v1863, 0.0
      %v1896 = vmax.f32 %v1864, 0.0
      %v1897 = vmax.f32 %v1865, 0.0
      %v1898 = vmax.f32 %v1866, 0.0
      %v1899 = vmax.f32 %v1867, 0.0
      %v1900 = vmax.f32 %v1868, 0.0
      %v1901 = vmax.f32 %v1869, 0.0
      %v1902 = vmax.f32 %v1870, 0.0
      %v1903 = vmax.f32 %v1871, 0.0
      %v1904 = vmax.f32 %v1872, 0.0
      %v1905 = vmax.f32 %v1873, 0.0
      %v1906 = vmax.f32 %v1874, 0.0
      %v1907 = vmax.f32 %v1875, 0.0
      %v1908 = vmax.f32 %v1876, 0.0
      %v1909 = vmax.f32 %v1877, 0.0
      %v1910 = vmax.f32 %v1878, 0.0
      %v1911 = vmax.f32 %v1879, 0.0
      %v1912 = vmax.f32 %v1880, 0.0
      %v1913 = vmax.f32 %v1881, 0.0
      %v1914 = vmax.f32 %v1882, 0.0
      %v1915 = vmax.f32 %v1883, 0.0
      %v1916 = vmax.f32 %v1884, 0.0
      %v1917 = vmax.f32 %v1885, 0.0
      %v1918 = vmax.f32 %v1886, 0.0
      %v1919 = vmax.f32 %v1887, 0.0
      %v1920 = vmax.f32 %v1888, 0.0
      %v1921 = vmax.f32 %v1889, 0.0
      %v1922 = vmax.f32 %v1890, 0.0
      %v1923 = vmax.f32 %v1891, 0.0
      %v1924 = vmax.f32 %v1892, 0.0
      %v1925 = vmax.f32 %v1893, 0.0
      %v1926 = vmax.f32 %v1894, 0.0
      %v1927 = vmax.f32 %v1895, 0.0
      %v1928 = vmax.f32 %v1896, 0.0
      %v1929 = vmax.f32 %v1897, 0.0
      %v1930 = vmax.f32 %v1898, 0.0
      %v1931 = vmax.f32 %v1899, 0.0
      %v1932 = vmax.f32 %v1900, 0.0
      %v1933 = vmax.f32 %v1901, 0.0
      %v1934 = vmax.f32 %v1902, 0.0
      %v1935 = vmax.f32 %v1903, 0.0
      %v1936 = vmax.f32 %v1904, 0.0
      %v1937 = vmax.f32 %v1905, 0.0
      %v1938 = vmax.f32 %v1906, 0.0
      %v1939 = vmax.f32 %v1907, 0.0
      %v1940 = vmax.f32 %v1908, 0.0
      %v1941 = vmax.f32 %v1909, 0.0
      %v1942 = vmax.f32 %v1910, 0.0
      %v1943 = vmax.f32 %v1911, 0.0
      %v1944 = vmax.f32 %v1912, 0.0
      %v1945 = vmax.f32 %v1913, 0.0
      %v1946 = vmax.f32 %v1914, 0.0
      %v1947 = vmax.f32 %v1915, 0.0
      %v1948 = vmin.f32 %v1916, 1.0
      %v1949 = vmin.f32 %v1917, 1.0
      %v1950 = vmin.f32 %v1918, 1.0
      %v1951 = vmin.f32 %v1919, 1.0
      %v1952 = vmin.f32 %v1920, 1.0
      %v1953 = vmin.f32 %v1921, 1.0
      %v1954 = vmin.f32 %v1922, 1.0
      %v1955 = vmin.f32 %v1923, 1.0
      %v1956 = vmin.f32 %v1924, 1.0
      %v1957 = vmin.f32 %v1925, 1.0
      %v1958 = vmin.f32 %v1926, 1.0
      %v1959 = vmin.f32 %v1927, 1.0
      %v1960 = vmin.f32 %v1928, 1.0
      %v1961 = vmin.f32 %v1929, 1.0
      %v1962 = vmin.f32 %v1930, 1.0
      %v1963 = vmin.f32 %v1931, 1.0
      %v1964 = vmin.f32 %v1932, 1.0
      %v1965 = vmin.f32 %v1933, 1.0
      %v1966 = vmin.f32 %v1934, 1.0
      %v1967 = vmin.f32 %v1935, 1.0
      %v1968 = vmin.f32 %v1936, 1.0
      %v1969 = vmin.f32 %v1937, 1.0
      %v1970 = vmin.f32 %v1938, 1.0
      %v1971 = vmin.f32 %v1939, 1.0
      %v1972 = vmin.f32 %v1940, 1.0
      %v1973 = vmin.f32 %v1941, 1.0
      %v1974 = vmin.f32 %v1942, 1.0
      %v1975 = vmin.f32 %v1943, 1.0
      %v1976 = vmin.f32 %v1944, 1.0
      %v1977 = vmin.f32 %v1945, 1.0
      %v1978 = vmin.f32 %v1946, 1.0
      %v1979 = vmin.f32 %v1947, 1.0
      %v1980 = vmul.f32 %v1948, 255.0
      %v1981 = vmul.f32 %v1949, 255.0
      %v1982 = vmul.f32 %v1950, 255.0
      %v1983 = vmul.f32 %v1951, 255.0
      %v1984 = vmul.f32 %v1952, 255.0
      %v1985 = vmul.f32 %v1953, 255.0
      %v1986 = vmul.f32 %v1954, 255.0
      %v1987 = vmul.f32 %v1955, 255.0
      %v1988 = vmul.f32 %v1956, 255.0
      %v1989 = vmul.f32 %v1957, 255.0
      %v1990 = vmul.f32 %v1958, 255.0
      %v1991 = vmul.f32 %v1959, 255.0
      %v1992 = vmul.f32 %v1960, 255.0
      %v1993 = vmul.f32 %v1961, 255.0
      %v1994 = vmul.f32 %v1962, 255.0
      %v1995 = vmul.f32 %v1963, 255.0
      %v1996 = vmul.f32 %v1964, 255.0
      %v1997 = vmul.f32 %v1965, 255.0
      %v1998 = vmul.f32 %v1966, 255.0
      %v1999 = vmul.f32 %v1967, 255.0
      %v2000 = vmul.f32 %v1968, 255.0
      %v2001 = vmul.f32 %v1969, 255.0
      %v2002 = vmul.f32 %v1970, 255.0
      %v2003 = vmul.f32 %v1971, 255.0
      %v2004 = vmul.f32 %v1972, 255.0
      %v2005 = vmul.f32 %v1973, 255.0
      %v2006 = vmul.f32 %v1974, 255.0
      %v2007 = vmul.f32 %v1975, 255.0
      %v2008 = vmul.f32 %v1976, 255.0
      %v2009 = vmul.f32 %v1977, 255.0
      %v2010 = vmul.f32 %v1978, 255.0
      %v2011 = vmul.f32 %v1979, 255.0
      %v2012 = vround.ne.pseudo %v1980
      %v2013 = vround.ne.pseudo %v1981
      %v2014 = vround.ne.pseudo %v1982
      %v2015 = vround.ne.pseudo %v1983
      %v2016 = vround.ne.pseudo %v1984
      %v2017 = vround.ne.pseudo %v1985
      %v2018 = vround.ne.pseudo %v1986
      %v2019 = vround.ne.pseudo %v1987
      %v2020 = vround.ne.pseudo %v1988
      %v2021 = vround.ne.pseudo %v1989
      %v2022 = vround.ne.pseudo %v1990
      %v2023 = vround.ne.pseudo %v1991
      %v2024 = vround.ne.pseudo %v1992
      %v2025 = vround.ne.pseudo %v1993
      %v2026 = vround.ne.pseudo %v1994
      %v2027 = vround.ne.pseudo %v1995
      %v2028 = vround.ne.pseudo %v1996
      %v2029 = vround.ne.pseudo %v1997
      %v2030 = vround.ne.pseudo %v1998
      %v2031 = vround.ne.pseudo %v1999
      %v2032 = vround.ne.pseudo %v2000
      %v2033 = vround.ne.pseudo %v2001
      %v2034 = vround.ne.pseudo %v2002
      %v2035 = vround.ne.pseudo %v2003
      %v2036 = vround.ne.pseudo %v2004
      %v2037 = vround.ne.pseudo %v2005
      %v2038 = vround.ne.pseudo %v2006
      %v2039 = vround.ne.pseudo %v2007
      %v2040 = vround.ne.pseudo %v2008
      %v2041 = vround.ne.pseudo %v2009
      %v2042 = vround.ne.pseudo %v2010
      %v2043 = vround.ne.pseudo %v2011
      %v2044 = vmul.f32 %v2012, 0.003921569
      %v2045 = vmul.f32 %v2013, 0.003921569
      %v2046 = vmul.f32 %v2014, 0.003921569
      %v2047 = vmul.f32 %v2015, 0.003921569
      %v2048 = vmul.f32 %v2016, 0.003921569
      %v2049 = vmul.f32 %v2017, 0.003921569
      %v2050 = vmul.f32 %v2018, 0.003921569
      %v2051 = vmul.f32 %v2019, 0.003921569
      %v2052 = vmul.f32 %v2020, 0.003921569
      %v2053 = vmul.f32 %v2021, 0.003921569
      %v2054 = vmul.f32 %v2022, 0.003921569
      %v2055 = vmul.f32 %v2023, 0.003921569
      %v2056 = vmul.f32 %v2024, 0.003921569
      %v2057 = vmul.f32 %v2025, 0.003921569
      %v2058 = vmul.f32 %v2026, 0.003921569
      %v2059 = vmul.f32 %v2027, 0.003921569
      %v2060 = vmul.f32 %v2028, 0.003921569
      %v2061 = vmul.f32 %v2029, 0.003921569
      %v2062 = vmul.f32 %v2030, 0.003921569
      %v2063 = vmul.f32 %v2031, 0.003921569
      %v2064 = vmul.f32 %v2032, 0.003921569
      %v2065 = vmul.f32 %v2033, 0.003921569
      %v2066 = vmul.f32 %v2034, 0.003921569
      %v2067 = vmul.f32 %v2035, 0.003921569
      %v2068 = vmul.f32 %v2036, 0.003921569
      %v2069 = vmul.f32 %v2037, 0.003921569
      %v2070 = vmul.f32 %v2038, 0.003921569
      %v2071 = vmul.f32 %v2039, 0.003921569
      %v2072 = vmul.f32 %v2040, 0.003921569
      %v2073 = vmul.f32 %v2041, 0.003921569
      %v2074 = vmul.f32 %v2042, 0.003921569
      %v2075 = vmul.f32 %v2043, 0.003921569
      %v2108 = vrot.slane %v2044, 7
      %v2109 = vrot.slane %v2045, 7
      %v2110 = vsel %vm295, %v2108, %v2109
      %v2111 = vrot.slane %v2046, 7
      %v2112 = vrot.slane %v2047, 7
      %v2113 = vsel %vm295, %v2111, %v2112
      %v2114 = vrot.slane %v2048, 7
      %v2115 = vrot.slane %v2049, 7
      %v2116 = vsel %vm295, %v2114, %v2115
      %v2117 = vrot.slane %v2050, 7
      %v2118 = vrot.slane %v2051, 7
      %v2119 = vsel %vm295, %v2117, %v2118
      %v2120 = vrot.slane %v2052, 7
      %v2121 = vrot.slane %v2053, 7
      %v2122 = vsel %vm295, %v2120, %v2121
      %v2123 = vrot.slane %v2054, 7
      %v2124 = vrot.slane %v2055, 7
      %v2125 = vsel %vm295, %v2123, %v2124
      %v2126 = vrot.slane %v2056, 7
      %v2127 = vrot.slane %v2057, 7
      %v2128 = vsel %vm295, %v2126, %v2127
      %v2129 = vrot.slane %v2058, 7
      %v2130 = vrot.slane %v2059, 7
      %v2131 = vsel %vm295, %v2129, %v2130
      %v2132 = vrot.slane %v2060, 7
      %v2133 = vrot.slane %v2061, 7
      %v2134 = vsel %vm295, %v2132, %v2133
      %v2135 = vrot.slane %v2062, 7
      %v2136 = vrot.slane %v2063, 7
      %v2137 = vsel %vm295, %v2135, %v2136
      %v2138 = vrot.slane %v2064, 7
      %v2139 = vrot.slane %v2065, 7
      %v2140 = vsel %vm295, %v2138, %v2139
      %v2141 = vrot.slane %v2066, 7
      %v2142 = vrot.slane %v2067, 7
      %v2143 = vsel %vm295, %v2141, %v2142
      %v2144 = vrot.slane %v2068, 7
      %v2145 = vrot.slane %v2069, 7
      %v2146 = vsel %vm295, %v2144, %v2145
      %v2147 = vrot.slane %v2070, 7
      %v2148 = vrot.slane %v2071, 7
      %v2149 = vsel %vm295, %v2147, %v2148
      %v2150 = vrot.slane %v2072, 7
      %v2151 = vrot.slane %v2073, 7
      %v2152 = vsel %vm295, %v2150, %v2151
      %v2153 = vrot.slane %v2074, 7
      %v2154 = vrot.slane %v2075, 7
      %v2155 = vsel %vm295, %v2153, %v2154
      %v2204 = vsel %vm295, 0.0, %v2108
      %v2205 = vsel %vm295, 0.0, %v2111
      %v2206 = vsel %vm295, 0.0, %v2114
      %v2207 = vsel %vm295, 0.0, %v2117
      %v2208 = vsel %vm295, 0.0, %v2120
      %v2209 = vsel %vm295, 0.0, %v2123
      %v2210 = vsel %vm295, 0.0, %v2126
      %v2211 = vsel %vm295, 0.0, %v2129
      %v2212 = vsel %vm295, 0.0, %v2132
      %v2213 = vsel %vm295, 0.0, %v2135
      %v2214 = vsel %vm295, 0.0, %v2138
      %v2215 = vsel %vm295, 0.0, %v2141
      %v2216 = vsel %vm295, 0.0, %v2144
      %v2217 = vsel %vm295, 0.0, %v2147
      %v2218 = vsel %vm295, 0.0, %v2150
      %v2219 = vsel %vm295, 0.0, %v2153
      %v2220 = vsel %vm295, %v2109, 0.0
      %v2221 = vsel %vm295, %v2112, 0.0
      %v2222 = vsel %vm295, %v2115, 0.0
      %v2223 = vsel %vm295, %v2118, 0.0
      %v2224 = vsel %vm295, %v2121, 0.0
      %v2225 = vsel %vm295, %v2124, 0.0
      %v2226 = vsel %vm295, %v2127, 0.0
      %v2227 = vsel %vm295, %v2130, 0.0
      %v2228 = vsel %vm295, %v2133, 0.0
      %v2229 = vsel %vm295, %v2136, 0.0
      %v2230 = vsel %vm295, %v2139, 0.0
      %v2231 = vsel %vm295, %v2142, 0.0
      %v2232 = vsel %vm295, %v2145, 0.0
      %v2233 = vsel %vm295, %v2148, 0.0
      %v2234 = vsel %vm295, %v2151, 0.0
      %v2235 = vsel %vm295, %v2154, 0.0
      %v2236 = vpack.c.bf16 0.0, 0.0
      %v2237 = vpack.c.bf16 %v2204, %v2204
      %v2238 = vpack.c.bf16 %v2110, %v2110
      %v2239 = vpack.c.bf16 %v2220, %v2220
      %v2240 = vpack.c.bf16 %v2205, %v2205
      %v2241 = vpack.c.bf16 %v2113, %v2113
      %v2242 = vpack.c.bf16 %v2221, %v2221
      %v2243 = vpack.c.bf16 %v2206, %v2206
      %v2244 = vpack.c.bf16 %v2116, %v2116
      %v2245 = vpack.c.bf16 %v2222, %v2222
      %v2246 = vpack.c.bf16 %v2207, %v2207
      %v2247 = vpack.c.bf16 %v2119, %v2119
      %v2248 = vpack.c.bf16 %v2223, %v2223
      %v2249 = vpack.c.bf16 %v2208, %v2208
      %v2250 = vpack.c.bf16 %v2122, %v2122
      %v2251 = vpack.c.bf16 %v2224, %v2224
      %v2252 = vpack.c.bf16 %v2209, %v2209
      %v2253 = vpack.c.bf16 %v2125, %v2125
      %v2254 = vpack.c.bf16 %v2225, %v2225
      %v2255 = vpack.c.bf16 %v2210, %v2210
      %v2256 = vpack.c.bf16 %v2128, %v2128
      %v2257 = vpack.c.bf16 %v2226, %v2226
      %v2258 = vpack.c.bf16 %v2211, %v2211
      %v2259 = vpack.c.bf16 %v2131, %v2131
      %v2260 = vpack.c.bf16 %v2227, %v2227
      %v2261 = vpack.c.bf16 %v2212, %v2212
      %v2262 = vpack.c.bf16 %v2134, %v2134
      %v2263 = vpack.c.bf16 %v2228, %v2228
      %v2264 = vpack.c.bf16 %v2213, %v2213
      %v2265 = vpack.c.bf16 %v2137, %v2137
      %v2266 = vpack.c.bf16 %v2229, %v2229
      %v2267 = vpack.c.bf16 %v2214, %v2214
      %v2268 = vpack.c.bf16 %v2140, %v2140
      %v2269 = vpack.c.bf16 %v2230, %v2230
      %v2270 = vpack.c.bf16 %v2215, %v2215
      %v2271 = vpack.c.bf16 %v2143, %v2143
      %v2272 = vpack.c.bf16 %v2231, %v2231
      %v2273 = vpack.c.bf16 %v2216, %v2216
      %v2274 = vpack.c.bf16 %v2146, %v2146
      %v2275 = vpack.c.bf16 %v2232, %v2232
      %v2276 = vpack.c.bf16 %v2217, %v2217
      %v2277 = vpack.c.bf16 %v2149, %v2149
      %v2278 = vpack.c.bf16 %v2233, %v2233
      %v2279 = vpack.c.bf16 %v2218, %v2218
      %v2280 = vpack.c.bf16 %v2152, %v2152
      %v2281 = vpack.c.bf16 %v2234, %v2234
      %v2282 = vpack.c.bf16 %v2219, %v2219
      %v2283 = vpack.c.bf16 %v2155, %v2155
      %v2284 = vpack.c.bf16 %v2235, %v2235
      %vm2285 = vcmask 60416
      %2286 = vst.msk [vmem:[%s197] sm:$0xf] %vm2285, %v2236
      %2287 = vst.msk [vmem:[%s197 + $0x4] sm:$0xf] %vm2285, %v2236
      %vm2288 = vcmask 57344
      %2289 = vst.msk [vmem:[%s197 + $0x8] sm:$0x1] %vm2288, %v2236
      %2290 = vst.msk [vmem:[%s197 + $0xc] sm:$0xf] %vm2285, %v2237
      %2291 = vst.msk [vmem:[%s197 + $0x10] sm:$0xf] %vm2285, %v2238
      %2292 = vst.msk [vmem:[%s197 + $0x14] sm:$0x1] %vm2288, %v2239
      %2293 = vst.msk [vmem:[%s197 + $0x18] sm:$0xf] %vm2285, %v2240
      %2294 = vst.msk [vmem:[%s197 + $0x1c] sm:$0xf] %vm2285, %v2241
      %2295 = vst.msk [vmem:[%s197 + $0x20] sm:$0x1] %vm2288, %v2242
      %2296 = vst.msk [vmem:[%s197 + $0x24] sm:$0xf] %vm2285, %v2243
      %2297 = vst.msk [vmem:[%s197 + $0x28] sm:$0xf] %vm2285, %v2244
      %2298 = vst.msk [vmem:[%s197 + $0x2c] sm:$0x1] %vm2288, %v2245
      %2299 = vst.msk [vmem:[%s197 + $0x30] sm:$0xf] %vm2285, %v2246
      %2300 = vst.msk [vmem:[%s197 + $0x34] sm:$0xf] %vm2285, %v2247
      %2301 = vst.msk [vmem:[%s197 + $0x38] sm:$0x1] %vm2288, %v2248
      %2302 = vst.msk [vmem:[%s197 + $0x3c] sm:$0xf] %vm2285, %v2249
      %2303 = vst.msk [vmem:[%s197 + $0x40] sm:$0xf] %vm2285, %v2250
      %2304 = vst.msk [vmem:[%s197 + $0x44] sm:$0x1] %vm2288, %v2251
      %2305 = vst.msk [vmem:[%s197 + $0x48] sm:$0xf] %vm2285, %v2252
      %2306 = vst.msk [vmem:[%s197 + $0x4c] sm:$0xf] %vm2285, %v2253
      %2307 = vst.msk [vmem:[%s197 + $0x50] sm:$0x1] %vm2288, %v2254
      %2308 = vst.msk [vmem:[%s197 + $0x54] sm:$0xf] %vm2285, %v2255
      %2309 = vst.msk [vmem:[%s197 + $0x58] sm:$0xf] %vm2285, %v2256
      %2310 = vst.msk [vmem:[%s197 + $0x5c] sm:$0x1] %vm2288, %v2257
      %2311 = vst.msk [vmem:[%s197 + $0x60] sm:$0xf] %vm2285, %v2258
      %2312 = vst.msk [vmem:[%s197 + $0x64] sm:$0xf] %vm2285, %v2259
      %2313 = vst.msk [vmem:[%s197 + $0x68] sm:$0x1] %vm2288, %v2260
      %2314 = vst.msk [vmem:[%s197 + $0x6c] sm:$0xf] %vm2285, %v2261
      %2315 = vst.msk [vmem:[%s197 + $0x70] sm:$0xf] %vm2285, %v2262
      %2316 = vst.msk [vmem:[%s197 + $0x74] sm:$0x1] %vm2288, %v2263
      %2317 = vst.msk [vmem:[%s197 + $0x78] sm:$0xf] %vm2285, %v2264
      %2318 = vst.msk [vmem:[%s197 + $0x7c] sm:$0xf] %vm2285, %v2265
      %2319 = vst.msk [vmem:[%s197 + $0x80] sm:$0x1] %vm2288, %v2266
      %2320 = vst.msk [vmem:[%s197 + $0x84] sm:$0xf] %vm2285, %v2267
      %2321 = vst.msk [vmem:[%s197 + $0x88] sm:$0xf] %vm2285, %v2268
      %2322 = vst.msk [vmem:[%s197 + $0x8c] sm:$0x1] %vm2288, %v2269
      %2323 = vst.msk [vmem:[%s197 + $0x90] sm:$0xf] %vm2285, %v2270
      %2324 = vst.msk [vmem:[%s197 + $0x94] sm:$0xf] %vm2285, %v2271
      %2325 = vst.msk [vmem:[%s197 + $0x98] sm:$0x1] %vm2288, %v2272
      %2326 = vst.msk [vmem:[%s197 + $0x9c] sm:$0xf] %vm2285, %v2273
      %2327 = vst.msk [vmem:[%s197 + $0xa0] sm:$0xf] %vm2285, %v2274
      %2328 = vst.msk [vmem:[%s197 + $0xa4] sm:$0x1] %vm2288, %v2275
      %2329 = vst.msk [vmem:[%s197 + $0xa8] sm:$0xf] %vm2285, %v2276
      %2330 = vst.msk [vmem:[%s197 + $0xac] sm:$0xf] %vm2285, %v2277
      %2331 = vst.msk [vmem:[%s197 + $0xb0] sm:$0x1] %vm2288, %v2278
      %2332 = vst.msk [vmem:[%s197 + $0xb4] sm:$0xf] %vm2285, %v2279
      %2333 = vst.msk [vmem:[%s197 + $0xb8] sm:$0xf] %vm2285, %v2280
      %2334 = vst.msk [vmem:[%s197 + $0xbc] sm:$0x1] %vm2288, %v2281
      %2335 = vst.msk [vmem:[%s197 + $0xc0] sm:$0xf] %vm2285, %v2282
      %2336 = vst.msk [vmem:[%s197 + $0xc4] sm:$0xf] %vm2285, %v2283
      %2337 = vst.msk [vmem:[%s197 + $0xc8] sm:$0x1] %vm2288, %v2284
      %2338 = vst.msk [vmem:[%s197 + $0xcc] sm:$0xf] %vm2285, %v2236
      %2339 = vst.msk [vmem:[%s197 + $0xd0] sm:$0xf] %vm2285, %v2236
      %2340 = vst.msk [vmem:[%s197 + $0xd4] sm:$0x1] %vm2288, %v2236
      %p2341 = scmp.lt.s32.totalorder %s15, 1
      %s2342 = scalar_select %p2341, %s15, 1
      %s2343 = smul.addr %s2342, 54
      %s2344 = smul.addr %s2343, 4
      %s2345 = scalar_lea.vmem %s4, %s2344
      // Predicated region
      $region37: #{_lambda_.4} parent=35 // pred_check
        %p2346 = pneg %p122
      $region38: #{_lambda_.4} parent=35 // pred_check_branch
        %2348 = sbr.rel (%p2346) target = $region40
      $region39: #{_lambda_.4} parent=35 // pred_region
        _
      $region40: #{_lambda_.4} parent=35 // pred_fallthru
        _
    $region36: #{_lambda_.4} parent=5 // pred_fallthru
      _
    %p2349 = scmp.le.s32.totalorder 2, %s10
    // Predicated region
    $region41: #{_lambda_.4} parent=5 // pred_check
      %p2350 = pneg %p2349
    $region42: #{_lambda_.4} parent=5 // pred_check_branch
      %2352 = sbr.rel (%p2350) target = $region44
    $region43: #{_lambda_.4} parent=5 // pred_region
      %s2353 = ssub.s32 %s10, 2
      // Predicated region
      $region45: #{_lambda_.4} parent=43 // pred_check
        %p2354 = pneg %p128
      $region46: #{_lambda_.4} parent=43 // pred_check_branch
        %2356 = sbr.rel (%p2354) target = $region48
      $region47: #{_lambda_.4} parent=43 // pred_region
        %p2357 = scmp.lt.s32.totalorder %s16, 1
        %s2358 = scalar_select %p2357, %s16, 1
        %s2359 = smul.addr %s2358, 54
        %s2360 = smul.addr %s2359, 4
        %s2361 = scalar_lea.vmem %s4, %s2360
      $region48: #{_lambda_.4} parent=43 // pred_fallthru
        _
    $region44: #{_lambda_.4} parent=5 // pred_fallthru
      _
  $region6: #{_lambda_.4} parent=0 // loop_footer
    %s14 = sadd.s32 1, %s10
  $region7: #{_lambda_.4} parent=0 // loop_footer_branch
    %9 = sbr.rel target = $region3
  $region8: #{_lambda_.4} parent=0 // loop_exit
    _

// kernel: _lambda_.6
$region0: #{_lambda_.6}
  #allocation0 [shape = 'u32[]', space=smem, size = 0x4, offset = 0x4, fixed_abs, tag = 'smem constant byte address 0x4 - core index']
  #allocation1 [shape = 'u32[72,128]{1,0:T(1,128)}', space=vmem, size = 0x9000, scoped, tag = 'internal scratch']
  %s0 = inlined_call_operand.vmem [shape: bf16[2,4,9,9,8], index: 0, kind: input, shape index: {}]
  %s1 = inlined_call_operand.vmem [shape: bf16[72,16], index: 1, kind: input, shape index: {}]
  %s2 = inlined_call_operand.vmem [shape: f32[1,16], index: 2, kind: input, shape index: {}]
  %s3 = inlined_call_operand.vmem [shape: f32[1,16], index: 3, kind: input, shape index: {}]
  %s4 = inlined_call_operand.vmem [shape: bf16[144,16], index: 4, kind: input, shape index: {}]
  %s5 = inlined_call_operand.vmem [shape: f32[1,16], index: 5, kind: input, shape index: {}]
  %s6 = inlined_call_operand.vmem [shape: f32[1,16], index: 6, kind: input, shape index: {}]
  %s7 = inlined_call_operand.vmem [shape: bf16[8,16], index: 7, kind: input, shape index: {}]
  %s8 = inlined_call_operand.vmem [shape: f32[1,16], index: 8, kind: input, shape index: {}]
  %s9 = inlined_call_operand.vmem [shape: f32[1,16], index: 9, kind: input, shape index: {}]
  %s10 = inlined_call_operand.vmem [shape: bf16[2,10,10,16], index: 10, kind: output, shape index: {}]
  %s11 = sld [smem:[#allocation0]]
  $region73: #{_lambda_.6} parent=0
    _
  %s13 = ssub.s32 1, %s11
  %s14 = scalar_select 0, %s13, %s11
  loop: start=0, step=1, limit=4
  $region2: #{_lambda_.6} parent=0 // loop_pre_header
    _
  $region3: #{_lambda_.6} parent=0 // loop_header
    %s16 = sphi 0, %s20
    %p17 = scmp.ge.s32.totalorder %s16, 4
    %s26 = sphi 0, %s28
    %s29 = sphi 0, %s26
    %s30 = sphi 0, %s29
    %s46 = sphi 0, %s30
    %s50 = sphi 0, %s50
    %s52 = sphi 0, %s50
    %s53 = sphi 0, %s52
    %s67 = sphi 0, %s53
    %s71 = sphi 0, %s71
    %s73 = sphi 0, %s71
    %s74 = sphi 0, %s73
    %s88 = sphi 0, %s74
    %s92 = sphi 0, %s92
    %s94 = sphi 0, %s92
    %s95 = sphi 0, %s94
    %s109 = sphi 0, %s95
    %s113 = sphi 0, %s113
    %s115 = sphi 0, %s113
    %s116 = sphi 0, %s115
    %s130 = sphi 0, %s116
    %s134 = sphi 0, %s134
    %s136 = sphi 0, %s134
    %s137 = sphi 0, %s136
    %s151 = sphi 0, %s137
    %s155 = sphi 0, %s155
    %s157 = sphi 0, %s155
    %s158 = sphi 0, %s157
    %s172 = sphi 0, %s158
    %s176 = sphi 0, %s176
    %s178 = sphi 0, %s176
    %s179 = sphi 0, %s178
    %s193 = sphi 0, %s179
    %s197 = sphi 0, %s197
    %s199 = sphi 0, %s197
    %s200 = sphi 0, %s199
    %s214 = sphi 0, %s200
    %s218 = sphi 0, %s218
    %s220 = sphi 0, %s218
    %s221 = sphi 0, %s220
    %s235 = sphi 0, %s221
    %s241 = sphi 0, %s243
    %s244 = sphi 0, %s241
    %s245 = sphi 0, %s244
    %s261 = sphi 0, %s245
  $region4: #{_lambda_.6} parent=0 // loop_header_branch
    %19 = sbr.rel (%p17) target = $region8
  $region5: #{_lambda_.6} parent=0 // loop_body
    %s21 = ssub.s32 %s16, 1
    %s22 = ssub.s32 %s16, 2
    %s23 = sadd.s32 %s16, 1
    %s24 = ssub.s32 %s16, %s23
    %p25 = scmp.eq.s32.totalorder %s24, 0
    %s27 = sadd.s32 %s26, 1
    %s28 = scalar_select %p25, %s26, %s27
    %p31 = pneg %p25
    %p32 = scmp.eq.s32.totalorder %s16, 1
    %p33 = por %p31, %p32
    %p34 = scmp.ne.s32.totalorder %s26, %s29
    %p35 = scmp.eq.s32.totalorder %s16, 0
    %p36 = por %p34, %p35
    %p37 = scmp.ne.s32.totalorder %s26, %s29
    %p38 = scmp.eq.s32.totalorder %s21, 1
    %p39 = por %p37, %p38
    %p40 = scmp.ne.s32.totalorder %s29, %s30
    %p41 = scmp.eq.s32.totalorder %s21, 0
    %p42 = por %p40, %p41
    %p43 = scmp.ne.s32.totalorder %s29, %s30
    %p44 = scmp.eq.s32.totalorder %s22, 1
    %p45 = por %p43, %p44
    %p47 = scmp.ne.s32.totalorder %s30, %s46
    %p48 = scmp.eq.s32.totalorder %s22, 0
    %p49 = por %p47, %p48
    %s51 = sadd.s32 %s50, 1
    %p54 = scmp.eq.s32.totalorder %s16, 1
    %p55 = scmp.ne.s32.totalorder %s50, %s52
    %p56 = scmp.eq.s32.totalorder %s16, 0
    %p57 = por %p55, %p56
    %p58 = scmp.ne.s32.totalorder %s50, %s52
    %p59 = scmp.eq.s32.totalorder %s21, 1
    %p60 = por %p58, %p59
    %p61 = scmp.ne.s32.totalorder %s52, %s53
    %p62 = scmp.eq.s32.totalorder %s21, 0
    %p63 = por %p61, %p62
    %p64 = scmp.ne.s32.totalorder %s52, %s53
    %p65 = scmp.eq.s32.totalorder %s22, 1
    %p66 = por %p64, %p65
    %p68 = scmp.ne.s32.totalorder %s53, %s67
    %p69 = scmp.eq.s32.totalorder %s22, 0
    %p70 = por %p68, %p69
    %s72 = sadd.s32 %s71, 1
    %p75 = scmp.eq.s32.totalorder %s16, 1
    %p76 = scmp.ne.s32.totalorder %s71, %s73
    %p77 = scmp.eq.s32.totalorder %s16, 0
    %p78 = por %p76, %p77
    %p79 = scmp.ne.s32.totalorder %s71, %s73
    %p80 = scmp.eq.s32.totalorder %s21, 1
    %p81 = por %p79, %p80
    %p82 = scmp.ne.s32.totalorder %s73, %s74
    %p83 = scmp.eq.s32.totalorder %s21, 0
    %p84 = por %p82, %p83
    %p85 = scmp.ne.s32.totalorder %s73, %s74
    %p86 = scmp.eq.s32.totalorder %s22, 1
    %p87 = por %p85, %p86
    %p89 = scmp.ne.s32.totalorder %s74, %s88
    %p90 = scmp.eq.s32.totalorder %s22, 0
    %p91 = por %p89, %p90
    %s93 = sadd.s32 %s92, 1
    %p96 = scmp.eq.s32.totalorder %s16, 1
    %p97 = scmp.ne.s32.totalorder %s92, %s94
    %p98 = scmp.eq.s32.totalorder %s16, 0
    %p99 = por %p97, %p98
    %p100 = scmp.ne.s32.totalorder %s92, %s94
    %p101 = scmp.eq.s32.totalorder %s21, 1
    %p102 = por %p100, %p101
    %p103 = scmp.ne.s32.totalorder %s94, %s95
    %p104 = scmp.eq.s32.totalorder %s21, 0
    %p105 = por %p103, %p104
    %p106 = scmp.ne.s32.totalorder %s94, %s95
    %p107 = scmp.eq.s32.totalorder %s22, 1
    %p108 = por %p106, %p107
    %p110 = scmp.ne.s32.totalorder %s95, %s109
    %p111 = scmp.eq.s32.totalorder %s22, 0
    %p112 = por %p110, %p111
    %s114 = sadd.s32 %s113, 1
    %p117 = scmp.eq.s32.totalorder %s16, 1
    %p118 = scmp.ne.s32.totalorder %s113, %s115
    %p119 = scmp.eq.s32.totalorder %s16, 0
    %p120 = por %p118, %p119
    %p121 = scmp.ne.s32.totalorder %s113, %s115
    %p122 = scmp.eq.s32.totalorder %s21, 1
    %p123 = por %p121, %p122
    %p124 = scmp.ne.s32.totalorder %s115, %s116
    %p125 = scmp.eq.s32.totalorder %s21, 0
    %p126 = por %p124, %p125
    %p127 = scmp.ne.s32.totalorder %s115, %s116
    %p128 = scmp.eq.s32.totalorder %s22, 1
    %p129 = por %p127, %p128
    %p131 = scmp.ne.s32.totalorder %s116, %s130
    %p132 = scmp.eq.s32.totalorder %s22, 0
    %p133 = por %p131, %p132
    %s135 = sadd.s32 %s134, 1
    %p138 = scmp.eq.s32.totalorder %s16, 1
    %p139 = scmp.ne.s32.totalorder %s134, %s136
    %p140 = scmp.eq.s32.totalorder %s16, 0
    %p141 = por %p139, %p140
    %p142 = scmp.ne.s32.totalorder %s134, %s136
    %p143 = scmp.eq.s32.totalorder %s21, 1
    %p144 = por %p142, %p143
    %p145 = scmp.ne.s32.totalorder %s136, %s137
    %p146 = scmp.eq.s32.totalorder %s21, 0
    %p147 = por %p145, %p146
    %p148 = scmp.ne.s32.totalorder %s136, %s137
    %p149 = scmp.eq.s32.totalorder %s22, 1
    %p150 = por %p148, %p149
    %p152 = scmp.ne.s32.totalorder %s137, %s151
    %p153 = scmp.eq.s32.totalorder %s22, 0
    %p154 = por %p152, %p153
    %s156 = sadd.s32 %s155, 1
    %p159 = scmp.eq.s32.totalorder %s16, 1
    %p160 = scmp.ne.s32.totalorder %s155, %s157
    %p161 = scmp.eq.s32.totalorder %s16, 0
    %p162 = por %p160, %p161
    %p163 = scmp.ne.s32.totalorder %s155, %s157
    %p164 = scmp.eq.s32.totalorder %s21, 1
    %p165 = por %p163, %p164
    %p166 = scmp.ne.s32.totalorder %s157, %s158
    %p167 = scmp.eq.s32.totalorder %s21, 0
    %p168 = por %p166, %p167
    %p169 = scmp.ne.s32.totalorder %s157, %s158
    %p170 = scmp.eq.s32.totalorder %s22, 1
    %p171 = por %p169, %p170
    %p173 = scmp.ne.s32.totalorder %s158, %s172
    %p174 = scmp.eq.s32.totalorder %s22, 0
    %p175 = por %p173, %p174
    %s177 = sadd.s32 %s176, 1
    %p180 = scmp.eq.s32.totalorder %s16, 1
    %p181 = scmp.ne.s32.totalorder %s176, %s178
    %p182 = scmp.eq.s32.totalorder %s16, 0
    %p183 = por %p181, %p182
    %p184 = scmp.ne.s32.totalorder %s176, %s178
    %p185 = scmp.eq.s32.totalorder %s21, 1
    %p186 = por %p184, %p185
    %p187 = scmp.ne.s32.totalorder %s178, %s179
    %p188 = scmp.eq.s32.totalorder %s21, 0
    %p189 = por %p187, %p188
    %p190 = scmp.ne.s32.totalorder %s178, %s179
    %p191 = scmp.eq.s32.totalorder %s22, 1
    %p192 = por %p190, %p191
    %p194 = scmp.ne.s32.totalorder %s179, %s193
    %p195 = scmp.eq.s32.totalorder %s22, 0
    %p196 = por %p194, %p195
    %s198 = sadd.s32 %s197, 1
    %p201 = scmp.eq.s32.totalorder %s16, 1
    %p202 = scmp.ne.s32.totalorder %s197, %s199
    %p203 = scmp.eq.s32.totalorder %s16, 0
    %p204 = por %p202, %p203
    %p205 = scmp.ne.s32.totalorder %s197, %s199
    %p206 = scmp.eq.s32.totalorder %s21, 1
    %p207 = por %p205, %p206
    %p208 = scmp.ne.s32.totalorder %s199, %s200
    %p209 = scmp.eq.s32.totalorder %s21, 0
    %p210 = por %p208, %p209
    %p211 = scmp.ne.s32.totalorder %s199, %s200
    %p212 = scmp.eq.s32.totalorder %s22, 1
    %p213 = por %p211, %p212
    %p215 = scmp.ne.s32.totalorder %s200, %s214
    %p216 = scmp.eq.s32.totalorder %s22, 0
    %p217 = por %p215, %p216
    %s219 = sadd.s32 %s218, 1
    %p222 = scmp.eq.s32.totalorder %s16, 1
    %p223 = scmp.ne.s32.totalorder %s218, %s220
    %p224 = scmp.eq.s32.totalorder %s16, 0
    %p225 = por %p223, %p224
    %p226 = scmp.ne.s32.totalorder %s218, %s220
    %p227 = scmp.eq.s32.totalorder %s21, 1
    %p228 = por %p226, %p227
    %p229 = scmp.ne.s32.totalorder %s220, %s221
    %p230 = scmp.eq.s32.totalorder %s21, 0
    %p231 = por %p229, %p230
    %p232 = scmp.ne.s32.totalorder %s220, %s221
    %p233 = scmp.eq.s32.totalorder %s22, 1
    %p234 = por %p232, %p233
    %p236 = scmp.ne.s32.totalorder %s221, %s235
    %p237 = scmp.eq.s32.totalorder %s22, 0
    %p238 = por %p236, %p237
    %s239 = ssub.s32 %s16, %s23
    %p240 = scmp.eq.s32.totalorder %s239, 0
    %s242 = sadd.s32 %s241, 1
    %s243 = scalar_select %p240, %s241, %s242
    %p246 = pneg %p240
    %p247 = scmp.eq.s32.totalorder %s16, 1
    %p248 = por %p246, %p247
    %p249 = scmp.ne.s32.totalorder %s241, %s244
    %p250 = scmp.eq.s32.totalorder %s16, 0
    %p251 = por %p249, %p250
    %p252 = scmp.ne.s32.totalorder %s241, %s244
    %p253 = scmp.eq.s32.totalorder %s21, 1
    %p254 = por %p252, %p253
    %p255 = scmp.ne.s32.totalorder %s244, %s245
    %p256 = scmp.eq.s32.totalorder %s21, 0
    %p257 = por %p255, %p256
    %p258 = scmp.ne.s32.totalorder %s244, %s245
    %p259 = scmp.eq.s32.totalorder %s22, 1
    %p260 = por %p258, %p259
    %p262 = scmp.ne.s32.totalorder %s245, %s261
    %p263 = scmp.eq.s32.totalorder %s22, 0
    %p264 = por %p262, %p263
    %p265 = scmp.le.s32.totalorder 1, %s16
    %p266 = scmp.lt.s32.totalorder %s16, 3
    %p267 = pnand %p265, %p266
    %p268 = pneg %p267
    // Predicated region
    $region9: #{_lambda_.6} parent=5 // pred_check
      _
    $region10: #{_lambda_.6} parent=5 // pred_check_branch
      %270 = sbr.rel (%p267) target = $region12
    $region11: #{_lambda_.6} parent=5 // pred_region
      %s271 = ssub.s32 %s16, 1
      // Predicated region
      $region13: #{_lambda_.6} parent=11 // pred_check
        %p272 = pneg %p63
      $region14: #{_lambda_.6} parent=11 // pred_check_branch
        %274 = sbr.rel (%p272) target = $region16
      $region15: #{_lambda_.6} parent=11 // pred_region
        _
      $region16: #{_lambda_.6} parent=11 // pred_fallthru
        _
      // Predicated region
      $region17: #{_lambda_.6} parent=11 // pred_check
        %p275 = pneg %p84
      $region18: #{_lambda_.6} parent=11 // pred_check_branch
        %277 = sbr.rel (%p275) target = $region20
      $region19: #{_lambda_.6} parent=11 // pred_region
        _
      $region20: #{_lambda_.6} parent=11 // pred_fallthru
        _
      // Predicated region
      $region21: #{_lambda_.6} parent=11 // pred_check
        %p278 = pneg %p105
      $region22: #{_lambda_.6} parent=11 // pred_check_branch
        %280 = sbr.rel (%p278) target = $region24
      $region23: #{_lambda_.6} parent=11 // pred_region
        _
      $region24: #{_lambda_.6} parent=11 // pred_fallthru
        _
      // Predicated region
      $region25: #{_lambda_.6} parent=11 // pred_check
        %p281 = pneg %p126
      $region26: #{_lambda_.6} parent=11 // pred_check_branch
        %283 = sbr.rel (%p281) target = $region28
      $region27: #{_lambda_.6} parent=11 // pred_region
        _
      $region28: #{_lambda_.6} parent=11 // pred_fallthru
        _
      // Predicated region
      $region29: #{_lambda_.6} parent=11 // pred_check
        %p284 = pneg %p147
      $region30: #{_lambda_.6} parent=11 // pred_check_branch
        %286 = sbr.rel (%p284) target = $region32
      $region31: #{_lambda_.6} parent=11 // pred_region
        _
      $region32: #{_lambda_.6} parent=11 // pred_fallthru
        _
      // Predicated region
      $region33: #{_lambda_.6} parent=11 // pred_check
        %p287 = pneg %p168
      $region34: #{_lambda_.6} parent=11 // pred_check_branch
        %289 = sbr.rel (%p287) target = $region36
      $region35: #{_lambda_.6} parent=11 // pred_region
        _
      $region36: #{_lambda_.6} parent=11 // pred_fallthru
        _
      // Predicated region
      $region37: #{_lambda_.6} parent=11 // pred_check
        %p290 = pneg %p189
      $region38: #{_lambda_.6} parent=11 // pred_check_branch
        %292 = sbr.rel (%p290) target = $region40
      $region39: #{_lambda_.6} parent=11 // pred_region
        _
      $region40: #{_lambda_.6} parent=11 // pred_fallthru
        _
      // Predicated region
      $region41: #{_lambda_.6} parent=11 // pred_check
        %p293 = pneg %p210
      $region42: #{_lambda_.6} parent=11 // pred_check_branch
        %295 = sbr.rel (%p293) target = $region44
      $region43: #{_lambda_.6} parent=11 // pred_region
        _
      $region44: #{_lambda_.6} parent=11 // pred_fallthru
        _
      // Predicated region
      $region45: #{_lambda_.6} parent=11 // pred_check
        %p296 = pneg %p231
      $region46: #{_lambda_.6} parent=11 // pred_check_branch
        %298 = sbr.rel (%p296) target = $region48
      $region47: #{_lambda_.6} parent=11 // pred_region
        _
      $region48: #{_lambda_.6} parent=11 // pred_fallthru
        _
    $region12: #{_lambda_.6} parent=5 // pred_fallthru
      _
    %p299 = scmp.lt.s32.totalorder %s16, 2
    // Predicated region
    $region49: #{_lambda_.6} parent=5 // pred_check
      %p300 = pneg %p299
    $region50: #{_lambda_.6} parent=5 // pred_check_branch
      %302 = sbr.rel (%p300) target = $region52
    $region51: #{_lambda_.6} parent=5 // pred_region
      // Predicated region
      $region53: #{_lambda_.6} parent=51 // pred_check
        %p303 = pneg %p36
      $region54: #{_lambda_.6} parent=51 // pred_check_branch
        %305 = sbr.rel (%p303) target = $region56
      $region55: #{_lambda_.6} parent=51 // pred_region
        %p306 = scmp.lt.s32.totalorder %s16, 1
        %s307 = scalar_select %p306, %s16, 1
        %s308 = smul.addr %s307, 72
        %s309 = smul.addr %s308, 4
        %s310 = scalar_lea.vmem %s0, %s309
      $region56: #{_lambda_.6} parent=51 // pred_fallthru
        _
    $region52: #{_lambda_.6} parent=5 // pred_fallthru
      _
    %p311 = scmp.le.s32.totalorder 1, %s16
    %p312 = scmp.lt.s32.totalorder %s16, 3
    %p313 = pnand %p311, %p312
    %p314 = pneg %p313
    // Predicated region
    $region57: #{_lambda_.6} parent=5 // pred_check
      _
    $region58: #{_lambda_.6} parent=5 // pred_check_branch
      %316 = sbr.rel (%p313) target = $region60
    $region59: #{_lambda_.6} parent=5 // pred_region
      %s317 = ssub.s32 %s16, 1
      %p318 = scmp.lt.s32.totalorder %s21, 1
      %s319 = scalar_select %p318, %s21, 1
      %s320 = smul.addr %s319, 72
      %s321 = smul.addr %s320, 4
      %s322 = scalar_lea.vmem %s0, %s321
      %p323 = pneg %p42
      %p324 = pneg %p39
      %p325 = pneg %p63
      %p326 = pneg %p60
      %p327 = pneg %p84
      %p328 = pneg %p81
      %p329 = pneg %p105
      %p330 = pneg %p102
      %p331 = pneg %p126
      %p332 = pneg %p123
      %p333 = pneg %p147
      %p334 = pneg %p144
      %p335 = pneg %p168
      %p336 = pneg %p165
      %p337 = pneg %p189
      %p338 = pneg %p186
      %p339 = pneg %p210
      %p340 = pneg %p207
      %p341 = pneg %p231
      %p342 = pneg %p228
      %p343 = pneg %p257
      %p344 = pneg %p254
      %p345 = scmp.lt.s32.totalorder %s21, 1
      %s346 = scalar_select %p345, %s21, 1
      %s347 = smul.addr %s346, 20
      %s348 = smul.addr %s347, 4
      %s349 = scalar_lea.vmem %s10, %s348
      %p350 = scmp.lt.s32.totalorder %s21, 1
      %s351 = scalar_select %p350, %s21, 1
      %s352 = smul.addr %s351, 72
      %s353 = smul.addr %s352, 4
      %s354 = scalar_lea.vmem %s0, %s353
      %p355 = scmp.lt.s32.totalorder %s21, 1
      %s356 = scalar_select %p355, %s21, 1
      %s357 = smul.addr %s356, 20
      %s358 = smul.addr %s357, 4
      %s359 = scalar_lea.vmem %s10, %s358
      %v361 = vld [vmem:[%s354] sm:$0xf]
      %v362 = vld [vmem:[%s354 + $0x4] sm:$0x1]
      %v363 = vld [vmem:[%s354 + $0x8] sm:$0xf]
      %v364 = vld [vmem:[%s354 + $0xc] sm:$0x1]
      %v365 = vld [vmem:[%s354 + $0x10] sm:$0xf]
      %v366 = vld [vmem:[%s354 + $0x14] sm:$0x1]
      %v367 = vld [vmem:[%s354 + $0x18] sm:$0xf]
      %v368 = vld [vmem:[%s354 + $0x1c] sm:$0x1]
      %v369 = vld [vmem:[%s354 + $0x20] sm:$0xf]
      %v370 = vld [vmem:[%s354 + $0x24] sm:$0x1]
      %v371 = vld [vmem:[%s354 + $0x28] sm:$0xf]
      %v372 = vld [vmem:[%s354 + $0x2c] sm:$0x1]
      %v373 = vld [vmem:[%s354 + $0x30] sm:$0xf]
      %v374 = vld [vmem:[%s354 + $0x34] sm:$0x1]
      %v375 = vld [vmem:[%s354 + $0x38] sm:$0xf]
      %v376 = vld [vmem:[%s354 + $0x3c] sm:$0x1]
      %v377 = vld [vmem:[%s354 + $0x40] sm:$0xf]
      %v378 = vld [vmem:[%s354 + $0x44] sm:$0x1]
      %v379 = vld [vmem:[%s354 + $0x48] sm:$0xf]
      %v380 = vld [vmem:[%s354 + $0x50] sm:$0xf]
      %v381 = vld [vmem:[%s354 + $0x58] sm:$0xf]
      %v382 = vld [vmem:[%s354 + $0x60] sm:$0xf]
      %v383 = vld [vmem:[%s354 + $0x68] sm:$0xf]
      %v384 = vld [vmem:[%s354 + $0x70] sm:$0xf]
      %v385 = vld [vmem:[%s354 + $0x78] sm:$0xf]
      %v386 = vld [vmem:[%s354 + $0x80] sm:$0xf]
      %v387 = vld [vmem:[%s354 + $0x88] sm:$0xf]
      %v388 = vld [vmem:[%s354 + $0x90] sm:$0xf]
      %v389 = vld [vmem:[%s354 + $0x94] sm:$0x1]
      %v390 = vld [vmem:[%s354 + $0x98] sm:$0xf]
      %v391 = vld [vmem:[%s354 + $0x9c] sm:$0x1]
      %v392 = vld [vmem:[%s354 + $0xa0] sm:$0xf]
      %v393 = vld [vmem:[%s354 + $0xa4] sm:$0x1]
      %v394 = vld [vmem:[%s354 + $0xa8] sm:$0xf]
      %v395 = vld [vmem:[%s354 + $0xac] sm:$0x1]
      %v396 = vld [vmem:[%s354 + $0xb0] sm:$0xf]
      %v397 = vld [vmem:[%s354 + $0xb4] sm:$0x1]
      %v398 = vld [vmem:[%s354 + $0xb8] sm:$0xf]
      %v399 = vld [vmem:[%s354 + $0xbc] sm:$0x1]
      %v400 = vld [vmem:[%s354 + $0xc0] sm:$0xf]
      %v401 = vld [vmem:[%s354 + $0xc4] sm:$0x1]
      %v402 = vld [vmem:[%s354 + $0xc8] sm:$0xf]
      %v403 = vld [vmem:[%s354 + $0xcc] sm:$0x1]
      %v404 = vld [vmem:[%s354 + $0xd8] sm:$0xf]
      %v405 = vld [vmem:[%s354 + $0xe0] sm:$0xf]
      %v406 = vld [vmem:[%s354 + $0xe8] sm:$0xf]
      %v407 = vld [vmem:[%s354 + $0xf0] sm:$0xf]
      %v408 = vld [vmem:[%s354 + $0xf8] sm:$0xf]
      %v409 = vld [vmem:[%s354 + $0x100] sm:$0xf]
      %v410 = vld [vmem:[%s354 + $0x108] sm:$0xf]
      %v411 = vld [vmem:[%s354 + $0x110] sm:$0xf]
      %v412 = vunpack.c.l.bf16 %v361
      %v413 = vunpack.c.l.bf16 %v362
      %v414 = vunpack.c.l.bf16 %v363
      %v415 = vunpack.c.l.bf16 %v364
      %v416 = vunpack.c.l.bf16 %v365
      %v417 = vunpack.c.l.bf16 %v366
      %v418 = vunpack.c.l.bf16 %v367
      %v419 = vunpack.c.l.bf16 %v368
      %v420 = vunpack.c.l.bf16 %v369
      %v421 = vunpack.c.l.bf16 %v370
      %v422 = vunpack.c.l.bf16 %v371
      %v423 = vunpack.c.l.bf16 %v372
      %v424 = vunpack.c.l.bf16 %v373
      %v425 = vunpack.c.l.bf16 %v374
      %v426 = vunpack.c.l.bf16 %v375
      %v427 = vunpack.c.l.bf16 %v376
      %v428 = vunpack.c.l.bf16 %v377
      %v429 = vunpack.c.l.bf16 %v378
      %v430 = vunpack.c.l.bf16 %v379
      %v431 = vunpack.c.l.bf16 %v380
      %v432 = vunpack.c.l.bf16 %v381
      %v433 = vunpack.c.l.bf16 %v382
      %v434 = vunpack.c.l.bf16 %v383
      %v435 = vunpack.c.l.bf16 %v384
      %v436 = vunpack.c.l.bf16 %v385
      %v437 = vunpack.c.l.bf16 %v386
      %v438 = vunpack.c.l.bf16 %v387
      %v439 = vunpack.c.l.bf16 %v388
      %v440 = vunpack.c.l.bf16 %v389
      %v441 = vunpack.c.l.bf16 %v390
      %v442 = vunpack.c.l.bf16 %v391
      %v443 = vunpack.c.l.bf16 %v392
      %v444 = vunpack.c.l.bf16 %v393
      %v445 = vunpack.c.l.bf16 %v394
      %v446 = vunpack.c.l.bf16 %v395
      %v447 = vunpack.c.l.bf16 %v396
      %v448 = vunpack.c.l.bf16 %v397
      %v449 = vunpack.c.l.bf16 %v398
      %v450 = vunpack.c.l.bf16 %v399
      %v451 = vunpack.c.l.bf16 %v400
      %v452 = vunpack.c.l.bf16 %v401
      %v453 = vunpack.c.l.bf16 %v402
      %v454 = vunpack.c.l.bf16 %v403
      %v455 = vunpack.c.l.bf16 %v404
      %v456 = vunpack.c.l.bf16 %v405
      %v457 = vunpack.c.l.bf16 %v406
      %v458 = vunpack.c.l.bf16 %v407
      %v459 = vunpack.c.l.bf16 %v408
      %v460 = vunpack.c.l.bf16 %v409
      %v461 = vunpack.c.l.bf16 %v410
      %v462 = vunpack.c.l.bf16 %v411
      %v463 = vld [vmem:[%s1] sm:$0xf]
      %v464 = vld [vmem:[%s1 + $0x4] sm:$0xf]
      %v465 = vld [vmem:[%s1 + $0x8] sm:$0xf]
      %v466 = vld [vmem:[%s1 + $0xc] sm:$0xf]
      %v467 = vld [vmem:[%s1 + $0x10] sm:$0xf]
      %v468 = vld [vmem:[%s1 + $0x14] sm:$0xf]
      %v469 = vld [vmem:[%s1 + $0x18] sm:$0xf]
      %v470 = vld [vmem:[%s1 + $0x1c] sm:$0xf]
      %v471 = vld [vmem:[%s1 + $0x20] sm:$0xf]
      %vm488 = vcmask 1046528
      %v489 = vrot.slane %v412, 1
      %v490 = vrot.slane %v413, 1
      %v491 = vsel %vm488, %v489, %v490
      %v492 = vrot.slane %v414, 1
      %v493 = vrot.slane %v415, 1
      %v494 = vsel %vm488, %v492, %v493
      %v495 = vrot.slane %v416, 1
      %v496 = vrot.slane %v417, 1
      %v497 = vsel %vm488, %v495, %v496
      %v498 = vrot.slane %v418, 1
      %v499 = vrot.slane %v419, 1
      %v500 = vsel %vm488, %v498, %v499
      %v501 = vrot.slane %v420, 1
      %v502 = vrot.slane %v421, 1
      %v503 = vsel %vm488, %v501, %v502
      %v504 = vrot.slane %v422, 1
      %v505 = vrot.slane %v423, 1
      %v506 = vsel %vm488, %v504, %v505
      %v507 = vrot.slane %v424, 1
      %v508 = vrot.slane %v425, 1
      %v509 = vsel %vm488, %v507, %v508
      %v510 = vrot.slane %v426, 1
      %v511 = vrot.slane %v427, 1
      %v512 = vsel %vm488, %v510, %v511
      %v529 = vrot.slane %v439, 1
      %v530 = vrot.slane %v440, 1
      %v531 = vsel %vm488, %v529, %v530
      %v532 = vrot.slane %v441, 1
      %v533 = vrot.slane %v442, 1
      %v534 = vsel %vm488, %v532, %v533
      %v535 = vrot.slane %v443, 1
      %v536 = vrot.slane %v444, 1
      %v537 = vsel %vm488, %v535, %v536
      %v538 = vrot.slane %v445, 1
      %v539 = vrot.slane %v446, 1
      %v540 = vsel %vm488, %v538, %v539
      %v541 = vrot.slane %v447, 1
      %v542 = vrot.slane %v448, 1
      %v543 = vsel %vm488, %v541, %v542
      %v544 = vrot.slane %v449, 1
      %v545 = vrot.slane %v450, 1
      %v546 = vsel %vm488, %v544, %v545
      %v547 = vrot.slane %v451, 1
      %v548 = vrot.slane %v452, 1
      %v549 = vsel %vm488, %v547, %v548
      %v550 = vrot.slane %v453, 1
      %v551 = vrot.slane %v454, 1
      %v552 = vsel %vm488, %v550, %v551
      %v555 = vrot.slane %v428, 1
      %v556 = vrot.slane %v429, 1
      %v557 = vsel %vm488, %v555, %v556
      %566 = vrot.lane.b32.xlu0 %v430, 8
      %v567 = vpop.permute.xlu0 %566
      %568 = vrot.lane.b32.xlu0 %v431, 8
      %v569 = vpop.permute.xlu0 %568
      %570 = vrot.lane.b32.xlu0 %v432, 8
      %v571 = vpop.permute.xlu0 %570
      %572 = vrot.lane.b32.xlu0 %v433, 8
      %v573 = vpop.permute.xlu0 %572
      %574 = vrot.lane.b32.xlu0 %v434, 8
      %v575 = vpop.permute.xlu0 %574
      %576 = vrot.lane.b32.xlu0 %v435, 8
      %v577 = vpop.permute.xlu0 %576
      %578 = vrot.lane.b32.xlu0 %v436, 8
      %v579 = vpop.permute.xlu0 %578
      %580 = vrot.lane.b32.xlu0 %v437, 8
      %v581 = vpop.permute.xlu0 %580
      %590 = vrot.lane.b32.xlu0 %v491, 16
      %v591 = vpop.permute.xlu0 %590
      %592 = vrot.lane.b32.xlu0 %v494, 16
      %v593 = vpop.permute.xlu0 %592
      %594 = vrot.lane.b32.xlu0 %v497, 16
      %v595 = vpop.permute.xlu0 %594
      %596 = vrot.lane.b32.xlu0 %v500, 16
      %v597 = vpop.permute.xlu0 %596
      %598 = vrot.lane.b32.xlu0 %v503, 16
      %v599 = vpop.permute.xlu0 %598
      %600 = vrot.lane.b32.xlu0 %v506, 16
      %v601 = vpop.permute.xlu0 %600
      %602 = vrot.lane.b32.xlu0 %v509, 16
      %v603 = vpop.permute.xlu0 %602
      %604 = vrot.lane.b32.xlu0 %v512, 16
      %v605 = vpop.permute.xlu0 %604
      %614 = vrot.lane.b32.xlu0 %v439, 24
      %v615 = vpop.permute.xlu0 %614
      %616 = vrot.lane.b32.xlu0 %v441, 24
      %v617 = vpop.permute.xlu0 %616
      %618 = vrot.lane.b32.xlu0 %v443, 24
      %v619 = vpop.permute.xlu0 %618
      %620 = vrot.lane.b32.xlu0 %v445, 24
      %v621 = vpop.permute.xlu0 %620
      %622 = vrot.lane.b32.xlu0 %v447, 24
      %v623 = vpop.permute.xlu0 %622
      %624 = vrot.lane.b32.xlu0 %v449, 24
      %v625 = vpop.permute.xlu0 %624
      %626 = vrot.lane.b32.xlu0 %v451, 24
      %v627 = vpop.permute.xlu0 %626
      %628 = vrot.lane.b32.xlu0 %v453, 24
      %v629 = vpop.permute.xlu0 %628
      %646 = vrot.lane.b32.xlu0 %v455, 32
      %v647 = vpop.permute.xlu0 %646
      %648 = vrot.lane.b32.xlu0 %v456, 32
      %v649 = vpop.permute.xlu0 %648
      %650 = vrot.lane.b32.xlu0 %v457, 32
      %v651 = vpop.permute.xlu0 %650
      %652 = vrot.lane.b32.xlu0 %v458, 32
      %v653 = vpop.permute.xlu0 %652
      %654 = vrot.lane.b32.xlu0 %v459, 32
      %v655 = vpop.permute.xlu0 %654
      %656 = vrot.lane.b32.xlu0 %v460, 32
      %v657 = vpop.permute.xlu0 %656
      %658 = vrot.lane.b32.xlu0 %v461, 32
      %v659 = vpop.permute.xlu0 %658
      %660 = vrot.lane.b32.xlu0 %v462, 32
      %v661 = vpop.permute.xlu0 %660
      %670 = vrot.lane.b32.xlu0 %v531, 40
      %v671 = vpop.permute.xlu0 %670
      %672 = vrot.lane.b32.xlu0 %v534, 40
      %v673 = vpop.permute.xlu0 %672
      %674 = vrot.lane.b32.xlu0 %v537, 40
      %v675 = vpop.permute.xlu0 %674
      %676 = vrot.lane.b32.xlu0 %v540, 40
      %v677 = vpop.permute.xlu0 %676
      %678 = vrot.lane.b32.xlu0 %v543, 40
      %v679 = vpop.permute.xlu0 %678
      %680 = vrot.lane.b32.xlu0 %v546, 40
      %v681 = vpop.permute.xlu0 %680
      %682 = vrot.lane.b32.xlu0 %v549, 40
      %v683 = vpop.permute.xlu0 %682
      %684 = vrot.lane.b32.xlu0 %v552, 40
      %v685 = vpop.permute.xlu0 %684
      %694 = vrot.lane.b32.xlu0 %v414, 48
      %v695 = vpop.permute.xlu0 %694
      %696 = vrot.lane.b32.xlu0 %v416, 48
      %v697 = vpop.permute.xlu0 %696
      %698 = vrot.lane.b32.xlu0 %v418, 48
      %v699 = vpop.permute.xlu0 %698
      %700 = vrot.lane.b32.xlu0 %v420, 48
      %v701 = vpop.permute.xlu0 %700
      %702 = vrot.lane.b32.xlu0 %v422, 48
      %v703 = vpop.permute.xlu0 %702
      %704 = vrot.lane.b32.xlu0 %v424, 48
      %v705 = vpop.permute.xlu0 %704
      %706 = vrot.lane.b32.xlu0 %v426, 48
      %v707 = vpop.permute.xlu0 %706
      %708 = vrot.lane.b32.xlu0 %v428, 48
      %v709 = vpop.permute.xlu0 %708
      %719 = vrot.lane.b32.xlu0 %v431, 56
      %v720 = vpop.permute.xlu0 %719
      %721 = vrot.lane.b32.xlu0 %v432, 56
      %v722 = vpop.permute.xlu0 %721
      %723 = vrot.lane.b32.xlu0 %v433, 56
      %v724 = vpop.permute.xlu0 %723
      %725 = vrot.lane.b32.xlu0 %v434, 56
      %v726 = vpop.permute.xlu0 %725
      %727 = vrot.lane.b32.xlu0 %v435, 56
      %v728 = vpop.permute.xlu0 %727
      %729 = vrot.lane.b32.xlu0 %v436, 56
      %v730 = vpop.permute.xlu0 %729
      %731 = vrot.lane.b32.xlu0 %v437, 56
      %v732 = vpop.permute.xlu0 %731
      %733 = vrot.lane.b32.xlu0 %v438, 56
      %v734 = vpop.permute.xlu0 %733
      %743 = vrot.lane.b32.xlu0 %v494, 64
      %v744 = vpop.permute.xlu0 %743
      %745 = vrot.lane.b32.xlu0 %v497, 64
      %v746 = vpop.permute.xlu0 %745
      %747 = vrot.lane.b32.xlu0 %v500, 64
      %v748 = vpop.permute.xlu0 %747
      %749 = vrot.lane.b32.xlu0 %v503, 64
      %v750 = vpop.permute.xlu0 %749
      %751 = vrot.lane.b32.xlu0 %v506, 64
      %v752 = vpop.permute.xlu0 %751
      %753 = vrot.lane.b32.xlu0 %v509, 64
      %v754 = vpop.permute.xlu0 %753
      %755 = vrot.lane.b32.xlu0 %v512, 64
      %v756 = vpop.permute.xlu0 %755
      %757 = vrot.lane.b32.xlu0 %v557, 64
      %v758 = vpop.permute.xlu0 %757
      %vm767 = vcmask 64512
      %v768 = vsel %vm767, %v412, %v567
      %v769 = vsel %vm767, %v414, %v569
      %v770 = vsel %vm767, %v416, %v571
      %v771 = vsel %vm767, %v418, %v573
      %v772 = vsel %vm767, %v420, %v575
      %v773 = vsel %vm767, %v422, %v577
      %v774 = vsel %vm767, %v424, %v579
      %v775 = vsel %vm767, %v426, %v581
      %vm776 = vcmask 130048
      %v777 = vsel %vm776, %v768, %v591
      %v778 = vsel %vm776, %v769, %v593
      %v779 = vsel %vm776, %v770, %v595
      %v780 = vsel %vm776, %v771, %v597
      %v781 = vsel %vm776, %v772, %v599
      %v782 = vsel %vm776, %v773, %v601
      %v783 = vsel %vm776, %v774, %v603
      %v784 = vsel %vm776, %v775, %v605
      %vm785 = vcmask 195584
      %v786 = vsel %vm785, %v777, %v615
      %v787 = vsel %vm785, %v778, %v617
      %v788 = vsel %vm785, %v779, %v619
      %v789 = vsel %vm785, %v780, %v621
      %v790 = vsel %vm785, %v781, %v623
      %v791 = vsel %vm785, %v782, %v625
      %v792 = vsel %vm785, %v783, %v627
      %v793 = vsel %vm785, %v784, %v629
      %vm794 = vcmask 261120
      %v795 = vsel %vm794, %v786, %v647
      %v796 = vsel %vm794, %v787, %v649
      %v797 = vsel %vm794, %v788, %v651
      %v798 = vsel %vm794, %v789, %v653
      %v799 = vsel %vm794, %v790, %v655
      %v800 = vsel %vm794, %v791, %v657
      %v801 = vsel %vm794, %v792, %v659
      %v802 = vsel %vm794, %v793, %v661
      %vm803 = vcmask 326656
      %v804 = vsel %vm803, %v795, %v671
      %v805 = vsel %vm803, %v796, %v673
      %v806 = vsel %vm803, %v797, %v675
      %v807 = vsel %vm803, %v798, %v677
      %v808 = vsel %vm803, %v799, %v679
      %v809 = vsel %vm803, %v800, %v681
      %v810 = vsel %vm803, %v801, %v683
      %v811 = vsel %vm803, %v802, %v685
      %vm812 = vcmask 392192
      %v813 = vsel %vm812, %v804, %v695
      %v814 = vsel %vm812, %v805, %v697
      %v815 = vsel %vm812, %v806, %v699
      %v816 = vsel %vm812, %v807, %v701
      %v817 = vsel %vm812, %v808, %v703
      %v818 = vsel %vm812, %v809, %v705
      %v819 = vsel %vm812, %v810, %v707
      %v820 = vsel %vm812, %v811, %v709
      %vm821 = vcmask 457728
      %v822 = vsel %vm821, %v813, %v720
      %v823 = vsel %vm821, %v814, %v722
      %v824 = vsel %vm821, %v815, %v724
      %v825 = vsel %vm821, %v816, %v726
      %v826 = vsel %vm821, %v817, %v728
      %v827 = vsel %vm821, %v818, %v730
      %v828 = vsel %vm821, %v819, %v732
      %v829 = vsel %vm821, %v820, %v734
      %vm830 = vcmask 523264
      %v831 = vsel %vm830, %v822, %v744
      %v832 = vsel %vm830, %v823, %v746
      %v833 = vsel %vm830, %v824, %v748
      %v834 = vsel %vm830, %v825, %v750
      %v835 = vsel %vm830, %v826, %v752
      %v836 = vsel %vm830, %v827, %v754
      %v837 = vsel %vm830, %v828, %v756
      %v838 = vsel %vm830, %v829, %v758
      %v839 = vpack.c.bf16 %v832, %v831
      %v840 = vpack.c.bf16 %v834, %v833
      %v841 = vpack.c.bf16 %v836, %v835
      %v842 = vpack.c.bf16 %v838, %v837
      %v852 = vunpack.c.l.b16 %v463
      %v853 = vunpack.c.l.b16 %v464
      %v854 = vunpack.c.l.b16 %v465
      %v855 = vunpack.c.l.b16 %v466
      %v856 = vunpack.c.l.b16 %v467
      %v857 = vunpack.c.l.b16 %v468
      %v858 = vunpack.c.l.b16 %v469
      %v859 = vunpack.c.l.b16 %v470
      %v860 = vunpack.c.l.b16 %v471
      %v861 = vpack.c.b16 %v853, %v852
      %v862 = vpack.c.b16 %v855, %v854
      %v863 = vpack.c.b16 %v857, %v856
      %v864 = vpack.c.b16 %v859, %v858
      %v865 = vpack.c.b16 %v860, %v860
      %vm870 = vcmask 588800
      %v872 = vsel %vm870, %v839, 0
      %v875 = vsel %vm870, %v840, 0
      %v878 = vsel %vm870, %v841, 0
      %v881 = vsel %vm870, %v842, 0
      %vm883 = vcmask 1043456
      %v885 = vsel %vm883, %v865, 0
      %887 = vmatpush.bf16.msra.mxu0 0
      %888 = vmatpush.bf16.msra.mxu0 0
      %889 = vmatpush.bf16.msra.mxu0 0
      %890 = vmatpush.bf16.msra.mxu0 %v885
      %891 = vmatpush.bf16.msra.mxu0 %v864
      %892 = vmatpush.bf16.msra.mxu0 %v863
      %893 = vmatpush.bf16.msra.mxu0 %v862
      %894 = vmatpush.bf16.msra.mxu0 %v861
      %895 = vmatmul.bf16.gmra.mxu0 %v872
      %v896 = vpop.f32.mrf.mxu0
      %v897 = vadd.f32 0.0, %v896
      %v898 = vpop.f32.mrf.mxu0
      %v899 = vadd.f32 0.0, %v898
      %900 = vmatmul.bf16.gmra.mxu0 %v875
      %v901 = vpop.f32.mrf.mxu0
      %v902 = vadd.f32 0.0, %v901
      %v903 = vpop.f32.mrf.mxu0
      %v904 = vadd.f32 0.0, %v903
      %905 = vmatmul.bf16.gmra.mxu0 %v878
      %v906 = vpop.f32.mrf.mxu0
      %v907 = vadd.f32 0.0, %v906
      %v908 = vpop.f32.mrf.mxu0
      %v909 = vadd.f32 0.0, %v908
      %910 = vmatmul.bf16.gmra.mxu0 %v881
      %v911 = vpop.f32.mrf.mxu0
      %v912 = vadd.f32 0.0, %v911
      %v913 = vpop.f32.mrf.mxu0
      %v914 = vadd.f32 0.0, %v913
      %915 = vdwg.mxu0
      %v916 = vld [vmem:[%s2] sm:$0x1]
      %v918 = vperm.slane %v916, 0
      %v920 = vmul.f32 %v897, %v918
      %v921 = vmul.f32 %v899, %v918
      %v922 = vmul.f32 %v902, %v918
      %v923 = vmul.f32 %v904, %v918
      %v924 = vmul.f32 %v907, %v918
      %v925 = vmul.f32 %v909, %v918
      %v926 = vmul.f32 %v912, %v918
      %v927 = vmul.f32 %v914, %v918
      %v928 = vld [vmem:[%s3] sm:$0x1]
      %v930 = vperm.slane %v928, 0
      %v932 = vadd.f32 %v920, %v930
      %v933 = vadd.f32 %v921, %v930
      %v934 = vadd.f32 %v922, %v930
      %v935 = vadd.f32 %v923, %v930
      %v936 = vadd.f32 %v924, %v930
      %v937 = vadd.f32 %v925, %v930
      %v938 = vadd.f32 %v926, %v930
      %v939 = vadd.f32 %v927, %v930
      %v940 = vmax.f32 %v932, 0.0
      %v941 = vmax.f32 %v933, 0.0
      %v942 = vmax.f32 %v934, 0.0
      %v943 = vmax.f32 %v935, 0.0
      %v944 = vmax.f32 %v936, 0.0
      %v945 = vmax.f32 %v937, 0.0
      %v946 = vmax.f32 %v938, 0.0
      %v947 = vmax.f32 %v939, 0.0
      %v948 = vmax.f32 %v940, 0.0
      %v949 = vmax.f32 %v941, 0.0
      %v950 = vmax.f32 %v942, 0.0
      %v951 = vmax.f32 %v943, 0.0
      %v952 = vmax.f32 %v944, 0.0
      %v953 = vmax.f32 %v945, 0.0
      %v954 = vmax.f32 %v946, 0.0
      %v955 = vmax.f32 %v947, 0.0
      %v956 = vmin.f32 %v948, 1.0
      %v957 = vmin.f32 %v949, 1.0
      %v958 = vmin.f32 %v950, 1.0
      %v959 = vmin.f32 %v951, 1.0
      %v960 = vmin.f32 %v952, 1.0
      %v961 = vmin.f32 %v953, 1.0
      %v962 = vmin.f32 %v954, 1.0
      %v963 = vmin.f32 %v955, 1.0
      %v964 = vmul.f32 %v956, 255.0
      %v965 = vmul.f32 %v957, 255.0
      %v966 = vmul.f32 %v958, 255.0
      %v967 = vmul.f32 %v959, 255.0
      %v968 = vmul.f32 %v960, 255.0
      %v969 = vmul.f32 %v961, 255.0
      %v970 = vmul.f32 %v962, 255.0
      %v971 = vmul.f32 %v963, 255.0
      %v972 = vround.ne.pseudo %v964
      %v973 = vround.ne.pseudo %v965
      %v974 = vround.ne.pseudo %v966
      %v975 = vround.ne.pseudo %v967
      %v976 = vround.ne.pseudo %v968
      %v977 = vround.ne.pseudo %v969
      %v978 = vround.ne.pseudo %v970
      %v979 = vround.ne.pseudo %v971
      %v980 = vmul.f32 %v972, 0.003921569
      %v981 = vmul.f32 %v973, 0.003921569
      %v982 = vmul.f32 %v974, 0.003921569
      %v983 = vmul.f32 %v975, 0.003921569
      %v984 = vmul.f32 %v976, 0.003921569
      %v985 = vmul.f32 %v977, 0.003921569
      %v986 = vmul.f32 %v978, 0.003921569
      %v987 = vmul.f32 %v979, 0.003921569
      %v996 = vrot.slane %v980, 7
      %v997 = vrot.slane %v981, 7
      %v998 = vrot.slane %v982, 7
      %v999 = vrot.slane %v983, 7
      %v1000 = vrot.slane %v984, 7
      %v1001 = vrot.slane %v985, 7
      %v1002 = vrot.slane %v986, 7
      %v1003 = vrot.slane %v987, 7
      %vm1012 = vcmask 1040384
      %v1013 = vsel %vm1012, 0.0, %v996
      %v1014 = vsel %vm1012, 0.0, %v997
      %v1015 = vsel %vm1012, 0.0, %v998
      %v1016 = vsel %vm1012, 0.0, %v999
      %v1017 = vsel %vm1012, 0.0, %v1000
      %v1018 = vsel %vm1012, 0.0, %v1001
      %v1019 = vsel %vm1012, 0.0, %v1002
      %v1020 = vsel %vm1012, 0.0, %v1003
      %v1021 = vsel %vm1012, %v996, 0.0
      %v1022 = vsel %vm1012, %v997, 0.0
      %v1023 = vsel %vm1012, %v998, 0.0
      %v1024 = vsel %vm1012, %v999, 0.0
      %v1025 = vsel %vm1012, %v1000, 0.0
      %v1026 = vsel %vm1012, %v1001, 0.0
      %v1027 = vsel %vm1012, %v1002, 0.0
      %v1028 = vsel %vm1012, %v1003, 0.0
      %v1029 = vld [vmem:[%s4] sm:$0xf]
      %v1030 = vld [vmem:[%s4 + $0x4] sm:$0xf]
      %v1031 = vld [vmem:[%s4 + $0x8] sm:$0xf]
      %v1032 = vld [vmem:[%s4 + $0xc] sm:$0xf]
      %v1033 = vld [vmem:[%s4 + $0x10] sm:$0xf]
      %v1034 = vld [vmem:[%s4 + $0x14] sm:$0xf]
      %v1035 = vld [vmem:[%s4 + $0x18] sm:$0xf]
      %v1036 = vld [vmem:[%s4 + $0x1c] sm:$0xf]
      %v1037 = vld [vmem:[%s4 + $0x20] sm:$0xf]
      %v1038 = vld [vmem:[%s4 + $0x24] sm:$0xf]
      %v1039 = vld [vmem:[%s4 + $0x28] sm:$0xf]
      %v1040 = vld [vmem:[%s4 + $0x2c] sm:$0xf]
      %v1041 = vld [vmem:[%s4 + $0x30] sm:$0xf]
      %v1042 = vld [vmem:[%s4 + $0x34] sm:$0xf]
      %v1043 = vld [vmem:[%s4 + $0x38] sm:$0xf]
      %v1044 = vld [vmem:[%s4 + $0x3c] sm:$0xf]
      %v1045 = vld [vmem:[%s4 + $0x40] sm:$0xf]
      %v1046 = vld [vmem:[%s4 + $0x44] sm:$0xf]
      %v1064 = vrot.slane 0.0, 1
      %v1065 = vsel %vm488, %v1064, %v1064
      %v1066 = vrot.slane %v1013, 1
      %v1067 = vrot.slane %v1021, 1
      %v1068 = vsel %vm488, %v1066, %v1067
      %v1069 = vrot.slane %v1014, 1
      %v1070 = vrot.slane %v1022, 1
      %v1071 = vsel %vm488, %v1069, %v1070
      %v1072 = vrot.slane %v1015, 1
      %v1073 = vrot.slane %v1023, 1
      %v1074 = vsel %vm488, %v1072, %v1073
      %v1075 = vrot.slane %v1016, 1
      %v1076 = vrot.slane %v1024, 1
      %v1077 = vsel %vm488, %v1075, %v1076
      %v1078 = vrot.slane %v1017, 1
      %v1079 = vrot.slane %v1025, 1
      %v1080 = vsel %vm488, %v1078, %v1079
      %v1081 = vrot.slane %v1018, 1
      %v1082 = vrot.slane %v1026, 1
      %v1083 = vsel %vm488, %v1081, %v1082
      %v1084 = vrot.slane %v1019, 1
      %v1085 = vrot.slane %v1027, 1
      %v1086 = vsel %vm488, %v1084, %v1085
      %v1087 = vrot.slane %v1020, 1
      %v1088 = vrot.slane %v1028, 1
      %v1089 = vsel %vm488, %v1087, %v1088
      %vm1090 = vcmask 1045504
      %v1091 = vrot.slane 0.0, 2
      %v1092 = vsel %vm1090, %v1091, %v1091
      %v1093 = vrot.slane %v1013, 2
      %v1094 = vrot.slane %v1021, 2
      %v1095 = vsel %vm1090, %v1093, %v1094
      %v1096 = vrot.slane %v1014, 2
      %v1097 = vrot.slane %v1022, 2
      %v1098 = vsel %vm1090, %v1096, %v1097
      %v1099 = vrot.slane %v1015, 2
      %v1100 = vrot.slane %v1023, 2
      %v1101 = vsel %vm1090, %v1099, %v1100
      %v1102 = vrot.slane %v1016, 2
      %v1103 = vrot.slane %v1024, 2
      %v1104 = vsel %vm1090, %v1102, %v1103
      %v1105 = vrot.slane %v1017, 2
      %v1106 = vrot.slane %v1025, 2
      %v1107 = vsel %vm1090, %v1105, %v1106
      %v1108 = vrot.slane %v1018, 2
      %v1109 = vrot.slane %v1026, 2
      %v1110 = vsel %vm1090, %v1108, %v1109
      %v1111 = vrot.slane %v1019, 2
      %v1112 = vrot.slane %v1027, 2
      %v1113 = vsel %vm1090, %v1111, %v1112
      %v1114 = vrot.slane %v1020, 2
      %v1115 = vrot.slane %v1028, 2
      %v1116 = vsel %vm1090, %v1114, %v1115
      %1125 = vrot.lane.b32.xlu0 %v1065, 16
      %v1126 = vpop.permute.xlu0 %1125
      %1127 = vrot.lane.b32.xlu0 %v1068, 16
      %v1128 = vpop.permute.xlu0 %1127
      %1129 = vrot.lane.b32.xlu0 %v1071, 16
      %v1130 = vpop.permute.xlu0 %1129
      %1131 = vrot.lane.b32.xlu0 %v1074, 16
      %v1132 = vpop.permute.xlu0 %1131
      %1133 = vrot.lane.b32.xlu0 %v1077, 16
      %v1134 = vpop.permute.xlu0 %1133
      %1135 = vrot.lane.b32.xlu0 %v1080, 16
      %v1136 = vpop.permute.xlu0 %1135
      %1137 = vrot.lane.b32.xlu0 %v1083, 16
      %v1138 = vpop.permute.xlu0 %1137
      %1139 = vrot.lane.b32.xlu0 %v1086, 16
      %v1140 = vpop.permute.xlu0 %1139
      %1149 = vrot.lane.b32.xlu0 %v1092, 32
      %v1150 = vpop.permute.xlu0 %1149
      %1151 = vrot.lane.b32.xlu0 %v1095, 32
      %v1152 = vpop.permute.xlu0 %1151
      %1153 = vrot.lane.b32.xlu0 %v1098, 32
      %v1154 = vpop.permute.xlu0 %1153
      %1155 = vrot.lane.b32.xlu0 %v1101, 32
      %v1156 = vpop.permute.xlu0 %1155
      %1157 = vrot.lane.b32.xlu0 %v1104, 32
      %v1158 = vpop.permute.xlu0 %1157
      %1159 = vrot.lane.b32.xlu0 %v1107, 32
      %v1160 = vpop.permute.xlu0 %1159
      %1161 = vrot.lane.b32.xlu0 %v1110, 32
      %v1162 = vpop.permute.xlu0 %1161
      %1163 = vrot.lane.b32.xlu0 %v1113, 32
      %v1164 = vpop.permute.xlu0 %1163
      %1173 = vrot.lane.b32.xlu0 %v1013, 48
      %v1174 = vpop.permute.xlu0 %1173
      %1175 = vrot.lane.b32.xlu0 %v1014, 48
      %v1176 = vpop.permute.xlu0 %1175
      %1177 = vrot.lane.b32.xlu0 %v1015, 48
      %v1178 = vpop.permute.xlu0 %1177
      %1179 = vrot.lane.b32.xlu0 %v1016, 48
      %v1180 = vpop.permute.xlu0 %1179
      %1181 = vrot.lane.b32.xlu0 %v1017, 48
      %v1182 = vpop.permute.xlu0 %1181
      %1183 = vrot.lane.b32.xlu0 %v1018, 48
      %v1184 = vpop.permute.xlu0 %1183
      %1185 = vrot.lane.b32.xlu0 %v1019, 48
      %v1186 = vpop.permute.xlu0 %1185
      %1187 = vrot.lane.b32.xlu0 %v1020, 48
      %v1188 = vpop.permute.xlu0 %1187
      %1197 = vrot.lane.b32.xlu0 %v1068, 64
      %v1198 = vpop.permute.xlu0 %1197
      %1199 = vrot.lane.b32.xlu0 %v1071, 64
      %v1200 = vpop.permute.xlu0 %1199
      %1201 = vrot.lane.b32.xlu0 %v1074, 64
      %v1202 = vpop.permute.xlu0 %1201
      %1203 = vrot.lane.b32.xlu0 %v1077, 64
      %v1204 = vpop.permute.xlu0 %1203
      %1205 = vrot.lane.b32.xlu0 %v1080, 64
      %v1206 = vpop.permute.xlu0 %1205
      %1207 = vrot.lane.b32.xlu0 %v1083, 64
      %v1208 = vpop.permute.xlu0 %1207
      %1209 = vrot.lane.b32.xlu0 %v1086, 64
      %v1210 = vpop.permute.xlu0 %1209
      %1211 = vrot.lane.b32.xlu0 %v1089, 64
      %v1212 = vpop.permute.xlu0 %1211
      %1221 = vrot.lane.b32.xlu0 %v1095, 80
      %v1222 = vpop.permute.xlu0 %1221
      %1223 = vrot.lane.b32.xlu0 %v1098, 80
      %v1224 = vpop.permute.xlu0 %1223
      %1225 = vrot.lane.b32.xlu0 %v1101, 80
      %v1226 = vpop.permute.xlu0 %1225
      %1227 = vrot.lane.b32.xlu0 %v1104, 80
      %v1228 = vpop.permute.xlu0 %1227
      %1229 = vrot.lane.b32.xlu0 %v1107, 80
      %v1230 = vpop.permute.xlu0 %1229
      %1231 = vrot.lane.b32.xlu0 %v1110, 80
      %v1232 = vpop.permute.xlu0 %1231
      %1233 = vrot.lane.b32.xlu0 %v1113, 80
      %v1234 = vpop.permute.xlu0 %1233
      %1235 = vrot.lane.b32.xlu0 %v1116, 80
      %v1236 = vpop.permute.xlu0 %1235
      %1245 = vrot.lane.b32.xlu0 %v1014, 96
      %v1246 = vpop.permute.xlu0 %1245
      %1247 = vrot.lane.b32.xlu0 %v1015, 96
      %v1248 = vpop.permute.xlu0 %1247
      %1249 = vrot.lane.b32.xlu0 %v1016, 96
      %v1250 = vpop.permute.xlu0 %1249
      %1251 = vrot.lane.b32.xlu0 %v1017, 96
      %v1252 = vpop.permute.xlu0 %1251
      %1253 = vrot.lane.b32.xlu0 %v1018, 96
      %v1254 = vpop.permute.xlu0 %1253
      %1255 = vrot.lane.b32.xlu0 %v1019, 96
      %v1256 = vpop.permute.xlu0 %1255
      %1257 = vrot.lane.b32.xlu0 %v1020, 96
      %v1258 = vpop.permute.xlu0 %1257
      %1259 = vrot.lane.b32.xlu0 0.0, 96
      %v1260 = vpop.permute.xlu0 %1259
      %1269 = vrot.lane.b32.xlu0 %v1071, 112
      %v1270 = vpop.permute.xlu0 %1269
      %1271 = vrot.lane.b32.xlu0 %v1074, 112
      %v1272 = vpop.permute.xlu0 %1271
      %1273 = vrot.lane.b32.xlu0 %v1077, 112
      %v1274 = vpop.permute.xlu0 %1273
      %1275 = vrot.lane.b32.xlu0 %v1080, 112
      %v1276 = vpop.permute.xlu0 %1275
      %1277 = vrot.lane.b32.xlu0 %v1083, 112
      %v1278 = vpop.permute.xlu0 %1277
      %1279 = vrot.lane.b32.xlu0 %v1086, 112
      %v1280 = vpop.permute.xlu0 %1279
      %1281 = vrot.lane.b32.xlu0 %v1089, 112
      %v1282 = vpop.permute.xlu0 %1281
      %1283 = vrot.lane.b32.xlu0 %v1065, 112
      %v1284 = vpop.permute.xlu0 %1283
      %v1293 = vsel %vm776, 0.0, %v1126
      %v1294 = vsel %vm776, %v1013, %v1128
      %v1295 = vsel %vm776, %v1014, %v1130
      %v1296 = vsel %vm776, %v1015, %v1132
      %v1297 = vsel %vm776, %v1016, %v1134
      %v1298 = vsel %vm776, %v1017, %v1136
      %v1299 = vsel %vm776, %v1018, %v1138
      %v1300 = vsel %vm776, %v1019, %v1140
      %v1301 = vsel %vm794, %v1293, %v1150
      %v1302 = vsel %vm794, %v1294, %v1152
      %v1303 = vsel %vm794, %v1295, %v1154
      %v1304 = vsel %vm794, %v1296, %v1156
      %v1305 = vsel %vm794, %v1297, %v1158
      %v1306 = vsel %vm794, %v1298, %v1160
      %v1307 = vsel %vm794, %v1299, %v1162
      %v1308 = vsel %vm794, %v1300, %v1164
      %v1309 = vsel %vm812, %v1301, %v1174
      %v1310 = vsel %vm812, %v1302, %v1176
      %v1311 = vsel %vm812, %v1303, %v1178
      %v1312 = vsel %vm812, %v1304, %v1180
      %v1313 = vsel %vm812, %v1305, %v1182
      %v1314 = vsel %vm812, %v1306, %v1184
      %v1315 = vsel %vm812, %v1307, %v1186
      %v1316 = vsel %vm812, %v1308, %v1188
      %v1317 = vsel %vm830, %v1309, %v1198
      %v1318 = vsel %vm830, %v1310, %v1200
      %v1319 = vsel %vm830, %v1311, %v1202
      %v1320 = vsel %vm830, %v1312, %v1204
      %v1321 = vsel %vm830, %v1313, %v1206
      %v1322 = vsel %vm830, %v1314, %v1208
      %v1323 = vsel %vm830, %v1315, %v1210
      %v1324 = vsel %vm830, %v1316, %v1212
      %vm1325 = vcmask 654336
      %v1326 = vsel %vm1325, %v1317, %v1222
      %v1327 = vsel %vm1325, %v1318, %v1224
      %v1328 = vsel %vm1325, %v1319, %v1226
      %v1329 = vsel %vm1325, %v1320, %v1228
      %v1330 = vsel %vm1325, %v1321, %v1230
      %v1331 = vsel %vm1325, %v1322, %v1232
      %v1332 = vsel %vm1325, %v1323, %v1234
      %v1333 = vsel %vm1325, %v1324, %v1236
      %vm1334 = vcmask 785408
      %v1335 = vsel %vm1334, %v1326, %v1246
      %v1336 = vsel %vm1334, %v1327, %v1248
      %v1337 = vsel %vm1334, %v1328, %v1250
      %v1338 = vsel %vm1334, %v1329, %v1252
      %v1339 = vsel %vm1334, %v1330, %v1254
      %v1340 = vsel %vm1334, %v1331, %v1256
      %v1341 = vsel %vm1334, %v1332, %v1258
      %v1342 = vsel %vm1334, %v1333, %v1260
      %vm1343 = vcmask 916480
      %v1344 = vsel %vm1343, %v1335, %v1270
      %v1345 = vsel %vm1343, %v1336, %v1272
      %v1346 = vsel %vm1343, %v1337, %v1274
      %v1347 = vsel %vm1343, %v1338, %v1276
      %v1348 = vsel %vm1343, %v1339, %v1278
      %v1349 = vsel %vm1343, %v1340, %v1280
      %v1350 = vsel %vm1343, %v1341, %v1282
      %v1351 = vsel %vm1343, %v1342, %v1284
      %v1352 = vpack.c.bf16 %v1345, %v1344
      %v1353 = vpack.c.bf16 %v1101, %v1098
      %v1354 = vpack.c.bf16 %v1347, %v1346
      %v1355 = vpack.c.bf16 %v1107, %v1104
      %v1356 = vpack.c.bf16 %v1349, %v1348
      %v1357 = vpack.c.bf16 %v1113, %v1110
      %v1358 = vpack.c.bf16 %v1351, %v1350
      %v1359 = vpack.c.bf16 %v1092, %v1116
      %v1378 = vunpack.c.l.b16 %v1029
      %v1379 = vunpack.c.l.b16 %v1030
      %v1380 = vunpack.c.l.b16 %v1031
      %v1381 = vunpack.c.l.b16 %v1032
      %v1382 = vunpack.c.l.b16 %v1033
      %v1383 = vunpack.c.l.b16 %v1034
      %v1384 = vunpack.c.l.b16 %v1035
      %v1385 = vunpack.c.l.b16 %v1036
      %v1386 = vunpack.c.l.b16 %v1037
      %v1387 = vunpack.c.l.b16 %v1038
      %v1388 = vunpack.c.l.b16 %v1039
      %v1389 = vunpack.c.l.b16 %v1040
      %v1390 = vunpack.c.l.b16 %v1041
      %v1391 = vunpack.c.l.b16 %v1042
      %v1392 = vunpack.c.l.b16 %v1043
      %v1393 = vunpack.c.l.b16 %v1044
      %v1394 = vunpack.c.l.b16 %v1045
      %v1395 = vunpack.c.l.b16 %v1046
      %v1396 = vpack.c.b16 %v1379, %v1378
      %v1397 = vpack.c.b16 %v1381, %v1380
      %v1398 = vpack.c.b16 %v1383, %v1382
      %v1399 = vpack.c.b16 %v1385, %v1384
      %v1400 = vpack.c.b16 %v1387, %v1386
      %v1401 = vpack.c.b16 %v1389, %v1388
      %v1402 = vpack.c.b16 %v1391, %v1390
      %v1403 = vpack.c.b16 %v1393, %v1392
      %v1404 = vpack.c.b16 %v1395, %v1394
      %v1415 = vsel %vm776, %v1353, 0
      %v1418 = vsel %vm776, %v1355, 0
      %v1421 = vsel %vm776, %v1357, 0
      %v1424 = vsel %vm776, %v1359, 0
      %1426 = vmatpush.bf16.msra.mxu0 %v1403
      %1427 = vmatpush.bf16.msra.mxu0 %v1402
      %1428 = vmatpush.bf16.msra.mxu0 %v1401
      %1429 = vmatpush.bf16.msra.mxu0 %v1400
      %1430 = vmatpush.bf16.msra.mxu0 %v1399
      %1431 = vmatpush.bf16.msra.mxu0 %v1398
      %1432 = vmatpush.bf16.msra.mxu0 %v1397
      %1433 = vmatpush.bf16.msra.mxu0 %v1396
      %1434 = vmatmul.bf16.gmra.mxu0 %v1352
      %v1435 = vpop.f32.mrf.mxu0
      %v1436 = vadd.f32 0.0, %v1435
      %v1437 = vpop.f32.mrf.mxu0
      %v1438 = vadd.f32 0.0, %v1437
      %1439 = vmatmul.bf16.gmra.mxu0 %v1354
      %v1440 = vpop.f32.mrf.mxu0
      %v1441 = vadd.f32 0.0, %v1440
      %v1442 = vpop.f32.mrf.mxu0
      %v1443 = vadd.f32 0.0, %v1442
      %1444 = vmatmul.bf16.gmra.mxu0 %v1356
      %v1445 = vpop.f32.mrf.mxu0
      %v1446 = vadd.f32 0.0, %v1445
      %v1447 = vpop.f32.mrf.mxu0
      %v1448 = vadd.f32 0.0, %v1447
      %1449 = vmatmul.bf16.gmra.mxu0 %v1358
      %v1450 = vpop.f32.mrf.mxu0
      %v1451 = vadd.f32 0.0, %v1450
      %v1452 = vpop.f32.mrf.mxu0
      %v1453 = vadd.f32 0.0, %v1452
      %1454 = vdwg.mxu0
      %1455 = vmatpush.bf16.msra.mxu0 0
      %1456 = vmatpush.bf16.msra.mxu0 0
      %1457 = vmatpush.bf16.msra.mxu0 0
      %1458 = vmatpush.bf16.msra.mxu0 0
      %1459 = vmatpush.bf16.msra.mxu0 0
      %1460 = vmatpush.bf16.msra.mxu0 0
      %1461 = vmatpush.bf16.msra.mxu0 0
      %1462 = vmatpush.bf16.msra.mxu0 %v1404
      %1463 = vmatmul.bf16.gmra.mxu0 %v1415
      %v1464 = vpop.f32.mrf.mxu0
      %v1465 = vadd.f32 %v1436, %v1464
      %v1466 = vpop.f32.mrf.mxu0
      %v1467 = vadd.f32 %v1438, %v1466
      %1468 = vmatmul.bf16.gmra.mxu0 %v1418
      %v1469 = vpop.f32.mrf.mxu0
      %v1470 = vadd.f32 %v1441, %v1469
      %v1471 = vpop.f32.mrf.mxu0
      %v1472 = vadd.f32 %v1443, %v1471
      %1473 = vmatmul.bf16.gmra.mxu0 %v1421
      %v1474 = vpop.f32.mrf.mxu0
      %v1475 = vadd.f32 %v1446, %v1474
      %v1476 = vpop.f32.mrf.mxu0
      %v1477 = vadd.f32 %v1448, %v1476
      %1478 = vmatmul.bf16.gmra.mxu0 %v1424
      %v1479 = vpop.f32.mrf.mxu0
      %v1480 = vadd.f32 %v1451, %v1479
      %v1481 = vpop.f32.mrf.mxu0
      %v1482 = vadd.f32 %v1453, %v1481
      %1483 = vdwg.mxu0
      %v1484 = vld [vmem:[%s5] sm:$0x1]
      %v1486 = vperm.slane %v1484, 0
      %v1488 = vmul.f32 %v1465, %v1486
      %v1489 = vmul.f32 %v1467, %v1486
      %v1490 = vmul.f32 %v1470, %v1486
      %v1491 = vmul.f32 %v1472, %v1486
      %v1492 = vmul.f32 %v1475, %v1486
      %v1493 = vmul.f32 %v1477, %v1486
      %v1494 = vmul.f32 %v1480, %v1486
      %v1495 = vmul.f32 %v1482, %v1486
      %v1496 = vld [vmem:[%s6] sm:$0x1]
      %v1498 = vperm.slane %v1496, 0
      %v1500 = vadd.f32 %v1488, %v1498
      %v1501 = vadd.f32 %v1489, %v1498
      %v1502 = vadd.f32 %v1490, %v1498
      %v1503 = vadd.f32 %v1491, %v1498
      %v1504 = vadd.f32 %v1492, %v1498
      %v1505 = vadd.f32 %v1493, %v1498
      %v1506 = vadd.f32 %v1494, %v1498
      %v1507 = vadd.f32 %v1495, %v1498
      %v1508 = vpack.c.bf16 %v456, %v455
      %v1509 = vpack.c.bf16 %v458, %v457
      %v1510 = vpack.c.bf16 %v460, %v459
      %v1511 = vpack.c.bf16 %v462, %v461
      %v1512 = vld [vmem:[%s7] sm:$0xf]
      %v1514 = vsel %vm767, %v1508, 0
      %v1517 = vsel %vm767, %v1509, 0
      %v1520 = vsel %vm767, %v1510, 0
      %v1523 = vsel %vm767, %v1511, 0
      %v1526 = vsel %vm883, %v1512, 0
      %1528 = vmatpush.bf16.msra.mxu0 0
      %1529 = vmatpush.bf16.msra.mxu0 0
      %1530 = vmatpush.bf16.msra.mxu0 0
      %1531 = vmatpush.bf16.msra.mxu0 0
      %1532 = vmatpush.bf16.msra.mxu0 0
      %1533 = vmatpush.bf16.msra.mxu0 0
      %1534 = vmatpush.bf16.msra.mxu0 0
      %1535 = vmatpush.bf16.msra.mxu0 %v1526
      %1536 = vmatmul.bf16.gmra.mxu0 %v1514
      %v1537 = vpop.f32.mrf.mxu0
      %v1538 = vadd.f32 0.0, %v1537
      %v1539 = vpop.f32.mrf.mxu0
      %v1540 = vadd.f32 0.0, %v1539
      %1541 = vmatmul.bf16.gmra.mxu0 %v1517
      %v1542 = vpop.f32.mrf.mxu0
      %v1543 = vadd.f32 0.0, %v1542
      %v1544 = vpop.f32.mrf.mxu0
      %v1545 = vadd.f32 0.0, %v1544
      %1546 = vmatmul.bf16.gmra.mxu0 %v1520
      %v1547 = vpop.f32.mrf.mxu0
      %v1548 = vadd.f32 0.0, %v1547
      %v1549 = vpop.f32.mrf.mxu0
      %v1550 = vadd.f32 0.0, %v1549
      %1551 = vmatmul.bf16.gmra.mxu0 %v1523
      %v1552 = vpop.f32.mrf.mxu0
      %v1553 = vadd.f32 0.0, %v1552
      %v1554 = vpop.f32.mrf.mxu0
      %v1555 = vadd.f32 0.0, %v1554
      %1556 = vdwg.mxu0
      %v1557 = vld [vmem:[%s8] sm:$0x1]
      %v1559 = vperm.slane %v1557, 0
      %v1561 = vmul.f32 %v1538, %v1559
      %v1562 = vmul.f32 %v1540, %v1559
      %v1563 = vmul.f32 %v1543, %v1559
      %v1564 = vmul.f32 %v1545, %v1559
      %v1565 = vmul.f32 %v1548, %v1559
      %v1566 = vmul.f32 %v1550, %v1559
      %v1567 = vmul.f32 %v1553, %v1559
      %v1568 = vmul.f32 %v1555, %v1559
      %v1569 = vld [vmem:[%s9] sm:$0x1]
      %v1571 = vperm.slane %v1569, 0
      %v1573 = vadd.f32 %v1561, %v1571
      %v1574 = vadd.f32 %v1562, %v1571
      %v1575 = vadd.f32 %v1563, %v1571
      %v1576 = vadd.f32 %v1564, %v1571
      %v1577 = vadd.f32 %v1565, %v1571
      %v1578 = vadd.f32 %v1566, %v1571
      %v1579 = vadd.f32 %v1567, %v1571
      %v1580 = vadd.f32 %v1568, %v1571
      %v1581 = vmax.f32 %v1573, 0.0
      %v1582 = vmax.f32 %v1574, 0.0
      %v1583 = vmax.f32 %v1575, 0.0
      %v1584 = vmax.f32 %v1576, 0.0
      %v1585 = vmax.f32 %v1577, 0.0
      %v1586 = vmax.f32 %v1578, 0.0
      %v1587 = vmax.f32 %v1579, 0.0
      %v1588 = vmax.f32 %v1580, 0.0
      %v1589 = vmin.f32 %v1581, 1.0
      %v1590 = vmin.f32 %v1582, 1.0
      %v1591 = vmin.f32 %v1583, 1.0
      %v1592 = vmin.f32 %v1584, 1.0
      %v1593 = vmin.f32 %v1585, 1.0
      %v1594 = vmin.f32 %v1586, 1.0
      %v1595 = vmin.f32 %v1587, 1.0
      %v1596 = vmin.f32 %v1588, 1.0
      %v1597 = vmul.f32 %v1589, 255.0
      %v1598 = vmul.f32 %v1590, 255.0
      %v1599 = vmul.f32 %v1591, 255.0
      %v1600 = vmul.f32 %v1592, 255.0
      %v1601 = vmul.f32 %v1593, 255.0
      %v1602 = vmul.f32 %v1594, 255.0
      %v1603 = vmul.f32 %v1595, 255.0
      %v1604 = vmul.f32 %v1596, 255.0
      %v1605 = vround.ne.pseudo %v1597
      %v1606 = vround.ne.pseudo %v1598
      %v1607 = vround.ne.pseudo %v1599
      %v1608 = vround.ne.pseudo %v1600
      %v1609 = vround.ne.pseudo %v1601
      %v1610 = vround.ne.pseudo %v1602
      %v1611 = vround.ne.pseudo %v1603
      %v1612 = vround.ne.pseudo %v1604
      %v1613 = vmul.f32 %v1605, 0.003921569
      %v1614 = vmul.f32 %v1606, 0.003921569
      %v1615 = vmul.f32 %v1607, 0.003921569
      %v1616 = vmul.f32 %v1608, 0.003921569
      %v1617 = vmul.f32 %v1609, 0.003921569
      %v1618 = vmul.f32 %v1610, 0.003921569
      %v1619 = vmul.f32 %v1611, 0.003921569
      %v1620 = vmul.f32 %v1612, 0.003921569
      %v1621 = vadd.f32 %v1500, %v1613
      %v1622 = vadd.f32 %v1501, %v1614
      %v1623 = vadd.f32 %v1502, %v1615
      %v1624 = vadd.f32 %v1503, %v1616
      %v1625 = vadd.f32 %v1504, %v1617
      %v1626 = vadd.f32 %v1505, %v1618
      %v1627 = vadd.f32 %v1506, %v1619
      %v1628 = vadd.f32 %v1507, %v1620
      %v1629 = vmax.f32 %v1621, 0.0
      %v1630 = vmax.f32 %v1622, 0.0
      %v1631 = vmax.f32 %v1623, 0.0
      %v1632 = vmax.f32 %v1624, 0.0
      %v1633 = vmax.f32 %v1625, 0.0
      %v1634 = vmax.f32 %v1626, 0.0
      %v1635 = vmax.f32 %v1627, 0.0
      %v1636 = vmax.f32 %v1628, 0.0
      %v1637 = vmin.f32 %v1629, 1.0
      %v1638 = vmin.f32 %v1630, 1.0
      %v1639 = vmin.f32 %v1631, 1.0
      %v1640 = vmin.f32 %v1632, 1.0
      %v1641 = vmin.f32 %v1633, 1.0
      %v1642 = vmin.f32 %v1634, 1.0
      %v1643 = vmin.f32 %v1635, 1.0
      %v1644 = vmin.f32 %v1636, 1.0
      %v1645 = vmul.f32 %v1637, 255.0
      %v1646 = vmul.f32 %v1638, 255.0
      %v1647 = vmul.f32 %v1639, 255.0
      %v1648 = vmul.f32 %v1640, 255.0
      %v1649 = vmul.f32 %v1641, 255.0
      %v1650 = vmul.f32 %v1642, 255.0
      %v1651 = vmul.f32 %v1643, 255.0
      %v1652 = vmul.f32 %v1644, 255.0
      %v1653 = vround.ne.pseudo %v1645
      %v1654 = vround.ne.pseudo %v1646
      %v1655 = vround.ne.pseudo %v1647
      %v1656 = vround.ne.pseudo %v1648
      %v1657 = vround.ne.pseudo %v1649
      %v1658 = vround.ne.pseudo %v1650
      %v1659 = vround.ne.pseudo %v1651
      %v1660 = vround.ne.pseudo %v1652
      %v1661 = vmul.f32 %v1653, 0.003921569
      %v1662 = vmul.f32 %v1654, 0.003921569
      %v1663 = vmul.f32 %v1655, 0.003921569
      %v1664 = vmul.f32 %v1656, 0.003921569
      %v1665 = vmul.f32 %v1657, 0.003921569
      %v1666 = vmul.f32 %v1658, 0.003921569
      %v1667 = vmul.f32 %v1659, 0.003921569
      %v1668 = vmul.f32 %v1660, 0.003921569
      %v1677 = vrot.slane %v1661, 7
      %v1678 = vrot.slane %v1662, 7
      %v1679 = vrot.slane %v1663, 7
      %v1680 = vrot.slane %v1664, 7
      %v1681 = vrot.slane %v1665, 7
      %v1682 = vrot.slane %v1666, 7
      %v1683 = vrot.slane %v1667, 7
      %v1684 = vrot.slane %v1668, 7
      %v1693 = vsel %vm1012, 0.0, %v1677
      %v1694 = vsel %vm1012, 0.0, %v1678
      %v1695 = vsel %vm1012, 0.0, %v1679
      %v1696 = vsel %vm1012, 0.0, %v1680
      %v1697 = vsel %vm1012, 0.0, %v1681
      %v1698 = vsel %vm1012, 0.0, %v1682
      %v1699 = vsel %vm1012, 0.0, %v1683
      %v1700 = vsel %vm1012, 0.0, %v1684
      %v1701 = vsel %vm1012, %v1677, 0.0
      %v1702 = vsel %vm1012, %v1678, 0.0
      %v1703 = vsel %vm1012, %v1679, 0.0
      %v1704 = vsel %vm1012, %v1680, 0.0
      %v1705 = vsel %vm1012, %v1681, 0.0
      %v1706 = vsel %vm1012, %v1682, 0.0
      %v1707 = vsel %vm1012, %v1683, 0.0
      %v1708 = vsel %vm1012, %v1684, 0.0
      %v1709 = vpack.c.bf16 0.0, 0.0
      %v1710 = vpack.c.bf16 %v1693, %v1693
      %v1711 = vpack.c.bf16 %v1701, %v1701
      %v1712 = vpack.c.bf16 %v1694, %v1694
      %v1713 = vpack.c.bf16 %v1702, %v1702
      %v1714 = vpack.c.bf16 %v1695, %v1695
      %v1715 = vpack.c.bf16 %v1703, %v1703
      %v1716 = vpack.c.bf16 %v1696, %v1696
      %v1717 = vpack.c.bf16 %v1704, %v1704
      %v1718 = vpack.c.bf16 %v1697, %v1697
      %v1719 = vpack.c.bf16 %v1705, %v1705
      %v1720 = vpack.c.bf16 %v1698, %v1698
      %v1721 = vpack.c.bf16 %v1706, %v1706
      %v1722 = vpack.c.bf16 %v1699, %v1699
      %v1723 = vpack.c.bf16 %v1707, %v1707
      %v1724 = vpack.c.bf16 %v1700, %v1700
      %v1725 = vpack.c.bf16 %v1708, %v1708
      %vm1726 = vcmask 125952
      %1727 = vst.msk [vmem:[%s359] sm:$0xf] %vm1726, %v1709
      %vm1728 = vcmask 122880
      %1729 = vst.msk [vmem:[%s359 + $0x4] sm:$0x1] %vm1728, %v1709
      %1730 = vst.msk [vmem:[%s359 + $0x8] sm:$0xf] %vm1726, %v1710
      %1731 = vst.msk [vmem:[%s359 + $0xc] sm:$0x1] %vm1728, %v1711
      %1732 = vst.msk [vmem:[%s359 + $0x10] sm:$0xf] %vm1726, %v1712
      %1733 = vst.msk [vmem:[%s359 + $0x14] sm:$0x1] %vm1728, %v1713
      %1734 = vst.msk [vmem:[%s359 + $0x18] sm:$0xf] %vm1726, %v1714
      %1735 = vst.msk [vmem:[%s359 + $0x1c] sm:$0x1] %vm1728, %v1715
      %1736 = vst.msk [vmem:[%s359 + $0x20] sm:$0xf] %vm1726, %v1716
      %1737 = vst.msk [vmem:[%s359 + $0x24] sm:$0x1] %vm1728, %v1717
      %1738 = vst.msk [vmem:[%s359 + $0x28] sm:$0xf] %vm1726, %v1718
      %1739 = vst.msk [vmem:[%s359 + $0x2c] sm:$0x1] %vm1728, %v1719
      %1740 = vst.msk [vmem:[%s359 + $0x30] sm:$0xf] %vm1726, %v1720
      %1741 = vst.msk [vmem:[%s359 + $0x34] sm:$0x1] %vm1728, %v1721
      %1742 = vst.msk [vmem:[%s359 + $0x38] sm:$0xf] %vm1726, %v1722
      %1743 = vst.msk [vmem:[%s359 + $0x3c] sm:$0x1] %vm1728, %v1723
      %1744 = vst.msk [vmem:[%s359 + $0x40] sm:$0xf] %vm1726, %v1724
      %1745 = vst.msk [vmem:[%s359 + $0x44] sm:$0x1] %vm1728, %v1725
      %1746 = vst.msk [vmem:[%s359 + $0x48] sm:$0xf] %vm1726, %v1709
      %1747 = vst.msk [vmem:[%s359 + $0x4c] sm:$0x1] %vm1728, %v1709
      %p1748 = scmp.lt.s32.totalorder %s21, 1
      %s1749 = scalar_select %p1748, %s21, 1
      %s1750 = smul.addr %s1749, 20
      %s1751 = smul.addr %s1750, 4
      %s1752 = scalar_lea.vmem %s10, %s1751
      // Predicated region
      $region61: #{_lambda_.6} parent=59 // pred_check
        %p1753 = pneg %p254
      $region62: #{_lambda_.6} parent=59 // pred_check_branch
        %1755 = sbr.rel (%p1753) target = $region64
      $region63: #{_lambda_.6} parent=59 // pred_region
        _
      $region64: #{_lambda_.6} parent=59 // pred_fallthru
        _
    $region60: #{_lambda_.6} parent=5 // pred_fallthru
      _
    %p1756 = scmp.le.s32.totalorder 2, %s16
    // Predicated region
    $region65: #{_lambda_.6} parent=5 // pred_check
      %p1757 = pneg %p1756
    $region66: #{_lambda_.6} parent=5 // pred_check_branch
      %1759 = sbr.rel (%p1757) target = $region68
    $region67: #{_lambda_.6} parent=5 // pred_region
      %s1760 = ssub.s32 %s16, 2
      // Predicated region
      $region69: #{_lambda_.6} parent=67 // pred_check
        %p1761 = pneg %p260
      $region70: #{_lambda_.6} parent=67 // pred_check_branch
        %1763 = sbr.rel (%p1761) target = $region72
      $region71: #{_lambda_.6} parent=67 // pred_region
        %p1764 = scmp.lt.s32.totalorder %s22, 1
        %s1765 = scalar_select %p1764, %s22, 1
        %s1766 = smul.addr %s1765, 20
        %s1767 = smul.addr %s1766, 4
        %s1768 = scalar_lea.vmem %s10, %s1767
      $region72: #{_lambda_.6} parent=67 // pred_fallthru
        _
    $region68: #{_lambda_.6} parent=5 // pred_fallthru
      _
  $region6: #{_lambda_.6} parent=0 // loop_footer
    %s20 = sadd.s32 1, %s16
  $region7: #{_lambda_.6} parent=0 // loop_footer_branch
    %15 = sbr.rel target = $region3
  $region8: #{_lambda_.6} parent=0 // loop_exit
    _

// kernel: _lambda_.5
$region0: #{_lambda_.5}
  #allocation0 [shape = 'u32[]', space=smem, size = 0x4, offset = 0x4, fixed_abs, tag = 'smem constant byte address 0x4 - core index']
  #allocation1 [shape = 'u32[72,128]{1,0:T(1,128)}', space=vmem, size = 0x9000, scoped, tag = 'internal scratch']
  %s0 = inlined_call_operand.vmem [shape: bf16[2,18,18,8], index: 0, kind: input, shape index: {}]
  %s1 = inlined_call_operand.vmem [shape: bf16[72,8], index: 1, kind: input, shape index: {}]
  %s2 = inlined_call_operand.vmem [shape: f32[1,8], index: 2, kind: input, shape index: {}]
  %s3 = inlined_call_operand.vmem [shape: f32[1,8], index: 3, kind: input, shape index: {}]
  %s4 = inlined_call_operand.vmem [shape: bf16[72,8], index: 4, kind: input, shape index: {}]
  %s5 = inlined_call_operand.vmem [shape: f32[1,8], index: 5, kind: input, shape index: {}]
  %s6 = inlined_call_operand.vmem [shape: f32[1,8], index: 6, kind: input, shape index: {}]
  %s7 = inlined_call_operand.vmem [shape: bf16[2,18,18,8], index: 7, kind: output, shape index: {}]
  %s8 = sld [smem:[#allocation0]]
  $region61: #{_lambda_.5} parent=0
    _
  %s10 = ssub.s32 1, %s8
  %s11 = scalar_select 0, %s10, %s8
  loop: start=0, step=1, limit=4
  $region2: #{_lambda_.5} parent=0 // loop_pre_header
    _
  $region3: #{_lambda_.5} parent=0 // loop_header
    %s13 = sphi 0, %s17
    %p14 = scmp.ge.s32.totalorder %s13, 4
    %s23 = sphi 0, %s25
    %s26 = sphi 0, %s23
    %s27 = sphi 0, %s26
    %s43 = sphi 0, %s27
    %s47 = sphi 0, %s47
    %s49 = sphi 0, %s47
    %s50 = sphi 0, %s49
    %s64 = sphi 0, %s50
    %s68 = sphi 0, %s68
    %s70 = sphi 0, %s68
    %s71 = sphi 0, %s70
    %s85 = sphi 0, %s71
    %s89 = sphi 0, %s89
    %s91 = sphi 0, %s89
    %s92 = sphi 0, %s91
    %s106 = sphi 0, %s92
    %s110 = sphi 0, %s110
    %s112 = sphi 0, %s110
    %s113 = sphi 0, %s112
    %s127 = sphi 0, %s113
    %s131 = sphi 0, %s131
    %s133 = sphi 0, %s131
    %s134 = sphi 0, %s133
    %s148 = sphi 0, %s134
    %s152 = sphi 0, %s152
    %s154 = sphi 0, %s152
    %s155 = sphi 0, %s154
    %s169 = sphi 0, %s155
    %s175 = sphi 0, %s177
    %s178 = sphi 0, %s175
    %s179 = sphi 0, %s178
    %s195 = sphi 0, %s179
  $region4: #{_lambda_.5} parent=0 // loop_header_branch
    %16 = sbr.rel (%p14) target = $region8
  $region5: #{_lambda_.5} parent=0 // loop_body
    %s18 = ssub.s32 %s13, 1
    %s19 = ssub.s32 %s13, 2
    %s20 = sadd.s32 %s13, 1
    %s21 = ssub.s32 %s13, %s20
    %p22 = scmp.eq.s32.totalorder %s21, 0
    %s24 = sadd.s32 %s23, 1
    %s25 = scalar_select %p22, %s23, %s24
    %p28 = pneg %p22
    %p29 = scmp.eq.s32.totalorder %s13, 1
    %p30 = por %p28, %p29
    %p31 = scmp.ne.s32.totalorder %s23, %s26
    %p32 = scmp.eq.s32.totalorder %s13, 0
    %p33 = por %p31, %p32
    %p34 = scmp.ne.s32.totalorder %s23, %s26
    %p35 = scmp.eq.s32.totalorder %s18, 1
    %p36 = por %p34, %p35
    %p37 = scmp.ne.s32.totalorder %s26, %s27
    %p38 = scmp.eq.s32.totalorder %s18, 0
    %p39 = por %p37, %p38
    %p40 = scmp.ne.s32.totalorder %s26, %s27
    %p41 = scmp.eq.s32.totalorder %s19, 1
    %p42 = por %p40, %p41
    %p44 = scmp.ne.s32.totalorder %s27, %s43
    %p45 = scmp.eq.s32.totalorder %s19, 0
    %p46 = por %p44, %p45
    %s48 = sadd.s32 %s47, 1
    %p51 = scmp.eq.s32.totalorder %s13, 1
    %p52 = scmp.ne.s32.totalorder %s47, %s49
    %p53 = scmp.eq.s32.totalorder %s13, 0
    %p54 = por %p52, %p53
    %p55 = scmp.ne.s32.totalorder %s47, %s49
    %p56 = scmp.eq.s32.totalorder %s18, 1
    %p57 = por %p55, %p56
    %p58 = scmp.ne.s32.totalorder %s49, %s50
    %p59 = scmp.eq.s32.totalorder %s18, 0
    %p60 = por %p58, %p59
    %p61 = scmp.ne.s32.totalorder %s49, %s50
    %p62 = scmp.eq.s32.totalorder %s19, 1
    %p63 = por %p61, %p62
    %p65 = scmp.ne.s32.totalorder %s50, %s64
    %p66 = scmp.eq.s32.totalorder %s19, 0
    %p67 = por %p65, %p66
    %s69 = sadd.s32 %s68, 1
    %p72 = scmp.eq.s32.totalorder %s13, 1
    %p73 = scmp.ne.s32.totalorder %s68, %s70
    %p74 = scmp.eq.s32.totalorder %s13, 0
    %p75 = por %p73, %p74
    %p76 = scmp.ne.s32.totalorder %s68, %s70
    %p77 = scmp.eq.s32.totalorder %s18, 1
    %p78 = por %p76, %p77
    %p79 = scmp.ne.s32.totalorder %s70, %s71
    %p80 = scmp.eq.s32.totalorder %s18, 0
    %p81 = por %p79, %p80
    %p82 = scmp.ne.s32.totalorder %s70, %s71
    %p83 = scmp.eq.s32.totalorder %s19, 1
    %p84 = por %p82, %p83
    %p86 = scmp.ne.s32.totalorder %s71, %s85
    %p87 = scmp.eq.s32.totalorder %s19, 0
    %p88 = por %p86, %p87
    %s90 = sadd.s32 %s89, 1
    %p93 = scmp.eq.s32.totalorder %s13, 1
    %p94 = scmp.ne.s32.totalorder %s89, %s91
    %p95 = scmp.eq.s32.totalorder %s13, 0
    %p96 = por %p94, %p95
    %p97 = scmp.ne.s32.totalorder %s89, %s91
    %p98 = scmp.eq.s32.totalorder %s18, 1
    %p99 = por %p97, %p98
    %p100 = scmp.ne.s32.totalorder %s91, %s92
    %p101 = scmp.eq.s32.totalorder %s18, 0
    %p102 = por %p100, %p101
    %p103 = scmp.ne.s32.totalorder %s91, %s92
    %p104 = scmp.eq.s32.totalorder %s19, 1
    %p105 = por %p103, %p104
    %p107 = scmp.ne.s32.totalorder %s92, %s106
    %p108 = scmp.eq.s32.totalorder %s19, 0
    %p109 = por %p107, %p108
    %s111 = sadd.s32 %s110, 1
    %p114 = scmp.eq.s32.totalorder %s13, 1
    %p115 = scmp.ne.s32.totalorder %s110, %s112
    %p116 = scmp.eq.s32.totalorder %s13, 0
    %p117 = por %p115, %p116
    %p118 = scmp.ne.s32.totalorder %s110, %s112
    %p119 = scmp.eq.s32.totalorder %s18, 1
    %p120 = por %p118, %p119
    %p121 = scmp.ne.s32.totalorder %s112, %s113
    %p122 = scmp.eq.s32.totalorder %s18, 0
    %p123 = por %p121, %p122
    %p124 = scmp.ne.s32.totalorder %s112, %s113
    %p125 = scmp.eq.s32.totalorder %s19, 1
    %p126 = por %p124, %p125
    %p128 = scmp.ne.s32.totalorder %s113, %s127
    %p129 = scmp.eq.s32.totalorder %s19, 0
    %p130 = por %p128, %p129
    %s132 = sadd.s32 %s131, 1
    %p135 = scmp.eq.s32.totalorder %s13, 1
    %p136 = scmp.ne.s32.totalorder %s131, %s133
    %p137 = scmp.eq.s32.totalorder %s13, 0
    %p138 = por %p136, %p137
    %p139 = scmp.ne.s32.totalorder %s131, %s133
    %p140 = scmp.eq.s32.totalorder %s18, 1
    %p141 = por %p139, %p140
    %p142 = scmp.ne.s32.totalorder %s133, %s134
    %p143 = scmp.eq.s32.totalorder %s18, 0
    %p144 = por %p142, %p143
    %p145 = scmp.ne.s32.totalorder %s133, %s134
    %p146 = scmp.eq.s32.totalorder %s19, 1
    %p147 = por %p145, %p146
    %p149 = scmp.ne.s32.totalorder %s134, %s148
    %p150 = scmp.eq.s32.totalorder %s19, 0
    %p151 = por %p149, %p150
    %s153 = sadd.s32 %s152, 1
    %p156 = scmp.eq.s32.totalorder %s13, 1
    %p157 = scmp.ne.s32.totalorder %s152, %s154
    %p158 = scmp.eq.s32.totalorder %s13, 0
    %p159 = por %p157, %p158
    %p160 = scmp.ne.s32.totalorder %s152, %s154
    %p161 = scmp.eq.s32.totalorder %s18, 1
    %p162 = por %p160, %p161
    %p163 = scmp.ne.s32.totalorder %s154, %s155
    %p164 = scmp.eq.s32.totalorder %s18, 0
    %p165 = por %p163, %p164
    %p166 = scmp.ne.s32.totalorder %s154, %s155
    %p167 = scmp.eq.s32.totalorder %s19, 1
    %p168 = por %p166, %p167
    %p170 = scmp.ne.s32.totalorder %s155, %s169
    %p171 = scmp.eq.s32.totalorder %s19, 0
    %p172 = por %p170, %p171
    %s173 = ssub.s32 %s13, %s20
    %p174 = scmp.eq.s32.totalorder %s173, 0
    %s176 = sadd.s32 %s175, 1
    %s177 = scalar_select %p174, %s175, %s176
    %p180 = pneg %p174
    %p181 = scmp.eq.s32.totalorder %s13, 1
    %p182 = por %p180, %p181
    %p183 = scmp.ne.s32.totalorder %s175, %s178
    %p184 = scmp.eq.s32.totalorder %s13, 0
    %p185 = por %p183, %p184
    %p186 = scmp.ne.s32.totalorder %s175, %s178
    %p187 = scmp.eq.s32.totalorder %s18, 1
    %p188 = por %p186, %p187
    %p189 = scmp.ne.s32.totalorder %s178, %s179
    %p190 = scmp.eq.s32.totalorder %s18, 0
    %p191 = por %p189, %p190
    %p192 = scmp.ne.s32.totalorder %s178, %s179
    %p193 = scmp.eq.s32.totalorder %s19, 1
    %p194 = por %p192, %p193
    %p196 = scmp.ne.s32.totalorder %s179, %s195
    %p197 = scmp.eq.s32.totalorder %s19, 0
    %p198 = por %p196, %p197
    %p199 = scmp.le.s32.totalorder 1, %s13
    %p200 = scmp.lt.s32.totalorder %s13, 3
    %p201 = pnand %p199, %p200
    %p202 = pneg %p201
    // Predicated region
    $region9: #{_lambda_.5} parent=5 // pred_check
      _
    $region10: #{_lambda_.5} parent=5 // pred_check_branch
      %204 = sbr.rel (%p201) target = $region12
    $region11: #{_lambda_.5} parent=5 // pred_region
      %s205 = ssub.s32 %s13, 1
      // Predicated region
      $region13: #{_lambda_.5} parent=11 // pred_check
        %p206 = pneg %p60
      $region14: #{_lambda_.5} parent=11 // pred_check_branch
        %208 = sbr.rel (%p206) target = $region16
      $region15: #{_lambda_.5} parent=11 // pred_region
        _
      $region16: #{_lambda_.5} parent=11 // pred_fallthru
        _
      // Predicated region
      $region17: #{_lambda_.5} parent=11 // pred_check
        %p209 = pneg %p81
      $region18: #{_lambda_.5} parent=11 // pred_check_branch
        %211 = sbr.rel (%p209) target = $region20
      $region19: #{_lambda_.5} parent=11 // pred_region
        _
      $region20: #{_lambda_.5} parent=11 // pred_fallthru
        _
      // Predicated region
      $region21: #{_lambda_.5} parent=11 // pred_check
        %p212 = pneg %p102
      $region22: #{_lambda_.5} parent=11 // pred_check_branch
        %214 = sbr.rel (%p212) target = $region24
      $region23: #{_lambda_.5} parent=11 // pred_region
        _
      $region24: #{_lambda_.5} parent=11 // pred_fallthru
        _
      // Predicated region
      $region25: #{_lambda_.5} parent=11 // pred_check
        %p215 = pneg %p123
      $region26: #{_lambda_.5} parent=11 // pred_check_branch
        %217 = sbr.rel (%p215) target = $region28
      $region27: #{_lambda_.5} parent=11 // pred_region
        _
      $region28: #{_lambda_.5} parent=11 // pred_fallthru
        _
      // Predicated region
      $region29: #{_lambda_.5} parent=11 // pred_check
        %p218 = pneg %p144
      $region30: #{_lambda_.5} parent=11 // pred_check_branch
        %220 = sbr.rel (%p218) target = $region32
      $region31: #{_lambda_.5} parent=11 // pred_region
        _
      $region32: #{_lambda_.5} parent=11 // pred_fallthru
        _
      // Predicated region
      $region33: #{_lambda_.5} parent=11 // pred_check
        %p221 = pneg %p165
      $region34: #{_lambda_.5} parent=11 // pred_check_branch
        %223 = sbr.rel (%p221) target = $region36
      $region35: #{_lambda_.5} parent=11 // pred_region
        _
      $region36: #{_lambda_.5} parent=11 // pred_fallthru
        _
    $region12: #{_lambda_.5} parent=5 // pred_fallthru
      _
    %p224 = scmp.lt.s32.totalorder %s13, 2
    // Predicated region
    $region37: #{_lambda_.5} parent=5 // pred_check
      %p225 = pneg %p224
    $region38: #{_lambda_.5} parent=5 // pred_check_branch
      %227 = sbr.rel (%p225) target = $region40
    $region39: #{_lambda_.5} parent=5 // pred_region
      // Predicated region
      $region41: #{_lambda_.5} parent=39 // pred_check
        %p228 = pneg %p33
      $region42: #{_lambda_.5} parent=39 // pred_check_branch
        %230 = sbr.rel (%p228) target = $region44
      $region43: #{_lambda_.5} parent=39 // pred_region
        %p231 = scmp.lt.s32.totalorder %s13, 1
        %s232 = scalar_select %p231, %s13, 1
        %s233 = smul.addr %s232, 54
        %s234 = smul.addr %s233, 4
        %s235 = scalar_lea.vmem %s0, %s234
      $region44: #{_lambda_.5} parent=39 // pred_fallthru
        _
    $region40: #{_lambda_.5} parent=5 // pred_fallthru
      _
    %p236 = scmp.le.s32.totalorder 1, %s13
    %p237 = scmp.lt.s32.totalorder %s13, 3
    %p238 = pnand %p236, %p237
    %p239 = pneg %p238
    // Predicated region
    $region45: #{_lambda_.5} parent=5 // pred_check
      _
    $region46: #{_lambda_.5} parent=5 // pred_check_branch
      %241 = sbr.rel (%p238) target = $region48
    $region47: #{_lambda_.5} parent=5 // pred_region
      %s242 = ssub.s32 %s13, 1
      %p243 = scmp.lt.s32.totalorder %s18, 1
      %s244 = scalar_select %p243, %s18, 1
      %s245 = smul.addr %s244, 54
      %s246 = smul.addr %s245, 4
      %s247 = scalar_lea.vmem %s0, %s246
      %p248 = pneg %p39
      %p249 = pneg %p36
      %p250 = pneg %p60
      %p251 = pneg %p57
      %p252 = pneg %p81
      %p253 = pneg %p78
      %p254 = pneg %p102
      %p255 = pneg %p99
      %p256 = pneg %p123
      %p257 = pneg %p120
      %p258 = pneg %p144
      %p259 = pneg %p141
      %p260 = pneg %p165
      %p261 = pneg %p162
      %p262 = pneg %p191
      %p263 = pneg %p188
      %p264 = scmp.lt.s32.totalorder %s18, 1
      %s265 = scalar_select %p264, %s18, 1
      %s266 = smul.addr %s265, 54
      %s267 = smul.addr %s266, 4
      %s268 = scalar_lea.vmem %s7, %s267
      %p269 = scmp.lt.s32.totalorder %s18, 1
      %s270 = scalar_select %p269, %s18, 1
      %s271 = smul.addr %s270, 54
      %s272 = smul.addr %s271, 4
      %s273 = scalar_lea.vmem %s0, %s272
      %p274 = scmp.lt.s32.totalorder %s18, 1
      %s275 = scalar_select %p274, %s18, 1
      %s276 = smul.addr %s275, 54
      %s277 = smul.addr %s276, 4
      %s278 = scalar_lea.vmem %s7, %s277
      %v280 = vld [vmem:[%s273] sm:$0xf]
      %v281 = vld [vmem:[%s273 + $0x4] sm:$0xf]
      %v282 = vld [vmem:[%s273 + $0x8] sm:$0x1]
      %v283 = vld [vmem:[%s273 + $0xc] sm:$0xf]
      %v284 = vld [vmem:[%s273 + $0x10] sm:$0xf]
      %v285 = vld [vmem:[%s273 + $0x14] sm:$0x1]
      %v286 = vld [vmem:[%s273 + $0x18] sm:$0xf]
      %v287 = vld [vmem:[%s273 + $0x1c] sm:$0xf]
      %v288 = vld [vmem:[%s273 + $0x20] sm:$0x1]
      %v289 = vld [vmem:[%s273 + $0x24] sm:$0xf]
      %v290 = vld [vmem:[%s273 + $0x28] sm:$0xf]
      %v291 = vld [vmem:[%s273 + $0x2c] sm:$0x1]
      %v292 = vld [vmem:[%s273 + $0x30] sm:$0xf]
      %v293 = vld [vmem:[%s273 + $0x34] sm:$0xf]
      %v294 = vld [vmem:[%s273 + $0x38] sm:$0x1]
      %v295 = vld [vmem:[%s273 + $0x3c] sm:$0xf]
      %v296 = vld [vmem:[%s273 + $0x40] sm:$0xf]
      %v297 = vld [vmem:[%s273 + $0x44] sm:$0x1]
      %v298 = vld [vmem:[%s273 + $0x48] sm:$0xf]
      %v299 = vld [vmem:[%s273 + $0x4c] sm:$0xf]
      %v300 = vld [vmem:[%s273 + $0x50] sm:$0x1]
      %v301 = vld [vmem:[%s273 + $0x54] sm:$0xf]
      %v302 = vld [vmem:[%s273 + $0x58] sm:$0xf]
      %v303 = vld [vmem:[%s273 + $0x5c] sm:$0x1]
      %v304 = vld [vmem:[%s273 + $0x60] sm:$0xf]
      %v305 = vld [vmem:[%s273 + $0x64] sm:$0xf]
      %v306 = vld [vmem:[%s273 + $0x68] sm:$0x1]
      %v307 = vld [vmem:[%s273 + $0x6c] sm:$0xf]
      %v308 = vld [vmem:[%s273 + $0x70] sm:$0xf]
      %v309 = vld [vmem:[%s273 + $0x74] sm:$0x1]
      %v310 = vld [vmem:[%s273 + $0x78] sm:$0xf]
      %v311 = vld [vmem:[%s273 + $0x7c] sm:$0xf]
      %v312 = vld [vmem:[%s273 + $0x80] sm:$0x1]
      %v313 = vld [vmem:[%s273 + $0x84] sm:$0xf]
      %v314 = vld [vmem:[%s273 + $0x88] sm:$0xf]
      %v315 = vld [vmem:[%s273 + $0x8c] sm:$0x1]
      %v316 = vld [vmem:[%s273 + $0x90] sm:$0xf]
      %v317 = vld [vmem:[%s273 + $0x94] sm:$0xf]
      %v318 = vld [vmem:[%s273 + $0x98] sm:$0x1]
      %v319 = vld [vmem:[%s273 + $0x9c] sm:$0xf]
      %v320 = vld [vmem:[%s273 + $0xa0] sm:$0xf]
      %v321 = vld [vmem:[%s273 + $0xa4] sm:$0x1]
      %v322 = vld [vmem:[%s273 + $0xa8] sm:$0xf]
      %v323 = vld [vmem:[%s273 + $0xac] sm:$0xf]
      %v324 = vld [vmem:[%s273 + $0xb0] sm:$0x1]
      %v325 = vld [vmem:[%s273 + $0xb4] sm:$0xf]
      %v326 = vld [vmem:[%s273 + $0xb8] sm:$0xf]
      %v327 = vld [vmem:[%s273 + $0xbc] sm:$0x1]
      %v328 = vld [vmem:[%s273 + $0xc0] sm:$0xf]
      %v329 = vld [vmem:[%s273 + $0xc4] sm:$0xf]
      %v330 = vld [vmem:[%s273 + $0xc8] sm:$0x1]
      %v331 = vld [vmem:[%s273 + $0xcc] sm:$0xf]
      %v332 = vld [vmem:[%s273 + $0xd0] sm:$0xf]
      %v333 = vld [vmem:[%s273 + $0xd4] sm:$0x1]
      %v334 = vunpack.c.l.bf16 %v280
      %v335 = vunpack.c.l.bf16 %v281
      %v336 = vunpack.c.l.bf16 %v282
      %v337 = vunpack.c.l.bf16 %v283
      %v338 = vunpack.c.l.bf16 %v284
      %v339 = vunpack.c.l.bf16 %v285
      %v340 = vunpack.c.l.bf16 %v286
      %v341 = vunpack.c.l.bf16 %v287
      %v342 = vunpack.c.l.bf16 %v288
      %v343 = vunpack.c.l.bf16 %v289
      %v344 = vunpack.c.l.bf16 %v290
      %v345 = vunpack.c.l.bf16 %v291
      %v346 = vunpack.c.l.bf16 %v292
      %v347 = vunpack.c.l.bf16 %v293
      %v348 = vunpack.c.l.bf16 %v294
      %v349 = vunpack.c.l.bf16 %v295
      %v350 = vunpack.c.l.bf16 %v296
      %v351 = vunpack.c.l.bf16 %v297
      %v352 = vunpack.c.l.bf16 %v298
      %v353 = vunpack.c.l.bf16 %v299
      %v354 = vunpack.c.l.bf16 %v300
      %v355 = vunpack.c.l.bf16 %v301
      %v356 = vunpack.c.l.bf16 %v302
      %v357 = vunpack.c.l.bf16 %v303
      %v358 = vunpack.c.l.bf16 %v304
      %v359 = vunpack.c.l.bf16 %v305
      %v360 = vunpack.c.l.bf16 %v306
      %v361 = vunpack.c.l.bf16 %v307
      %v362 = vunpack.c.l.bf16 %v308
      %v363 = vunpack.c.l.bf16 %v309
      %v364 = vunpack.c.l.bf16 %v310
      %v365 = vunpack.c.l.bf16 %v311
      %v366 = vunpack.c.l.bf16 %v312
      %v367 = vunpack.c.l.bf16 %v313
      %v368 = vunpack.c.l.bf16 %v314
      %v369 = vunpack.c.l.bf16 %v315
      %v370 = vunpack.c.l.bf16 %v316
      %v371 = vunpack.c.l.bf16 %v317
      %v372 = vunpack.c.l.bf16 %v318
      %v373 = vunpack.c.l.bf16 %v319
      %v374 = vunpack.c.l.bf16 %v320
      %v375 = vunpack.c.l.bf16 %v321
      %v376 = vunpack.c.l.bf16 %v322
      %v377 = vunpack.c.l.bf16 %v323
      %v378 = vunpack.c.l.bf16 %v324
      %v379 = vunpack.c.l.bf16 %v325
      %v380 = vunpack.c.l.bf16 %v326
      %v381 = vunpack.c.l.bf16 %v327
      %v382 = vunpack.c.l.bf16 %v328
      %v383 = vunpack.c.l.bf16 %v329
      %v384 = vunpack.c.l.bf16 %v330
      %v385 = vunpack.c.l.bf16 %v331
      %v386 = vunpack.c.l.bf16 %v332
      %v387 = vunpack.c.l.bf16 %v333
      %v388 = vld [vmem:[%s1] sm:$0xf]
      %v389 = vld [vmem:[%s1 + $0x4] sm:$0xf]
      %v390 = vld [vmem:[%s1 + $0x8] sm:$0xf]
      %v391 = vld [vmem:[%s1 + $0xc] sm:$0xf]
      %v392 = vld [vmem:[%s1 + $0x10] sm:$0xf]
      %v393 = vld [vmem:[%s1 + $0x14] sm:$0xf]
      %v394 = vld [vmem:[%s1 + $0x18] sm:$0xf]
      %v395 = vld [vmem:[%s1 + $0x1c] sm:$0xf]
      %v396 = vld [vmem:[%s1 + $0x20] sm:$0xf]
      %vm451 = vcmask 1046528
      %v452 = vrot.slane %v334, 1
      %v453 = vrot.slane %v335, 1
      %v454 = vsel %vm451, %v452, %v453
      %v455 = vrot.slane %v336, 1
      %v456 = vsel %vm451, %v453, %v455
      %v457 = vrot.slane %v337, 1
      %v458 = vrot.slane %v338, 1
      %v459 = vsel %vm451, %v457, %v458
      %v460 = vrot.slane %v339, 1
      %v461 = vsel %vm451, %v458, %v460
      %v462 = vrot.slane %v340, 1
      %v463 = vrot.slane %v341, 1
      %v464 = vsel %vm451, %v462, %v463
      %v465 = vrot.slane %v342, 1
      %v466 = vsel %vm451, %v463, %v465
      %v467 = vrot.slane %v343, 1
      %v468 = vrot.slane %v344, 1
      %v469 = vsel %vm451, %v467, %v468
      %v470 = vrot.slane %v345, 1
      %v471 = vsel %vm451, %v468, %v470
      %v472 = vrot.slane %v346, 1
      %v473 = vrot.slane %v347, 1
      %v474 = vsel %vm451, %v472, %v473
      %v475 = vrot.slane %v348, 1
      %v476 = vsel %vm451, %v473, %v475
      %v477 = vrot.slane %v349, 1
      %v478 = vrot.slane %v350, 1
      %v479 = vsel %vm451, %v477, %v478
      %v480 = vrot.slane %v351, 1
      %v481 = vsel %vm451, %v478, %v480
      %v482 = vrot.slane %v352, 1
      %v483 = vrot.slane %v353, 1
      %v484 = vsel %vm451, %v482, %v483
      %v485 = vrot.slane %v354, 1
      %v486 = vsel %vm451, %v483, %v485
      %v487 = vrot.slane %v355, 1
      %v488 = vrot.slane %v356, 1
      %v489 = vsel %vm451, %v487, %v488
      %v490 = vrot.slane %v357, 1
      %v491 = vsel %vm451, %v488, %v490
      %v492 = vrot.slane %v358, 1
      %v493 = vrot.slane %v359, 1
      %v494 = vsel %vm451, %v492, %v493
      %v495 = vrot.slane %v360, 1
      %v496 = vsel %vm451, %v493, %v495
      %v497 = vrot.slane %v361, 1
      %v498 = vrot.slane %v362, 1
      %v499 = vsel %vm451, %v497, %v498
      %v500 = vrot.slane %v363, 1
      %v501 = vsel %vm451, %v498, %v500
      %v502 = vrot.slane %v364, 1
      %v503 = vrot.slane %v365, 1
      %v504 = vsel %vm451, %v502, %v503
      %v505 = vrot.slane %v366, 1
      %v506 = vsel %vm451, %v503, %v505
      %v507 = vrot.slane %v367, 1
      %v508 = vrot.slane %v368, 1
      %v509 = vsel %vm451, %v507, %v508
      %v510 = vrot.slane %v369, 1
      %v511 = vsel %vm451, %v508, %v510
      %v512 = vrot.slane %v370, 1
      %v513 = vrot.slane %v371, 1
      %v514 = vsel %vm451, %v512, %v513
      %v515 = vrot.slane %v372, 1
      %v516 = vsel %vm451, %v513, %v515
      %v517 = vrot.slane %v373, 1
      %v518 = vrot.slane %v374, 1
      %v519 = vsel %vm451, %v517, %v518
      %v520 = vrot.slane %v375, 1
      %v521 = vsel %vm451, %v518, %v520
      %v522 = vrot.slane %v376, 1
      %v523 = vrot.slane %v377, 1
      %v524 = vsel %vm451, %v522, %v523
      %v525 = vrot.slane %v378, 1
      %v526 = vsel %vm451, %v523, %v525
      %v527 = vrot.slane %v379, 1
      %v528 = vrot.slane %v380, 1
      %v529 = vsel %vm451, %v527, %v528
      %v530 = vrot.slane %v381, 1
      %v531 = vsel %vm451, %v528, %v530
      %v532 = vrot.slane %v382, 1
      %v533 = vrot.slane %v383, 1
      %v534 = vsel %vm451, %v532, %v533
      %v535 = vrot.slane %v384, 1
      %v536 = vsel %vm451, %v533, %v535
      %v537 = vrot.slane %v385, 1
      %v538 = vrot.slane %v386, 1
      %v539 = vsel %vm451, %v537, %v538
      %v540 = vrot.slane %v387, 1
      %v541 = vsel %vm451, %v538, %v540
      %vm542 = vcmask 1045504
      %v543 = vrot.slane %v334, 2
      %v544 = vrot.slane %v335, 2
      %v545 = vsel %vm542, %v543, %v544
      %v546 = vrot.slane %v336, 2
      %v547 = vsel %vm542, %v544, %v546
      %v548 = vrot.slane %v337, 2
      %v549 = vrot.slane %v338, 2
      %v550 = vsel %vm542, %v548, %v549
      %v551 = vrot.slane %v339, 2
      %v552 = vsel %vm542, %v549, %v551
      %v553 = vrot.slane %v340, 2
      %v554 = vrot.slane %v341, 2
      %v555 = vsel %vm542, %v553, %v554
      %v556 = vrot.slane %v342, 2
      %v557 = vsel %vm542, %v554, %v556
      %v558 = vrot.slane %v343, 2
      %v559 = vrot.slane %v344, 2
      %v560 = vsel %vm542, %v558, %v559
      %v561 = vrot.slane %v345, 2
      %v562 = vsel %vm542, %v559, %v561
      %v563 = vrot.slane %v346, 2
      %v564 = vrot.slane %v347, 2
      %v565 = vsel %vm542, %v563, %v564
      %v566 = vrot.slane %v348, 2
      %v567 = vsel %vm542, %v564, %v566
      %v568 = vrot.slane %v349, 2
      %v569 = vrot.slane %v350, 2
      %v570 = vsel %vm542, %v568, %v569
      %v571 = vrot.slane %v351, 2
      %v572 = vsel %vm542, %v569, %v571
      %v573 = vrot.slane %v352, 2
      %v574 = vrot.slane %v353, 2
      %v575 = vsel %vm542, %v573, %v574
      %v576 = vrot.slane %v354, 2
      %v577 = vsel %vm542, %v574, %v576
      %v578 = vrot.slane %v355, 2
      %v579 = vrot.slane %v356, 2
      %v580 = vsel %vm542, %v578, %v579
      %v581 = vrot.slane %v357, 2
      %v582 = vsel %vm542, %v579, %v581
      %v583 = vrot.slane %v358, 2
      %v584 = vrot.slane %v359, 2
      %v585 = vsel %vm542, %v583, %v584
      %v586 = vrot.slane %v360, 2
      %v587 = vsel %vm542, %v584, %v586
      %v588 = vrot.slane %v361, 2
      %v589 = vrot.slane %v362, 2
      %v590 = vsel %vm542, %v588, %v589
      %v591 = vrot.slane %v363, 2
      %v592 = vsel %vm542, %v589, %v591
      %v593 = vrot.slane %v364, 2
      %v594 = vrot.slane %v365, 2
      %v595 = vsel %vm542, %v593, %v594
      %v596 = vrot.slane %v366, 2
      %v597 = vsel %vm542, %v594, %v596
      %v598 = vrot.slane %v367, 2
      %v599 = vrot.slane %v368, 2
      %v600 = vsel %vm542, %v598, %v599
      %v601 = vrot.slane %v369, 2
      %v602 = vsel %vm542, %v599, %v601
      %v603 = vrot.slane %v370, 2
      %v604 = vrot.slane %v371, 2
      %v605 = vsel %vm542, %v603, %v604
      %v606 = vrot.slane %v372, 2
      %v607 = vsel %vm542, %v604, %v606
      %v608 = vrot.slane %v373, 2
      %v609 = vrot.slane %v374, 2
      %v610 = vsel %vm542, %v608, %v609
      %v611 = vrot.slane %v375, 2
      %v612 = vsel %vm542, %v609, %v611
      %v613 = vrot.slane %v376, 2
      %v614 = vrot.slane %v377, 2
      %v615 = vsel %vm542, %v613, %v614
      %v616 = vrot.slane %v378, 2
      %v617 = vsel %vm542, %v614, %v616
      %v618 = vrot.slane %v379, 2
      %v619 = vrot.slane %v380, 2
      %v620 = vsel %vm542, %v618, %v619
      %v621 = vrot.slane %v381, 2
      %v622 = vsel %vm542, %v619, %v621
      %v623 = vrot.slane %v382, 2
      %v624 = vrot.slane %v383, 2
      %v625 = vsel %vm542, %v623, %v624
      %v626 = vrot.slane %v384, 2
      %v627 = vsel %vm542, %v624, %v626
      %v628 = vrot.slane %v385, 2
      %v629 = vrot.slane %v386, 2
      %v630 = vsel %vm542, %v628, %v629
      %v631 = vrot.slane %v387, 2
      %v632 = vsel %vm542, %v629, %v631
      %633 = vrot.lane.b32.xlu0 %v454, 8
      %v634 = vpop.permute.xlu0 %633
      %635 = vrot.lane.b32.xlu0 %v456, 8
      %v636 = vpop.permute.xlu0 %635
      %637 = vrot.lane.b32.xlu0 %v459, 8
      %v638 = vpop.permute.xlu0 %637
      %639 = vrot.lane.b32.xlu0 %v461, 8
      %v640 = vpop.permute.xlu0 %639
      %641 = vrot.lane.b32.xlu0 %v464, 8
      %v642 = vpop.permute.xlu0 %641
      %643 = vrot.lane.b32.xlu0 %v466, 8
      %v644 = vpop.permute.xlu0 %643
      %645 = vrot.lane.b32.xlu0 %v469, 8
      %v646 = vpop.permute.xlu0 %645
      %647 = vrot.lane.b32.xlu0 %v471, 8
      %v648 = vpop.permute.xlu0 %647
      %649 = vrot.lane.b32.xlu0 %v474, 8
      %v650 = vpop.permute.xlu0 %649
      %651 = vrot.lane.b32.xlu0 %v476, 8
      %v652 = vpop.permute.xlu0 %651
      %653 = vrot.lane.b32.xlu0 %v479, 8
      %v654 = vpop.permute.xlu0 %653
      %655 = vrot.lane.b32.xlu0 %v481, 8
      %v656 = vpop.permute.xlu0 %655
      %657 = vrot.lane.b32.xlu0 %v484, 8
      %v658 = vpop.permute.xlu0 %657
      %659 = vrot.lane.b32.xlu0 %v486, 8
      %v660 = vpop.permute.xlu0 %659
      %661 = vrot.lane.b32.xlu0 %v489, 8
      %v662 = vpop.permute.xlu0 %661
      %663 = vrot.lane.b32.xlu0 %v491, 8
      %v664 = vpop.permute.xlu0 %663
      %665 = vrot.lane.b32.xlu0 %v494, 8
      %v666 = vpop.permute.xlu0 %665
      %667 = vrot.lane.b32.xlu0 %v496, 8
      %v668 = vpop.permute.xlu0 %667
      %669 = vrot.lane.b32.xlu0 %v499, 8
      %v670 = vpop.permute.xlu0 %669
      %671 = vrot.lane.b32.xlu0 %v501, 8
      %v672 = vpop.permute.xlu0 %671
      %673 = vrot.lane.b32.xlu0 %v504, 8
      %v674 = vpop.permute.xlu0 %673
      %675 = vrot.lane.b32.xlu0 %v506, 8
      %v676 = vpop.permute.xlu0 %675
      %677 = vrot.lane.b32.xlu0 %v509, 8
      %v678 = vpop.permute.xlu0 %677
      %679 = vrot.lane.b32.xlu0 %v511, 8
      %v680 = vpop.permute.xlu0 %679
      %681 = vrot.lane.b32.xlu0 %v514, 8
      %v682 = vpop.permute.xlu0 %681
      %683 = vrot.lane.b32.xlu0 %v516, 8
      %v684 = vpop.permute.xlu0 %683
      %685 = vrot.lane.b32.xlu0 %v519, 8
      %v686 = vpop.permute.xlu0 %685
      %687 = vrot.lane.b32.xlu0 %v521, 8
      %v688 = vpop.permute.xlu0 %687
      %689 = vrot.lane.b32.xlu0 %v524, 8
      %v690 = vpop.permute.xlu0 %689
      %691 = vrot.lane.b32.xlu0 %v526, 8
      %v692 = vpop.permute.xlu0 %691
      %693 = vrot.lane.b32.xlu0 %v529, 8
      %v694 = vpop.permute.xlu0 %693
      %695 = vrot.lane.b32.xlu0 %v531, 8
      %v696 = vpop.permute.xlu0 %695
      %729 = vrot.lane.b32.xlu0 %v545, 16
      %v730 = vpop.permute.xlu0 %729
      %731 = vrot.lane.b32.xlu0 %v547, 16
      %v732 = vpop.permute.xlu0 %731
      %733 = vrot.lane.b32.xlu0 %v550, 16
      %v734 = vpop.permute.xlu0 %733
      %735 = vrot.lane.b32.xlu0 %v552, 16
      %v736 = vpop.permute.xlu0 %735
      %737 = vrot.lane.b32.xlu0 %v555, 16
      %v738 = vpop.permute.xlu0 %737
      %739 = vrot.lane.b32.xlu0 %v557, 16
      %v740 = vpop.permute.xlu0 %739
      %741 = vrot.lane.b32.xlu0 %v560, 16
      %v742 = vpop.permute.xlu0 %741
      %743 = vrot.lane.b32.xlu0 %v562, 16
      %v744 = vpop.permute.xlu0 %743
      %745 = vrot.lane.b32.xlu0 %v565, 16
      %v746 = vpop.permute.xlu0 %745
      %747 = vrot.lane.b32.xlu0 %v567, 16
      %v748 = vpop.permute.xlu0 %747
      %749 = vrot.lane.b32.xlu0 %v570, 16
      %v750 = vpop.permute.xlu0 %749
      %751 = vrot.lane.b32.xlu0 %v572, 16
      %v752 = vpop.permute.xlu0 %751
      %753 = vrot.lane.b32.xlu0 %v575, 16
      %v754 = vpop.permute.xlu0 %753
      %755 = vrot.lane.b32.xlu0 %v577, 16
      %v756 = vpop.permute.xlu0 %755
      %757 = vrot.lane.b32.xlu0 %v580, 16
      %v758 = vpop.permute.xlu0 %757
      %759 = vrot.lane.b32.xlu0 %v582, 16
      %v760 = vpop.permute.xlu0 %759
      %761 = vrot.lane.b32.xlu0 %v585, 16
      %v762 = vpop.permute.xlu0 %761
      %763 = vrot.lane.b32.xlu0 %v587, 16
      %v764 = vpop.permute.xlu0 %763
      %765 = vrot.lane.b32.xlu0 %v590, 16
      %v766 = vpop.permute.xlu0 %765
      %767 = vrot.lane.b32.xlu0 %v592, 16
      %v768 = vpop.permute.xlu0 %767
      %769 = vrot.lane.b32.xlu0 %v595, 16
      %v770 = vpop.permute.xlu0 %769
      %771 = vrot.lane.b32.xlu0 %v597, 16
      %v772 = vpop.permute.xlu0 %771
      %773 = vrot.lane.b32.xlu0 %v600, 16
      %v774 = vpop.permute.xlu0 %773
      %775 = vrot.lane.b32.xlu0 %v602, 16
      %v776 = vpop.permute.xlu0 %775
      %777 = vrot.lane.b32.xlu0 %v605, 16
      %v778 = vpop.permute.xlu0 %777
      %779 = vrot.lane.b32.xlu0 %v607, 16
      %v780 = vpop.permute.xlu0 %779
      %781 = vrot.lane.b32.xlu0 %v610, 16
      %v782 = vpop.permute.xlu0 %781
      %783 = vrot.lane.b32.xlu0 %v612, 16
      %v784 = vpop.permute.xlu0 %783
      %785 = vrot.lane.b32.xlu0 %v615, 16
      %v786 = vpop.permute.xlu0 %785
      %787 = vrot.lane.b32.xlu0 %v617, 16
      %v788 = vpop.permute.xlu0 %787
      %789 = vrot.lane.b32.xlu0 %v620, 16
      %v790 = vpop.permute.xlu0 %789
      %791 = vrot.lane.b32.xlu0 %v622, 16
      %v792 = vpop.permute.xlu0 %791
      %825 = vrot.lane.b32.xlu0 %v337, 24
      %v826 = vpop.permute.xlu0 %825
      %827 = vrot.lane.b32.xlu0 %v338, 24
      %v828 = vpop.permute.xlu0 %827
      %829 = vrot.lane.b32.xlu0 %v340, 24
      %v830 = vpop.permute.xlu0 %829
      %831 = vrot.lane.b32.xlu0 %v341, 24
      %v832 = vpop.permute.xlu0 %831
      %833 = vrot.lane.b32.xlu0 %v343, 24
      %v834 = vpop.permute.xlu0 %833
      %835 = vrot.lane.b32.xlu0 %v344, 24
      %v836 = vpop.permute.xlu0 %835
      %837 = vrot.lane.b32.xlu0 %v346, 24
      %v838 = vpop.permute.xlu0 %837
      %839 = vrot.lane.b32.xlu0 %v347, 24
      %v840 = vpop.permute.xlu0 %839
      %841 = vrot.lane.b32.xlu0 %v349, 24
      %v842 = vpop.permute.xlu0 %841
      %843 = vrot.lane.b32.xlu0 %v350, 24
      %v844 = vpop.permute.xlu0 %843
      %845 = vrot.lane.b32.xlu0 %v352, 24
      %v846 = vpop.permute.xlu0 %845
      %847 = vrot.lane.b32.xlu0 %v353, 24
      %v848 = vpop.permute.xlu0 %847
      %849 = vrot.lane.b32.xlu0 %v355, 24
      %v850 = vpop.permute.xlu0 %849
      %851 = vrot.lane.b32.xlu0 %v356, 24
      %v852 = vpop.permute.xlu0 %851
      %853 = vrot.lane.b32.xlu0 %v358, 24
      %v854 = vpop.permute.xlu0 %853
      %855 = vrot.lane.b32.xlu0 %v359, 24
      %v856 = vpop.permute.xlu0 %855
      %857 = vrot.lane.b32.xlu0 %v361, 24
      %v858 = vpop.permute.xlu0 %857
      %859 = vrot.lane.b32.xlu0 %v362, 24
      %v860 = vpop.permute.xlu0 %859
      %861 = vrot.lane.b32.xlu0 %v364, 24
      %v862 = vpop.permute.xlu0 %861
      %863 = vrot.lane.b32.xlu0 %v365, 24
      %v864 = vpop.permute.xlu0 %863
      %865 = vrot.lane.b32.xlu0 %v367, 24
      %v866 = vpop.permute.xlu0 %865
      %867 = vrot.lane.b32.xlu0 %v368, 24
      %v868 = vpop.permute.xlu0 %867
      %869 = vrot.lane.b32.xlu0 %v370, 24
      %v870 = vpop.permute.xlu0 %869
      %871 = vrot.lane.b32.xlu0 %v371, 24
      %v872 = vpop.permute.xlu0 %871
      %873 = vrot.lane.b32.xlu0 %v373, 24
      %v874 = vpop.permute.xlu0 %873
      %875 = vrot.lane.b32.xlu0 %v374, 24
      %v876 = vpop.permute.xlu0 %875
      %877 = vrot.lane.b32.xlu0 %v376, 24
      %v878 = vpop.permute.xlu0 %877
      %879 = vrot.lane.b32.xlu0 %v377, 24
      %v880 = vpop.permute.xlu0 %879
      %881 = vrot.lane.b32.xlu0 %v379, 24
      %v882 = vpop.permute.xlu0 %881
      %883 = vrot.lane.b32.xlu0 %v380, 24
      %v884 = vpop.permute.xlu0 %883
      %885 = vrot.lane.b32.xlu0 %v382, 24
      %v886 = vpop.permute.xlu0 %885
      %887 = vrot.lane.b32.xlu0 %v383, 24
      %v888 = vpop.permute.xlu0 %887
      %921 = vrot.lane.b32.xlu0 %v459, 32
      %v922 = vpop.permute.xlu0 %921
      %923 = vrot.lane.b32.xlu0 %v461, 32
      %v924 = vpop.permute.xlu0 %923
      %925 = vrot.lane.b32.xlu0 %v464, 32
      %v926 = vpop.permute.xlu0 %925
      %927 = vrot.lane.b32.xlu0 %v466, 32
      %v928 = vpop.permute.xlu0 %927
      %929 = vrot.lane.b32.xlu0 %v469, 32
      %v930 = vpop.permute.xlu0 %929
      %931 = vrot.lane.b32.xlu0 %v471, 32
      %v932 = vpop.permute.xlu0 %931
      %933 = vrot.lane.b32.xlu0 %v474, 32
      %v934 = vpop.permute.xlu0 %933
      %935 = vrot.lane.b32.xlu0 %v476, 32
      %v936 = vpop.permute.xlu0 %935
      %937 = vrot.lane.b32.xlu0 %v479, 32
      %v938 = vpop.permute.xlu0 %937
      %939 = vrot.lane.b32.xlu0 %v481, 32
      %v940 = vpop.permute.xlu0 %939
      %941 = vrot.lane.b32.xlu0 %v484, 32
      %v942 = vpop.permute.xlu0 %941
      %943 = vrot.lane.b32.xlu0 %v486, 32
      %v944 = vpop.permute.xlu0 %943
      %945 = vrot.lane.b32.xlu0 %v489, 32
      %v946 = vpop.permute.xlu0 %945
      %947 = vrot.lane.b32.xlu0 %v491, 32
      %v948 = vpop.permute.xlu0 %947
      %949 = vrot.lane.b32.xlu0 %v494, 32
      %v950 = vpop.permute.xlu0 %949
      %951 = vrot.lane.b32.xlu0 %v496, 32
      %v952 = vpop.permute.xlu0 %951
      %953 = vrot.lane.b32.xlu0 %v499, 32
      %v954 = vpop.permute.xlu0 %953
      %955 = vrot.lane.b32.xlu0 %v501, 32
      %v956 = vpop.permute.xlu0 %955
      %957 = vrot.lane.b32.xlu0 %v504, 32
      %v958 = vpop.permute.xlu0 %957
      %959 = vrot.lane.b32.xlu0 %v506, 32
      %v960 = vpop.permute.xlu0 %959
      %961 = vrot.lane.b32.xlu0 %v509, 32
      %v962 = vpop.permute.xlu0 %961
      %963 = vrot.lane.b32.xlu0 %v511, 32
      %v964 = vpop.permute.xlu0 %963
      %965 = vrot.lane.b32.xlu0 %v514, 32
      %v966 = vpop.permute.xlu0 %965
      %967 = vrot.lane.b32.xlu0 %v516, 32
      %v968 = vpop.permute.xlu0 %967
      %969 = vrot.lane.b32.xlu0 %v519, 32
      %v970 = vpop.permute.xlu0 %969
      %971 = vrot.lane.b32.xlu0 %v521, 32
      %v972 = vpop.permute.xlu0 %971
      %973 = vrot.lane.b32.xlu0 %v524, 32
      %v974 = vpop.permute.xlu0 %973
      %975 = vrot.lane.b32.xlu0 %v526, 32
      %v976 = vpop.permute.xlu0 %975
      %977 = vrot.lane.b32.xlu0 %v529, 32
      %v978 = vpop.permute.xlu0 %977
      %979 = vrot.lane.b32.xlu0 %v531, 32
      %v980 = vpop.permute.xlu0 %979
      %981 = vrot.lane.b32.xlu0 %v534, 32
      %v982 = vpop.permute.xlu0 %981
      %983 = vrot.lane.b32.xlu0 %v536, 32
      %v984 = vpop.permute.xlu0 %983
      %1017 = vrot.lane.b32.xlu0 %v550, 40
      %v1018 = vpop.permute.xlu0 %1017
      %1019 = vrot.lane.b32.xlu0 %v552, 40
      %v1020 = vpop.permute.xlu0 %1019
      %1021 = vrot.lane.b32.xlu0 %v555, 40
      %v1022 = vpop.permute.xlu0 %1021
      %1023 = vrot.lane.b32.xlu0 %v557, 40
      %v1024 = vpop.permute.xlu0 %1023
      %1025 = vrot.lane.b32.xlu0 %v560, 40
      %v1026 = vpop.permute.xlu0 %1025
      %1027 = vrot.lane.b32.xlu0 %v562, 40
      %v1028 = vpop.permute.xlu0 %1027
      %1029 = vrot.lane.b32.xlu0 %v565, 40
      %v1030 = vpop.permute.xlu0 %1029
      %1031 = vrot.lane.b32.xlu0 %v567, 40
      %v1032 = vpop.permute.xlu0 %1031
      %1033 = vrot.lane.b32.xlu0 %v570, 40
      %v1034 = vpop.permute.xlu0 %1033
      %1035 = vrot.lane.b32.xlu0 %v572, 40
      %v1036 = vpop.permute.xlu0 %1035
      %1037 = vrot.lane.b32.xlu0 %v575, 40
      %v1038 = vpop.permute.xlu0 %1037
      %1039 = vrot.lane.b32.xlu0 %v577, 40
      %v1040 = vpop.permute.xlu0 %1039
      %1041 = vrot.lane.b32.xlu0 %v580, 40
      %v1042 = vpop.permute.xlu0 %1041
      %1043 = vrot.lane.b32.xlu0 %v582, 40
      %v1044 = vpop.permute.xlu0 %1043
      %1045 = vrot.lane.b32.xlu0 %v585, 40
      %v1046 = vpop.permute.xlu0 %1045
      %1047 = vrot.lane.b32.xlu0 %v587, 40
      %v1048 = vpop.permute.xlu0 %1047
      %1049 = vrot.lane.b32.xlu0 %v590, 40
      %v1050 = vpop.permute.xlu0 %1049
      %1051 = vrot.lane.b32.xlu0 %v592, 40
      %v1052 = vpop.permute.xlu0 %1051
      %1053 = vrot.lane.b32.xlu0 %v595, 40
      %v1054 = vpop.permute.xlu0 %1053
      %1055 = vrot.lane.b32.xlu0 %v597, 40
      %v1056 = vpop.permute.xlu0 %1055
      %1057 = vrot.lane.b32.xlu0 %v600, 40
      %v1058 = vpop.permute.xlu0 %1057
      %1059 = vrot.lane.b32.xlu0 %v602, 40
      %v1060 = vpop.permute.xlu0 %1059
      %1061 = vrot.lane.b32.xlu0 %v605, 40
      %v1062 = vpop.permute.xlu0 %1061
      %1063 = vrot.lane.b32.xlu0 %v607, 40
      %v1064 = vpop.permute.xlu0 %1063
      %1065 = vrot.lane.b32.xlu0 %v610, 40
      %v1066 = vpop.permute.xlu0 %1065
      %1067 = vrot.lane.b32.xlu0 %v612, 40
      %v1068 = vpop.permute.xlu0 %1067
      %1069 = vrot.lane.b32.xlu0 %v615, 40
      %v1070 = vpop.permute.xlu0 %1069
      %1071 = vrot.lane.b32.xlu0 %v617, 40
      %v1072 = vpop.permute.xlu0 %1071
      %1073 = vrot.lane.b32.xlu0 %v620, 40
      %v1074 = vpop.permute.xlu0 %1073
      %1075 = vrot.lane.b32.xlu0 %v622, 40
      %v1076 = vpop.permute.xlu0 %1075
      %1077 = vrot.lane.b32.xlu0 %v625, 40
      %v1078 = vpop.permute.xlu0 %1077
      %1079 = vrot.lane.b32.xlu0 %v627, 40
      %v1080 = vpop.permute.xlu0 %1079
      %1113 = vrot.lane.b32.xlu0 %v340, 48
      %v1114 = vpop.permute.xlu0 %1113
      %1115 = vrot.lane.b32.xlu0 %v341, 48
      %v1116 = vpop.permute.xlu0 %1115
      %1117 = vrot.lane.b32.xlu0 %v343, 48
      %v1118 = vpop.permute.xlu0 %1117
      %1119 = vrot.lane.b32.xlu0 %v344, 48
      %v1120 = vpop.permute.xlu0 %1119
      %1121 = vrot.lane.b32.xlu0 %v346, 48
      %v1122 = vpop.permute.xlu0 %1121
      %1123 = vrot.lane.b32.xlu0 %v347, 48
      %v1124 = vpop.permute.xlu0 %1123
      %1125 = vrot.lane.b32.xlu0 %v349, 48
      %v1126 = vpop.permute.xlu0 %1125
      %1127 = vrot.lane.b32.xlu0 %v350, 48
      %v1128 = vpop.permute.xlu0 %1127
      %1129 = vrot.lane.b32.xlu0 %v352, 48
      %v1130 = vpop.permute.xlu0 %1129
      %1131 = vrot.lane.b32.xlu0 %v353, 48
      %v1132 = vpop.permute.xlu0 %1131
      %1133 = vrot.lane.b32.xlu0 %v355, 48
      %v1134 = vpop.permute.xlu0 %1133
      %1135 = vrot.lane.b32.xlu0 %v356, 48
      %v1136 = vpop.permute.xlu0 %1135
      %1137 = vrot.lane.b32.xlu0 %v358, 48
      %v1138 = vpop.permute.xlu0 %1137
      %1139 = vrot.lane.b32.xlu0 %v359, 48
      %v1140 = vpop.permute.xlu0 %1139
      %1141 = vrot.lane.b32.xlu0 %v361, 48
      %v1142 = vpop.permute.xlu0 %1141
      %1143 = vrot.lane.b32.xlu0 %v362, 48
      %v1144 = vpop.permute.xlu0 %1143
      %1145 = vrot.lane.b32.xlu0 %v364, 48
      %v1146 = vpop.permute.xlu0 %1145
      %1147 = vrot.lane.b32.xlu0 %v365, 48
      %v1148 = vpop.permute.xlu0 %1147
      %1149 = vrot.lane.b32.xlu0 %v367, 48
      %v1150 = vpop.permute.xlu0 %1149
      %1151 = vrot.lane.b32.xlu0 %v368, 48
      %v1152 = vpop.permute.xlu0 %1151
      %1153 = vrot.lane.b32.xlu0 %v370, 48
      %v1154 = vpop.permute.xlu0 %1153
      %1155 = vrot.lane.b32.xlu0 %v371, 48
      %v1156 = vpop.permute.xlu0 %1155
      %1157 = vrot.lane.b32.xlu0 %v373, 48
      %v1158 = vpop.permute.xlu0 %1157
      %1159 = vrot.lane.b32.xlu0 %v374, 48
      %v1160 = vpop.permute.xlu0 %1159
      %1161 = vrot.lane.b32.xlu0 %v376, 48
      %v1162 = vpop.permute.xlu0 %1161
      %1163 = vrot.lane.b32.xlu0 %v377, 48
      %v1164 = vpop.permute.xlu0 %1163
      %1165 = vrot.lane.b32.xlu0 %v379, 48
      %v1166 = vpop.permute.xlu0 %1165
      %1167 = vrot.lane.b32.xlu0 %v380, 48
      %v1168 = vpop.permute.xlu0 %1167
      %1169 = vrot.lane.b32.xlu0 %v382, 48
      %v1170 = vpop.permute.xlu0 %1169
      %1171 = vrot.lane.b32.xlu0 %v383, 48
      %v1172 = vpop.permute.xlu0 %1171
      %1173 = vrot.lane.b32.xlu0 %v385, 48
      %v1174 = vpop.permute.xlu0 %1173
      %1175 = vrot.lane.b32.xlu0 %v386, 48
      %v1176 = vpop.permute.xlu0 %1175
      %1209 = vrot.lane.b32.xlu0 %v464, 56
      %v1210 = vpop.permute.xlu0 %1209
      %1211 = vrot.lane.b32.xlu0 %v466, 56
      %v1212 = vpop.permute.xlu0 %1211
      %1213 = vrot.lane.b32.xlu0 %v469, 56
      %v1214 = vpop.permute.xlu0 %1213
      %1215 = vrot.lane.b32.xlu0 %v471, 56
      %v1216 = vpop.permute.xlu0 %1215
      %1217 = vrot.lane.b32.xlu0 %v474, 56
      %v1218 = vpop.permute.xlu0 %1217
      %1219 = vrot.lane.b32.xlu0 %v476, 56
      %v1220 = vpop.permute.xlu0 %1219
      %1221 = vrot.lane.b32.xlu0 %v479, 56
      %v1222 = vpop.permute.xlu0 %1221
      %1223 = vrot.lane.b32.xlu0 %v481, 56
      %v1224 = vpop.permute.xlu0 %1223
      %1225 = vrot.lane.b32.xlu0 %v484, 56
      %v1226 = vpop.permute.xlu0 %1225
      %1227 = vrot.lane.b32.xlu0 %v486, 56
      %v1228 = vpop.permute.xlu0 %1227
      %1229 = vrot.lane.b32.xlu0 %v489, 56
      %v1230 = vpop.permute.xlu0 %1229
      %1231 = vrot.lane.b32.xlu0 %v491, 56
      %v1232 = vpop.permute.xlu0 %1231
      %1233 = vrot.lane.b32.xlu0 %v494, 56
      %v1234 = vpop.permute.xlu0 %1233
      %1235 = vrot.lane.b32.xlu0 %v496, 56
      %v1236 = vpop.permute.xlu0 %1235
      %1237 = vrot.lane.b32.xlu0 %v499, 56
      %v1238 = vpop.permute.xlu0 %1237
      %1239 = vrot.lane.b32.xlu0 %v501, 56
      %v1240 = vpop.permute.xlu0 %1239
      %1241 = vrot.lane.b32.xlu0 %v504, 56
      %v1242 = vpop.permute.xlu0 %1241
      %1243 = vrot.lane.b32.xlu0 %v506, 56
      %v1244 = vpop.permute.xlu0 %1243
      %1245 = vrot.lane.b32.xlu0 %v509, 56
      %v1246 = vpop.permute.xlu0 %1245
      %1247 = vrot.lane.b32.xlu0 %v511, 56
      %v1248 = vpop.permute.xlu0 %1247
      %1249 = vrot.lane.b32.xlu0 %v514, 56
      %v1250 = vpop.permute.xlu0 %1249
      %1251 = vrot.lane.b32.xlu0 %v516, 56
      %v1252 = vpop.permute.xlu0 %1251
      %1253 = vrot.lane.b32.xlu0 %v519, 56
      %v1254 = vpop.permute.xlu0 %1253
      %1255 = vrot.lane.b32.xlu0 %v521, 56
      %v1256 = vpop.permute.xlu0 %1255
      %1257 = vrot.lane.b32.xlu0 %v524, 56
      %v1258 = vpop.permute.xlu0 %1257
      %1259 = vrot.lane.b32.xlu0 %v526, 56
      %v1260 = vpop.permute.xlu0 %1259
      %1261 = vrot.lane.b32.xlu0 %v529, 56
      %v1262 = vpop.permute.xlu0 %1261
      %1263 = vrot.lane.b32.xlu0 %v531, 56
      %v1264 = vpop.permute.xlu0 %1263
      %1265 = vrot.lane.b32.xlu0 %v534, 56
      %v1266 = vpop.permute.xlu0 %1265
      %1267 = vrot.lane.b32.xlu0 %v536, 56
      %v1268 = vpop.permute.xlu0 %1267
      %1269 = vrot.lane.b32.xlu0 %v539, 56
      %v1270 = vpop.permute.xlu0 %1269
      %1271 = vrot.lane.b32.xlu0 %v541, 56
      %v1272 = vpop.permute.xlu0 %1271
      %1305 = vrot.lane.b32.xlu0 %v555, 64
      %v1306 = vpop.permute.xlu0 %1305
      %1307 = vrot.lane.b32.xlu0 %v557, 64
      %v1308 = vpop.permute.xlu0 %1307
      %1309 = vrot.lane.b32.xlu0 %v560, 64
      %v1310 = vpop.permute.xlu0 %1309
      %1311 = vrot.lane.b32.xlu0 %v562, 64
      %v1312 = vpop.permute.xlu0 %1311
      %1313 = vrot.lane.b32.xlu0 %v565, 64
      %v1314 = vpop.permute.xlu0 %1313
      %1315 = vrot.lane.b32.xlu0 %v567, 64
      %v1316 = vpop.permute.xlu0 %1315
      %1317 = vrot.lane.b32.xlu0 %v570, 64
      %v1318 = vpop.permute.xlu0 %1317
      %1319 = vrot.lane.b32.xlu0 %v572, 64
      %v1320 = vpop.permute.xlu0 %1319
      %1321 = vrot.lane.b32.xlu0 %v575, 64
      %v1322 = vpop.permute.xlu0 %1321
      %1323 = vrot.lane.b32.xlu0 %v577, 64
      %v1324 = vpop.permute.xlu0 %1323
      %1325 = vrot.lane.b32.xlu0 %v580, 64
      %v1326 = vpop.permute.xlu0 %1325
      %1327 = vrot.lane.b32.xlu0 %v582, 64
      %v1328 = vpop.permute.xlu0 %1327
      %1329 = vrot.lane.b32.xlu0 %v585, 64
      %v1330 = vpop.permute.xlu0 %1329
      %1331 = vrot.lane.b32.xlu0 %v587, 64
      %v1332 = vpop.permute.xlu0 %1331
      %1333 = vrot.lane.b32.xlu0 %v590, 64
      %v1334 = vpop.permute.xlu0 %1333
      %1335 = vrot.lane.b32.xlu0 %v592, 64
      %v1336 = vpop.permute.xlu0 %1335
      %1337 = vrot.lane.b32.xlu0 %v595, 64
      %v1338 = vpop.permute.xlu0 %1337
      %1339 = vrot.lane.b32.xlu0 %v597, 64
      %v1340 = vpop.permute.xlu0 %1339
      %1341 = vrot.lane.b32.xlu0 %v600, 64
      %v1342 = vpop.permute.xlu0 %1341
      %1343 = vrot.lane.b32.xlu0 %v602, 64
      %v1344 = vpop.permute.xlu0 %1343
      %1345 = vrot.lane.b32.xlu0 %v605, 64
      %v1346 = vpop.permute.xlu0 %1345
      %1347 = vrot.lane.b32.xlu0 %v607, 64
      %v1348 = vpop.permute.xlu0 %1347
      %1349 = vrot.lane.b32.xlu0 %v610, 64
      %v1350 = vpop.permute.xlu0 %1349
      %1351 = vrot.lane.b32.xlu0 %v612, 64
      %v1352 = vpop.permute.xlu0 %1351
      %1353 = vrot.lane.b32.xlu0 %v615, 64
      %v1354 = vpop.permute.xlu0 %1353
      %1355 = vrot.lane.b32.xlu0 %v617, 64
      %v1356 = vpop.permute.xlu0 %1355
      %1357 = vrot.lane.b32.xlu0 %v620, 64
      %v1358 = vpop.permute.xlu0 %1357
      %1359 = vrot.lane.b32.xlu0 %v622, 64
      %v1360 = vpop.permute.xlu0 %1359
      %1361 = vrot.lane.b32.xlu0 %v625, 64
      %v1362 = vpop.permute.xlu0 %1361
      %1363 = vrot.lane.b32.xlu0 %v627, 64
      %v1364 = vpop.permute.xlu0 %1363
      %1365 = vrot.lane.b32.xlu0 %v630, 64
      %v1366 = vpop.permute.xlu0 %1365
      %1367 = vrot.lane.b32.xlu0 %v632, 64
      %v1368 = vpop.permute.xlu0 %1367
      %vm1401 = vcmask 64512
      %v1402 = vsel %vm1401, %v334, %v634
      %v1403 = vsel %vm1401, %v335, %v636
      %v1404 = vsel %vm1401, %v337, %v638
      %v1405 = vsel %vm1401, %v338, %v640
      %v1406 = vsel %vm1401, %v340, %v642
      %v1407 = vsel %vm1401, %v341, %v644
      %v1408 = vsel %vm1401, %v343, %v646
      %v1409 = vsel %vm1401, %v344, %v648
      %v1410 = vsel %vm1401, %v346, %v650
      %v1411 = vsel %vm1401, %v347, %v652
      %v1412 = vsel %vm1401, %v349, %v654
      %v1413 = vsel %vm1401, %v350, %v656
      %v1414 = vsel %vm1401, %v352, %v658
      %v1415 = vsel %vm1401, %v353, %v660
      %v1416 = vsel %vm1401, %v355, %v662
      %v1417 = vsel %vm1401, %v356, %v664
      %v1418 = vsel %vm1401, %v358, %v666
      %v1419 = vsel %vm1401, %v359, %v668
      %v1420 = vsel %vm1401, %v361, %v670
      %v1421 = vsel %vm1401, %v362, %v672
      %v1422 = vsel %vm1401, %v364, %v674
      %v1423 = vsel %vm1401, %v365, %v676
      %v1424 = vsel %vm1401, %v367, %v678
      %v1425 = vsel %vm1401, %v368, %v680
      %v1426 = vsel %vm1401, %v370, %v682
      %v1427 = vsel %vm1401, %v371, %v684
      %v1428 = vsel %vm1401, %v373, %v686
      %v1429 = vsel %vm1401, %v374, %v688
      %v1430 = vsel %vm1401, %v376, %v690
      %v1431 = vsel %vm1401, %v377, %v692
      %v1432 = vsel %vm1401, %v379, %v694
      %v1433 = vsel %vm1401, %v380, %v696
      %vm1434 = vcmask 130048
      %v1435 = vsel %vm1434, %v1402, %v730
      %v1436 = vsel %vm1434, %v1403, %v732
      %v1437 = vsel %vm1434, %v1404, %v734
      %v1438 = vsel %vm1434, %v1405, %v736
      %v1439 = vsel %vm1434, %v1406, %v738
      %v1440 = vsel %vm1434, %v1407, %v740
      %v1441 = vsel %vm1434, %v1408, %v742
      %v1442 = vsel %vm1434, %v1409, %v744
      %v1443 = vsel %vm1434, %v1410, %v746
      %v1444 = vsel %vm1434, %v1411, %v748
      %v1445 = vsel %vm1434, %v1412, %v750
      %v1446 = vsel %vm1434, %v1413, %v752
      %v1447 = vsel %vm1434, %v1414, %v754
      %v1448 = vsel %vm1434, %v1415, %v756
      %v1449 = vsel %vm1434, %v1416, %v758
      %v1450 = vsel %vm1434, %v1417, %v760
      %v1451 = vsel %vm1434, %v1418, %v762
      %v1452 = vsel %vm1434, %v1419, %v764
      %v1453 = vsel %vm1434, %v1420, %v766
      %v1454 = vsel %vm1434, %v1421, %v768
      %v1455 = vsel %vm1434, %v1422, %v770
      %v1456 = vsel %vm1434, %v1423, %v772
      %v1457 = vsel %vm1434, %v1424, %v774
      %v1458 = vsel %vm1434, %v1425, %v776
      %v1459 = vsel %vm1434, %v1426, %v778
      %v1460 = vsel %vm1434, %v1427, %v780
      %v1461 = vsel %vm1434, %v1428, %v782
      %v1462 = vsel %vm1434, %v1429, %v784
      %v1463 = vsel %vm1434, %v1430, %v786
      %v1464 = vsel %vm1434, %v1431, %v788
      %v1465 = vsel %vm1434, %v1432, %v790
      %v1466 = vsel %vm1434, %v1433, %v792
      %vm1467 = vcmask 195584
      %v1468 = vsel %vm1467, %v1435, %v826
      %v1469 = vsel %vm1467, %v1436, %v828
      %v1470 = vsel %vm1467, %v1437, %v830
      %v1471 = vsel %vm1467, %v1438, %v832
      %v1472 = vsel %vm1467, %v1439, %v834
      %v1473 = vsel %vm1467, %v1440, %v836
      %v1474 = vsel %vm1467, %v1441, %v838
      %v1475 = vsel %vm1467, %v1442, %v840
      %v1476 = vsel %vm1467, %v1443, %v842
      %v1477 = vsel %vm1467, %v1444, %v844
      %v1478 = vsel %vm1467, %v1445, %v846
      %v1479 = vsel %vm1467, %v1446, %v848
      %v1480 = vsel %vm1467, %v1447, %v850
      %v1481 = vsel %vm1467, %v1448, %v852
      %v1482 = vsel %vm1467, %v1449, %v854
      %v1483 = vsel %vm1467, %v1450, %v856
      %v1484 = vsel %vm1467, %v1451, %v858
      %v1485 = vsel %vm1467, %v1452, %v860
      %v1486 = vsel %vm1467, %v1453, %v862
      %v1487 = vsel %vm1467, %v1454, %v864
      %v1488 = vsel %vm1467, %v1455, %v866
      %v1489 = vsel %vm1467, %v1456, %v868
      %v1490 = vsel %vm1467, %v1457, %v870
      %v1491 = vsel %vm1467, %v1458, %v872
      %v1492 = vsel %vm1467, %v1459, %v874
      %v1493 = vsel %vm1467, %v1460, %v876
      %v1494 = vsel %vm1467, %v1461, %v878
      %v1495 = vsel %vm1467, %v1462, %v880
      %v1496 = vsel %vm1467, %v1463, %v882
      %v1497 = vsel %vm1467, %v1464, %v884
      %v1498 = vsel %vm1467, %v1465, %v886
      %v1499 = vsel %vm1467, %v1466, %v888
      %vm1500 = vcmask 261120
      %v1501 = vsel %vm1500, %v1468, %v922
      %v1502 = vsel %vm1500, %v1469, %v924
      %v1503 = vsel %vm1500, %v1470, %v926
      %v1504 = vsel %vm1500, %v1471, %v928
      %v1505 = vsel %vm1500, %v1472, %v930
      %v1506 = vsel %vm1500, %v1473, %v932
      %v1507 = vsel %vm1500, %v1474, %v934
      %v1508 = vsel %vm1500, %v1475, %v936
      %v1509 = vsel %vm1500, %v1476, %v938
      %v1510 = vsel %vm1500, %v1477, %v940
      %v1511 = vsel %vm1500, %v1478, %v942
      %v1512 = vsel %vm1500, %v1479, %v944
      %v1513 = vsel %vm1500, %v1480, %v946
      %v1514 = vsel %vm1500, %v1481, %v948
      %v1515 = vsel %vm1500, %v1482, %v950
      %v1516 = vsel %vm1500, %v1483, %v952
      %v1517 = vsel %vm1500, %v1484, %v954
      %v1518 = vsel %vm1500, %v1485, %v956
      %v1519 = vsel %vm1500, %v1486, %v958
      %v1520 = vsel %vm1500, %v1487, %v960
      %v1521 = vsel %vm1500, %v1488, %v962
      %v1522 = vsel %vm1500, %v1489, %v964
      %v1523 = vsel %vm1500, %v1490, %v966
      %v1524 = vsel %vm1500, %v1491, %v968
      %v1525 = vsel %vm1500, %v1492, %v970
      %v1526 = vsel %vm1500, %v1493, %v972
      %v1527 = vsel %vm1500, %v1494, %v974
      %v1528 = vsel %vm1500, %v1495, %v976
      %v1529 = vsel %vm1500, %v1496, %v978
      %v1530 = vsel %vm1500, %v1497, %v980
      %v1531 = vsel %vm1500, %v1498, %v982
      %v1532 = vsel %vm1500, %v1499, %v984
      %vm1533 = vcmask 326656
      %v1534 = vsel %vm1533, %v1501, %v1018
      %v1535 = vsel %vm1533, %v1502, %v1020
      %v1536 = vsel %vm1533, %v1503, %v1022
      %v1537 = vsel %vm1533, %v1504, %v1024
      %v1538 = vsel %vm1533, %v1505, %v1026
      %v1539 = vsel %vm1533, %v1506, %v1028
      %v1540 = vsel %vm1533, %v1507, %v1030
      %v1541 = vsel %vm1533, %v1508, %v1032
      %v1542 = vsel %vm1533, %v1509, %v1034
      %v1543 = vsel %vm1533, %v1510, %v1036
      %v1544 = vsel %vm1533, %v1511, %v1038
      %v1545 = vsel %vm1533, %v1512, %v1040
      %v1546 = vsel %vm1533, %v1513, %v1042
      %v1547 = vsel %vm1533, %v1514, %v1044
      %v1548 = vsel %vm1533, %v1515, %v1046
      %v1549 = vsel %vm1533, %v1516, %v1048
      %v1550 = vsel %vm1533, %v1517, %v1050
      %v1551 = vsel %vm1533, %v1518, %v1052
      %v1552 = vsel %vm1533, %v1519, %v1054
      %v1553 = vsel %vm1533, %v1520, %v1056
      %v1554 = vsel %vm1533, %v1521, %v1058
      %v1555 = vsel %vm1533, %v1522, %v1060
      %v1556 = vsel %vm1533, %v1523, %v1062
      %v1557 = vsel %vm1533, %v1524, %v1064
      %v1558 = vsel %vm1533, %v1525, %v1066
      %v1559 = vsel %vm1533, %v1526, %v1068
      %v1560 = vsel %vm1533, %v1527, %v1070
      %v1561 = vsel %vm1533, %v1528, %v1072
      %v1562 = vsel %vm1533, %v1529, %v1074
      %v1563 = vsel %vm1533, %v1530, %v1076
      %v1564 = vsel %vm1533, %v1531, %v1078
      %v1565 = vsel %vm1533, %v1532, %v1080
      %vm1566 = vcmask 392192
      %v1567 = vsel %vm1566, %v1534, %v1114
      %v1568 = vsel %vm1566, %v1535, %v1116
      %v1569 = vsel %vm1566, %v1536, %v1118
      %v1570 = vsel %vm1566, %v1537, %v1120
      %v1571 = vsel %vm1566, %v1538, %v1122
      %v1572 = vsel %vm1566, %v1539, %v1124
      %v1573 = vsel %vm1566, %v1540, %v1126
      %v1574 = vsel %vm1566, %v1541, %v1128
      %v1575 = vsel %vm1566, %v1542, %v1130
      %v1576 = vsel %vm1566, %v1543, %v1132
      %v1577 = vsel %vm1566, %v1544, %v1134
      %v1578 = vsel %vm1566, %v1545, %v1136
      %v1579 = vsel %vm1566, %v1546, %v1138
      %v1580 = vsel %vm1566, %v1547, %v1140
      %v1581 = vsel %vm1566, %v1548, %v1142
      %v1582 = vsel %vm1566, %v1549, %v1144
      %v1583 = vsel %vm1566, %v1550, %v1146
      %v1584 = vsel %vm1566, %v1551, %v1148
      %v1585 = vsel %vm1566, %v1552, %v1150
      %v1586 = vsel %vm1566, %v1553, %v1152
      %v1587 = vsel %vm1566, %v1554, %v1154
      %v1588 = vsel %vm1566, %v1555, %v1156
      %v1589 = vsel %vm1566, %v1556, %v1158
      %v1590 = vsel %vm1566, %v1557, %v1160
      %v1591 = vsel %vm1566, %v1558, %v1162
      %v1592 = vsel %vm1566, %v1559, %v1164
      %v1593 = vsel %vm1566, %v1560, %v1166
      %v1594 = vsel %vm1566, %v1561, %v1168
      %v1595 = vsel %vm1566, %v1562, %v1170
      %v1596 = vsel %vm1566, %v1563, %v1172
      %v1597 = vsel %vm1566, %v1564, %v1174
      %v1598 = vsel %vm1566, %v1565, %v1176
      %vm1599 = vcmask 457728
      %v1600 = vsel %vm1599, %v1567, %v1210
      %v1601 = vsel %vm1599, %v1568, %v1212
      %v1602 = vsel %vm1599, %v1569, %v1214
      %v1603 = vsel %vm1599, %v1570, %v1216
      %v1604 = vsel %vm1599, %v1571, %v1218
      %v1605 = vsel %vm1599, %v1572, %v1220
      %v1606 = vsel %vm1599, %v1573, %v1222
      %v1607 = vsel %vm1599, %v1574, %v1224
      %v1608 = vsel %vm1599, %v1575, %v1226
      %v1609 = vsel %vm1599, %v1576, %v1228
      %v1610 = vsel %vm1599, %v1577, %v1230
      %v1611 = vsel %vm1599, %v1578, %v1232
      %v1612 = vsel %vm1599, %v1579, %v1234
      %v1613 = vsel %vm1599, %v1580, %v1236
      %v1614 = vsel %vm1599, %v1581, %v1238
      %v1615 = vsel %vm1599, %v1582, %v1240
      %v1616 = vsel %vm1599, %v1583, %v1242
      %v1617 = vsel %vm1599, %v1584, %v1244
      %v1618 = vsel %vm1599, %v1585, %v1246
      %v1619 = vsel %vm1599, %v1586, %v1248
      %v1620 = vsel %vm1599, %v1587, %v1250
      %v1621 = vsel %vm1599, %v1588, %v1252
      %v1622 = vsel %vm1599, %v1589, %v1254
      %v1623 = vsel %vm1599, %v1590, %v1256
      %v1624 = vsel %vm1599, %v1591, %v1258
      %v1625 = vsel %vm1599, %v1592, %v1260
      %v1626 = vsel %vm1599, %v1593, %v1262
      %v1627 = vsel %vm1599, %v1594, %v1264
      %v1628 = vsel %vm1599, %v1595, %v1266
      %v1629 = vsel %vm1599, %v1596, %v1268
      %v1630 = vsel %vm1599, %v1597, %v1270
      %v1631 = vsel %vm1599, %v1598, %v1272
      %vm1632 = vcmask 523264
      %v1633 = vsel %vm1632, %v1600, %v1306
      %v1634 = vsel %vm1632, %v1601, %v1308
      %v1635 = vsel %vm1632, %v1602, %v1310
      %v1636 = vsel %vm1632, %v1603, %v1312
      %v1637 = vsel %vm1632, %v1604, %v1314
      %v1638 = vsel %vm1632, %v1605, %v1316
      %v1639 = vsel %vm1632, %v1606, %v1318
      %v1640 = vsel %vm1632, %v1607, %v1320
      %v1641 = vsel %vm1632, %v1608, %v1322
      %v1642 = vsel %vm1632, %v1609, %v1324
      %v1643 = vsel %vm1632, %v1610, %v1326
      %v1644 = vsel %vm1632, %v1611, %v1328
      %v1645 = vsel %vm1632, %v1612, %v1330
      %v1646 = vsel %vm1632, %v1613, %v1332
      %v1647 = vsel %vm1632, %v1614, %v1334
      %v1648 = vsel %vm1632, %v1615, %v1336
      %v1649 = vsel %vm1632, %v1616, %v1338
      %v1650 = vsel %vm1632, %v1617, %v1340
      %v1651 = vsel %vm1632, %v1618, %v1342
      %v1652 = vsel %vm1632, %v1619, %v1344
      %v1653 = vsel %vm1632, %v1620, %v1346
      %v1654 = vsel %vm1632, %v1621, %v1348
      %v1655 = vsel %vm1632, %v1622, %v1350
      %v1656 = vsel %vm1632, %v1623, %v1352
      %v1657 = vsel %vm1632, %v1624, %v1354
      %v1658 = vsel %vm1632, %v1625, %v1356
      %v1659 = vsel %vm1632, %v1626, %v1358
      %v1660 = vsel %vm1632, %v1627, %v1360
      %v1661 = vsel %vm1632, %v1628, %v1362
      %v1662 = vsel %vm1632, %v1629, %v1364
      %v1663 = vsel %vm1632, %v1630, %v1366
      %v1664 = vsel %vm1632, %v1631, %v1368
      %v1665 = vpack.c.bf16 %v1634, %v1633
      %v1666 = vpack.c.bf16 %v1636, %v1635
      %v1667 = vpack.c.bf16 %v1638, %v1637
      %v1668 = vpack.c.bf16 %v1640, %v1639
      %v1669 = vpack.c.bf16 %v1642, %v1641
      %v1670 = vpack.c.bf16 %v1644, %v1643
      %v1671 = vpack.c.bf16 %v1646, %v1645
      %v1672 = vpack.c.bf16 %v1648, %v1647
      %v1673 = vpack.c.bf16 %v1650, %v1649
      %v1674 = vpack.c.bf16 %v1652, %v1651
      %v1675 = vpack.c.bf16 %v1654, %v1653
      %v1676 = vpack.c.bf16 %v1656, %v1655
      %v1677 = vpack.c.bf16 %v1658, %v1657
      %v1678 = vpack.c.bf16 %v1660, %v1659
      %v1679 = vpack.c.bf16 %v1662, %v1661
      %v1680 = vpack.c.bf16 %v1664, %v1663
      %v1690 = vunpack.c.l.b16 %v388
      %v1691 = vunpack.c.l.b16 %v389
      %v1692 = vunpack.c.l.b16 %v390
      %v1693 = vunpack.c.l.b16 %v391
      %v1694 = vunpack.c.l.b16 %v392
      %v1695 = vunpack.c.l.b16 %v393
      %v1696 = vunpack.c.l.b16 %v394
      %v1697 = vunpack.c.l.b16 %v395
      %v1698 = vunpack.c.l.b16 %v396
      %v1699 = vpack.c.b16 %v1691, %v1690
      %v1700 = vpack.c.b16 %v1693, %v1692
      %v1701 = vpack.c.b16 %v1695, %v1694
      %v1702 = vpack.c.b16 %v1697, %v1696
      %v1703 = vpack.c.b16 %v1698, %v1698
      %vm1708 = vcmask 588800
      %v1710 = vsel %vm1708, %v1665, 0
      %v1713 = vsel %vm1708, %v1666, 0
      %v1716 = vsel %vm1708, %v1667, 0
      %v1719 = vsel %vm1708, %v1668, 0
      %v1722 = vsel %vm1708, %v1669, 0
      %v1725 = vsel %vm1708, %v1670, 0
      %v1728 = vsel %vm1708, %v1671, 0
      %v1731 = vsel %vm1708, %v1672, 0
      %v1734 = vsel %vm1708, %v1673, 0
      %v1737 = vsel %vm1708, %v1674, 0
      %v1740 = vsel %vm1708, %v1675, 0
      %v1743 = vsel %vm1708, %v1676, 0
      %v1746 = vsel %vm1708, %v1677, 0
      %v1749 = vsel %vm1708, %v1678, 0
      %v1752 = vsel %vm1708, %v1679, 0
      %v1755 = vsel %vm1708, %v1680, 0
      %vm1757 = vcmask 1043456
      %v1759 = vsel %vm1757, %v1703, 0
      %1761 = vmatpush.bf16.msra.mxu0 0
      %1762 = vmatpush.bf16.msra.mxu0 0
      %1763 = vmatpush.bf16.msra.mxu0 0
      %1764 = vmatpush.bf16.msra.mxu0 %v1759
      %1765 = vmatpush.bf16.msra.mxu0 %v1702
      %1766 = vmatpush.bf16.msra.mxu0 %v1701
      %1767 = vmatpush.bf16.msra.mxu0 %v1700
      %1768 = vmatpush.bf16.msra.mxu0 %v1699
      %1769 = vmatmul.bf16.gmra.mxu0 %v1710
      %v1770 = vpop.f32.mrf.mxu0
      %v1771 = vadd.f32 0.0, %v1770
      %v1772 = vpop.f32.mrf.mxu0
      %v1773 = vadd.f32 0.0, %v1772
      %1774 = vmatmul.bf16.gmra.mxu0 %v1713
      %v1775 = vpop.f32.mrf.mxu0
      %v1776 = vadd.f32 0.0, %v1775
      %v1777 = vpop.f32.mrf.mxu0
      %v1778 = vadd.f32 0.0, %v1777
      %1779 = vmatmul.bf16.gmra.mxu0 %v1716
      %v1780 = vpop.f32.mrf.mxu0
      %v1781 = vadd.f32 0.0, %v1780
      %v1782 = vpop.f32.mrf.mxu0
      %v1783 = vadd.f32 0.0, %v1782
      %1784 = vmatmul.bf16.gmra.mxu0 %v1719
      %v1785 = vpop.f32.mrf.mxu0
      %v1786 = vadd.f32 0.0, %v1785
      %v1787 = vpop.f32.mrf.mxu0
      %v1788 = vadd.f32 0.0, %v1787
      %1789 = vmatmul.bf16.gmra.mxu0 %v1722
      %v1790 = vpop.f32.mrf.mxu0
      %v1791 = vadd.f32 0.0, %v1790
      %v1792 = vpop.f32.mrf.mxu0
      %v1793 = vadd.f32 0.0, %v1792
      %1794 = vmatmul.bf16.gmra.mxu0 %v1725
      %v1795 = vpop.f32.mrf.mxu0
      %v1796 = vadd.f32 0.0, %v1795
      %v1797 = vpop.f32.mrf.mxu0
      %v1798 = vadd.f32 0.0, %v1797
      %1799 = vmatmul.bf16.gmra.mxu0 %v1728
      %v1800 = vpop.f32.mrf.mxu0
      %v1801 = vadd.f32 0.0, %v1800
      %v1802 = vpop.f32.mrf.mxu0
      %v1803 = vadd.f32 0.0, %v1802
      %1804 = vmatmul.bf16.gmra.mxu0 %v1731
      %v1805 = vpop.f32.mrf.mxu0
      %v1806 = vadd.f32 0.0, %v1805
      %v1807 = vpop.f32.mrf.mxu0
      %v1808 = vadd.f32 0.0, %v1807
      %1809 = vmatmul.bf16.gmra.mxu0 %v1734
      %v1810 = vpop.f32.mrf.mxu0
      %v1811 = vadd.f32 0.0, %v1810
      %v1812 = vpop.f32.mrf.mxu0
      %v1813 = vadd.f32 0.0, %v1812
      %1814 = vmatmul.bf16.gmra.mxu0 %v1737
      %v1815 = vpop.f32.mrf.mxu0
      %v1816 = vadd.f32 0.0, %v1815
      %v1817 = vpop.f32.mrf.mxu0
      %v1818 = vadd.f32 0.0, %v1817
      %1819 = vmatmul.bf16.gmra.mxu0 %v1740
      %v1820 = vpop.f32.mrf.mxu0
      %v1821 = vadd.f32 0.0, %v1820
      %v1822 = vpop.f32.mrf.mxu0
      %v1823 = vadd.f32 0.0, %v1822
      %1824 = vmatmul.bf16.gmra.mxu0 %v1743
      %v1825 = vpop.f32.mrf.mxu0
      %v1826 = vadd.f32 0.0, %v1825
      %v1827 = vpop.f32.mrf.mxu0
      %v1828 = vadd.f32 0.0, %v1827
      %1829 = vmatmul.bf16.gmra.mxu0 %v1746
      %v1830 = vpop.f32.mrf.mxu0
      %v1831 = vadd.f32 0.0, %v1830
      %v1832 = vpop.f32.mrf.mxu0
      %v1833 = vadd.f32 0.0, %v1832
      %1834 = vmatmul.bf16.gmra.mxu0 %v1749
      %v1835 = vpop.f32.mrf.mxu0
      %v1836 = vadd.f32 0.0, %v1835
      %v1837 = vpop.f32.mrf.mxu0
      %v1838 = vadd.f32 0.0, %v1837
      %1839 = vmatmul.bf16.gmra.mxu0 %v1752
      %v1840 = vpop.f32.mrf.mxu0
      %v1841 = vadd.f32 0.0, %v1840
      %v1842 = vpop.f32.mrf.mxu0
      %v1843 = vadd.f32 0.0, %v1842
      %1844 = vmatmul.bf16.gmra.mxu0 %v1755
      %v1845 = vpop.f32.mrf.mxu0
      %v1846 = vadd.f32 0.0, %v1845
      %v1847 = vpop.f32.mrf.mxu0
      %v1848 = vadd.f32 0.0, %v1847
      %1849 = vdwg.mxu0
      %v1850 = vld [vmem:[%s2] sm:$0x1]
      %v1852 = vperm.slane %v1850, 0
      %v1854 = vmul.f32 %v1771, %v1852
      %v1855 = vmul.f32 %v1773, %v1852
      %v1856 = vmul.f32 %v1776, %v1852
      %v1857 = vmul.f32 %v1778, %v1852
      %v1858 = vmul.f32 %v1781, %v1852
      %v1859 = vmul.f32 %v1783, %v1852
      %v1860 = vmul.f32 %v1786, %v1852
      %v1861 = vmul.f32 %v1788, %v1852
      %v1862 = vmul.f32 %v1791, %v1852
      %v1863 = vmul.f32 %v1793, %v1852
      %v1864 = vmul.f32 %v1796, %v1852
      %v1865 = vmul.f32 %v1798, %v1852
      %v1866 = vmul.f32 %v1801, %v1852
      %v1867 = vmul.f32 %v1803, %v1852
      %v1868 = vmul.f32 %v1806, %v1852
      %v1869 = vmul.f32 %v1808, %v1852
      %v1870 = vmul.f32 %v1811, %v1852
      %v1871 = vmul.f32 %v1813, %v1852
      %v1872 = vmul.f32 %v1816, %v1852
      %v1873 = vmul.f32 %v1818, %v1852
      %v1874 = vmul.f32 %v1821, %v1852
      %v1875 = vmul.f32 %v1823, %v1852
      %v1876 = vmul.f32 %v1826, %v1852
      %v1877 = vmul.f32 %v1828, %v1852
      %v1878 = vmul.f32 %v1831, %v1852
      %v1879 = vmul.f32 %v1833, %v1852
      %v1880 = vmul.f32 %v1836, %v1852
      %v1881 = vmul.f32 %v1838, %v1852
      %v1882 = vmul.f32 %v1841, %v1852
      %v1883 = vmul.f32 %v1843, %v1852
      %v1884 = vmul.f32 %v1846, %v1852
      %v1885 = vmul.f32 %v1848, %v1852
      %v1886 = vld [vmem:[%s3] sm:$0x1]
      %v1888 = vperm.slane %v1886, 0
      %v1890 = vadd.f32 %v1854, %v1888
      %v1891 = vadd.f32 %v1855, %v1888
      %v1892 = vadd.f32 %v1856, %v1888
      %v1893 = vadd.f32 %v1857, %v1888
      %v1894 = vadd.f32 %v1858, %v1888
      %v1895 = vadd.f32 %v1859, %v1888
      %v1896 = vadd.f32 %v1860, %v1888
      %v1897 = vadd.f32 %v1861, %v1888
      %v1898 = vadd.f32 %v1862, %v1888
      %v1899 = vadd.f32 %v1863, %v1888
      %v1900 = vadd.f32 %v1864, %v1888
      %v1901 = vadd.f32 %v1865, %v1888
      %v1902 = vadd.f32 %v1866, %v1888
      %v1903 = vadd.f32 %v1867, %v1888
      %v1904 = vadd.f32 %v1868, %v1888
      %v1905 = vadd.f32 %v1869, %v1888
      %v1906 = vadd.f32 %v1870, %v1888
      %v1907 = vadd.f32 %v1871, %v1888
      %v1908 = vadd.f32 %v1872, %v1888
      %v1909 = vadd.f32 %v1873, %v1888
      %v1910 = vadd.f32 %v1874, %v1888
      %v1911 = vadd.f32 %v1875, %v1888
      %v1912 = vadd.f32 %v1876, %v1888
      %v1913 = vadd.f32 %v1877, %v1888
      %v1914 = vadd.f32 %v1878, %v1888
      %v1915 = vadd.f32 %v1879, %v1888
      %v1916 = vadd.f32 %v1880, %v1888
      %v1917 = vadd.f32 %v1881, %v1888
      %v1918 = vadd.f32 %v1882, %v1888
      %v1919 = vadd.f32 %v1883, %v1888
      %v1920 = vadd.f32 %v1884, %v1888
      %v1921 = vadd.f32 %v1885, %v1888
      %v1922 = vmax.f32 %v1890, 0.0
      %v1923 = vmax.f32 %v1891, 0.0
      %v1924 = vmax.f32 %v1892, 0.0
      %v1925 = vmax.f32 %v1893, 0.0
      %v1926 = vmax.f32 %v1894, 0.0
      %v1927 = vmax.f32 %v1895, 0.0
      %v1928 = vmax.f32 %v1896, 0.0
      %v1929 = vmax.f32 %v1897, 0.0
      %v1930 = vmax.f32 %v1898, 0.0
      %v1931 = vmax.f32 %v1899, 0.0
      %v1932 = vmax.f32 %v1900, 0.0
      %v1933 = vmax.f32 %v1901, 0.0
      %v1934 = vmax.f32 %v1902, 0.0
      %v1935 = vmax.f32 %v1903, 0.0
      %v1936 = vmax.f32 %v1904, 0.0
      %v1937 = vmax.f32 %v1905, 0.0
      %v1938 = vmax.f32 %v1906, 0.0
      %v1939 = vmax.f32 %v1907, 0.0
      %v1940 = vmax.f32 %v1908, 0.0
      %v1941 = vmax.f32 %v1909, 0.0
      %v1942 = vmax.f32 %v1910, 0.0
      %v1943 = vmax.f32 %v1911, 0.0
      %v1944 = vmax.f32 %v1912, 0.0
      %v1945 = vmax.f32 %v1913, 0.0
      %v1946 = vmax.f32 %v1914, 0.0
      %v1947 = vmax.f32 %v1915, 0.0
      %v1948 = vmax.f32 %v1916, 0.0
      %v1949 = vmax.f32 %v1917, 0.0
      %v1950 = vmax.f32 %v1918, 0.0
      %v1951 = vmax.f32 %v1919, 0.0
      %v1952 = vmax.f32 %v1920, 0.0
      %v1953 = vmax.f32 %v1921, 0.0
      %v1954 = vmax.f32 %v1922, 0.0
      %v1955 = vmax.f32 %v1923, 0.0
      %v1956 = vmax.f32 %v1924, 0.0
      %v1957 = vmax.f32 %v1925, 0.0
      %v1958 = vmax.f32 %v1926, 0.0
      %v1959 = vmax.f32 %v1927, 0.0
      %v1960 = vmax.f32 %v1928, 0.0
      %v1961 = vmax.f32 %v1929, 0.0
      %v1962 = vmax.f32 %v1930, 0.0
      %v1963 = vmax.f32 %v1931, 0.0
      %v1964 = vmax.f32 %v1932, 0.0
      %v1965 = vmax.f32 %v1933, 0.0
      %v1966 = vmax.f32 %v1934, 0.0
      %v1967 = vmax.f32 %v1935, 0.0
      %v1968 = vmax.f32 %v1936, 0.0
      %v1969 = vmax.f32 %v1937, 0.0
      %v1970 = vmax.f32 %v1938, 0.0
      %v1971 = vmax.f32 %v1939, 0.0
      %v1972 = vmax.f32 %v1940, 0.0
      %v1973 = vmax.f32 %v1941, 0.0
      %v1974 = vmax.f32 %v1942, 0.0
      %v1975 = vmax.f32 %v1943, 0.0
      %v1976 = vmax.f32 %v1944, 0.0
      %v1977 = vmax.f32 %v1945, 0.0
      %v1978 = vmax.f32 %v1946, 0.0
      %v1979 = vmax.f32 %v1947, 0.0
      %v1980 = vmax.f32 %v1948, 0.0
      %v1981 = vmax.f32 %v1949, 0.0
      %v1982 = vmax.f32 %v1950, 0.0
      %v1983 = vmax.f32 %v1951, 0.0
      %v1984 = vmax.f32 %v1952, 0.0
      %v1985 = vmax.f32 %v1953, 0.0
      %v1986 = vmin.f32 %v1954, 1.0
      %v1987 = vmin.f32 %v1955, 1.0
      %v1988 = vmin.f32 %v1956, 1.0
      %v1989 = vmin.f32 %v1957, 1.0
      %v1990 = vmin.f32 %v1958, 1.0
      %v1991 = vmin.f32 %v1959, 1.0
      %v1992 = vmin.f32 %v1960, 1.0
      %v1993 = vmin.f32 %v1961, 1.0
      %v1994 = vmin.f32 %v1962, 1.0
      %v1995 = vmin.f32 %v1963, 1.0
      %v1996 = vmin.f32 %v1964, 1.0
      %v1997 = vmin.f32 %v1965, 1.0
      %v1998 = vmin.f32 %v1966, 1.0
      %v1999 = vmin.f32 %v1967, 1.0
      %v2000 = vmin.f32 %v1968, 1.0
      %v2001 = vmin.f32 %v1969, 1.0
      %v2002 = vmin.f32 %v1970, 1.0
      %v2003 = vmin.f32 %v1971, 1.0
      %v2004 = vmin.f32 %v1972, 1.0
      %v2005 = vmin.f32 %v1973, 1.0
      %v2006 = vmin.f32 %v1974, 1.0
      %v2007 = vmin.f32 %v1975, 1.0
      %v2008 = vmin.f32 %v1976, 1.0
      %v2009 = vmin.f32 %v1977, 1.0
      %v2010 = vmin.f32 %v1978, 1.0
      %v2011 = vmin.f32 %v1979, 1.0
      %v2012 = vmin.f32 %v1980, 1.0
      %v2013 = vmin.f32 %v1981, 1.0
      %v2014 = vmin.f32 %v1982, 1.0
      %v2015 = vmin.f32 %v1983, 1.0
      %v2016 = vmin.f32 %v1984, 1.0
      %v2017 = vmin.f32 %v1985, 1.0
      %v2018 = vmul.f32 %v1986, 255.0
      %v2019 = vmul.f32 %v1987, 255.0
      %v2020 = vmul.f32 %v1988, 255.0
      %v2021 = vmul.f32 %v1989, 255.0
      %v2022 = vmul.f32 %v1990, 255.0
      %v2023 = vmul.f32 %v1991, 255.0
      %v2024 = vmul.f32 %v1992, 255.0
      %v2025 = vmul.f32 %v1993, 255.0
      %v2026 = vmul.f32 %v1994, 255.0
      %v2027 = vmul.f32 %v1995, 255.0
      %v2028 = vmul.f32 %v1996, 255.0
      %v2029 = vmul.f32 %v1997, 255.0
      %v2030 = vmul.f32 %v1998, 255.0
      %v2031 = vmul.f32 %v1999, 255.0
      %v2032 = vmul.f32 %v2000, 255.0
      %v2033 = vmul.f32 %v2001, 255.0
      %v2034 = vmul.f32 %v2002, 255.0
      %v2035 = vmul.f32 %v2003, 255.0
      %v2036 = vmul.f32 %v2004, 255.0
      %v2037 = vmul.f32 %v2005, 255.0
      %v2038 = vmul.f32 %v2006, 255.0
      %v2039 = vmul.f32 %v2007, 255.0
      %v2040 = vmul.f32 %v2008, 255.0
      %v2041 = vmul.f32 %v2009, 255.0
      %v2042 = vmul.f32 %v2010, 255.0
      %v2043 = vmul.f32 %v2011, 255.0
      %v2044 = vmul.f32 %v2012, 255.0
      %v2045 = vmul.f32 %v2013, 255.0
      %v2046 = vmul.f32 %v2014, 255.0
      %v2047 = vmul.f32 %v2015, 255.0
      %v2048 = vmul.f32 %v2016, 255.0
      %v2049 = vmul.f32 %v2017, 255.0
      %v2050 = vround.ne.pseudo %v2018
      %v2051 = vround.ne.pseudo %v2019
      %v2052 = vround.ne.pseudo %v2020
      %v2053 = vround.ne.pseudo %v2021
      %v2054 = vround.ne.pseudo %v2022
      %v2055 = vround.ne.pseudo %v2023
      %v2056 = vround.ne.pseudo %v2024
      %v2057 = vround.ne.pseudo %v2025
      %v2058 = vround.ne.pseudo %v2026
      %v2059 = vround.ne.pseudo %v2027
      %v2060 = vround.ne.pseudo %v2028
      %v2061 = vround.ne.pseudo %v2029
      %v2062 = vround.ne.pseudo %v2030
      %v2063 = vround.ne.pseudo %v2031
      %v2064 = vround.ne.pseudo %v2032
      %v2065 = vround.ne.pseudo %v2033
      %v2066 = vround.ne.pseudo %v2034
      %v2067 = vround.ne.pseudo %v2035
      %v2068 = vround.ne.pseudo %v2036
      %v2069 = vround.ne.pseudo %v2037
      %v2070 = vround.ne.pseudo %v2038
      %v2071 = vround.ne.pseudo %v2039
      %v2072 = vround.ne.pseudo %v2040
      %v2073 = vround.ne.pseudo %v2041
      %v2074 = vround.ne.pseudo %v2042
      %v2075 = vround.ne.pseudo %v2043
      %v2076 = vround.ne.pseudo %v2044
      %v2077 = vround.ne.pseudo %v2045
      %v2078 = vround.ne.pseudo %v2046
      %v2079 = vround.ne.pseudo %v2047
      %v2080 = vround.ne.pseudo %v2048
      %v2081 = vround.ne.pseudo %v2049
      %v2082 = vmul.f32 %v2050, 0.003921569
      %v2083 = vmul.f32 %v2051, 0.003921569
      %v2084 = vmul.f32 %v2052, 0.003921569
      %v2085 = vmul.f32 %v2053, 0.003921569
      %v2086 = vmul.f32 %v2054, 0.003921569
      %v2087 = vmul.f32 %v2055, 0.003921569
      %v2088 = vmul.f32 %v2056, 0.003921569
      %v2089 = vmul.f32 %v2057, 0.003921569
      %v2090 = vmul.f32 %v2058, 0.003921569
      %v2091 = vmul.f32 %v2059, 0.003921569
      %v2092 = vmul.f32 %v2060, 0.003921569
      %v2093 = vmul.f32 %v2061, 0.003921569
      %v2094 = vmul.f32 %v2062, 0.003921569
      %v2095 = vmul.f32 %v2063, 0.003921569
      %v2096 = vmul.f32 %v2064, 0.003921569
      %v2097 = vmul.f32 %v2065, 0.003921569
      %v2098 = vmul.f32 %v2066, 0.003921569
      %v2099 = vmul.f32 %v2067, 0.003921569
      %v2100 = vmul.f32 %v2068, 0.003921569
      %v2101 = vmul.f32 %v2069, 0.003921569
      %v2102 = vmul.f32 %v2070, 0.003921569
      %v2103 = vmul.f32 %v2071, 0.003921569
      %v2104 = vmul.f32 %v2072, 0.003921569
      %v2105 = vmul.f32 %v2073, 0.003921569
      %v2106 = vmul.f32 %v2074, 0.003921569
      %v2107 = vmul.f32 %v2075, 0.003921569
      %v2108 = vmul.f32 %v2076, 0.003921569
      %v2109 = vmul.f32 %v2077, 0.003921569
      %v2110 = vmul.f32 %v2078, 0.003921569
      %v2111 = vmul.f32 %v2079, 0.003921569
      %v2112 = vmul.f32 %v2080, 0.003921569
      %v2113 = vmul.f32 %v2081, 0.003921569
      %vm2146 = vcmask 1040384
      %v2147 = vrot.slane %v2082, 7
      %v2148 = vrot.slane %v2083, 7
      %v2149 = vsel %vm2146, %v2147, %v2148
      %v2150 = vrot.slane %v2084, 7
      %v2151 = vrot.slane %v2085, 7
      %v2152 = vsel %vm2146, %v2150, %v2151
      %v2153 = vrot.slane %v2086, 7
      %v2154 = vrot.slane %v2087, 7
      %v2155 = vsel %vm2146, %v2153, %v2154
      %v2156 = vrot.slane %v2088, 7
      %v2157 = vrot.slane %v2089, 7
      %v2158 = vsel %vm2146, %v2156, %v2157
      %v2159 = vrot.slane %v2090, 7
      %v2160 = vrot.slane %v2091, 7
      %v2161 = vsel %vm2146, %v2159, %v2160
      %v2162 = vrot.slane %v2092, 7
      %v2163 = vrot.slane %v2093, 7
      %v2164 = vsel %vm2146, %v2162, %v2163
      %v2165 = vrot.slane %v2094, 7
      %v2166 = vrot.slane %v2095, 7
      %v2167 = vsel %vm2146, %v2165, %v2166
      %v2168 = vrot.slane %v2096, 7
      %v2169 = vrot.slane %v2097, 7
      %v2170 = vsel %vm2146, %v2168, %v2169
      %v2171 = vrot.slane %v2098, 7
      %v2172 = vrot.slane %v2099, 7
      %v2173 = vsel %vm2146, %v2171, %v2172
      %v2174 = vrot.slane %v2100, 7
      %v2175 = vrot.slane %v2101, 7
      %v2176 = vsel %vm2146, %v2174, %v2175
      %v2177 = vrot.slane %v2102, 7
      %v2178 = vrot.slane %v2103, 7
      %v2179 = vsel %vm2146, %v2177, %v2178
      %v2180 = vrot.slane %v2104, 7
      %v2181 = vrot.slane %v2105, 7
      %v2182 = vsel %vm2146, %v2180, %v2181
      %v2183 = vrot.slane %v2106, 7
      %v2184 = vrot.slane %v2107, 7
      %v2185 = vsel %vm2146, %v2183, %v2184
      %v2186 = vrot.slane %v2108, 7
      %v2187 = vrot.slane %v2109, 7
      %v2188 = vsel %vm2146, %v2186, %v2187
      %v2189 = vrot.slane %v2110, 7
      %v2190 = vrot.slane %v2111, 7
      %v2191 = vsel %vm2146, %v2189, %v2190
      %v2192 = vrot.slane %v2112, 7
      %v2193 = vrot.slane %v2113, 7
      %v2194 = vsel %vm2146, %v2192, %v2193
      %v2242 = vsel %vm2146, 0.0, %v2147
      %v2243 = vsel %vm2146, 0.0, %v2150
      %v2244 = vsel %vm2146, 0.0, %v2153
      %v2245 = vsel %vm2146, 0.0, %v2156
      %v2246 = vsel %vm2146, 0.0, %v2159
      %v2247 = vsel %vm2146, 0.0, %v2162
      %v2248 = vsel %vm2146, 0.0, %v2165
      %v2249 = vsel %vm2146, 0.0, %v2168
      %v2250 = vsel %vm2146, 0.0, %v2171
      %v2251 = vsel %vm2146, 0.0, %v2174
      %v2252 = vsel %vm2146, 0.0, %v2177
      %v2253 = vsel %vm2146, 0.0, %v2180
      %v2254 = vsel %vm2146, 0.0, %v2183
      %v2255 = vsel %vm2146, 0.0, %v2186
      %v2256 = vsel %vm2146, 0.0, %v2189
      %v2257 = vsel %vm2146, 0.0, %v2192
      %v2258 = vsel %vm2146, %v2148, 0.0
      %v2259 = vsel %vm2146, %v2151, 0.0
      %v2260 = vsel %vm2146, %v2154, 0.0
      %v2261 = vsel %vm2146, %v2157, 0.0
      %v2262 = vsel %vm2146, %v2160, 0.0
      %v2263 = vsel %vm2146, %v2163, 0.0
      %v2264 = vsel %vm2146, %v2166, 0.0
      %v2265 = vsel %vm2146, %v2169, 0.0
      %v2266 = vsel %vm2146, %v2172, 0.0
      %v2267 = vsel %vm2146, %v2175, 0.0
      %v2268 = vsel %vm2146, %v2178, 0.0
      %v2269 = vsel %vm2146, %v2181, 0.0
      %v2270 = vsel %vm2146, %v2184, 0.0
      %v2271 = vsel %vm2146, %v2187, 0.0
      %v2272 = vsel %vm2146, %v2190, 0.0
      %v2273 = vsel %vm2146, %v2193, 0.0
      %v2274 = vld [vmem:[%s4] sm:$0xf]
      %v2275 = vld [vmem:[%s4 + $0x4] sm:$0xf]
      %v2276 = vld [vmem:[%s4 + $0x8] sm:$0xf]
      %v2277 = vld [vmem:[%s4 + $0xc] sm:$0xf]
      %v2278 = vld [vmem:[%s4 + $0x10] sm:$0xf]
      %v2279 = vld [vmem:[%s4 + $0x14] sm:$0xf]
      %v2280 = vld [vmem:[%s4 + $0x18] sm:$0xf]
      %v2281 = vld [vmem:[%s4 + $0x1c] sm:$0xf]
      %v2282 = vld [vmem:[%s4 + $0x20] sm:$0xf]
      %v2316 = vrot.slane 0.0, 1
      %v2317 = vsel %vm451, %v2316, %v2316
      %v2318 = vrot.slane %v2242, 1
      %v2319 = vrot.slane %v2149, 1
      %v2320 = vsel %vm451, %v2318, %v2319
      %v2321 = vrot.slane %v2258, 1
      %v2322 = vsel %vm451, %v2319, %v2321
      %v2323 = vrot.slane %v2243, 1
      %v2324 = vrot.slane %v2152, 1
      %v2325 = vsel %vm451, %v2323, %v2324
      %v2326 = vrot.slane %v2259, 1
      %v2327 = vsel %vm451, %v2324, %v2326
      %v2328 = vrot.slane %v2244, 1
      %v2329 = vrot.slane %v2155, 1
      %v2330 = vsel %vm451, %v2328, %v2329
      %v2331 = vrot.slane %v2260, 1
      %v2332 = vsel %vm451, %v2329, %v2331
      %v2333 = vrot.slane %v2245, 1
      %v2334 = vrot.slane %v2158, 1
      %v2335 = vsel %vm451, %v2333, %v2334
      %v2336 = vrot.slane %v2261, 1
      %v2337 = vsel %vm451, %v2334, %v2336
      %v2338 = vrot.slane %v2246, 1
      %v2339 = vrot.slane %v2161, 1
      %v2340 = vsel %vm451, %v2338, %v2339
      %v2341 = vrot.slane %v2262, 1
      %v2342 = vsel %vm451, %v2339, %v2341
      %v2343 = vrot.slane %v2247, 1
      %v2344 = vrot.slane %v2164, 1
      %v2345 = vsel %vm451, %v2343, %v2344
      %v2346 = vrot.slane %v2263, 1
      %v2347 = vsel %vm451, %v2344, %v2346
      %v2348 = vrot.slane %v2248, 1
      %v2349 = vrot.slane %v2167, 1
      %v2350 = vsel %vm451, %v2348, %v2349
      %v2351 = vrot.slane %v2264, 1
      %v2352 = vsel %vm451, %v2349, %v2351
      %v2353 = vrot.slane %v2249, 1
      %v2354 = vrot.slane %v2170, 1
      %v2355 = vsel %vm451, %v2353, %v2354
      %v2356 = vrot.slane %v2265, 1
      %v2357 = vsel %vm451, %v2354, %v2356
      %v2358 = vrot.slane %v2250, 1
      %v2359 = vrot.slane %v2173, 1
      %v2360 = vsel %vm451, %v2358, %v2359
      %v2361 = vrot.slane %v2266, 1
      %v2362 = vsel %vm451, %v2359, %v2361
      %v2363 = vrot.slane %v2251, 1
      %v2364 = vrot.slane %v2176, 1
      %v2365 = vsel %vm451, %v2363, %v2364
      %v2366 = vrot.slane %v2267, 1
      %v2367 = vsel %vm451, %v2364, %v2366
      %v2368 = vrot.slane %v2252, 1
      %v2369 = vrot.slane %v2179, 1
      %v2370 = vsel %vm451, %v2368, %v2369
      %v2371 = vrot.slane %v2268, 1
      %v2372 = vsel %vm451, %v2369, %v2371
      %v2373 = vrot.slane %v2253, 1
      %v2374 = vrot.slane %v2182, 1
      %v2375 = vsel %vm451, %v2373, %v2374
      %v2376 = vrot.slane %v2269, 1
      %v2377 = vsel %vm451, %v2374, %v2376
      %v2378 = vrot.slane %v2254, 1
      %v2379 = vrot.slane %v2185, 1
      %v2380 = vsel %vm451, %v2378, %v2379
      %v2381 = vrot.slane %v2270, 1
      %v2382 = vsel %vm451, %v2379, %v2381
      %v2383 = vrot.slane %v2255, 1
      %v2384 = vrot.slane %v2188, 1
      %v2385 = vsel %vm451, %v2383, %v2384
      %v2386 = vrot.slane %v2271, 1
      %v2387 = vsel %vm451, %v2384, %v2386
      %v2388 = vrot.slane %v2256, 1
      %v2389 = vrot.slane %v2191, 1
      %v2390 = vsel %vm451, %v2388, %v2389
      %v2391 = vrot.slane %v2272, 1
      %v2392 = vsel %vm451, %v2389, %v2391
      %v2393 = vrot.slane %v2257, 1
      %v2394 = vrot.slane %v2194, 1
      %v2395 = vsel %vm451, %v2393, %v2394
      %v2396 = vrot.slane %v2273, 1
      %v2397 = vsel %vm451, %v2394, %v2396
      %v2398 = vrot.slane 0.0, 2
      %v2399 = vsel %vm542, %v2398, %v2398
      %v2400 = vrot.slane %v2242, 2
      %v2401 = vrot.slane %v2149, 2
      %v2402 = vsel %vm542, %v2400, %v2401
      %v2403 = vrot.slane %v2258, 2
      %v2404 = vsel %vm542, %v2401, %v2403
      %v2405 = vrot.slane %v2243, 2
      %v2406 = vrot.slane %v2152, 2
      %v2407 = vsel %vm542, %v2405, %v2406
      %v2408 = vrot.slane %v2259, 2
      %v2409 = vsel %vm542, %v2406, %v2408
      %v2410 = vrot.slane %v2244, 2
      %v2411 = vrot.slane %v2155, 2
      %v2412 = vsel %vm542, %v2410, %v2411
      %v2413 = vrot.slane %v2260, 2
      %v2414 = vsel %vm542, %v2411, %v2413
      %v2415 = vrot.slane %v2245, 2
      %v2416 = vrot.slane %v2158, 2
      %v2417 = vsel %vm542, %v2415, %v2416
      %v2418 = vrot.slane %v2261, 2
      %v2419 = vsel %vm542, %v2416, %v2418
      %v2420 = vrot.slane %v2246, 2
      %v2421 = vrot.slane %v2161, 2
      %v2422 = vsel %vm542, %v2420, %v2421
      %v2423 = vrot.slane %v2262, 2
      %v2424 = vsel %vm542, %v2421, %v2423
      %v2425 = vrot.slane %v2247, 2
      %v2426 = vrot.slane %v2164, 2
      %v2427 = vsel %vm542, %v2425, %v2426
      %v2428 = vrot.slane %v2263, 2
      %v2429 = vsel %vm542, %v2426, %v2428
      %v2430 = vrot.slane %v2248, 2
      %v2431 = vrot.slane %v2167, 2
      %v2432 = vsel %vm542, %v2430, %v2431
      %v2433 = vrot.slane %v2264, 2
      %v2434 = vsel %vm542, %v2431, %v2433
      %v2435 = vrot.slane %v2249, 2
      %v2436 = vrot.slane %v2170, 2
      %v2437 = vsel %vm542, %v2435, %v2436
      %v2438 = vrot.slane %v2265, 2
      %v2439 = vsel %vm542, %v2436, %v2438
      %v2440 = vrot.slane %v2250, 2
      %v2441 = vrot.slane %v2173, 2
      %v2442 = vsel %vm542, %v2440, %v2441
      %v2443 = vrot.slane %v2266, 2
      %v2444 = vsel %vm542, %v2441, %v2443
      %v2445 = vrot.slane %v2251, 2
      %v2446 = vrot.slane %v2176, 2
      %v2447 = vsel %vm542, %v2445, %v2446
      %v2448 = vrot.slane %v2267, 2
      %v2449 = vsel %vm542, %v2446, %v2448
      %v2450 = vrot.slane %v2252, 2
      %v2451 = vrot.slane %v2179, 2
      %v2452 = vsel %vm542, %v2450, %v2451
      %v2453 = vrot.slane %v2268, 2
      %v2454 = vsel %vm542, %v2451, %v2453
      %v2455 = vrot.slane %v2253, 2
      %v2456 = vrot.slane %v2182, 2
      %v2457 = vsel %vm542, %v2455, %v2456
      %v2458 = vrot.slane %v2269, 2
      %v2459 = vsel %vm542, %v2456, %v2458
      %v2460 = vrot.slane %v2254, 2
      %v2461 = vrot.slane %v2185, 2
      %v2462 = vsel %vm542, %v2460, %v2461
      %v2463 = vrot.slane %v2270, 2
      %v2464 = vsel %vm542, %v2461, %v2463
      %v2465 = vrot.slane %v2255, 2
      %v2466 = vrot.slane %v2188, 2
      %v2467 = vsel %vm542, %v2465, %v2466
      %v2468 = vrot.slane %v2271, 2
      %v2469 = vsel %vm542, %v2466, %v2468
      %v2470 = vrot.slane %v2256, 2
      %v2471 = vrot.slane %v2191, 2
      %v2472 = vsel %vm542, %v2470, %v2471
      %v2473 = vrot.slane %v2272, 2
      %v2474 = vsel %vm542, %v2471, %v2473
      %v2475 = vrot.slane %v2257, 2
      %v2476 = vrot.slane %v2194, 2
      %v2477 = vsel %vm542, %v2475, %v2476
      %v2478 = vrot.slane %v2273, 2
      %v2479 = vsel %vm542, %v2476, %v2478
      %2480 = vrot.lane.b32.xlu0 %v2317, 8
      %v2481 = vpop.permute.xlu0 %2480
      %2482 = vrot.lane.b32.xlu0 %v2320, 8
      %v2483 = vpop.permute.xlu0 %2482
      %2484 = vrot.lane.b32.xlu0 %v2322, 8
      %v2485 = vpop.permute.xlu0 %2484
      %2486 = vrot.lane.b32.xlu0 %v2325, 8
      %v2487 = vpop.permute.xlu0 %2486
      %2488 = vrot.lane.b32.xlu0 %v2327, 8
      %v2489 = vpop.permute.xlu0 %2488
      %2490 = vrot.lane.b32.xlu0 %v2330, 8
      %v2491 = vpop.permute.xlu0 %2490
      %2492 = vrot.lane.b32.xlu0 %v2332, 8
      %v2493 = vpop.permute.xlu0 %2492
      %2494 = vrot.lane.b32.xlu0 %v2335, 8
      %v2495 = vpop.permute.xlu0 %2494
      %2496 = vrot.lane.b32.xlu0 %v2337, 8
      %v2497 = vpop.permute.xlu0 %2496
      %2498 = vrot.lane.b32.xlu0 %v2340, 8
      %v2499 = vpop.permute.xlu0 %2498
      %2500 = vrot.lane.b32.xlu0 %v2342, 8
      %v2501 = vpop.permute.xlu0 %2500
      %2502 = vrot.lane.b32.xlu0 %v2345, 8
      %v2503 = vpop.permute.xlu0 %2502
      %2504 = vrot.lane.b32.xlu0 %v2347, 8
      %v2505 = vpop.permute.xlu0 %2504
      %2506 = vrot.lane.b32.xlu0 %v2350, 8
      %v2507 = vpop.permute.xlu0 %2506
      %2508 = vrot.lane.b32.xlu0 %v2352, 8
      %v2509 = vpop.permute.xlu0 %2508
      %2510 = vrot.lane.b32.xlu0 %v2355, 8
      %v2511 = vpop.permute.xlu0 %2510
      %2512 = vrot.lane.b32.xlu0 %v2357, 8
      %v2513 = vpop.permute.xlu0 %2512
      %2514 = vrot.lane.b32.xlu0 %v2360, 8
      %v2515 = vpop.permute.xlu0 %2514
      %2516 = vrot.lane.b32.xlu0 %v2362, 8
      %v2517 = vpop.permute.xlu0 %2516
      %2518 = vrot.lane.b32.xlu0 %v2365, 8
      %v2519 = vpop.permute.xlu0 %2518
      %2520 = vrot.lane.b32.xlu0 %v2367, 8
      %v2521 = vpop.permute.xlu0 %2520
      %2522 = vrot.lane.b32.xlu0 %v2370, 8
      %v2523 = vpop.permute.xlu0 %2522
      %2524 = vrot.lane.b32.xlu0 %v2372, 8
      %v2525 = vpop.permute.xlu0 %2524
      %2526 = vrot.lane.b32.xlu0 %v2375, 8
      %v2527 = vpop.permute.xlu0 %2526
      %2528 = vrot.lane.b32.xlu0 %v2377, 8
      %v2529 = vpop.permute.xlu0 %2528
      %2530 = vrot.lane.b32.xlu0 %v2380, 8
      %v2531 = vpop.permute.xlu0 %2530
      %2532 = vrot.lane.b32.xlu0 %v2382, 8
      %v2533 = vpop.permute.xlu0 %2532
      %2534 = vrot.lane.b32.xlu0 %v2385, 8
      %v2535 = vpop.permute.xlu0 %2534
      %2536 = vrot.lane.b32.xlu0 %v2387, 8
      %v2537 = vpop.permute.xlu0 %2536
      %2538 = vrot.lane.b32.xlu0 %v2390, 8
      %v2539 = vpop.permute.xlu0 %2538
      %2540 = vrot.lane.b32.xlu0 %v2392, 8
      %v2541 = vpop.permute.xlu0 %2540
      %2573 = vrot.lane.b32.xlu0 %v2399, 16
      %v2574 = vpop.permute.xlu0 %2573
      %2575 = vrot.lane.b32.xlu0 %v2402, 16
      %v2576 = vpop.permute.xlu0 %2575
      %2577 = vrot.lane.b32.xlu0 %v2404, 16
      %v2578 = vpop.permute.xlu0 %2577
      %2579 = vrot.lane.b32.xlu0 %v2407, 16
      %v2580 = vpop.permute.xlu0 %2579
      %2581 = vrot.lane.b32.xlu0 %v2409, 16
      %v2582 = vpop.permute.xlu0 %2581
      %2583 = vrot.lane.b32.xlu0 %v2412, 16
      %v2584 = vpop.permute.xlu0 %2583
      %2585 = vrot.lane.b32.xlu0 %v2414, 16
      %v2586 = vpop.permute.xlu0 %2585
      %2587 = vrot.lane.b32.xlu0 %v2417, 16
      %v2588 = vpop.permute.xlu0 %2587
      %2589 = vrot.lane.b32.xlu0 %v2419, 16
      %v2590 = vpop.permute.xlu0 %2589
      %2591 = vrot.lane.b32.xlu0 %v2422, 16
      %v2592 = vpop.permute.xlu0 %2591
      %2593 = vrot.lane.b32.xlu0 %v2424, 16
      %v2594 = vpop.permute.xlu0 %2593
      %2595 = vrot.lane.b32.xlu0 %v2427, 16
      %v2596 = vpop.permute.xlu0 %2595
      %2597 = vrot.lane.b32.xlu0 %v2429, 16
      %v2598 = vpop.permute.xlu0 %2597
      %2599 = vrot.lane.b32.xlu0 %v2432, 16
      %v2600 = vpop.permute.xlu0 %2599
      %2601 = vrot.lane.b32.xlu0 %v2434, 16
      %v2602 = vpop.permute.xlu0 %2601
      %2603 = vrot.lane.b32.xlu0 %v2437, 16
      %v2604 = vpop.permute.xlu0 %2603
      %2605 = vrot.lane.b32.xlu0 %v2439, 16
      %v2606 = vpop.permute.xlu0 %2605
      %2607 = vrot.lane.b32.xlu0 %v2442, 16
      %v2608 = vpop.permute.xlu0 %2607
      %2609 = vrot.lane.b32.xlu0 %v2444, 16
      %v2610 = vpop.permute.xlu0 %2609
      %2611 = vrot.lane.b32.xlu0 %v2447, 16
      %v2612 = vpop.permute.xlu0 %2611
      %2613 = vrot.lane.b32.xlu0 %v2449, 16
      %v2614 = vpop.permute.xlu0 %2613
      %2615 = vrot.lane.b32.xlu0 %v2452, 16
      %v2616 = vpop.permute.xlu0 %2615
      %2617 = vrot.lane.b32.xlu0 %v2454, 16
      %v2618 = vpop.permute.xlu0 %2617
      %2619 = vrot.lane.b32.xlu0 %v2457, 16
      %v2620 = vpop.permute.xlu0 %2619
      %2621 = vrot.lane.b32.xlu0 %v2459, 16
      %v2622 = vpop.permute.xlu0 %2621
      %2623 = vrot.lane.b32.xlu0 %v2462, 16
      %v2624 = vpop.permute.xlu0 %2623
      %2625 = vrot.lane.b32.xlu0 %v2464, 16
      %v2626 = vpop.permute.xlu0 %2625
      %2627 = vrot.lane.b32.xlu0 %v2467, 16
      %v2628 = vpop.permute.xlu0 %2627
      %2629 = vrot.lane.b32.xlu0 %v2469, 16
      %v2630 = vpop.permute.xlu0 %2629
      %2631 = vrot.lane.b32.xlu0 %v2472, 16
      %v2632 = vpop.permute.xlu0 %2631
      %2633 = vrot.lane.b32.xlu0 %v2474, 16
      %v2634 = vpop.permute.xlu0 %2633
      %2666 = vrot.lane.b32.xlu0 %v2242, 24
      %v2667 = vpop.permute.xlu0 %2666
      %2668 = vrot.lane.b32.xlu0 %v2149, 24
      %v2669 = vpop.permute.xlu0 %2668
      %2670 = vrot.lane.b32.xlu0 %v2243, 24
      %v2671 = vpop.permute.xlu0 %2670
      %2672 = vrot.lane.b32.xlu0 %v2152, 24
      %v2673 = vpop.permute.xlu0 %2672
      %2674 = vrot.lane.b32.xlu0 %v2244, 24
      %v2675 = vpop.permute.xlu0 %2674
      %2676 = vrot.lane.b32.xlu0 %v2155, 24
      %v2677 = vpop.permute.xlu0 %2676
      %2678 = vrot.lane.b32.xlu0 %v2245, 24
      %v2679 = vpop.permute.xlu0 %2678
      %2680 = vrot.lane.b32.xlu0 %v2158, 24
      %v2681 = vpop.permute.xlu0 %2680
      %2682 = vrot.lane.b32.xlu0 %v2246, 24
      %v2683 = vpop.permute.xlu0 %2682
      %2684 = vrot.lane.b32.xlu0 %v2161, 24
      %v2685 = vpop.permute.xlu0 %2684
      %2686 = vrot.lane.b32.xlu0 %v2247, 24
      %v2687 = vpop.permute.xlu0 %2686
      %2688 = vrot.lane.b32.xlu0 %v2164, 24
      %v2689 = vpop.permute.xlu0 %2688
      %2690 = vrot.lane.b32.xlu0 %v2248, 24
      %v2691 = vpop.permute.xlu0 %2690
      %2692 = vrot.lane.b32.xlu0 %v2167, 24
      %v2693 = vpop.permute.xlu0 %2692
      %2694 = vrot.lane.b32.xlu0 %v2249, 24
      %v2695 = vpop.permute.xlu0 %2694
      %2696 = vrot.lane.b32.xlu0 %v2170, 24
      %v2697 = vpop.permute.xlu0 %2696
      %2698 = vrot.lane.b32.xlu0 %v2250, 24
      %v2699 = vpop.permute.xlu0 %2698
      %2700 = vrot.lane.b32.xlu0 %v2173, 24
      %v2701 = vpop.permute.xlu0 %2700
      %2702 = vrot.lane.b32.xlu0 %v2251, 24
      %v2703 = vpop.permute.xlu0 %2702
      %2704 = vrot.lane.b32.xlu0 %v2176, 24
      %v2705 = vpop.permute.xlu0 %2704
      %2706 = vrot.lane.b32.xlu0 %v2252, 24
      %v2707 = vpop.permute.xlu0 %2706
      %2708 = vrot.lane.b32.xlu0 %v2179, 24
      %v2709 = vpop.permute.xlu0 %2708
      %2710 = vrot.lane.b32.xlu0 %v2253, 24
      %v2711 = vpop.permute.xlu0 %2710
      %2712 = vrot.lane.b32.xlu0 %v2182, 24
      %v2713 = vpop.permute.xlu0 %2712
      %2714 = vrot.lane.b32.xlu0 %v2254, 24
      %v2715 = vpop.permute.xlu0 %2714
      %2716 = vrot.lane.b32.xlu0 %v2185, 24
      %v2717 = vpop.permute.xlu0 %2716
      %2718 = vrot.lane.b32.xlu0 %v2255, 24
      %v2719 = vpop.permute.xlu0 %2718
      %2720 = vrot.lane.b32.xlu0 %v2188, 24
      %v2721 = vpop.permute.xlu0 %2720
      %2722 = vrot.lane.b32.xlu0 %v2256, 24
      %v2723 = vpop.permute.xlu0 %2722
      %2724 = vrot.lane.b32.xlu0 %v2191, 24
      %v2725 = vpop.permute.xlu0 %2724
      %2726 = vrot.lane.b32.xlu0 %v2257, 24
      %v2727 = vpop.permute.xlu0 %2726
      %2728 = vrot.lane.b32.xlu0 %v2194, 24
      %v2729 = vpop.permute.xlu0 %2728
      %2762 = vrot.lane.b32.xlu0 %v2320, 32
      %v2763 = vpop.permute.xlu0 %2762
      %2764 = vrot.lane.b32.xlu0 %v2322, 32
      %v2765 = vpop.permute.xlu0 %2764
      %2766 = vrot.lane.b32.xlu0 %v2325, 32
      %v2767 = vpop.permute.xlu0 %2766
      %2768 = vrot.lane.b32.xlu0 %v2327, 32
      %v2769 = vpop.permute.xlu0 %2768
      %2770 = vrot.lane.b32.xlu0 %v2330, 32
      %v2771 = vpop.permute.xlu0 %2770
      %2772 = vrot.lane.b32.xlu0 %v2332, 32
      %v2773 = vpop.permute.xlu0 %2772
      %2774 = vrot.lane.b32.xlu0 %v2335, 32
      %v2775 = vpop.permute.xlu0 %2774
      %2776 = vrot.lane.b32.xlu0 %v2337, 32
      %v2777 = vpop.permute.xlu0 %2776
      %2778 = vrot.lane.b32.xlu0 %v2340, 32
      %v2779 = vpop.permute.xlu0 %2778
      %2780 = vrot.lane.b32.xlu0 %v2342, 32
      %v2781 = vpop.permute.xlu0 %2780
      %2782 = vrot.lane.b32.xlu0 %v2345, 32
      %v2783 = vpop.permute.xlu0 %2782
      %2784 = vrot.lane.b32.xlu0 %v2347, 32
      %v2785 = vpop.permute.xlu0 %2784
      %2786 = vrot.lane.b32.xlu0 %v2350, 32
      %v2787 = vpop.permute.xlu0 %2786
      %2788 = vrot.lane.b32.xlu0 %v2352, 32
      %v2789 = vpop.permute.xlu0 %2788
      %2790 = vrot.lane.b32.xlu0 %v2355, 32
      %v2791 = vpop.permute.xlu0 %2790
      %2792 = vrot.lane.b32.xlu0 %v2357, 32
      %v2793 = vpop.permute.xlu0 %2792
      %2794 = vrot.lane.b32.xlu0 %v2360, 32
      %v2795 = vpop.permute.xlu0 %2794
      %2796 = vrot.lane.b32.xlu0 %v2362, 32
      %v2797 = vpop.permute.xlu0 %2796
      %2798 = vrot.lane.b32.xlu0 %v2365, 32
      %v2799 = vpop.permute.xlu0 %2798
      %2800 = vrot.lane.b32.xlu0 %v2367, 32
      %v2801 = vpop.permute.xlu0 %2800
      %2802 = vrot.lane.b32.xlu0 %v2370, 32
      %v2803 = vpop.permute.xlu0 %2802
      %2804 = vrot.lane.b32.xlu0 %v2372, 32
      %v2805 = vpop.permute.xlu0 %2804
      %2806 = vrot.lane.b32.xlu0 %v2375, 32
      %v2807 = vpop.permute.xlu0 %2806
      %2808 = vrot.lane.b32.xlu0 %v2377, 32
      %v2809 = vpop.permute.xlu0 %2808
      %2810 = vrot.lane.b32.xlu0 %v2380, 32
      %v2811 = vpop.permute.xlu0 %2810
      %2812 = vrot.lane.b32.xlu0 %v2382, 32
      %v2813 = vpop.permute.xlu0 %2812
      %2814 = vrot.lane.b32.xlu0 %v2385, 32
      %v2815 = vpop.permute.xlu0 %2814
      %2816 = vrot.lane.b32.xlu0 %v2387, 32
      %v2817 = vpop.permute.xlu0 %2816
      %2818 = vrot.lane.b32.xlu0 %v2390, 32
      %v2819 = vpop.permute.xlu0 %2818
      %2820 = vrot.lane.b32.xlu0 %v2392, 32
      %v2821 = vpop.permute.xlu0 %2820
      %2822 = vrot.lane.b32.xlu0 %v2395, 32
      %v2823 = vpop.permute.xlu0 %2822
      %2824 = vrot.lane.b32.xlu0 %v2397, 32
      %v2825 = vpop.permute.xlu0 %2824
      %2858 = vrot.lane.b32.xlu0 %v2402, 40
      %v2859 = vpop.permute.xlu0 %2858
      %2860 = vrot.lane.b32.xlu0 %v2404, 40
      %v2861 = vpop.permute.xlu0 %2860
      %2862 = vrot.lane.b32.xlu0 %v2407, 40
      %v2863 = vpop.permute.xlu0 %2862
      %2864 = vrot.lane.b32.xlu0 %v2409, 40
      %v2865 = vpop.permute.xlu0 %2864
      %2866 = vrot.lane.b32.xlu0 %v2412, 40
      %v2867 = vpop.permute.xlu0 %2866
      %2868 = vrot.lane.b32.xlu0 %v2414, 40
      %v2869 = vpop.permute.xlu0 %2868
      %2870 = vrot.lane.b32.xlu0 %v2417, 40
      %v2871 = vpop.permute.xlu0 %2870
      %2872 = vrot.lane.b32.xlu0 %v2419, 40
      %v2873 = vpop.permute.xlu0 %2872
      %2874 = vrot.lane.b32.xlu0 %v2422, 40
      %v2875 = vpop.permute.xlu0 %2874
      %2876 = vrot.lane.b32.xlu0 %v2424, 40
      %v2877 = vpop.permute.xlu0 %2876
      %2878 = vrot.lane.b32.xlu0 %v2427, 40
      %v2879 = vpop.permute.xlu0 %2878
      %2880 = vrot.lane.b32.xlu0 %v2429, 40
      %v2881 = vpop.permute.xlu0 %2880
      %2882 = vrot.lane.b32.xlu0 %v2432, 40
      %v2883 = vpop.permute.xlu0 %2882
      %2884 = vrot.lane.b32.xlu0 %v2434, 40
      %v2885 = vpop.permute.xlu0 %2884
      %2886 = vrot.lane.b32.xlu0 %v2437, 40
      %v2887 = vpop.permute.xlu0 %2886
      %2888 = vrot.lane.b32.xlu0 %v2439, 40
      %v2889 = vpop.permute.xlu0 %2888
      %2890 = vrot.lane.b32.xlu0 %v2442, 40
      %v2891 = vpop.permute.xlu0 %2890
      %2892 = vrot.lane.b32.xlu0 %v2444, 40
      %v2893 = vpop.permute.xlu0 %2892
      %2894 = vrot.lane.b32.xlu0 %v2447, 40
      %v2895 = vpop.permute.xlu0 %2894
      %2896 = vrot.lane.b32.xlu0 %v2449, 40
      %v2897 = vpop.permute.xlu0 %2896
      %2898 = vrot.lane.b32.xlu0 %v2452, 40
      %v2899 = vpop.permute.xlu0 %2898
      %2900 = vrot.lane.b32.xlu0 %v2454, 40
      %v2901 = vpop.permute.xlu0 %2900
      %2902 = vrot.lane.b32.xlu0 %v2457, 40
      %v2903 = vpop.permute.xlu0 %2902
      %2904 = vrot.lane.b32.xlu0 %v2459, 40
      %v2905 = vpop.permute.xlu0 %2904
      %2906 = vrot.lane.b32.xlu0 %v2462, 40
      %v2907 = vpop.permute.xlu0 %2906
      %2908 = vrot.lane.b32.xlu0 %v2464, 40
      %v2909 = vpop.permute.xlu0 %2908
      %2910 = vrot.lane.b32.xlu0 %v2467, 40
      %v2911 = vpop.permute.xlu0 %2910
      %2912 = vrot.lane.b32.xlu0 %v2469, 40
      %v2913 = vpop.permute.xlu0 %2912
      %2914 = vrot.lane.b32.xlu0 %v2472, 40
      %v2915 = vpop.permute.xlu0 %2914
      %2916 = vrot.lane.b32.xlu0 %v2474, 40
      %v2917 = vpop.permute.xlu0 %2916
      %2918 = vrot.lane.b32.xlu0 %v2477, 40
      %v2919 = vpop.permute.xlu0 %2918
      %2920 = vrot.lane.b32.xlu0 %v2479, 40
      %v2921 = vpop.permute.xlu0 %2920
      %2954 = vrot.lane.b32.xlu0 %v2243, 48
      %v2955 = vpop.permute.xlu0 %2954
      %2956 = vrot.lane.b32.xlu0 %v2152, 48
      %v2957 = vpop.permute.xlu0 %2956
      %2958 = vrot.lane.b32.xlu0 %v2244, 48
      %v2959 = vpop.permute.xlu0 %2958
      %2960 = vrot.lane.b32.xlu0 %v2155, 48
      %v2961 = vpop.permute.xlu0 %2960
      %2962 = vrot.lane.b32.xlu0 %v2245, 48
      %v2963 = vpop.permute.xlu0 %2962
      %2964 = vrot.lane.b32.xlu0 %v2158, 48
      %v2965 = vpop.permute.xlu0 %2964
      %2966 = vrot.lane.b32.xlu0 %v2246, 48
      %v2967 = vpop.permute.xlu0 %2966
      %2968 = vrot.lane.b32.xlu0 %v2161, 48
      %v2969 = vpop.permute.xlu0 %2968
      %2970 = vrot.lane.b32.xlu0 %v2247, 48
      %v2971 = vpop.permute.xlu0 %2970
      %2972 = vrot.lane.b32.xlu0 %v2164, 48
      %v2973 = vpop.permute.xlu0 %2972
      %2974 = vrot.lane.b32.xlu0 %v2248, 48
      %v2975 = vpop.permute.xlu0 %2974
      %2976 = vrot.lane.b32.xlu0 %v2167, 48
      %v2977 = vpop.permute.xlu0 %2976
      %2978 = vrot.lane.b32.xlu0 %v2249, 48
      %v2979 = vpop.permute.xlu0 %2978
      %2980 = vrot.lane.b32.xlu0 %v2170, 48
      %v2981 = vpop.permute.xlu0 %2980
      %2982 = vrot.lane.b32.xlu0 %v2250, 48
      %v2983 = vpop.permute.xlu0 %2982
      %2984 = vrot.lane.b32.xlu0 %v2173, 48
      %v2985 = vpop.permute.xlu0 %2984
      %2986 = vrot.lane.b32.xlu0 %v2251, 48
      %v2987 = vpop.permute.xlu0 %2986
      %2988 = vrot.lane.b32.xlu0 %v2176, 48
      %v2989 = vpop.permute.xlu0 %2988
      %2990 = vrot.lane.b32.xlu0 %v2252, 48
      %v2991 = vpop.permute.xlu0 %2990
      %2992 = vrot.lane.b32.xlu0 %v2179, 48
      %v2993 = vpop.permute.xlu0 %2992
      %2994 = vrot.lane.b32.xlu0 %v2253, 48
      %v2995 = vpop.permute.xlu0 %2994
      %2996 = vrot.lane.b32.xlu0 %v2182, 48
      %v2997 = vpop.permute.xlu0 %2996
      %2998 = vrot.lane.b32.xlu0 %v2254, 48
      %v2999 = vpop.permute.xlu0 %2998
      %3000 = vrot.lane.b32.xlu0 %v2185, 48
      %v3001 = vpop.permute.xlu0 %3000
      %3002 = vrot.lane.b32.xlu0 %v2255, 48
      %v3003 = vpop.permute.xlu0 %3002
      %3004 = vrot.lane.b32.xlu0 %v2188, 48
      %v3005 = vpop.permute.xlu0 %3004
      %3006 = vrot.lane.b32.xlu0 %v2256, 48
      %v3007 = vpop.permute.xlu0 %3006
      %3008 = vrot.lane.b32.xlu0 %v2191, 48
      %v3009 = vpop.permute.xlu0 %3008
      %3010 = vrot.lane.b32.xlu0 %v2257, 48
      %v3011 = vpop.permute.xlu0 %3010
      %3012 = vrot.lane.b32.xlu0 %v2194, 48
      %v3013 = vpop.permute.xlu0 %3012
      %3014 = vrot.lane.b32.xlu0 0.0, 48
      %v3015 = vpop.permute.xlu0 %3014
      %3047 = vrot.lane.b32.xlu0 %v2325, 56
      %v3048 = vpop.permute.xlu0 %3047
      %3049 = vrot.lane.b32.xlu0 %v2327, 56
      %v3050 = vpop.permute.xlu0 %3049
      %3051 = vrot.lane.b32.xlu0 %v2330, 56
      %v3052 = vpop.permute.xlu0 %3051
      %3053 = vrot.lane.b32.xlu0 %v2332, 56
      %v3054 = vpop.permute.xlu0 %3053
      %3055 = vrot.lane.b32.xlu0 %v2335, 56
      %v3056 = vpop.permute.xlu0 %3055
      %3057 = vrot.lane.b32.xlu0 %v2337, 56
      %v3058 = vpop.permute.xlu0 %3057
      %3059 = vrot.lane.b32.xlu0 %v2340, 56
      %v3060 = vpop.permute.xlu0 %3059
      %3061 = vrot.lane.b32.xlu0 %v2342, 56
      %v3062 = vpop.permute.xlu0 %3061
      %3063 = vrot.lane.b32.xlu0 %v2345, 56
      %v3064 = vpop.permute.xlu0 %3063
      %3065 = vrot.lane.b32.xlu0 %v2347, 56
      %v3066 = vpop.permute.xlu0 %3065
      %3067 = vrot.lane.b32.xlu0 %v2350, 56
      %v3068 = vpop.permute.xlu0 %3067
      %3069 = vrot.lane.b32.xlu0 %v2352, 56
      %v3070 = vpop.permute.xlu0 %3069
      %3071 = vrot.lane.b32.xlu0 %v2355, 56
      %v3072 = vpop.permute.xlu0 %3071
      %3073 = vrot.lane.b32.xlu0 %v2357, 56
      %v3074 = vpop.permute.xlu0 %3073
      %3075 = vrot.lane.b32.xlu0 %v2360, 56
      %v3076 = vpop.permute.xlu0 %3075
      %3077 = vrot.lane.b32.xlu0 %v2362, 56
      %v3078 = vpop.permute.xlu0 %3077
      %3079 = vrot.lane.b32.xlu0 %v2365, 56
      %v3080 = vpop.permute.xlu0 %3079
      %3081 = vrot.lane.b32.xlu0 %v2367, 56
      %v3082 = vpop.permute.xlu0 %3081
      %3083 = vrot.lane.b32.xlu0 %v2370, 56
      %v3084 = vpop.permute.xlu0 %3083
      %3085 = vrot.lane.b32.xlu0 %v2372, 56
      %v3086 = vpop.permute.xlu0 %3085
      %3087 = vrot.lane.b32.xlu0 %v2375, 56
      %v3088 = vpop.permute.xlu0 %3087
      %3089 = vrot.lane.b32.xlu0 %v2377, 56
      %v3090 = vpop.permute.xlu0 %3089
      %3091 = vrot.lane.b32.xlu0 %v2380, 56
      %v3092 = vpop.permute.xlu0 %3091
      %3093 = vrot.lane.b32.xlu0 %v2382, 56
      %v3094 = vpop.permute.xlu0 %3093
      %3095 = vrot.lane.b32.xlu0 %v2385, 56
      %v3096 = vpop.permute.xlu0 %3095
      %3097 = vrot.lane.b32.xlu0 %v2387, 56
      %v3098 = vpop.permute.xlu0 %3097
      %3099 = vrot.lane.b32.xlu0 %v2390, 56
      %v3100 = vpop.permute.xlu0 %3099
      %3101 = vrot.lane.b32.xlu0 %v2392, 56
      %v3102 = vpop.permute.xlu0 %3101
      %3103 = vrot.lane.b32.xlu0 %v2395, 56
      %v3104 = vpop.permute.xlu0 %3103
      %3105 = vrot.lane.b32.xlu0 %v2397, 56
      %v3106 = vpop.permute.xlu0 %3105
      %3107 = vrot.lane.b32.xlu0 %v2317, 56
      %v3108 = vpop.permute.xlu0 %3107
      %3140 = vrot.lane.b32.xlu0 %v2407, 64
      %v3141 = vpop.permute.xlu0 %3140
      %3142 = vrot.lane.b32.xlu0 %v2409, 64
      %v3143 = vpop.permute.xlu0 %3142
      %3144 = vrot.lane.b32.xlu0 %v2412, 64
      %v3145 = vpop.permute.xlu0 %3144
      %3146 = vrot.lane.b32.xlu0 %v2414, 64
      %v3147 = vpop.permute.xlu0 %3146
      %3148 = vrot.lane.b32.xlu0 %v2417, 64
      %v3149 = vpop.permute.xlu0 %3148
      %3150 = vrot.lane.b32.xlu0 %v2419, 64
      %v3151 = vpop.permute.xlu0 %3150
      %3152 = vrot.lane.b32.xlu0 %v2422, 64
      %v3153 = vpop.permute.xlu0 %3152
      %3154 = vrot.lane.b32.xlu0 %v2424, 64
      %v3155 = vpop.permute.xlu0 %3154
      %3156 = vrot.lane.b32.xlu0 %v2427, 64
      %v3157 = vpop.permute.xlu0 %3156
      %3158 = vrot.lane.b32.xlu0 %v2429, 64
      %v3159 = vpop.permute.xlu0 %3158
      %3160 = vrot.lane.b32.xlu0 %v2432, 64
      %v3161 = vpop.permute.xlu0 %3160
      %3162 = vrot.lane.b32.xlu0 %v2434, 64
      %v3163 = vpop.permute.xlu0 %3162
      %3164 = vrot.lane.b32.xlu0 %v2437, 64
      %v3165 = vpop.permute.xlu0 %3164
      %3166 = vrot.lane.b32.xlu0 %v2439, 64
      %v3167 = vpop.permute.xlu0 %3166
      %3168 = vrot.lane.b32.xlu0 %v2442, 64
      %v3169 = vpop.permute.xlu0 %3168
      %3170 = vrot.lane.b32.xlu0 %v2444, 64
      %v3171 = vpop.permute.xlu0 %3170
      %3172 = vrot.lane.b32.xlu0 %v2447, 64
      %v3173 = vpop.permute.xlu0 %3172
      %3174 = vrot.lane.b32.xlu0 %v2449, 64
      %v3175 = vpop.permute.xlu0 %3174
      %3176 = vrot.lane.b32.xlu0 %v2452, 64
      %v3177 = vpop.permute.xlu0 %3176
      %3178 = vrot.lane.b32.xlu0 %v2454, 64
      %v3179 = vpop.permute.xlu0 %3178
      %3180 = vrot.lane.b32.xlu0 %v2457, 64
      %v3181 = vpop.permute.xlu0 %3180
      %3182 = vrot.lane.b32.xlu0 %v2459, 64
      %v3183 = vpop.permute.xlu0 %3182
      %3184 = vrot.lane.b32.xlu0 %v2462, 64
      %v3185 = vpop.permute.xlu0 %3184
      %3186 = vrot.lane.b32.xlu0 %v2464, 64
      %v3187 = vpop.permute.xlu0 %3186
      %3188 = vrot.lane.b32.xlu0 %v2467, 64
      %v3189 = vpop.permute.xlu0 %3188
      %3190 = vrot.lane.b32.xlu0 %v2469, 64
      %v3191 = vpop.permute.xlu0 %3190
      %3192 = vrot.lane.b32.xlu0 %v2472, 64
      %v3193 = vpop.permute.xlu0 %3192
      %3194 = vrot.lane.b32.xlu0 %v2474, 64
      %v3195 = vpop.permute.xlu0 %3194
      %3196 = vrot.lane.b32.xlu0 %v2477, 64
      %v3197 = vpop.permute.xlu0 %3196
      %3198 = vrot.lane.b32.xlu0 %v2479, 64
      %v3199 = vpop.permute.xlu0 %3198
      %3200 = vrot.lane.b32.xlu0 %v2399, 64
      %v3201 = vpop.permute.xlu0 %3200
      %v3233 = vsel %vm1401, 0.0, %v2481
      %v3234 = vsel %vm1401, %v2242, %v2483
      %v3235 = vsel %vm1401, %v2149, %v2485
      %v3236 = vsel %vm1401, %v2243, %v2487
      %v3237 = vsel %vm1401, %v2152, %v2489
      %v3238 = vsel %vm1401, %v2244, %v2491
      %v3239 = vsel %vm1401, %v2155, %v2493
      %v3240 = vsel %vm1401, %v2245, %v2495
      %v3241 = vsel %vm1401, %v2158, %v2497
      %v3242 = vsel %vm1401, %v2246, %v2499
      %v3243 = vsel %vm1401, %v2161, %v2501
      %v3244 = vsel %vm1401, %v2247, %v2503
      %v3245 = vsel %vm1401, %v2164, %v2505
      %v3246 = vsel %vm1401, %v2248, %v2507
      %v3247 = vsel %vm1401, %v2167, %v2509
      %v3248 = vsel %vm1401, %v2249, %v2511
      %v3249 = vsel %vm1401, %v2170, %v2513
      %v3250 = vsel %vm1401, %v2250, %v2515
      %v3251 = vsel %vm1401, %v2173, %v2517
      %v3252 = vsel %vm1401, %v2251, %v2519
      %v3253 = vsel %vm1401, %v2176, %v2521
      %v3254 = vsel %vm1401, %v2252, %v2523
      %v3255 = vsel %vm1401, %v2179, %v2525
      %v3256 = vsel %vm1401, %v2253, %v2527
      %v3257 = vsel %vm1401, %v2182, %v2529
      %v3258 = vsel %vm1401, %v2254, %v2531
      %v3259 = vsel %vm1401, %v2185, %v2533
      %v3260 = vsel %vm1401, %v2255, %v2535
      %v3261 = vsel %vm1401, %v2188, %v2537
      %v3262 = vsel %vm1401, %v2256, %v2539
      %v3263 = vsel %vm1401, %v2191, %v2541
      %v3264 = vsel %vm1434, %v3233, %v2574
      %v3265 = vsel %vm1434, %v3234, %v2576
      %v3266 = vsel %vm1434, %v3235, %v2578
      %v3267 = vsel %vm1434, %v3236, %v2580
      %v3268 = vsel %vm1434, %v3237, %v2582
      %v3269 = vsel %vm1434, %v3238, %v2584
      %v3270 = vsel %vm1434, %v3239, %v2586
      %v3271 = vsel %vm1434, %v3240, %v2588
      %v3272 = vsel %vm1434, %v3241, %v2590
      %v3273 = vsel %vm1434, %v3242, %v2592
      %v3274 = vsel %vm1434, %v3243, %v2594
      %v3275 = vsel %vm1434, %v3244, %v2596
      %v3276 = vsel %vm1434, %v3245, %v2598
      %v3277 = vsel %vm1434, %v3246, %v2600
      %v3278 = vsel %vm1434, %v3247, %v2602
      %v3279 = vsel %vm1434, %v3248, %v2604
      %v3280 = vsel %vm1434, %v3249, %v2606
      %v3281 = vsel %vm1434, %v3250, %v2608
      %v3282 = vsel %vm1434, %v3251, %v2610
      %v3283 = vsel %vm1434, %v3252, %v2612
      %v3284 = vsel %vm1434, %v3253, %v2614
      %v3285 = vsel %vm1434, %v3254, %v2616
      %v3286 = vsel %vm1434, %v3255, %v2618
      %v3287 = vsel %vm1434, %v3256, %v2620
      %v3288 = vsel %vm1434, %v3257, %v2622
      %v3289 = vsel %vm1434, %v3258, %v2624
      %v3290 = vsel %vm1434, %v3259, %v2626
      %v3291 = vsel %vm1434, %v3260, %v2628
      %v3292 = vsel %vm1434, %v3261, %v2630
      %v3293 = vsel %vm1434, %v3262, %v2632
      %v3294 = vsel %vm1434, %v3263, %v2634
      %v3295 = vsel %vm1467, %v3264, %v2667
      %v3296 = vsel %vm1467, %v3264, %v2669
      %v3297 = vsel %vm1467, %v3265, %v2671
      %v3298 = vsel %vm1467, %v3266, %v2673
      %v3299 = vsel %vm1467, %v3267, %v2675
      %v3300 = vsel %vm1467, %v3268, %v2677
      %v3301 = vsel %vm1467, %v3269, %v2679
      %v3302 = vsel %vm1467, %v3270, %v2681
      %v3303 = vsel %vm1467, %v3271, %v2683
      %v3304 = vsel %vm1467, %v3272, %v2685
      %v3305 = vsel %vm1467, %v3273, %v2687
      %v3306 = vsel %vm1467, %v3274, %v2689
      %v3307 = vsel %vm1467, %v3275, %v2691
      %v3308 = vsel %vm1467, %v3276, %v2693
      %v3309 = vsel %vm1467, %v3277, %v2695
      %v3310 = vsel %vm1467, %v3278, %v2697
      %v3311 = vsel %vm1467, %v3279, %v2699
      %v3312 = vsel %vm1467, %v3280, %v2701
      %v3313 = vsel %vm1467, %v3281, %v2703
      %v3314 = vsel %vm1467, %v3282, %v2705
      %v3315 = vsel %vm1467, %v3283, %v2707
      %v3316 = vsel %vm1467, %v3284, %v2709
      %v3317 = vsel %vm1467, %v3285, %v2711
      %v3318 = vsel %vm1467, %v3286, %v2713
      %v3319 = vsel %vm1467, %v3287, %v2715
      %v3320 = vsel %vm1467, %v3288, %v2717
      %v3321 = vsel %vm1467, %v3289, %v2719
      %v3322 = vsel %vm1467, %v3290, %v2721
      %v3323 = vsel %vm1467, %v3291, %v2723
      %v3324 = vsel %vm1467, %v3292, %v2725
      %v3325 = vsel %vm1467, %v3293, %v2727
      %v3326 = vsel %vm1467, %v3294, %v2729
      %v3327 = vsel %vm1500, %v3295, %v2763
      %v3328 = vsel %vm1500, %v3296, %v2765
      %v3329 = vsel %vm1500, %v3297, %v2767
      %v3330 = vsel %vm1500, %v3298, %v2769
      %v3331 = vsel %vm1500, %v3299, %v2771
      %v3332 = vsel %vm1500, %v3300, %v2773
      %v3333 = vsel %vm1500, %v3301, %v2775
      %v3334 = vsel %vm1500, %v3302, %v2777
      %v3335 = vsel %vm1500, %v3303, %v2779
      %v3336 = vsel %vm1500, %v3304, %v2781
      %v3337 = vsel %vm1500, %v3305, %v2783
      %v3338 = vsel %vm1500, %v3306, %v2785
      %v3339 = vsel %vm1500, %v3307, %v2787
      %v3340 = vsel %vm1500, %v3308, %v2789
      %v3341 = vsel %vm1500, %v3309, %v2791
      %v3342 = vsel %vm1500, %v3310, %v2793
      %v3343 = vsel %vm1500, %v3311, %v2795
      %v3344 = vsel %vm1500, %v3312, %v2797
      %v3345 = vsel %vm1500, %v3313, %v2799
      %v3346 = vsel %vm1500, %v3314, %v2801
      %v3347 = vsel %vm1500, %v3315, %v2803
      %v3348 = vsel %vm1500, %v3316, %v2805
      %v3349 = vsel %vm1500, %v3317, %v2807
      %v3350 = vsel %vm1500, %v3318, %v2809
      %v3351 = vsel %vm1500, %v3319, %v2811
      %v3352 = vsel %vm1500, %v3320, %v2813
      %v3353 = vsel %vm1500, %v3321, %v2815
      %v3354 = vsel %vm1500, %v3322, %v2817
      %v3355 = vsel %vm1500, %v3323, %v2819
      %v3356 = vsel %vm1500, %v3324, %v2821
      %v3357 = vsel %vm1500, %v3325, %v2823
      %v3358 = vsel %vm1500, %v3326, %v2825
      %v3359 = vsel %vm1533, %v3327, %v2859
      %v3360 = vsel %vm1533, %v3328, %v2861
      %v3361 = vsel %vm1533, %v3329, %v2863
      %v3362 = vsel %vm1533, %v3330, %v2865
      %v3363 = vsel %vm1533, %v3331, %v2867
      %v3364 = vsel %vm1533, %v3332, %v2869
      %v3365 = vsel %vm1533, %v3333, %v2871
      %v3366 = vsel %vm1533, %v3334, %v2873
      %v3367 = vsel %vm1533, %v3335, %v2875
      %v3368 = vsel %vm1533, %v3336, %v2877
      %v3369 = vsel %vm1533, %v3337, %v2879
      %v3370 = vsel %vm1533, %v3338, %v2881
      %v3371 = vsel %vm1533, %v3339, %v2883
      %v3372 = vsel %vm1533, %v3340, %v2885
      %v3373 = vsel %vm1533, %v3341, %v2887
      %v3374 = vsel %vm1533, %v3342, %v2889
      %v3375 = vsel %vm1533, %v3343, %v2891
      %v3376 = vsel %vm1533, %v3344, %v2893
      %v3377 = vsel %vm1533, %v3345, %v2895
      %v3378 = vsel %vm1533, %v3346, %v2897
      %v3379 = vsel %vm1533, %v3347, %v2899
      %v3380 = vsel %vm1533, %v3348, %v2901
      %v3381 = vsel %vm1533, %v3349, %v2903
      %v3382 = vsel %vm1533, %v3350, %v2905
      %v3383 = vsel %vm1533, %v3351, %v2907
      %v3384 = vsel %vm1533, %v3352, %v2909
      %v3385 = vsel %vm1533, %v3353, %v2911
      %v3386 = vsel %vm1533, %v3354, %v2913
      %v3387 = vsel %vm1533, %v3355, %v2915
      %v3388 = vsel %vm1533, %v3356, %v2917
      %v3389 = vsel %vm1533, %v3357, %v2919
      %v3390 = vsel %vm1533, %v3358, %v2921
      %v3391 = vsel %vm1566, %v3359, %v2955
      %v3392 = vsel %vm1566, %v3360, %v2957
      %v3393 = vsel %vm1566, %v3361, %v2959
      %v3394 = vsel %vm1566, %v3362, %v2961
      %v3395 = vsel %vm1566, %v3363, %v2963
      %v3396 = vsel %vm1566, %v3364, %v2965
      %v3397 = vsel %vm1566, %v3365, %v2967
      %v3398 = vsel %vm1566, %v3366, %v2969
      %v3399 = vsel %vm1566, %v3367, %v2971
      %v3400 = vsel %vm1566, %v3368, %v2973
      %v3401 = vsel %vm1566, %v3369, %v2975
      %v3402 = vsel %vm1566, %v3370, %v2977
      %v3403 = vsel %vm1566, %v3371, %v2979
      %v3404 = vsel %vm1566, %v3372, %v2981
      %v3405 = vsel %vm1566, %v3373, %v2983
      %v3406 = vsel %vm1566, %v3374, %v2985
      %v3407 = vsel %vm1566, %v3375, %v2987
      %v3408 = vsel %vm1566, %v3376, %v2989
      %v3409 = vsel %vm1566, %v3377, %v2991
      %v3410 = vsel %vm1566, %v3378, %v2993
      %v3411 = vsel %vm1566, %v3379, %v2995
      %v3412 = vsel %vm1566, %v3380, %v2997
      %v3413 = vsel %vm1566, %v3381, %v2999
      %v3414 = vsel %vm1566, %v3382, %v3001
      %v3415 = vsel %vm1566, %v3383, %v3003
      %v3416 = vsel %vm1566, %v3384, %v3005
      %v3417 = vsel %vm1566, %v3385, %v3007
      %v3418 = vsel %vm1566, %v3386, %v3009
      %v3419 = vsel %vm1566, %v3387, %v3011
      %v3420 = vsel %vm1566, %v3388, %v3013
      %v3421 = vsel %vm1566, %v3389, %v3015
      %v3422 = vsel %vm1566, %v3390, %v3015
      %v3423 = vsel %vm1599, %v3391, %v3048
      %v3424 = vsel %vm1599, %v3392, %v3050
      %v3425 = vsel %vm1599, %v3393, %v3052
      %v3426 = vsel %vm1599, %v3394, %v3054
      %v3427 = vsel %vm1599, %v3395, %v3056
      %v3428 = vsel %vm1599, %v3396, %v3058
      %v3429 = vsel %vm1599, %v3397, %v3060
      %v3430 = vsel %vm1599, %v3398, %v3062
      %v3431 = vsel %vm1599, %v3399, %v3064
      %v3432 = vsel %vm1599, %v3400, %v3066
      %v3433 = vsel %vm1599, %v3401, %v3068
      %v3434 = vsel %vm1599, %v3402, %v3070
      %v3435 = vsel %vm1599, %v3403, %v3072
      %v3436 = vsel %vm1599, %v3404, %v3074
      %v3437 = vsel %vm1599, %v3405, %v3076
      %v3438 = vsel %vm1599, %v3406, %v3078
      %v3439 = vsel %vm1599, %v3407, %v3080
      %v3440 = vsel %vm1599, %v3408, %v3082
      %v3441 = vsel %vm1599, %v3409, %v3084
      %v3442 = vsel %vm1599, %v3410, %v3086
      %v3443 = vsel %vm1599, %v3411, %v3088
      %v3444 = vsel %vm1599, %v3412, %v3090
      %v3445 = vsel %vm1599, %v3413, %v3092
      %v3446 = vsel %vm1599, %v3414, %v3094
      %v3447 = vsel %vm1599, %v3415, %v3096
      %v3448 = vsel %vm1599, %v3416, %v3098
      %v3449 = vsel %vm1599, %v3417, %v3100
      %v3450 = vsel %vm1599, %v3418, %v3102
      %v3451 = vsel %vm1599, %v3419, %v3104
      %v3452 = vsel %vm1599, %v3420, %v3106
      %v3453 = vsel %vm1599, %v3421, %v3108
      %v3454 = vsel %vm1599, %v3422, %v3108
      %v3455 = vsel %vm1632, %v3423, %v3141
      %v3456 = vsel %vm1632, %v3424, %v3143
      %v3457 = vsel %vm1632, %v3425, %v3145
      %v3458 = vsel %vm1632, %v3426, %v3147
      %v3459 = vsel %vm1632, %v3427, %v3149
      %v3460 = vsel %vm1632, %v3428, %v3151
      %v3461 = vsel %vm1632, %v3429, %v3153
      %v3462 = vsel %vm1632, %v3430, %v3155
      %v3463 = vsel %vm1632, %v3431, %v3157
      %v3464 = vsel %vm1632, %v3432, %v3159
      %v3465 = vsel %vm1632, %v3433, %v3161
      %v3466 = vsel %vm1632, %v3434, %v3163
      %v3467 = vsel %vm1632, %v3435, %v3165
      %v3468 = vsel %vm1632, %v3436, %v3167
      %v3469 = vsel %vm1632, %v3437, %v3169
      %v3470 = vsel %vm1632, %v3438, %v3171
      %v3471 = vsel %vm1632, %v3439, %v3173
      %v3472 = vsel %vm1632, %v3440, %v3175
      %v3473 = vsel %vm1632, %v3441, %v3177
      %v3474 = vsel %vm1632, %v3442, %v3179
      %v3475 = vsel %vm1632, %v3443, %v3181
      %v3476 = vsel %vm1632, %v3444, %v3183
      %v3477 = vsel %vm1632, %v3445, %v3185
      %v3478 = vsel %vm1632, %v3446, %v3187
      %v3479 = vsel %vm1632, %v3447, %v3189
      %v3480 = vsel %vm1632, %v3448, %v3191
      %v3481 = vsel %vm1632, %v3449, %v3193
      %v3482 = vsel %vm1632, %v3450, %v3195
      %v3483 = vsel %vm1632, %v3451, %v3197
      %v3484 = vsel %vm1632, %v3452, %v3199
      %v3485 = vsel %vm1632, %v3453, %v3201
      %v3486 = vsel %vm1632, %v3454, %v3201
      %v3487 = vpack.c.bf16 %v3456, %v3455
      %v3488 = vpack.c.bf16 %v3458, %v3457
      %v3489 = vpack.c.bf16 %v3460, %v3459
      %v3490 = vpack.c.bf16 %v3462, %v3461
      %v3491 = vpack.c.bf16 %v3464, %v3463
      %v3492 = vpack.c.bf16 %v3466, %v3465
      %v3493 = vpack.c.bf16 %v3468, %v3467
      %v3494 = vpack.c.bf16 %v3470, %v3469
      %v3495 = vpack.c.bf16 %v3472, %v3471
      %v3496 = vpack.c.bf16 %v3474, %v3473
      %v3497 = vpack.c.bf16 %v3476, %v3475
      %v3498 = vpack.c.bf16 %v3478, %v3477
      %v3499 = vpack.c.bf16 %v3480, %v3479
      %v3500 = vpack.c.bf16 %v3482, %v3481
      %v3501 = vpack.c.bf16 %v3484, %v3483
      %v3502 = vpack.c.bf16 %v3486, %v3485
      %v3512 = vunpack.c.l.b16 %v2274
      %v3513 = vunpack.c.l.b16 %v2275
      %v3514 = vunpack.c.l.b16 %v2276
      %v3515 = vunpack.c.l.b16 %v2277
      %v3516 = vunpack.c.l.b16 %v2278
      %v3517 = vunpack.c.l.b16 %v2279
      %v3518 = vunpack.c.l.b16 %v2280
      %v3519 = vunpack.c.l.b16 %v2281
      %v3520 = vunpack.c.l.b16 %v2282
      %v3521 = vpack.c.b16 %v3513, %v3512
      %v3522 = vpack.c.b16 %v3515, %v3514
      %v3523 = vpack.c.b16 %v3517, %v3516
      %v3524 = vpack.c.b16 %v3519, %v3518
      %v3525 = vpack.c.b16 %v3520, %v3520
      %v3531 = vsel %vm1708, %v3487, 0
      %v3534 = vsel %vm1708, %v3488, 0
      %v3537 = vsel %vm1708, %v3489, 0
      %v3540 = vsel %vm1708, %v3490, 0
      %v3543 = vsel %vm1708, %v3491, 0
      %v3546 = vsel %vm1708, %v3492, 0
      %v3549 = vsel %vm1708, %v3493, 0
      %v3552 = vsel %vm1708, %v3494, 0
      %v3555 = vsel %vm1708, %v3495, 0
      %v3558 = vsel %vm1708, %v3496, 0
      %v3561 = vsel %vm1708, %v3497, 0
      %v3564 = vsel %vm1708, %v3498, 0
      %v3567 = vsel %vm1708, %v3499, 0
      %v3570 = vsel %vm1708, %v3500, 0
      %v3573 = vsel %vm1708, %v3501, 0
      %v3576 = vsel %vm1708, %v3502, 0
      %v3579 = vsel %vm1757, %v3525, 0
      %3581 = vmatpush.bf16.msra.mxu0 0
      %3582 = vmatpush.bf16.msra.mxu0 0
      %3583 = vmatpush.bf16.msra.mxu0 0
      %3584 = vmatpush.bf16.msra.mxu0 %v3579
      %3585 = vmatpush.bf16.msra.mxu0 %v3524
      %3586 = vmatpush.bf16.msra.mxu0 %v3523
      %3587 = vmatpush.bf16.msra.mxu0 %v3522
      %3588 = vmatpush.bf16.msra.mxu0 %v3521
      %3589 = vmatmul.bf16.gmra.mxu0 %v3531
      %v3590 = vpop.f32.mrf.mxu0
      %v3591 = vadd.f32 0.0, %v3590
      %v3592 = vpop.f32.mrf.mxu0
      %v3593 = vadd.f32 0.0, %v3592
      %3594 = vmatmul.bf16.gmra.mxu0 %v3534
      %v3595 = vpop.f32.mrf.mxu0
      %v3596 = vadd.f32 0.0, %v3595
      %v3597 = vpop.f32.mrf.mxu0
      %v3598 = vadd.f32 0.0, %v3597
      %3599 = vmatmul.bf16.gmra.mxu0 %v3537
      %v3600 = vpop.f32.mrf.mxu0
      %v3601 = vadd.f32 0.0, %v3600
      %v3602 = vpop.f32.mrf.mxu0
      %v3603 = vadd.f32 0.0, %v3602
      %3604 = vmatmul.bf16.gmra.mxu0 %v3540
      %v3605 = vpop.f32.mrf.mxu0
      %v3606 = vadd.f32 0.0, %v3605
      %v3607 = vpop.f32.mrf.mxu0
      %v3608 = vadd.f32 0.0, %v3607
      %3609 = vmatmul.bf16.gmra.mxu0 %v3543
      %v3610 = vpop.f32.mrf.mxu0
      %v3611 = vadd.f32 0.0, %v3610
      %v3612 = vpop.f32.mrf.mxu0
      %v3613 = vadd.f32 0.0, %v3612
      %3614 = vmatmul.bf16.gmra.mxu0 %v3546
      %v3615 = vpop.f32.mrf.mxu0
      %v3616 = vadd.f32 0.0, %v3615
      %v3617 = vpop.f32.mrf.mxu0
      %v3618 = vadd.f32 0.0, %v3617
      %3619 = vmatmul.bf16.gmra.mxu0 %v3549
      %v3620 = vpop.f32.mrf.mxu0
      %v3621 = vadd.f32 0.0, %v3620
      %v3622 = vpop.f32.mrf.mxu0
      %v3623 = vadd.f32 0.0, %v3622
      %3624 = vmatmul.bf16.gmra.mxu0 %v3552
      %v3625 = vpop.f32.mrf.mxu0
      %v3626 = vadd.f32 0.0, %v3625
      %v3627 = vpop.f32.mrf.mxu0
      %v3628 = vadd.f32 0.0, %v3627
      %3629 = vmatmul.bf16.gmra.mxu0 %v3555
      %v3630 = vpop.f32.mrf.mxu0
      %v3631 = vadd.f32 0.0, %v3630
      %v3632 = vpop.f32.mrf.mxu0
      %v3633 = vadd.f32 0.0, %v3632
      %3634 = vmatmul.bf16.gmra.mxu0 %v3558
      %v3635 = vpop.f32.mrf.mxu0
      %v3636 = vadd.f32 0.0, %v3635
      %v3637 = vpop.f32.mrf.mxu0
      %v3638 = vadd.f32 0.0, %v3637
      %3639 = vmatmul.bf16.gmra.mxu0 %v3561
      %v3640 = vpop.f32.mrf.mxu0
      %v3641 = vadd.f32 0.0, %v3640
      %v3642 = vpop.f32.mrf.mxu0
      %v3643 = vadd.f32 0.0, %v3642
      %3644 = vmatmul.bf16.gmra.mxu0 %v3564
      %v3645 = vpop.f32.mrf.mxu0
      %v3646 = vadd.f32 0.0, %v3645
      %v3647 = vpop.f32.mrf.mxu0
      %v3648 = vadd.f32 0.0, %v3647
      %3649 = vmatmul.bf16.gmra.mxu0 %v3567
      %v3650 = vpop.f32.mrf.mxu0
      %v3651 = vadd.f32 0.0, %v3650
      %v3652 = vpop.f32.mrf.mxu0
      %v3653 = vadd.f32 0.0, %v3652
      %3654 = vmatmul.bf16.gmra.mxu0 %v3570
      %v3655 = vpop.f32.mrf.mxu0
      %v3656 = vadd.f32 0.0, %v3655
      %v3657 = vpop.f32.mrf.mxu0
      %v3658 = vadd.f32 0.0, %v3657
      %3659 = vmatmul.bf16.gmra.mxu0 %v3573
      %v3660 = vpop.f32.mrf.mxu0
      %v3661 = vadd.f32 0.0, %v3660
      %v3662 = vpop.f32.mrf.mxu0
      %v3663 = vadd.f32 0.0, %v3662
      %3664 = vmatmul.bf16.gmra.mxu0 %v3576
      %v3665 = vpop.f32.mrf.mxu0
      %v3666 = vadd.f32 0.0, %v3665
      %v3667 = vpop.f32.mrf.mxu0
      %v3668 = vadd.f32 0.0, %v3667
      %3669 = vdwg.mxu0
      %v3670 = vld [vmem:[%s5] sm:$0x1]
      %v3672 = vperm.slane %v3670, 0
      %v3674 = vmul.f32 %v3591, %v3672
      %v3675 = vmul.f32 %v3593, %v3672
      %v3676 = vmul.f32 %v3596, %v3672
      %v3677 = vmul.f32 %v3598, %v3672
      %v3678 = vmul.f32 %v3601, %v3672
      %v3679 = vmul.f32 %v3603, %v3672
      %v3680 = vmul.f32 %v3606, %v3672
      %v3681 = vmul.f32 %v3608, %v3672
      %v3682 = vmul.f32 %v3611, %v3672
      %v3683 = vmul.f32 %v3613, %v3672
      %v3684 = vmul.f32 %v3616, %v3672
      %v3685 = vmul.f32 %v3618, %v3672
      %v3686 = vmul.f32 %v3621, %v3672
      %v3687 = vmul.f32 %v3623, %v3672
      %v3688 = vmul.f32 %v3626, %v3672
      %v3689 = vmul.f32 %v3628, %v3672
      %v3690 = vmul.f32 %v3631, %v3672
      %v3691 = vmul.f32 %v3633, %v3672
      %v3692 = vmul.f32 %v3636, %v3672
      %v3693 = vmul.f32 %v3638, %v3672
      %v3694 = vmul.f32 %v3641, %v3672
      %v3695 = vmul.f32 %v3643, %v3672
      %v3696 = vmul.f32 %v3646, %v3672
      %v3697 = vmul.f32 %v3648, %v3672
      %v3698 = vmul.f32 %v3651, %v3672
      %v3699 = vmul.f32 %v3653, %v3672
      %v3700 = vmul.f32 %v3656, %v3672
      %v3701 = vmul.f32 %v3658, %v3672
      %v3702 = vmul.f32 %v3661, %v3672
      %v3703 = vmul.f32 %v3663, %v3672
      %v3704 = vmul.f32 %v3666, %v3672
      %v3705 = vmul.f32 %v3668, %v3672
      %v3706 = vld [vmem:[%s6] sm:$0x1]
      %v3708 = vperm.slane %v3706, 0
      %v3710 = vadd.f32 %v3674, %v3708
      %v3711 = vadd.f32 %v3675, %v3708
      %v3712 = vadd.f32 %v3676, %v3708
      %v3713 = vadd.f32 %v3677, %v3708
      %v3714 = vadd.f32 %v3678, %v3708
      %v3715 = vadd.f32 %v3679, %v3708
      %v3716 = vadd.f32 %v3680, %v3708
      %v3717 = vadd.f32 %v3681, %v3708
      %v3718 = vadd.f32 %v3682, %v3708
      %v3719 = vadd.f32 %v3683, %v3708
      %v3720 = vadd.f32 %v3684, %v3708
      %v3721 = vadd.f32 %v3685, %v3708
      %v3722 = vadd.f32 %v3686, %v3708
      %v3723 = vadd.f32 %v3687, %v3708
      %v3724 = vadd.f32 %v3688, %v3708
      %v3725 = vadd.f32 %v3689, %v3708
      %v3726 = vadd.f32 %v3690, %v3708
      %v3727 = vadd.f32 %v3691, %v3708
      %v3728 = vadd.f32 %v3692, %v3708
      %v3729 = vadd.f32 %v3693, %v3708
      %v3730 = vadd.f32 %v3694, %v3708
      %v3731 = vadd.f32 %v3695, %v3708
      %v3732 = vadd.f32 %v3696, %v3708
      %v3733 = vadd.f32 %v3697, %v3708
      %v3734 = vadd.f32 %v3698, %v3708
      %v3735 = vadd.f32 %v3699, %v3708
      %v3736 = vadd.f32 %v3700, %v3708
      %v3737 = vadd.f32 %v3701, %v3708
      %v3738 = vadd.f32 %v3702, %v3708
      %v3739 = vadd.f32 %v3703, %v3708
      %v3740 = vadd.f32 %v3704, %v3708
      %v3741 = vadd.f32 %v3705, %v3708
      %v3774 = vadd.f32 %v3710, %v459
      %v3775 = vadd.f32 %v3711, %v461
      %v3776 = vadd.f32 %v3712, %v464
      %v3777 = vadd.f32 %v3713, %v466
      %v3778 = vadd.f32 %v3714, %v469
      %v3779 = vadd.f32 %v3715, %v471
      %v3780 = vadd.f32 %v3716, %v474
      %v3781 = vadd.f32 %v3717, %v476
      %v3782 = vadd.f32 %v3718, %v479
      %v3783 = vadd.f32 %v3719, %v481
      %v3784 = vadd.f32 %v3720, %v484
      %v3785 = vadd.f32 %v3721, %v486
      %v3786 = vadd.f32 %v3722, %v489
      %v3787 = vadd.f32 %v3723, %v491
      %v3788 = vadd.f32 %v3724, %v494
      %v3789 = vadd.f32 %v3725, %v496
      %v3790 = vadd.f32 %v3726, %v499
      %v3791 = vadd.f32 %v3727, %v501
      %v3792 = vadd.f32 %v3728, %v504
      %v3793 = vadd.f32 %v3729, %v506
      %v3794 = vadd.f32 %v3730, %v509
      %v3795 = vadd.f32 %v3731, %v511
      %v3796 = vadd.f32 %v3732, %v514
      %v3797 = vadd.f32 %v3733, %v516
      %v3798 = vadd.f32 %v3734, %v519
      %v3799 = vadd.f32 %v3735, %v521
      %v3800 = vadd.f32 %v3736, %v524
      %v3801 = vadd.f32 %v3737, %v526
      %v3802 = vadd.f32 %v3738, %v529
      %v3803 = vadd.f32 %v3739, %v531
      %v3804 = vadd.f32 %v3740, %v534
      %v3805 = vadd.f32 %v3741, %v536
      %v3806 = vmax.f32 %v3774, 0.0
      %v3807 = vmax.f32 %v3775, 0.0
      %v3808 = vmax.f32 %v3776, 0.0
      %v3809 = vmax.f32 %v3777, 0.0
      %v3810 = vmax.f32 %v3778, 0.0
      %v3811 = vmax.f32 %v3779, 0.0
      %v3812 = vmax.f32 %v3780, 0.0
      %v3813 = vmax.f32 %v3781, 0.0
      %v3814 = vmax.f32 %v3782, 0.0
      %v3815 = vmax.f32 %v3783, 0.0
      %v3816 = vmax.f32 %v3784, 0.0
      %v3817 = vmax.f32 %v3785, 0.0
      %v3818 = vmax.f32 %v3786, 0.0
      %v3819 = vmax.f32 %v3787, 0.0
      %v3820 = vmax.f32 %v3788, 0.0
      %v3821 = vmax.f32 %v3789, 0.0
      %v3822 = vmax.f32 %v3790, 0.0
      %v3823 = vmax.f32 %v3791, 0.0
      %v3824 = vmax.f32 %v3792, 0.0
      %v3825 = vmax.f32 %v3793, 0.0
      %v3826 = vmax.f32 %v3794, 0.0
      %v3827 = vmax.f32 %v3795, 0.0
      %v3828 = vmax.f32 %v3796, 0.0
      %v3829 = vmax.f32 %v3797, 0.0
      %v3830 = vmax.f32 %v3798, 0.0
      %v3831 = vmax.f32 %v3799, 0.0
      %v3832 = vmax.f32 %v3800, 0.0
      %v3833 = vmax.f32 %v3801, 0.0
      %v3834 = vmax.f32 %v3802, 0.0
      %v3835 = vmax.f32 %v3803, 0.0
      %v3836 = vmax.f32 %v3804, 0.0
      %v3837 = vmax.f32 %v3805, 0.0
      %v3838 = vmin.f32 %v3806, 1.0
      %v3839 = vmin.f32 %v3807, 1.0
      %v3840 = vmin.f32 %v3808, 1.0
      %v3841 = vmin.f32 %v3809, 1.0
      %v3842 = vmin.f32 %v3810, 1.0
      %v3843 = vmin.f32 %v3811, 1.0
      %v3844 = vmin.f32 %v3812, 1.0
      %v3845 = vmin.f32 %v3813, 1.0
      %v3846 = vmin.f32 %v3814, 1.0
      %v3847 = vmin.f32 %v3815, 1.0
      %v3848 = vmin.f32 %v3816, 1.0
      %v3849 = vmin.f32 %v3817, 1.0
      %v3850 = vmin.f32 %v3818, 1.0
      %v3851 = vmin.f32 %v3819, 1.0
      %v3852 = vmin.f32 %v3820, 1.0
      %v3853 = vmin.f32 %v3821, 1.0
      %v3854 = vmin.f32 %v3822, 1.0
      %v3855 = vmin.f32 %v3823, 1.0
      %v3856 = vmin.f32 %v3824, 1.0
      %v3857 = vmin.f32 %v3825, 1.0
      %v3858 = vmin.f32 %v3826, 1.0
      %v3859 = vmin.f32 %v3827, 1.0
      %v3860 = vmin.f32 %v3828, 1.0
      %v3861 = vmin.f32 %v3829, 1.0
      %v3862 = vmin.f32 %v3830, 1.0
      %v3863 = vmin.f32 %v3831, 1.0
      %v3864 = vmin.f32 %v3832, 1.0
      %v3865 = vmin.f32 %v3833, 1.0
      %v3866 = vmin.f32 %v3834, 1.0
      %v3867 = vmin.f32 %v3835, 1.0
      %v3868 = vmin.f32 %v3836, 1.0
      %v3869 = vmin.f32 %v3837, 1.0
      %v3870 = vmul.f32 %v3838, 255.0
      %v3871 = vmul.f32 %v3839, 255.0
      %v3872 = vmul.f32 %v3840, 255.0
      %v3873 = vmul.f32 %v3841, 255.0
      %v3874 = vmul.f32 %v3842, 255.0
      %v3875 = vmul.f32 %v3843, 255.0
      %v3876 = vmul.f32 %v3844, 255.0
      %v3877 = vmul.f32 %v3845, 255.0
      %v3878 = vmul.f32 %v3846, 255.0
      %v3879 = vmul.f32 %v3847, 255.0
      %v3880 = vmul.f32 %v3848, 255.0
      %v3881 = vmul.f32 %v3849, 255.0
      %v3882 = vmul.f32 %v3850, 255.0
      %v3883 = vmul.f32 %v3851, 255.0
      %v3884 = vmul.f32 %v3852, 255.0
      %v3885 = vmul.f32 %v3853, 255.0
      %v3886 = vmul.f32 %v3854, 255.0
      %v3887 = vmul.f32 %v3855, 255.0
      %v3888 = vmul.f32 %v3856, 255.0
      %v3889 = vmul.f32 %v3857, 255.0
      %v3890 = vmul.f32 %v3858, 255.0
      %v3891 = vmul.f32 %v3859, 255.0
      %v3892 = vmul.f32 %v3860, 255.0
      %v3893 = vmul.f32 %v3861, 255.0
      %v3894 = vmul.f32 %v3862, 255.0
      %v3895 = vmul.f32 %v3863, 255.0
      %v3896 = vmul.f32 %v3864, 255.0
      %v3897 = vmul.f32 %v3865, 255.0
      %v3898 = vmul.f32 %v3866, 255.0
      %v3899 = vmul.f32 %v3867, 255.0
      %v3900 = vmul.f32 %v3868, 255.0
      %v3901 = vmul.f32 %v3869, 255.0
      %v3902 = vround.ne.pseudo %v3870
      %v3903 = vround.ne.pseudo %v3871
      %v3904 = vround.ne.pseudo %v3872
      %v3905 = vround.ne.pseudo %v3873
      %v3906 = vround.ne.pseudo %v3874
      %v3907 = vround.ne.pseudo %v3875
      %v3908 = vround.ne.pseudo %v3876
      %v3909 = vround.ne.pseudo %v3877
      %v3910 = vround.ne.pseudo %v3878
      %v3911 = vround.ne.pseudo %v3879
      %v3912 = vround.ne.pseudo %v3880
      %v3913 = vround.ne.pseudo %v3881
      %v3914 = vround.ne.pseudo %v3882
      %v3915 = vround.ne.pseudo %v3883
      %v3916 = vround.ne.pseudo %v3884
      %v3917 = vround.ne.pseudo %v3885
      %v3918 = vround.ne.pseudo %v3886
      %v3919 = vround.ne.pseudo %v3887
      %v3920 = vround.ne.pseudo %v3888
      %v3921 = vround.ne.pseudo %v3889
      %v3922 = vround.ne.pseudo %v3890
      %v3923 = vround.ne.pseudo %v3891
      %v3924 = vround.ne.pseudo %v3892
      %v3925 = vround.ne.pseudo %v3893
      %v3926 = vround.ne.pseudo %v3894
      %v3927 = vround.ne.pseudo %v3895
      %v3928 = vround.ne.pseudo %v3896
      %v3929 = vround.ne.pseudo %v3897
      %v3930 = vround.ne.pseudo %v3898
      %v3931 = vround.ne.pseudo %v3899
      %v3932 = vround.ne.pseudo %v3900
      %v3933 = vround.ne.pseudo %v3901
      %v3934 = vmul.f32 %v3902, 0.003921569
      %v3935 = vmul.f32 %v3903, 0.003921569
      %v3936 = vmul.f32 %v3904, 0.003921569
      %v3937 = vmul.f32 %v3905, 0.003921569
      %v3938 = vmul.f32 %v3906, 0.003921569
      %v3939 = vmul.f32 %v3907, 0.003921569
      %v3940 = vmul.f32 %v3908, 0.003921569
      %v3941 = vmul.f32 %v3909, 0.003921569
      %v3942 = vmul.f32 %v3910, 0.003921569
      %v3943 = vmul.f32 %v3911, 0.003921569
      %v3944 = vmul.f32 %v3912, 0.003921569
      %v3945 = vmul.f32 %v3913, 0.003921569
      %v3946 = vmul.f32 %v3914, 0.003921569
      %v3947 = vmul.f32 %v3915, 0.003921569
      %v3948 = vmul.f32 %v3916, 0.003921569
      %v3949 = vmul.f32 %v3917, 0.003921569
      %v3950 = vmul.f32 %v3918, 0.003921569
      %v3951 = vmul.f32 %v3919, 0.003921569
      %v3952 = vmul.f32 %v3920, 0.003921569
      %v3953 = vmul.f32 %v3921, 0.003921569
      %v3954 = vmul.f32 %v3922, 0.003921569
      %v3955 = vmul.f32 %v3923, 0.003921569
      %v3956 = vmul.f32 %v3924, 0.003921569
      %v3957 = vmul.f32 %v3925, 0.003921569
      %v3958 = vmul.f32 %v3926, 0.003921569
      %v3959 = vmul.f32 %v3927, 0.003921569
      %v3960 = vmul.f32 %v3928, 0.003921569
      %v3961 = vmul.f32 %v3929, 0.003921569
      %v3962 = vmul.f32 %v3930, 0.003921569
      %v3963 = vmul.f32 %v3931, 0.003921569
      %v3964 = vmul.f32 %v3932, 0.003921569
      %v3965 = vmul.f32 %v3933, 0.003921569
      %v3998 = vrot.slane %v3934, 7
      %v3999 = vrot.slane %v3935, 7
      %v4000 = vsel %vm2146, %v3998, %v3999
      %v4001 = vrot.slane %v3936, 7
      %v4002 = vrot.slane %v3937, 7
      %v4003 = vsel %vm2146, %v4001, %v4002
      %v4004 = vrot.slane %v3938, 7
      %v4005 = vrot.slane %v3939, 7
      %v4006 = vsel %vm2146, %v4004, %v4005
      %v4007 = vrot.slane %v3940, 7
      %v4008 = vrot.slane %v3941, 7
      %v4009 = vsel %vm2146, %v4007, %v4008
      %v4010 = vrot.slane %v3942, 7
      %v4011 = vrot.slane %v3943, 7
      %v4012 = vsel %vm2146, %v4010, %v4011
      %v4013 = vrot.slane %v3944, 7
      %v4014 = vrot.slane %v3945, 7
      %v4015 = vsel %vm2146, %v4013, %v4014
      %v4016 = vrot.slane %v3946, 7
      %v4017 = vrot.slane %v3947, 7
      %v4018 = vsel %vm2146, %v4016, %v4017
      %v4019 = vrot.slane %v3948, 7
      %v4020 = vrot.slane %v3949, 7
      %v4021 = vsel %vm2146, %v4019, %v4020
      %v4022 = vrot.slane %v3950, 7
      %v4023 = vrot.slane %v3951, 7
      %v4024 = vsel %vm2146, %v4022, %v4023
      %v4025 = vrot.slane %v3952, 7
      %v4026 = vrot.slane %v3953, 7
      %v4027 = vsel %vm2146, %v4025, %v4026
      %v4028 = vrot.slane %v3954, 7
      %v4029 = vrot.slane %v3955, 7
      %v4030 = vsel %vm2146, %v4028, %v4029
      %v4031 = vrot.slane %v3956, 7
      %v4032 = vrot.slane %v3957, 7
      %v4033 = vsel %vm2146, %v4031, %v4032
      %v4034 = vrot.slane %v3958, 7
      %v4035 = vrot.slane %v3959, 7
      %v4036 = vsel %vm2146, %v4034, %v4035
      %v4037 = vrot.slane %v3960, 7
      %v4038 = vrot.slane %v3961, 7
      %v4039 = vsel %vm2146, %v4037, %v4038
      %v4040 = vrot.slane %v3962, 7
      %v4041 = vrot.slane %v3963, 7
      %v4042 = vsel %vm2146, %v4040, %v4041
      %v4043 = vrot.slane %v3964, 7
      %v4044 = vrot.slane %v3965, 7
      %v4045 = vsel %vm2146, %v4043, %v4044
      %v4094 = vsel %vm2146, 0.0, %v3998
      %v4095 = vsel %vm2146, 0.0, %v4001
      %v4096 = vsel %vm2146, 0.0, %v4004
      %v4097 = vsel %vm2146, 0.0, %v4007
      %v4098 = vsel %vm2146, 0.0, %v4010
      %v4099 = vsel %vm2146, 0.0, %v4013
      %v4100 = vsel %vm2146, 0.0, %v4016
      %v4101 = vsel %vm2146, 0.0, %v4019
      %v4102 = vsel %vm2146, 0.0, %v4022
      %v4103 = vsel %vm2146, 0.0, %v4025
      %v4104 = vsel %vm2146, 0.0, %v4028
      %v4105 = vsel %vm2146, 0.0, %v4031
      %v4106 = vsel %vm2146, 0.0, %v4034
      %v4107 = vsel %vm2146, 0.0, %v4037
      %v4108 = vsel %vm2146, 0.0, %v4040
      %v4109 = vsel %vm2146, 0.0, %v4043
      %v4110 = vsel %vm2146, %v3999, 0.0
      %v4111 = vsel %vm2146, %v4002, 0.0
      %v4112 = vsel %vm2146, %v4005, 0.0
      %v4113 = vsel %vm2146, %v4008, 0.0
      %v4114 = vsel %vm2146, %v4011, 0.0
      %v4115 = vsel %vm2146, %v4014, 0.0
      %v4116 = vsel %vm2146, %v4017, 0.0
      %v4117 = vsel %vm2146, %v4020, 0.0
      %v4118 = vsel %vm2146, %v4023, 0.0
      %v4119 = vsel %vm2146, %v4026, 0.0
      %v4120 = vsel %vm2146, %v4029, 0.0
      %v4121 = vsel %vm2146, %v4032, 0.0
      %v4122 = vsel %vm2146, %v4035, 0.0
      %v4123 = vsel %vm2146, %v4038, 0.0
      %v4124 = vsel %vm2146, %v4041, 0.0
      %v4125 = vsel %vm2146, %v4044, 0.0
      %v4126 = vpack.c.bf16 0.0, 0.0
      %v4127 = vpack.c.bf16 %v4094, %v4094
      %v4128 = vpack.c.bf16 %v4000, %v4000
      %v4129 = vpack.c.bf16 %v4110, %v4110
      %v4130 = vpack.c.bf16 %v4095, %v4095
      %v4131 = vpack.c.bf16 %v4003, %v4003
      %v4132 = vpack.c.bf16 %v4111, %v4111
      %v4133 = vpack.c.bf16 %v4096, %v4096
      %v4134 = vpack.c.bf16 %v4006, %v4006
      %v4135 = vpack.c.bf16 %v4112, %v4112
      %v4136 = vpack.c.bf16 %v4097, %v4097
      %v4137 = vpack.c.bf16 %v4009, %v4009
      %v4138 = vpack.c.bf16 %v4113, %v4113
      %v4139 = vpack.c.bf16 %v4098, %v4098
      %v4140 = vpack.c.bf16 %v4012, %v4012
      %v4141 = vpack.c.bf16 %v4114, %v4114
      %v4142 = vpack.c.bf16 %v4099, %v4099
      %v4143 = vpack.c.bf16 %v4015, %v4015
      %v4144 = vpack.c.bf16 %v4115, %v4115
      %v4145 = vpack.c.bf16 %v4100, %v4100
      %v4146 = vpack.c.bf16 %v4018, %v4018
      %v4147 = vpack.c.bf16 %v4116, %v4116
      %v4148 = vpack.c.bf16 %v4101, %v4101
      %v4149 = vpack.c.bf16 %v4021, %v4021
      %v4150 = vpack.c.bf16 %v4117, %v4117
      %v4151 = vpack.c.bf16 %v4102, %v4102
      %v4152 = vpack.c.bf16 %v4024, %v4024
      %v4153 = vpack.c.bf16 %v4118, %v4118
      %v4154 = vpack.c.bf16 %v4103, %v4103
      %v4155 = vpack.c.bf16 %v4027, %v4027
      %v4156 = vpack.c.bf16 %v4119, %v4119
      %v4157 = vpack.c.bf16 %v4104, %v4104
      %v4158 = vpack.c.bf16 %v4030, %v4030
      %v4159 = vpack.c.bf16 %v4120, %v4120
      %v4160 = vpack.c.bf16 %v4105, %v4105
      %v4161 = vpack.c.bf16 %v4033, %v4033
      %v4162 = vpack.c.bf16 %v4121, %v4121
      %v4163 = vpack.c.bf16 %v4106, %v4106
      %v4164 = vpack.c.bf16 %v4036, %v4036
      %v4165 = vpack.c.bf16 %v4122, %v4122
      %v4166 = vpack.c.bf16 %v4107, %v4107
      %v4167 = vpack.c.bf16 %v4039, %v4039
      %v4168 = vpack.c.bf16 %v4123, %v4123
      %v4169 = vpack.c.bf16 %v4108, %v4108
      %v4170 = vpack.c.bf16 %v4042, %v4042
      %v4171 = vpack.c.bf16 %v4124, %v4124
      %v4172 = vpack.c.bf16 %v4109, %v4109
      %v4173 = vpack.c.bf16 %v4045, %v4045
      %v4174 = vpack.c.bf16 %v4125, %v4125
      %vm4175 = vcmask 60416
      %4176 = vst.msk [vmem:[%s278] sm:$0xf] %vm4175, %v4126
      %4177 = vst.msk [vmem:[%s278 + $0x4] sm:$0xf] %vm4175, %v4126
      %vm4178 = vcmask 57344
      %4179 = vst.msk [vmem:[%s278 + $0x8] sm:$0x1] %vm4178, %v4126
      %4180 = vst.msk [vmem:[%s278 + $0xc] sm:$0xf] %vm4175, %v4127
      %4181 = vst.msk [vmem:[%s278 + $0x10] sm:$0xf] %vm4175, %v4128
      %4182 = vst.msk [vmem:[%s278 + $0x14] sm:$0x1] %vm4178, %v4129
      %4183 = vst.msk [vmem:[%s278 + $0x18] sm:$0xf] %vm4175, %v4130
      %4184 = vst.msk [vmem:[%s278 + $0x1c] sm:$0xf] %vm4175, %v4131
      %4185 = vst.msk [vmem:[%s278 + $0x20] sm:$0x1] %vm4178, %v4132
      %4186 = vst.msk [vmem:[%s278 + $0x24] sm:$0xf] %vm4175, %v4133
      %4187 = vst.msk [vmem:[%s278 + $0x28] sm:$0xf] %vm4175, %v4134
      %4188 = vst.msk [vmem:[%s278 + $0x2c] sm:$0x1] %vm4178, %v4135
      %4189 = vst.msk [vmem:[%s278 + $0x30] sm:$0xf] %vm4175, %v4136
      %4190 = vst.msk [vmem:[%s278 + $0x34] sm:$0xf] %vm4175, %v4137
      %4191 = vst.msk [vmem:[%s278 + $0x38] sm:$0x1] %vm4178, %v4138
      %4192 = vst.msk [vmem:[%s278 + $0x3c] sm:$0xf] %vm4175, %v4139
      %4193 = vst.msk [vmem:[%s278 + $0x40] sm:$0xf] %vm4175, %v4140
      %4194 = vst.msk [vmem:[%s278 + $0x44] sm:$0x1] %vm4178, %v4141
      %4195 = vst.msk [vmem:[%s278 + $0x48] sm:$0xf] %vm4175, %v4142
      %4196 = vst.msk [vmem:[%s278 + $0x4c] sm:$0xf] %vm4175, %v4143
      %4197 = vst.msk [vmem:[%s278 + $0x50] sm:$0x1] %vm4178, %v4144
      %4198 = vst.msk [vmem:[%s278 + $0x54] sm:$0xf] %vm4175, %v4145
      %4199 = vst.msk [vmem:[%s278 + $0x58] sm:$0xf] %vm4175, %v4146
      %4200 = vst.msk [vmem:[%s278 + $0x5c] sm:$0x1] %vm4178, %v4147
      %4201 = vst.msk [vmem:[%s278 + $0x60] sm:$0xf] %vm4175, %v4148
      %4202 = vst.msk [vmem:[%s278 + $0x64] sm:$0xf] %vm4175, %v4149
      %4203 = vst.msk [vmem:[%s278 + $0x68] sm:$0x1] %vm4178, %v4150
      %4204 = vst.msk [vmem:[%s278 + $0x6c] sm:$0xf] %vm4175, %v4151
      %4205 = vst.msk [vmem:[%s278 + $0x70] sm:$0xf] %vm4175, %v4152
      %4206 = vst.msk [vmem:[%s278 + $0x74] sm:$0x1] %vm4178, %v4153
      %4207 = vst.msk [vmem:[%s278 + $0x78] sm:$0xf] %vm4175, %v4154
      %4208 = vst.msk [vmem:[%s278 + $0x7c] sm:$0xf] %vm4175, %v4155
      %4209 = vst.msk [vmem:[%s278 + $0x80] sm:$0x1] %vm4178, %v4156
      %4210 = vst.msk [vmem:[%s278 + $0x84] sm:$0xf] %vm4175, %v4157
      %4211 = vst.msk [vmem:[%s278 + $0x88] sm:$0xf] %vm4175, %v4158
      %4212 = vst.msk [vmem:[%s278 + $0x8c] sm:$0x1] %vm4178, %v4159
      %4213 = vst.msk [vmem:[%s278 + $0x90] sm:$0xf] %vm4175, %v4160
      %4214 = vst.msk [vmem:[%s278 + $0x94] sm:$0xf] %vm4175, %v4161
      %4215 = vst.msk [vmem:[%s278 + $0x98] sm:$0x1] %vm4178, %v4162
      %4216 = vst.msk [vmem:[%s278 + $0x9c] sm:$0xf] %vm4175, %v4163
      %4217 = vst.msk [vmem:[%s278 + $0xa0] sm:$0xf] %vm4175, %v4164
      %4218 = vst.msk [vmem:[%s278 + $0xa4] sm:$0x1] %vm4178, %v4165
      %4219 = vst.msk [vmem:[%s278 + $0xa8] sm:$0xf] %vm4175, %v4166
      %4220 = vst.msk [vmem:[%s278 + $0xac] sm:$0xf] %vm4175, %v4167
      %4221 = vst.msk [vmem:[%s278 + $0xb0] sm:$0x1] %vm4178, %v4168
      %4222 = vst.msk [vmem:[%s278 + $0xb4] sm:$0xf] %vm4175, %v4169
      %4223 = vst.msk [vmem:[%s278 + $0xb8] sm:$0xf] %vm4175, %v4170
      %4224 = vst.msk [vmem:[%s278 + $0xbc] sm:$0x1] %vm4178, %v4171
      %4225 = vst.msk [vmem:[%s278 + $0xc0] sm:$0xf] %vm4175, %v4172
      %4226 = vst.msk [vmem:[%s278 + $0xc4] sm:$0xf] %vm4175, %v4173
      %4227 = vst.msk [vmem:[%s278 + $0xc8] sm:$0x1] %vm4178, %v4174
      %4228 = vst.msk [vmem:[%s278 + $0xcc] sm:$0xf] %vm4175, %v4126
      %4229 = vst.msk [vmem:[%s278 + $0xd0] sm:$0xf] %vm4175, %v4126
      %4230 = vst.msk [vmem:[%s278 + $0xd4] sm:$0x1] %vm4178, %v4126
      %p4231 = scmp.lt.s32.totalorder %s18, 1
      %s4232 = scalar_select %p4231, %s18, 1
      %s4233 = smul.addr %s4232, 54
      %s4234 = smul.addr %s4233, 4
      %s4235 = scalar_lea.vmem %s7, %s4234
      // Predicated region
      $region49: #{_lambda_.5} parent=47 // pred_check
        %p4236 = pneg %p188
      $region50: #{_lambda_.5} parent=47 // pred_check_branch
        %4238 = sbr.rel (%p4236) target = $region52
      $region51: #{_lambda_.5} parent=47 // pred_region
        _
      $region52: #{_lambda_.5} parent=47 // pred_fallthru
        _
    $region48: #{_lambda_.5} parent=5 // pred_fallthru
      _
    %p4239 = scmp.le.s32.totalorder 2, %s13
    // Predicated region
    $region53: #{_lambda_.5} parent=5 // pred_check
      %p4240 = pneg %p4239
    $region54: #{_lambda_.5} parent=5 // pred_check_branch
      %4242 = sbr.rel (%p4240) target = $region56
    $region55: #{_lambda_.5} parent=5 // pred_region
      %s4243 = ssub.s32 %s13, 2
      // Predicated region
      $region57: #{_lambda_.5} parent=55 // pred_check
        %p4244 = pneg %p194
      $region58: #{_lambda_.5} parent=55 // pred_check_branch
        %4246 = sbr.rel (%p4244) target = $region60
      $region59: #{_lambda_.5} parent=55 // pred_region
        %p4247 = scmp.lt.s32.totalorder %s19, 1
        %s4248 = scalar_select %p4247, %s19, 1
        %s4249 = smul.addr %s4248, 54
        %s4250 = smul.addr %s4249, 4
        %s4251 = scalar_lea.vmem %s7, %s4250
      $region60: #{_lambda_.5} parent=55 // pred_fallthru
        _
    $region56: #{_lambda_.5} parent=5 // pred_fallthru
      _
  $region6: #{_lambda_.5} parent=0 // loop_footer
    %s17 = sadd.s32 1, %s13
  $region7: #{_lambda_.5} parent=0 // loop_footer_branch
    %12 = sbr.rel target = $region3
  $region8: #{_lambda_.5} parent=0 // loop_exit
    _

</llo_original>
